<compile_context>
chip_gen: v7x
topology: tpu7x:2x2x1
jax: 0.10.0
libtpu: 0.0.40
codegen_flags: <defaults>
</compile_context>

<pallas_src>
import jax
import jax.numpy as jnp
from jax.experimental import pallas as pl
from jax.experimental.pallas import tpu as pltpu

_BN_EPS = 1e-5


def _vmem_limit_bytes():
    """~3/4 of physical VMEM (96 MiB on v5e/v6e's 128 MiB, 48 MiB on v7x's
    64 MiB); falls back to 64 MiB if the hardware query is unavailable."""
    try:
        cap = int(getattr(pltpu.get_tpu_info(), "vmem_capacity_bytes", 0))
    except Exception:
        cap = 0
    if cap <= 0:
        return 64 * 1024 * 1024
    return min((cap * 3) // 4, 96 * 1024 * 1024)


_VMEM_LIMIT = _vmem_limit_bytes()


# --------------------------------------------------------------------------
# Pass 1: conv1 (single lane-dense MXU matmul) + BN1 partial statistics
# --------------------------------------------------------------------------
def _conv1_stats_kernel(p_ref, w_ref, c1_ref, st_ref):
    # p_ref:  (1, H*W, Kp) bf16  wrapper-built im2col patches (K zero-padded)
    # w_ref:  (Kp, CP)     bf16  im2col-ordered conv1 weights
    # c1_ref: (1, H, W, CP) bf16 conv1 pre-BN output
    # st_ref: (1, 2, CP)   f32   per-image (sum, sum-of-squares)
    _, H, W, CP = c1_ref.shape
    acc = jnp.dot(p_ref[0], w_ref[...],
                  preferred_element_type=jnp.float32)            # (H*W, CP) f32
    st_ref[:, 0:1, :] = jnp.sum(acc, axis=0, keepdims=True).reshape(1, 1, CP)
    st_ref[:, 1:2, :] = jnp.sum(acc * acc, axis=0, keepdims=True).reshape(1, 1, CP)
    c1_ref[...] = acc.reshape(1, H, W, CP).astype(c1_ref.dtype)


# --------------------------------------------------------------------------
# Pass 2: BN1 + ReLU -> conv2 as 9 accumulating matmuls + BN2 partial stats
# --------------------------------------------------------------------------
def _bn_relu_conv2_kernel(c1_ref, sc_ref, sh_ref, w_ref, c2_ref, st_ref,
                          y1p_ref):
    # c1_ref:        (1, H, W, CP)     bf16 conv1 pre-BN
    # sc_ref/sh_ref: (1, CP)           f32 fused BN1 scale / shift
    # w_ref:         (9, CP, CP)       bf16 per-tap conv2 weights
    # c2_ref:        (1, H, W, CP)     bf16 conv2 pre-BN output
    # st_ref:        (1, 2, CP)        f32 per-image (sum, sumsq)
    # y1p_ref:       (1, H+2, W+2, CP) bf16 scratch, zero-bordered ReLU(BN1)
    _, H, W, CP = c1_ref.shape
    scale = sc_ref[...].reshape(1, 1, 1, CP)
    shift = sh_ref[...].reshape(1, 1, 1, CP)
    y1 = jnp.maximum(c1_ref[...].astype(jnp.float32) * scale + shift, 0.0)
    zdt = y1p_ref.dtype
    # Zero only the 1-pixel halo border (every step: the scratch is per-core
    # and grid steps may be split across TensorCores, so a first-step-only
    # zero would be unsafe), then write the interior once.
    y1p_ref[:, 0:1, :, :] = jnp.zeros((1, 1, W + 2, CP), zdt)
    y1p_ref[:, H + 1:H + 2, :, :] = jnp.zeros((1, 1, W + 2, CP), zdt)
    y1p_ref[:, :, 0:1, :] = jnp.zeros((1, H + 2, 1, CP), zdt)
    y1p_ref[:, :, W + 1:W + 2, :] = jnp.zeros((1, H + 2, 1, CP), zdt)
    y1p_ref[:, 1:H + 1, 1:W + 1, :] = y1.astype(zdt)
    # 3x3 conv as 9 accumulating MXU matmuls directly from the padded source
    # (no im2col scratch, no scatter stores); f32 accumulation.
    acc = jnp.zeros((H * W, CP), jnp.float32)
    for dy in range(3):
        for dx in range(3):
            tap = y1p_ref[:, dy:dy + H, dx:dx + W, :].reshape(H * W, CP)
            acc = acc + jnp.dot(tap, w_ref[dy * 3 + dx],
                                preferred_element_type=jnp.float32)
    st_ref[:, 0:1, :] = jnp.sum(acc, axis=0, keepdims=True).reshape(1, 1, CP)
    st_ref[:, 1:2, :] = jnp.sum(acc * acc, axis=0, keepdims=True).reshape(1, 1, CP)
    c2_ref[...] = acc.reshape(1, H, W, CP).astype(c2_ref.dtype)


# --------------------------------------------------------------------------
# Pass 3: BN2 + ReLU -> x, fused 2x2/stride-2 maxpool -> p
# --------------------------------------------------------------------------
def _bn_relu_pool_kernel(c2_ref, sc_ref, sh_ref, x_ref, p_ref):
    # c2_ref: (1, TH, W, CP) bf16 conv2 pre-BN row-block
    # x_ref:  (1, TH, W, CP) f32     p_ref: (1, TH//2, W//2, CP) f32
    _, TH, W, CP = c2_ref.shape
    TH2, W2 = TH // 2, W // 2
    scale = sc_ref[...].reshape(1, 1, 1, CP)
    shift = sh_ref[...].reshape(1, 1, 1, CP)
    y2 = jnp.maximum(c2_ref[...].astype(jnp.float32) * scale + shift, 0.0)
    x_ref[...] = y2.astype(x_ref.dtype)
    # Maxpool from the in-register value: regroup W then H, VPU max.
    wmax = jnp.max(y2.reshape(TH, W2, 2, CP), axis=2)            # (TH, W2, CP)
    p_ref[...] = jnp.max(wmax.reshape(TH2, 2, W2, CP),
                         axis=1).reshape(1, TH2, W2, CP)


def _bn_scale_shift(stats, gamma, beta, count, CP):
    """Reduce per-image (sum, sumsq) partials -> fused BN scale/shift (1, CP)."""
    s = jnp.sum(stats[:, 0, :], axis=0)
    ss = jnp.sum(stats[:, 1, :], axis=0)
    mean = s / count
    var = ss / count - mean * mean                 # biased variance (training BN)
    g = jnp.zeros((CP,), jnp.float32).at[:gamma.shape[0]].set(
        gamma.astype(jnp.float32))
    b = jnp.zeros((CP,), jnp.float32).at[:beta.shape[0]].set(
        beta.astype(jnp.float32))
    scale = g * jax.lax.rsqrt(var + _BN_EPS)
    shift = b - mean * scale
    return scale.reshape(1, CP), shift.reshape(1, CP)


def _pick_th(H, W, CP):
    """Largest even divisor of H whose pass-3 per-step footprint (bf16 in +
    f32 x out + f32 pool out, double-buffered) stays within a ~12 MiB budget —
    large tiles amortize the ~0.35us/grid-step pipeline overhead."""
    budget = 12 * 1024 * 1024
    best = 2
    for th in range(2, H + 1, 2):
        if H % th:
            continue
        per_step = th * W * CP * (2 + 4) + (th // 2) * (W // 2) * CP * 4
        if 2 * per_step <= budget:
            best = th
    return best


@jax.jit
def encoder_block(x_nchw, w1, g1, b1, w2, g2, b2):
    """x_nchw: (N, Cin, H, W); w*: (Cout, Cin*, 3, 3) PyTorch layout.
    Returns (x, p) in NCHW, matching Encoder_Block.forward."""
    N, Cin, H, W = x_nchw.shape
    Cout = w1.shape[0]
    assert H % 2 == 0 and W % 2 == 0
    CP = ((Cout + 127) // 128) * 128        # lane-dense padded channel count
    Kp = ((9 * Cin + 127) // 128) * 128     # lane-dense conv1 im2col K
    mxu_dt = jnp.bfloat16                   # MXU operand dtype; accum/stats f32
    count = N * H * W

    # ---- wrapper-side layout prep (fused by XLA under jit) ----
    x_nhwc = jnp.transpose(x_nchw, (0, 2, 3, 1))
    xpad = jnp.pad(x_nhwc, ((0, 0), (1, 1), (1, 1), (0, 0)))
    # Lane-dense im2col for conv1 (Cin is tiny; K=9*Cin zero-padded to 128 so
    # pass-1 DMAs/stores are unmasked and the MXU K dim is aligned).
    taps = [xpad[:, dy:dy + H, dx:dx + W, :]
            for dy in range(3) for dx in range(3)]
    patches = jnp.concatenate(taps, axis=-1).reshape(N, H * W, 9 * Cin)
    patches = jnp.pad(patches, ((0, 0), (0, 0), (0, Kp - 9 * Cin))).astype(mxu_dt)
    # conv1 weights -> (Kp, CP) im2col operand (K index = (dy*3+dx)*Cin + c)
    w1k = jnp.transpose(w1, (2, 3, 1, 0)).reshape(9 * Cin, Cout)
    w1k = jnp.pad(w1k, ((0, Kp - 9 * Cin), (0, CP - Cout))).astype(mxu_dt)
    # conv2 weights -> 9 per-tap (CP, CP) matmul operands
    w2k = jnp.transpose(w2, (2, 3, 1, 0)).reshape(9, Cout, Cout)
    w2k = jnp.pad(w2k, ((0, 0), (0, CP - Cout), (0, CP - Cout))).astype(mxu_dt)

    cp1 = pltpu.CompilerParams(dimension_semantics=("parallel",),
                               vmem_limit_bytes=_VMEM_LIMIT)

    # ---- pass 1: conv1 (one aligned MXU matmul) + BN1 partial stats --------
    conv1, st1 = pl.pallas_call(
        _conv1_stats_kernel,
        grid=(N,),
        in_specs=[pl.BlockSpec((1, H * W, Kp), lambda n: (n, 0, 0)),
                  pl.BlockSpec((Kp, CP), lambda n: (0, 0))],
        out_specs=(pl.BlockSpec((1, H, W, CP), lambda n: (n, 0, 0, 0)),
                   pl.BlockSpec((1, 2, CP), lambda n: (n, 0, 0))),
        out_shape=(jax.ShapeDtypeStruct((N, H, W, CP), mxu_dt),
                   jax.ShapeDtypeStruct((N, 2, CP), jnp.float32)),
        compiler_params=cp1,
    )(patches, w1k)
    scale1, shift1 = _bn_scale_shift(st1, g1, b1, count, CP)

    # ---- pass 2: BN1+ReLU -> conv2 (9 accumulating matmuls) + BN2 stats ----
    conv2, st2 = pl.pallas_call(
        _bn_relu_conv2_kernel,
        grid=(N,),
        in_specs=[pl.BlockSpec((1, H, W, CP), lambda n: (n, 0, 0, 0)),
                  pl.BlockSpec((1, CP), lambda n: (0, 0)),
                  pl.BlockSpec((1, CP), lambda n: (0, 0)),
                  pl.BlockSpec((9, CP, CP), lambda n: (0, 0, 0))],
        out_specs=(pl.BlockSpec((1, H, W, CP), lambda n: (n, 0, 0, 0)),
                   pl.BlockSpec((1, 2, CP), lambda n: (n, 0, 0))),
        out_shape=(jax.ShapeDtypeStruct((N, H, W, CP), mxu_dt),  # bf16 (halves
                   jax.ShapeDtypeStruct((N, 2, CP), jnp.float32)),  # pass-3 HBM)
        scratch_shapes=[pltpu.VMEM((1, H + 2, W + 2, CP), mxu_dt)],
        compiler_params=cp1,
    )(conv1, scale1, shift1, w2k)
    scale2, shift2 = _bn_scale_shift(st2, g2, b2, count, CP)

    # ---- pass 3: BN2+ReLU -> x, fused 2x2 maxpool -> p, grid (N, row-blocks) -
    TH = _pick_th(H, W, CP)
    cp2 = pltpu.CompilerParams(dimension_semantics=("parallel", "parallel"),
                               vmem_limit_bytes=_VMEM_LIMIT)
    x_pad, p_pad = pl.pallas_call(
        _bn_relu_pool_kernel,
        grid=(N, H // TH),
        in_specs=[pl.BlockSpec((1, TH, W, CP), lambda n, h: (n, h, 0, 0)),
                  pl.BlockSpec((1, CP), lambda n, h: (0, 0)),
                  pl.BlockSpec((1, CP), lambda n, h: (0, 0))],
        out_specs=(pl.BlockSpec((1, TH, W, CP), lambda n, h: (n, h, 0, 0)),
                   pl.BlockSpec((1, TH // 2, W // 2, CP),
                                lambda n, h: (n, h, 0, 0))),
        out_shape=(jax.ShapeDtypeStruct((N, H, W, CP), jnp.float32),
                   jax.ShapeDtypeStruct((N, H // 2, W // 2, CP), jnp.float32)),
        compiler_params=cp2,
    )(conv2, scale2, shift2)

    # strip channel padding, back to PyTorch NCHW (fused slice+transpose)
    x_out = jnp.transpose(x_pad[..., :Cout], (0, 3, 1, 2))
    p_out = jnp.transpose(p_pad[..., :Cout], (0, 3, 1, 2))
    return x_out, p_out


def _reference(x, w1, g1, b1, w2, g2, b2):
    """Pure-JAX f32 reference mirroring the PyTorch module (NCHW)."""
    def conv(h, w):
        return jax.lax.conv_general_dilated(
            h, w, window_strides=(1, 1), padding=((1, 1), (1, 1)),
            dimension_numbers=("NCHW", "OIHW", "NCHW"))

    def bn_relu(h, g, b):
        mean = jnp.mean(h, axis=(0, 2, 3), keepdims=True)
        var = jnp.mean((h - mean) ** 2, axis=(0, 2, 3), keepdims=True)
        y = (h - mean) * jax.lax.rsqrt(var + _BN_EPS)
        y = y * g.reshape(1, -1, 1, 1) + b.reshape(1, -1, 1, 1)
        return jnp.maximum(y, 0.0)

    h = bn_relu(conv(x, w1), g1, b1)
    h = bn_relu(conv(h, w2), g2, b2)
    N, C, H, W = h.shape
    p = h.reshape(N, C, H // 2, 2, W // 2, 2).max(axis=(3, 5))
    return h, p


if __name__ == "__main__":
    key = jax.random.PRNGKey(0)
    k = jax.random.split(key, 7)
    N, Cin, Cout, H, W = 2, 4, 8, 16, 16

    x = jax.random.normal(k[0], (N, Cin, H, W), jnp.float32)
    w1 = 0.2 * jax.random.normal(k[1], (Cout, Cin, 3, 3), jnp.float32)
    w2 = 0.2 * jax.random.normal(k[2], (Cout, Cout, 3, 3), jnp.float32)
    # BatchNorm affine params (PyTorch init gamma=1, beta=0), perturbed so the
    # affine path is exercised.
    g1 = 1.0 + 0.1 * jax.random.normal(k[3], (Cout,), jnp.float32)
    b1 = 0.1 * jax.random.normal(k[4], (Cout,), jnp.float32)
    g2 = 1.0 + 0.1 * jax.random.normal(k[5], (Cout,), jnp.float32)
    b2 = 0.1 * jax.random.normal(k[6], (Cout,), jnp.float32)

    x_out, p_out = encoder_block(x, w1, g1, b1, w2, g2, b2)
    jax.block_until_ready((x_out, p_out))

    ref_x, ref_p = _reference(x, w1, g1, b1, w2, g2, b2)
    assert x_out.shape == (N, Cout, H, W)
    assert p_out.shape == (N, Cout, H // 2, W // 2)
    # MXU operands and both conv intermediates are bf16 (accumulation & BN
    # statistics in f32), so compare against the pure-f32 reference with a
    # bf16-appropriate tolerance.
    assert jnp.allclose(x_out, ref_x, atol=5e-2, rtol=5e-2), float(
        jnp.max(jnp.abs(x_out - ref_x)))
    assert jnp.allclose(p_out, ref_p, atol=5e-2, rtol=5e-2), float(
        jnp.max(jnp.abs(p_out - ref_p)))
    print("KERNEL_OK")
</pallas_src>

<mosaic_0001>
module attributes {stable_mosaic.version = 11 : i64} {
  func.func @_conv1_stats_kernel(%arg0: i32, %arg1: memref<1x256x128xbf16, #tpu.memory_space<vmem>>, %arg2: memref<128x128xbf16, #tpu.memory_space<vmem>>, %arg3: memref<1x16x16x128xbf16, #tpu.memory_space<vmem>>, %arg4: memref<1x2x128xf32, #tpu.memory_space<vmem>>) attributes {dimension_semantics = [#tpu.dimension_semantics<parallel>], iteration_bounds = array<i64: 2>, scalar_prefetch = 0 : i64, scratch_operands = 0 : i64, tpu.core_type = #tpu.core_type<tc>, window_params = [{transform_indices = @transform_0, window_bounds = array<i64: 1, 256, 128>}, {pipeline_mode = #tpu.pipeline_mode<synchronous>, transform_indices = @transform_1, window_bounds = array<i64: 128, 128>}, {transform_indices = @transform_2, window_bounds = array<i64: 1, 16, 16, 128>}, {transform_indices = @transform_3, window_bounds = array<i64: 1, 2, 128>}]} {
    %c0 = arith.constant 0 : index
    %c0_0 = arith.constant 0 : index
    %c0_1 = arith.constant 0 : index
    %0 = vector.load %arg1[%c0, %c0_0, %c0_1] : memref<1x256x128xbf16, #tpu.memory_space<vmem>>, vector<1x256x128xbf16>
    %1 = vector.shape_cast %0 : vector<1x256x128xbf16> to vector<256x128xbf16>
    %c0_2 = arith.constant 0 : index
    %c0_3 = arith.constant 0 : index
    %2 = vector.load %arg2[%c0_2, %c0_3] : memref<128x128xbf16, #tpu.memory_space<vmem>>, vector<128x128xbf16>
    %cst = arith.constant dense<0.000000e+00> : vector<256x128xf32>
    %3 = tpu.matmul %1, %2, %cst {dimension_numbers = #tpu.dot_dimension_numbers<[1], [0], [0], [1], [0, 0, 1, 1], [], []>} : vector<256x128xbf16>, vector<128x128xbf16>, vector<256x128xf32> -> vector<256x128xf32>
    %cst_4 = arith.constant dense<0.000000e+00> : vector<128xf32>
    %4 = vector.multi_reduction <add>, %3, %cst_4 [0] : vector<256x128xf32> to vector<128xf32>
    %5 = vector.shape_cast %4 : vector<128xf32> to vector<1x128xf32>
    %6 = vector.shape_cast %5 : vector<1x128xf32> to vector<1x1x128xf32>
    %c0_5 = arith.constant 0 : index
    %c0_6 = arith.constant 0 : index
    %c0_7 = arith.constant 0 : index
    %7 = vector.load %arg4[%c0_5, %c0_6, %c0_7] : memref<1x2x128xf32, #tpu.memory_space<vmem>>, vector<1x1x128xf32>
    tpu.vector_store %arg4[%c0_5, %c0_6, %c0_7], %6 {strides = array<i32>} : memref<1x2x128xf32, #tpu.memory_space<vmem>>, vector<1x1x128xf32>,
    %8 = arith.mulf %3, %3 : vector<256x128xf32>
    %cst_8 = arith.constant dense<0.000000e+00> : vector<128xf32>
    %9 = vector.multi_reduction <add>, %8, %cst_8 [0] : vector<256x128xf32> to vector<128xf32>
    %10 = vector.shape_cast %9 : vector<128xf32> to vector<1x128xf32>
    %11 = vector.shape_cast %10 : vector<1x128xf32> to vector<1x1x128xf32>
    %c0_9 = arith.constant 0 : index
    %c1 = arith.constant 1 : index
    %c0_10 = arith.constant 0 : index
    %12 = vector.load %arg4[%c0_9, %c1, %c0_10] : memref<1x2x128xf32, #tpu.memory_space<vmem>>, vector<1x1x128xf32>
    tpu.vector_store %arg4[%c0_9, %c1, %c0_10], %11 {strides = array<i32>} : memref<1x2x128xf32, #tpu.memory_space<vmem>>, vector<1x1x128xf32>,
    %13 = vector.shape_cast %3 : vector<256x128xf32> to vector<1x16x16x128xf32>
    %14 = arith.truncf %13 : vector<1x16x16x128xf32> to vector<1x16x16x128xbf16>
    %c0_11 = arith.constant 0 : index
    %c0_12 = arith.constant 0 : index
    %c0_13 = arith.constant 0 : index
    %c0_14 = arith.constant 0 : index
    %15 = vector.load %arg3[%c0_11, %c0_12, %c0_13, %c0_14] : memref<1x16x16x128xbf16, #tpu.memory_space<vmem>>, vector<1x16x16x128xbf16>
    tpu.vector_store %arg3[%c0_11, %c0_12, %c0_13, %c0_14], %14 {strides = array<i32>} : memref<1x16x16x128xbf16, #tpu.memory_space<vmem>>, vector<1x16x16x128xbf16>,
    return
  }
  func.func @transform_0(%arg0: i32) -> (i32, i32, i32) {
    %c0_i32 = arith.constant 0 : i32
    %c0_i32_0 = arith.constant 0 : i32
    %c0_i32_1 = arith.constant 0 : i32
    return %arg0, %c0_i32, %c0_i32_0 : i32, i32, i32
  }
  func.func @transform_1(%arg0: i32) -> (i32, i32) {
    %c0_i32 = arith.constant 0 : i32
    %c0_i32_0 = arith.constant 0 : i32
    %c0_i32_1 = arith.constant 0 : i32
    return %c0_i32, %c0_i32_0 : i32, i32
  }
  func.func @transform_2(%arg0: i32) -> (i32, i32, i32, i32) {
    %c0_i32 = arith.constant 0 : i32
    %c0_i32_0 = arith.constant 0 : i32
    %c0_i32_1 = arith.constant 0 : i32
    %c0_i32_2 = arith.constant 0 : i32
    return %arg0, %c0_i32, %c0_i32_0, %c0_i32_1 : i32, i32, i32, i32
  }
  func.func @transform_3(%arg0: i32) -> (i32, i32, i32) {
    %c0_i32 = arith.constant 0 : i32
    %c0_i32_0 = arith.constant 0 : i32
    %c0_i32_1 = arith.constant 0 : i32
    return %arg0, %c0_i32, %c0_i32_0 : i32, i32, i32
  }
}

module attributes {stable_mosaic.version = 11 : i64} {
  func.func @_bn_relu_conv2_kernel(%arg0: i32, %arg1: memref<1x16x16x128xbf16, #tpu.memory_space<vmem>>, %arg2: memref<1x128xf32, #tpu.memory_space<vmem>>, %arg3: memref<1x128xf32, #tpu.memory_space<vmem>>, %arg4: memref<9x128x128xbf16, #tpu.memory_space<vmem>>, %arg5: memref<1x16x16x128xbf16, #tpu.memory_space<vmem>>, %arg6: memref<1x2x128xf32, #tpu.memory_space<vmem>>, %arg7: memref<1x18x18x128xbf16, #tpu.memory_space<vmem>>) attributes {dimension_semantics = [#tpu.dimension_semantics<parallel>], iteration_bounds = array<i64: 2>, scalar_prefetch = 0 : i64, scratch_operands = 1 : i64, tpu.core_type = #tpu.core_type<tc>, window_params = [{transform_indices = @transform_0, window_bounds = array<i64: 1, 16, 16, 128>}, {pipeline_mode = #tpu.pipeline_mode<synchronous>, transform_indices = @transform_1, window_bounds = array<i64: 1, 128>}, {pipeline_mode = #tpu.pipeline_mode<synchronous>, transform_indices = @transform_2, window_bounds = array<i64: 1, 128>}, {pipeline_mode = #tpu.pipeline_mode<synchronous>, transform_indices = @transform_3, window_bounds = array<i64: 9, 128, 128>}, {transform_indices = @transform_4, window_bounds = array<i64: 1, 16, 16, 128>}, {transform_indices = @transform_5, window_bounds = array<i64: 1, 2, 128>}]} {
    %c0 = arith.constant 0 : index
    %c0_0 = arith.constant 0 : index
    %0 = vector.load %arg2[%c0, %c0_0] : memref<1x128xf32, #tpu.memory_space<vmem>>, vector<1x128xf32>
    %1 = vector.shape_cast %0 : vector<1x128xf32> to vector<1x1x1x128xf32>
    %c0_1 = arith.constant 0 : index
    %c0_2 = arith.constant 0 : index
    %2 = vector.load %arg3[%c0_1, %c0_2] : memref<1x128xf32, #tpu.memory_space<vmem>>, vector<1x128xf32>
    %3 = vector.shape_cast %2 : vector<1x128xf32> to vector<1x1x1x128xf32>
    %c0_3 = arith.constant 0 : index
    %c0_4 = arith.constant 0 : index
    %c0_5 = arith.constant 0 : index
    %c0_6 = arith.constant 0 : index
    %4 = vector.load %arg1[%c0_3, %c0_4, %c0_5, %c0_6] : memref<1x16x16x128xbf16, #tpu.memory_space<vmem>>, vector<1x16x16x128xbf16>
    %5 = arith.extf %4 : vector<1x16x16x128xbf16> to vector<1x16x16x128xf32>
    %6 = vector.broadcast %1 : vector<1x1x1x128xf32> to vector<1x16x16x128xf32>
    %7 = arith.mulf %5, %6 : vector<1x16x16x128xf32>
    %8 = vector.broadcast %3 : vector<1x1x1x128xf32> to vector<1x16x16x128xf32>
    %9 = arith.addf %7, %8 : vector<1x16x16x128xf32>
    %cst = arith.constant 0.000000e+00 : f32
    %10 = vector.broadcast %cst : f32 to vector<1x16x16x128xf32>
    %11 = arith.maximumf %9, %10 : vector<1x16x16x128xf32>
    %cst_7 = arith.constant 0.000000e+00 : bf16
    %12 = vector.broadcast %cst_7 : bf16 to vector<1x1x18x128xbf16>
    %c0_8 = arith.constant 0 : index
    %c0_9 = arith.constant 0 : index
    %c0_10 = arith.constant 0 : index
    %c0_11 = arith.constant 0 : index
    %13 = vector.load %arg7[%c0_8, %c0_9, %c0_10, %c0_11] : memref<1x18x18x128xbf16, #tpu.memory_space<vmem>>, vector<1x1x18x128xbf16>
    tpu.vector_store %arg7[%c0_8, %c0_9, %c0_10, %c0_11], %12 {strides = array<i32>} : memref<1x18x18x128xbf16, #tpu.memory_space<vmem>>, vector<1x1x18x128xbf16>,
    %cst_12 = arith.constant 0.000000e+00 : bf16
    %14 = vector.broadcast %cst_12 : bf16 to vector<1x1x18x128xbf16>
    %c0_13 = arith.constant 0 : index
    %c17 = arith.constant 17 : index
    %c0_14 = arith.constant 0 : index
    %c0_15 = arith.constant 0 : index
    %15 = vector.load %arg7[%c0_13, %c17, %c0_14, %c0_15] : memref<1x18x18x128xbf16, #tpu.memory_space<vmem>>, vector<1x1x18x128xbf16>
    tpu.vector_store %arg7[%c0_13, %c17, %c0_14, %c0_15], %14 {strides = array<i32>} : memref<1x18x18x128xbf16, #tpu.memory_space<vmem>>, vector<1x1x18x128xbf16>,
    %cst_16 = arith.constant 0.000000e+00 : bf16
    %16 = vector.broadcast %cst_16 : bf16 to vector<1x18x1x128xbf16>
    %c0_17 = arith.constant 0 : index
    %c0_18 = arith.constant 0 : index
    %c0_19 = arith.constant 0 : index
    %c0_20 = arith.constant 0 : index
    %17 = vector.load %arg7[%c0_17, %c0_18, %c0_19, %c0_20] : memref<1x18x18x128xbf16, #tpu.memory_space<vmem>>, vector<1x18x1x128xbf16>
    tpu.vector_store %arg7[%c0_17, %c0_18, %c0_19, %c0_20], %16 {strides = array<i32>} : memref<1x18x18x128xbf16, #tpu.memory_space<vmem>>, vector<1x18x1x128xbf16>,
    %cst_21 = arith.constant 0.000000e+00 : bf16
    %18 = vector.broadcast %cst_21 : bf16 to vector<1x18x1x128xbf16>
    %c0_22 = arith.constant 0 : index
    %c0_23 = arith.constant 0 : index
    %c17_24 = arith.constant 17 : index
    %c0_25 = arith.constant 0 : index
    %19 = vector.load %arg7[%c0_22, %c0_23, %c17_24, %c0_25] : memref<1x18x18x128xbf16, #tpu.memory_space<vmem>>, vector<1x18x1x128xbf16>
    tpu.vector_store %arg7[%c0_22, %c0_23, %c17_24, %c0_25], %18 {strides = array<i32>} : memref<1x18x18x128xbf16, #tpu.memory_space<vmem>>, vector<1x18x1x128xbf16>,
    %20 = arith.truncf %11 : vector<1x16x16x128xf32> to vector<1x16x16x128xbf16>
    %c0_26 = arith.constant 0 : index
    %c1 = arith.constant 1 : index
    %c1_27 = arith.constant 1 : index
    %c0_28 = arith.constant 0 : index
    %21 = vector.load %arg7[%c0_26, %c1, %c1_27, %c0_28] : memref<1x18x18x128xbf16, #tpu.memory_space<vmem>>, vector<1x16x16x128xbf16>
    tpu.vector_store %arg7[%c0_26, %c1, %c1_27, %c0_28], %20 {strides = array<i32>} : memref<1x18x18x128xbf16, #tpu.memory_space<vmem>>, vector<1x16x16x128xbf16>,
    %cst_29 = arith.constant 0.000000e+00 : f32
    %22 = vector.broadcast %cst_29 : f32 to vector<256x128xf32>
    %c0_30 = arith.constant 0 : index
    %c0_31 = arith.constant 0 : index
    %c0_32 = arith.constant 0 : index
    %c0_33 = arith.constant 0 : index
    %23 = vector.load %arg7[%c0_30, %c0_31, %c0_32, %c0_33] : memref<1x18x18x128xbf16, #tpu.memory_space<vmem>>, vector<1x16x16x128xbf16>
    %24 = vector.shape_cast %23 : vector<1x16x16x128xbf16> to vector<256x128xbf16>
    %c0_34 = arith.constant 0 : index
    %c0_35 = arith.constant 0 : index
    %c0_36 = arith.constant 0 : index
    %25 = vector.load %arg4[%c0_34, %c0_35, %c0_36] : memref<9x128x128xbf16, #tpu.memory_space<vmem>>, vector<1x128x128xbf16>
    %26 = vector.shape_cast %25 : vector<1x128x128xbf16> to vector<128x128xbf16>
    %cst_37 = arith.constant dense<0.000000e+00> : vector<256x128xf32>
    %27 = tpu.matmul %24, %26, %cst_37 {dimension_numbers = #tpu.dot_dimension_numbers<[1], [0], [0], [1], [0, 0, 1, 1], [], []>} : vector<256x128xbf16>, vector<128x128xbf16>, vector<256x128xf32> -> vector<256x128xf32>
    %28 = arith.addf %22, %27 : vector<256x128xf32>
    %c0_38 = arith.constant 0 : index
    %c0_39 = arith.constant 0 : index
    %c1_40 = arith.constant 1 : index
    %c0_41 = arith.constant 0 : index
    %29 = vector.load %arg7[%c0_38, %c0_39, %c1_40, %c0_41] : memref<1x18x18x128xbf16, #tpu.memory_space<vmem>>, vector<1x16x16x128xbf16>
    %30 = vector.shape_cast %29 : vector<1x16x16x128xbf16> to vector<256x128xbf16>
    %c1_42 = arith.constant 1 : index
    %c0_43 = arith.constant 0 : index
    %c0_44 = arith.constant 0 : index
    %31 = vector.load %arg4[%c1_42, %c0_43, %c0_44] : memref<9x128x128xbf16, #tpu.memory_space<vmem>>, vector<1x128x128xbf16>
    %32 = vector.shape_cast %31 : vector<1x128x128xbf16> to vector<128x128xbf16>
    %cst_45 = arith.constant dense<0.000000e+00> : vector<256x128xf32>
    %33 = tpu.matmul %30, %32, %cst_45 {dimension_numbers = #tpu.dot_dimension_numbers<[1], [0], [0], [1], [0, 0, 1, 1], [], []>} : vector<256x128xbf16>, vector<128x128xbf16>, vector<256x128xf32> -> vector<256x128xf32>
    %34 = arith.addf %28, %33 : vector<256x128xf32>
    %c0_46 = arith.constant 0 : index
    %c0_47 = arith.constant 0 : index
    %c2 = arith.constant 2 : index
    %c0_48 = arith.constant 0 : index
    %35 = vector.load %arg7[%c0_46, %c0_47, %c2, %c0_48] : memref<1x18x18x128xbf16, #tpu.memory_space<vmem>>, vector<1x16x16x128xbf16>
    %36 = vector.shape_cast %35 : vector<1x16x16x128xbf16> to vector<256x128xbf16>
    %c2_49 = arith.constant 2 : index
    %c0_50 = arith.constant 0 : index
    %c0_51 = arith.constant 0 : index
    %37 = vector.load %arg4[%c2_49, %c0_50, %c0_51] : memref<9x128x128xbf16, #tpu.memory_space<vmem>>, vector<1x128x128xbf16>
    %38 = vector.shape_cast %37 : vector<1x128x128xbf16> to vector<128x128xbf16>
    %cst_52 = arith.constant dense<0.000000e+00> : vector<256x128xf32>
    %39 = tpu.matmul %36, %38, %cst_52 {dimension_numbers = #tpu.dot_dimension_numbers<[1], [0], [0], [1], [0, 0, 1, 1], [], []>} : vector<256x128xbf16>, vector<128x128xbf16>, vector<256x128xf32> -> vector<256x128xf32>
    %40 = arith.addf %34, %39 : vector<256x128xf32>
    %c0_53 = arith.constant 0 : index
    %c1_54 = arith.constant 1 : index
    %c0_55 = arith.constant 0 : index
    %c0_56 = arith.constant 0 : index
    %41 = vector.load %arg7[%c0_53, %c1_54, %c0_55, %c0_56] : memref<1x18x18x128xbf16, #tpu.memory_space<vmem>>, vector<1x16x16x128xbf16>
    %42 = vector.shape_cast %41 : vector<1x16x16x128xbf16> to vector<256x128xbf16>
    %c3 = arith.constant 3 : index
    %c0_57 = arith.constant 0 : index
    %c0_58 = arith.constant 0 : index
    %43 = vector.load %arg4[%c3, %c0_57, %c0_58] : memref<9x128x128xbf16, #tpu.memory_space<vmem>>, vector<1x128x128xbf16>
    %44 = vector.shape_cast %43 : vector<1x128x128xbf16> to vector<128x128xbf16>
    %cst_59 = arith.constant dense<0.000000e+00> : vector<256x128xf32>
    %45 = tpu.matmul %42, %44, %cst_59 {dimension_numbers = #tpu.dot_dimension_numbers<[1], [0], [0], [1], [0, 0, 1, 1], [], []>} : vector<256x128xbf16>, vector<128x128xbf16>, vector<256x128xf32> -> vector<256x128xf32>
    %46 = arith.addf %40, %45 : vector<256x128xf32>
    %c0_60 = arith.constant 0 : index
    %c1_61 = arith.constant 1 : index
    %c1_62 = arith.constant 1 : index
    %c0_63 = arith.constant 0 : index
    %47 = vector.load %arg7[%c0_60, %c1_61, %c1_62, %c0_63] : memref<1x18x18x128xbf16, #tpu.memory_space<vmem>>, vector<1x16x16x128xbf16>
    %48 = vector.shape_cast %47 : vector<1x16x16x128xbf16> to vector<256x128xbf16>
    %c4 = arith.constant 4 : index
    %c0_64 = arith.constant 0 : index
    %c0_65 = arith.constant 0 : index
    %49 = vector.load %arg4[%c4, %c0_64, %c0_65] : memref<9x128x128xbf16, #tpu.memory_space<vmem>>, vector<1x128x128xbf16>
    %50 = vector.shape_cast %49 : vector<1x128x128xbf16> to vector<128x128xbf16>
    %cst_66 = arith.constant dense<0.000000e+00> : vector<256x128xf32>
    %51 = tpu.matmul %48, %50, %cst_66 {dimension_numbers = #tpu.dot_dimension_numbers<[1], [0], [0], [1], [0, 0, 1, 1], [], []>} : vector<256x128xbf16>, vector<128x128xbf16>, vector<256x128xf32> -> vector<256x128xf32>
    %52 = arith.addf %46, %51 : vector<256x128xf32>
    %c0_67 = arith.constant 0 : index
    %c1_68 = arith.constant 1 : index
    %c2_69 = arith.constant 2 : index
    %c0_70 = arith.constant 0 : index
    %53 = vector.load %arg7[%c0_67, %c1_68, %c2_69, %c0_70] : memref<1x18x18x128xbf16, #tpu.memory_space<vmem>>, vector<1x16x16x128xbf16>
    %54 = vector.shape_cast %53 : vector<1x16x16x128xbf16> to vector<256x128xbf16>
    %c5 = arith.constant 5 : index
    %c0_71 = arith.constant 0 : index
    %c0_72 = arith.constant 0 : index
    %55 = vector.load %arg4[%c5, %c0_71, %c0_72] : memref<9x128x128xbf16, #tpu.memory_space<vmem>>, vector<1x128x128xbf16>
    %56 = vector.shape_cast %55 : vector<1x128x128xbf16> to vector<128x128xbf16>
    %cst_73 = arith.constant dense<0.000000e+00> : vector<256x128xf32>
    %57 = tpu.matmul %54, %56, %cst_73 {dimension_numbers = #tpu.dot_dimension_numbers<[1], [0], [0], [1], [0, 0, 1, 1], [], []>} : vector<256x128xbf16>, vector<128x128xbf16>, vector<256x128xf32> -> vector<256x128xf32>
    %58 = arith.addf %52, %57 : vector<256x128xf32>
    %c0_74 = arith.constant 0 : index
    %c2_75 = arith.constant 2 : index
    %c0_76 = arith.constant 0 : index
    %c0_77 = arith.constant 0 : index
    %59 = vector.load %arg7[%c0_74, %c2_75, %c0_76, %c0_77] : memref<1x18x18x128xbf16, #tpu.memory_space<vmem>>, vector<1x16x16x128xbf16>
    %60 = vector.shape_cast %59 : vector<1x16x16x128xbf16> to vector<256x128xbf16>
    %c6 = arith.constant 6 : index
    %c0_78 = arith.constant 0 : index
    %c0_79 = arith.constant 0 : index
    %61 = vector.load %arg4[%c6, %c0_78, %c0_79] : memref<9x128x128xbf16, #tpu.memory_space<vmem>>, vector<1x128x128xbf16>
    %62 = vector.shape_cast %61 : vector<1x128x128xbf16> to vector<128x128xbf16>
    %cst_80 = arith.constant dense<0.000000e+00> : vector<256x128xf32>
    %63 = tpu.matmul %60, %62, %cst_80 {dimension_numbers = #tpu.dot_dimension_numbers<[1], [0], [0], [1], [0, 0, 1, 1], [], []>} : vector<256x128xbf16>, vector<128x128xbf16>, vector<256x128xf32> -> vector<256x128xf32>
    %64 = arith.addf %58, %63 : vector<256x128xf32>
    %c0_81 = arith.constant 0 : index
    %c2_82 = arith.constant 2 : index
    %c1_83 = arith.constant 1 : index
    %c0_84 = arith.constant 0 : index
    %65 = vector.load %arg7[%c0_81, %c2_82, %c1_83, %c0_84] : memref<1x18x18x128xbf16, #tpu.memory_space<vmem>>, vector<1x16x16x128xbf16>
    %66 = vector.shape_cast %65 : vector<1x16x16x128xbf16> to vector<256x128xbf16>
    %c7 = arith.constant 7 : index
    %c0_85 = arith.constant 0 : index
    %c0_86 = arith.constant 0 : index
    %67 = vector.load %arg4[%c7, %c0_85, %c0_86] : memref<9x128x128xbf16, #tpu.memory_space<vmem>>, vector<1x128x128xbf16>
    %68 = vector.shape_cast %67 : vector<1x128x128xbf16> to vector<128x128xbf16>
    %cst_87 = arith.constant dense<0.000000e+00> : vector<256x128xf32>
    %69 = tpu.matmul %66, %68, %cst_87 {dimension_numbers = #tpu.dot_dimension_numbers<[1], [0], [0], [1], [0, 0, 1, 1], [], []>} : vector<256x128xbf16>, vector<128x128xbf16>, vector<256x128xf32> -> vector<256x128xf32>
    %70 = arith.addf %64, %69 : vector<256x128xf32>
    %c0_88 = arith.constant 0 : index
    %c2_89 = arith.constant 2 : index
    %c2_90 = arith.constant 2 : index
    %c0_91 = arith.constant 0 : index
    %71 = vector.load %arg7[%c0_88, %c2_89, %c2_90, %c0_91] : memref<1x18x18x128xbf16, #tpu.memory_space<vmem>>, vector<1x16x16x128xbf16>
    %72 = vector.shape_cast %71 : vector<1x16x16x128xbf16> to vector<256x128xbf16>
    %c8 = arith.constant 8 : index
    %c0_92 = arith.constant 0 : index
    %c0_93 = arith.constant 0 : index
    %73 = vector.load %arg4[%c8, %c0_92, %c0_93] : memref<9x128x128xbf16, #tpu.memory_space<vmem>>, vector<1x128x128xbf16>
    %74 = vector.shape_cast %73 : vector<1x128x128xbf16> to vector<128x128xbf16>
    %cst_94 = arith.constant dense<0.000000e+00> : vector<256x128xf32>
    %75 = tpu.matmul %72, %74, %cst_94 {dimension_numbers = #tpu.dot_dimension_numbers<[1], [0], [0], [1], [0, 0, 1, 1], [], []>} : vector<256x128xbf16>, vector<128x128xbf16>, vector<256x128xf32> -> vector<256x128xf32>
    %76 = arith.addf %70, %75 : vector<256x128xf32>
    %cst_95 = arith.constant dense<0.000000e+00> : vector<128xf32>
    %77 = vector.multi_reduction <add>, %76, %cst_95 [0] : vector<256x128xf32> to vector<128xf32>
    %78 = vector.shape_cast %77 : vector<128xf32> to vector<1x128xf32>
    %79 = vector.shape_cast %78 : vector<1x128xf32> to vector<1x1x128xf32>
    %c0_96 = arith.constant 0 : index
    %c0_97 = arith.constant 0 : index
    %c0_98 = arith.constant 0 : index
    %80 = vector.load %arg6[%c0_96, %c0_97, %c0_98] : memref<1x2x128xf32, #tpu.memory_space<vmem>>, vector<1x1x128xf32>
    tpu.vector_store %arg6[%c0_96, %c0_97, %c0_98], %79 {strides = array<i32>} : memref<1x2x128xf32, #tpu.memory_space<vmem>>, vector<1x1x128xf32>,
    %81 = arith.mulf %76, %76 : vector<256x128xf32>
    %cst_99 = arith.constant dense<0.000000e+00> : vector<128xf32>
    %82 = vector.multi_reduction <add>, %81, %cst_99 [0] : vector<256x128xf32> to vector<128xf32>
    %83 = vector.shape_cast %82 : vector<128xf32> to vector<1x128xf32>
    %84 = vector.shape_cast %83 : vector<1x128xf32> to vector<1x1x128xf32>
    %c0_100 = arith.constant 0 : index
    %c1_101 = arith.constant 1 : index
    %c0_102 = arith.constant 0 : index
    %85 = vector.load %arg6[%c0_100, %c1_101, %c0_102] : memref<1x2x128xf32, #tpu.memory_space<vmem>>, vector<1x1x128xf32>
    tpu.vector_store %arg6[%c0_100, %c1_101, %c0_102], %84 {strides = array<i32>} : memref<1x2x128xf32, #tpu.memory_space<vmem>>, vector<1x1x128xf32>,
    %86 = vector.shape_cast %76 : vector<256x128xf32> to vector<1x16x16x128xf32>
    %87 = arith.truncf %86 : vector<1x16x16x128xf32> to vector<1x16x16x128xbf16>
    %c0_103 = arith.constant 0 : index
    %c0_104 = arith.constant 0 : index
    %c0_105 = arith.constant 0 : index
    %c0_106 = arith.constant 0 : index
    %88 = vector.load %arg5[%c0_103, %c0_104, %c0_105, %c0_106] : memref<1x16x16x128xbf16, #tpu.memory_space<vmem>>, vector<1x16x16x128xbf16>
    tpu.vector_store %arg5[%c0_103, %c0_104, %c0_105, %c0_106], %87 {strides = array<i32>} : memref<1x16x16x128xbf16, #tpu.memory_space<vmem>>, vector<1x16x16x128xbf16>,
    return
  }
  func.func @transform_0(%arg0: i32) -> (i32, i32, i32, i32) {
    %c0_i32 = arith.constant 0 : i32
    %c0_i32_0 = arith.constant 0 : i32
    %c0_i32_1 = arith.constant 0 : i32
    %c0_i32_2 = arith.constant 0 : i32
    return %arg0, %c0_i32, %c0_i32_0, %c0_i32_1 : i32, i32, i32, i32
  }
  func.func @transform_1(%arg0: i32) -> (i32, i32) {
    %c0_i32 = arith.constant 0 : i32
    %c0_i32_0 = arith.constant 0 : i32
    %c0_i32_1 = arith.constant 0 : i32
    return %c0_i32, %c0_i32_0 : i32, i32
  }
  func.func @transform_2(%arg0: i32) -> (i32, i32) {
    %c0_i32 = arith.constant 0 : i32
    %c0_i32_0 = arith.constant 0 : i32
    %c0_i32_1 = arith.constant 0 : i32
    return %c0_i32, %c0_i32_0 : i32, i32
  }
  func.func @transform_3(%arg0: i32) -> (i32, i32, i32) {
    %c0_i32 = arith.constant 0 : i32
    %c0_i32_0 = arith.constant 0 : i32
    %c0_i32_1 = arith.constant 0 : i32
    %c0_i32_2 = arith.constant 0 : i32
    return %c0_i32, %c0_i32_0, %c0_i32_1 : i32, i32, i32
  }
  func.func @transform_4(%arg0: i32) -> (i32, i32, i32, i32) {
    %c0_i32 = arith.constant 0 : i32
    %c0_i32_0 = arith.constant 0 : i32
    %c0_i32_1 = arith.constant 0 : i32
    %c0_i32_2 = arith.constant 0 : i32
    return %arg0, %c0_i32, %c0_i32_0, %c0_i32_1 : i32, i32, i32, i32
  }
  func.func @transform_5(%arg0: i32) -> (i32, i32, i32) {
    %c0_i32 = arith.constant 0 : i32
    %c0_i32_0 = arith.constant 0 : i32
    %c0_i32_1 = arith.constant 0 : i32
    return %arg0, %c0_i32, %c0_i32_0 : i32, i32, i32
  }
}

module attributes {stable_mosaic.version = 11 : i64} {
  func.func @_bn_relu_pool_kernel(%arg0: i32, %arg1: i32, %arg2: memref<1x16x16x128xbf16, #tpu.memory_space<vmem>>, %arg3: memref<1x128xf32, #tpu.memory_space<vmem>>, %arg4: memref<1x128xf32, #tpu.memory_space<vmem>>, %arg5: memref<1x16x16x128xf32, #tpu.memory_space<vmem>>, %arg6: memref<1x8x8x128xf32, #tpu.memory_space<vmem>>) attributes {dimension_semantics = [#tpu.dimension_semantics<parallel>, #tpu.dimension_semantics<parallel>], iteration_bounds = array<i64: 2, 1>, scalar_prefetch = 0 : i64, scratch_operands = 0 : i64, tpu.core_type = #tpu.core_type<tc>, window_params = [{transform_indices = @transform_0, window_bounds = array<i64: 1, 16, 16, 128>}, {pipeline_mode = #tpu.pipeline_mode<synchronous>, transform_indices = @transform_1, window_bounds = array<i64: 1, 128>}, {pipeline_mode = #tpu.pipeline_mode<synchronous>, transform_indices = @transform_2, window_bounds = array<i64: 1, 128>}, {transform_indices = @transform_3, window_bounds = array<i64: 1, 16, 16, 128>}, {transform_indices = @transform_4, window_bounds = array<i64: 1, 8, 8, 128>}]} {
    %c0 = arith.constant 0 : index
    %c0_0 = arith.constant 0 : index
    %0 = vector.load %arg3[%c0, %c0_0] : memref<1x128xf32, #tpu.memory_space<vmem>>, vector<1x128xf32>
    %1 = vector.shape_cast %0 : vector<1x128xf32> to vector<1x1x1x128xf32>
    %c0_1 = arith.constant 0 : index
    %c0_2 = arith.constant 0 : index
    %2 = vector.load %arg4[%c0_1, %c0_2] : memref<1x128xf32, #tpu.memory_space<vmem>>, vector<1x128xf32>
    %3 = vector.shape_cast %2 : vector<1x128xf32> to vector<1x1x1x128xf32>
    %c0_3 = arith.constant 0 : index
    %c0_4 = arith.constant 0 : index
    %c0_5 = arith.constant 0 : index
    %c0_6 = arith.constant 0 : index
    %4 = vector.load %arg2[%c0_3, %c0_4, %c0_5, %c0_6] : memref<1x16x16x128xbf16, #tpu.memory_space<vmem>>, vector<1x16x16x128xbf16>
    %5 = arith.extf %4 : vector<1x16x16x128xbf16> to vector<1x16x16x128xf32>
    %6 = vector.broadcast %1 : vector<1x1x1x128xf32> to vector<1x16x16x128xf32>
    %7 = arith.mulf %5, %6 : vector<1x16x16x128xf32>
    %8 = vector.broadcast %3 : vector<1x1x1x128xf32> to vector<1x16x16x128xf32>
    %9 = arith.addf %7, %8 : vector<1x16x16x128xf32>
    %cst = arith.constant 0.000000e+00 : f32
    %10 = vector.broadcast %cst : f32 to vector<1x16x16x128xf32>
    %11 = arith.maximumf %9, %10 : vector<1x16x16x128xf32>
    %c0_7 = arith.constant 0 : index
    %c0_8 = arith.constant 0 : index
    %c0_9 = arith.constant 0 : index
    %c0_10 = arith.constant 0 : index
    %12 = vector.load %arg5[%c0_7, %c0_8, %c0_9, %c0_10] : memref<1x16x16x128xf32, #tpu.memory_space<vmem>>, vector<1x16x16x128xf32>
    tpu.vector_store %arg5[%c0_7, %c0_8, %c0_9, %c0_10], %11 {strides = array<i32>} : memref<1x16x16x128xf32, #tpu.memory_space<vmem>>, vector<1x16x16x128xf32>,
    %13 = vector.shape_cast %11 : vector<1x16x16x128xf32> to vector<16x8x2x128xf32>
    %cst_11 = arith.constant dense<0xFF800000> : vector<16x8x128xf32>
    %14 = vector.multi_reduction <maximumf>, %13, %cst_11 [2] : vector<16x8x2x128xf32> to vector<16x8x128xf32>
    %15 = vector.shape_cast %14 : vector<16x8x128xf32> to vector<8x2x8x128xf32>
    %cst_12 = arith.constant dense<0xFF800000> : vector<8x8x128xf32>
    %16 = vector.multi_reduction <maximumf>, %15, %cst_12 [1] : vector<8x2x8x128xf32> to vector<8x8x128xf32>
    %17 = vector.shape_cast %16 : vector<8x8x128xf32> to vector<1x8x8x128xf32>
    %c0_13 = arith.constant 0 : index
    %c0_14 = arith.constant 0 : index
    %c0_15 = arith.constant 0 : index
    %c0_16 = arith.constant 0 : index
    %18 = vector.load %arg6[%c0_13, %c0_14, %c0_15, %c0_16] : memref<1x8x8x128xf32, #tpu.memory_space<vmem>>, vector<1x8x8x128xf32>
    tpu.vector_store %arg6[%c0_13, %c0_14, %c0_15, %c0_16], %17 {strides = array<i32>} : memref<1x8x8x128xf32, #tpu.memory_space<vmem>>, vector<1x8x8x128xf32>,
    return
  }
  func.func @transform_0(%arg0: i32, %arg1: i32) -> (i32, i32, i32, i32) {
    %c0_i32 = arith.constant 0 : i32
    %c0_i32_0 = arith.constant 0 : i32
    %c0_i32_1 = arith.constant 0 : i32
    return %arg0, %arg1, %c0_i32, %c0_i32_0 : i32, i32, i32, i32
  }
  func.func @transform_1(%arg0: i32, %arg1: i32) -> (i32, i32) {
    %c0_i32 = arith.constant 0 : i32
    %c0_i32_0 = arith.constant 0 : i32
    %c0_i32_1 = arith.constant 0 : i32
    return %c0_i32, %c0_i32_0 : i32, i32
  }
  func.func @transform_2(%arg0: i32, %arg1: i32) -> (i32, i32) {
    %c0_i32 = arith.constant 0 : i32
    %c0_i32_0 = arith.constant 0 : i32
    %c0_i32_1 = arith.constant 0 : i32
    return %c0_i32, %c0_i32_0 : i32, i32
  }
  func.func @transform_3(%arg0: i32, %arg1: i32) -> (i32, i32, i32, i32) {
    %c0_i32 = arith.constant 0 : i32
    %c0_i32_0 = arith.constant 0 : i32
    %c0_i32_1 = arith.constant 0 : i32
    return %arg0, %arg1, %c0_i32, %c0_i32_0 : i32, i32, i32, i32
  }
  func.func @transform_4(%arg0: i32, %arg1: i32) -> (i32, i32, i32, i32) {
    %c0_i32 = arith.constant 0 : i32
    %c0_i32_0 = arith.constant 0 : i32
    %c0_i32_1 = arith.constant 0 : i32
    return %arg0, %arg1, %c0_i32, %c0_i32_0 : i32, i32, i32, i32
  }
}

</mosaic_0001>

<llo_original>
// kernel: encoder_block.3
$region0: #{encoder_block.3}
  #allocation0 [shape = 'u32[]', space=smem, size = 0x4, offset = 0x4, fixed_abs, tag = 'smem constant byte address 0x4 - core index']
  #allocation1 [shape = 'u32[144,128]{1,0:T(1,128)}', space=vmem, size = 0x12000, scoped, tag = 'internal scratch']
  %s0 = inlined_call_operand.hbm [shape: bf16[2,256,128], index: 0, kind: input, shape index: {}]
  %s1 = inlined_call_operand.hbm [shape: bf16[128,128], index: 1, kind: input, shape index: {}]
  %s2 = inlined_call_operand.hbm [shape: bf16[2,16,16,128], index: 2, kind: output, shape index: {0}]
  %s3 = inlined_call_operand.hbm [shape: f32[2,2,128], index: 3, kind: output, shape index: {1}]
  %4 = xla_tuple %s2, %s3
  %s5 = sld [smem:[#allocation0]]
  $region57: #{encoder_block.3} parent=0
    _
  %s7 = ssub.s32 1, %s5
  %s8 = scalar_select 0, %s7, %s5
  $region1: #{encoder_block.3} parent=0
    #allocation2 [shape = 'u8[131072]{0}', space=vmem, size = 0x20000, scoped, tag = 'input window, operand 0']
    #allocation3 [shape = 's32[2]{0}', space=sflag, size = 0x8, scoped, tag = 'scoped memory for encoder_block.3']
    #allocation4 [shape = 's32[2]{0}', space=sflag, size = 0x8, scoped, tag = 'scoped memory for encoder_block.3']
    #allocation5 [shape = 'u8[32768]{0}', space=vmem, size = 0x8000, scoped, tag = 'input window, operand 1, single buffered']
    #allocation6 [shape = 's32[1]{0}', space=sflag, size = 0x4, scoped, tag = 'scoped memory for encoder_block.3']
    #allocation7 [shape = 'u8[131072]{0}', space=vmem, size = 0x20000, scoped, tag = 'output window, operand 0']
    #allocation8 [shape = 'u8[2048]{0}', space=vmem, size = 0x800, scoped, tag = 'output window, operand 1']
    #allocation9 [shape = 's32[2]{0}', space=sflag, size = 0x8, scoped, tag = 'scoped memory for encoder_block.3']
    %9 = vsyncpa [#allocation3], 0
    %s10 = scalar_lea.sflag [#allocation3], 1
    %11 = vsyncpa %s10, 0
    %12 = vsyncpa [#allocation6], 0
    %13 = vsyncpa [#allocation4], 0
    %s14 = scalar_lea.sflag [#allocation4], 1
    %15 = vsyncpa %s14, 0
    %16 = vsyncpa [#allocation9], 0
    %s17 = scalar_lea.sflag [#allocation9], 1
    %18 = vsyncpa %s17, 0
    loop: start=0, step=1, limit=4
    $region2: #{encoder_block.3} parent=1 // loop_pre_header
      _
    $region3: #{encoder_block.3} parent=1 // loop_header
      %s20 = sphi 0, %s24
      %p21 = scmp.ge.s32.totalorder %s20, 4
      %s30 = sphi 0, %s32
      %s33 = sphi 0, %s30
      %s34 = sphi 0, %s33
      %s50 = sphi 0, %s34
      %s54 = sphi 0, %s54
      %s56 = sphi 0, %s54
      %s57 = sphi 0, %s56
      %s71 = sphi 0, %s57
      %s77 = sphi 0, %s79
      %s80 = sphi 0, %s77
      %s81 = sphi 0, %s80
      %s97 = sphi 0, %s81
      %s103 = sphi 0, %s105
      %s106 = sphi 0, %s103
      %s107 = sphi 0, %s106
      %s123 = sphi 0, %s107
    $region4: #{encoder_block.3} parent=1 // loop_header_branch
      %23 = sbr.rel (%p21) target = $region8
    $region5: #{encoder_block.3} parent=1 // loop_body
      %s25 = ssub.s32 %s20, 1
      %s26 = ssub.s32 %s20, 2
      %s27 = sadd.s32 %s20, 1
      %s28 = ssub.s32 %s20, %s27
      %p29 = scmp.eq.s32.totalorder %s28, 0
      %s31 = sadd.s32 %s30, 1
      %s32 = scalar_select %p29, %s30, %s31
      %p35 = pneg %p29
      %p36 = scmp.eq.s32.totalorder %s20, 1
      %p37 = por %p35, %p36
      %p38 = scmp.ne.s32.totalorder %s30, %s33
      %p39 = scmp.eq.s32.totalorder %s20, 0
      %p40 = por %p38, %p39
      %p41 = scmp.ne.s32.totalorder %s30, %s33
      %p42 = scmp.eq.s32.totalorder %s25, 1
      %p43 = por %p41, %p42
      %p44 = scmp.ne.s32.totalorder %s33, %s34
      %p45 = scmp.eq.s32.totalorder %s25, 0
      %p46 = por %p44, %p45
      %p47 = scmp.ne.s32.totalorder %s33, %s34
      %p48 = scmp.eq.s32.totalorder %s26, 1
      %p49 = por %p47, %p48
      %p51 = scmp.ne.s32.totalorder %s34, %s50
      %p52 = scmp.eq.s32.totalorder %s26, 0
      %p53 = por %p51, %p52
      %s55 = sadd.s32 %s54, 1
      %p58 = scmp.eq.s32.totalorder %s20, 1
      %p59 = scmp.ne.s32.totalorder %s54, %s56
      %p60 = scmp.eq.s32.totalorder %s20, 0
      %p61 = por %p59, %p60
      %p62 = scmp.ne.s32.totalorder %s54, %s56
      %p63 = scmp.eq.s32.totalorder %s25, 1
      %p64 = por %p62, %p63
      %p65 = scmp.ne.s32.totalorder %s56, %s57
      %p66 = scmp.eq.s32.totalorder %s25, 0
      %p67 = por %p65, %p66
      %p68 = scmp.ne.s32.totalorder %s56, %s57
      %p69 = scmp.eq.s32.totalorder %s26, 1
      %p70 = por %p68, %p69
      %p72 = scmp.ne.s32.totalorder %s57, %s71
      %p73 = scmp.eq.s32.totalorder %s26, 0
      %p74 = por %p72, %p73
      %s75 = ssub.s32 %s20, %s27
      %p76 = scmp.eq.s32.totalorder %s75, 0
      %s78 = sadd.s32 %s77, 1
      %s79 = scalar_select %p76, %s77, %s78
      %p82 = pneg %p76
      %p83 = scmp.eq.s32.totalorder %s20, 1
      %p84 = por %p82, %p83
      %p85 = scmp.ne.s32.totalorder %s77, %s80
      %p86 = scmp.eq.s32.totalorder %s20, 0
      %p87 = por %p85, %p86
      %p88 = scmp.ne.s32.totalorder %s77, %s80
      %p89 = scmp.eq.s32.totalorder %s25, 1
      %p90 = por %p88, %p89
      %p91 = scmp.ne.s32.totalorder %s80, %s81
      %p92 = scmp.eq.s32.totalorder %s25, 0
      %p93 = por %p91, %p92
      %p94 = scmp.ne.s32.totalorder %s80, %s81
      %p95 = scmp.eq.s32.totalorder %s26, 1
      %p96 = por %p94, %p95
      %p98 = scmp.ne.s32.totalorder %s81, %s97
      %p99 = scmp.eq.s32.totalorder %s26, 0
      %p100 = por %p98, %p99
      %s101 = ssub.s32 %s20, %s27
      %p102 = scmp.eq.s32.totalorder %s101, 0
      %s104 = sadd.s32 %s103, 1
      %s105 = scalar_select %p102, %s103, %s104
      %p108 = pneg %p102
      %p109 = scmp.eq.s32.totalorder %s20, 1
      %p110 = por %p108, %p109
      %p111 = scmp.ne.s32.totalorder %s103, %s106
      %p112 = scmp.eq.s32.totalorder %s20, 0
      %p113 = por %p111, %p112
      %p114 = scmp.ne.s32.totalorder %s103, %s106
      %p115 = scmp.eq.s32.totalorder %s25, 1
      %p116 = por %p114, %p115
      %p117 = scmp.ne.s32.totalorder %s106, %s107
      %p118 = scmp.eq.s32.totalorder %s25, 0
      %p119 = por %p117, %p118
      %p120 = scmp.ne.s32.totalorder %s106, %s107
      %p121 = scmp.eq.s32.totalorder %s26, 1
      %p122 = por %p120, %p121
      %p124 = scmp.ne.s32.totalorder %s107, %s123
      %p125 = scmp.eq.s32.totalorder %s26, 0
      %p126 = por %p124, %p125
      %p127 = scmp.le.s32.totalorder 1, %s20
      %p128 = scmp.lt.s32.totalorder %s20, 3
      %p129 = pnand %p127, %p128
      %p130 = pneg %p129
      // Predicated region
      $region9: #{encoder_block.3} parent=5 // pred_check
        _
      $region10: #{encoder_block.3} parent=5 // pred_check_branch
        %132 = sbr.rel (%p129) target = $region12
      $region11: #{encoder_block.3} parent=5 // pred_region
        %s133 = ssub.s32 %s20, 1
        // Predicated region
        $region13: #{encoder_block.3} parent=11 // pred_check
          %p134 = pneg %p67
        $region14: #{encoder_block.3} parent=11 // pred_check_branch
          %136 = sbr.rel (%p134) target = $region16
        $region15: #{encoder_block.3} parent=11 // pred_region
          %s138 = ssub.s32 1024, 1024
          %139 = vsyncadd [#allocation6], %s138
          %s140 = sshll.u32 [#allocation5], 4
          %s141 = int_to_ptr.vmem [resolvable:$true] %s140
          %146 = dma.hbm_to_vmem [thread:$0]  %s1, 1024, %s141, [#allocation6], 64, 64, 4
        $region16: #{encoder_block.3} parent=11 // pred_fallthru
          _
      $region12: #{encoder_block.3} parent=5 // pred_fallthru
        _
      %p147 = scmp.lt.s32.totalorder %s20, 2
      // Predicated region
      $region17: #{encoder_block.3} parent=5 // pred_check
        %p148 = pneg %p147
      $region18: #{encoder_block.3} parent=5 // pred_check_branch
        %150 = sbr.rel (%p148) target = $region20
      $region19: #{encoder_block.3} parent=5 // pred_region
        // Predicated region
        $region21: #{encoder_block.3} parent=19 // pred_check
          %p151 = pneg %p40
        $region22: #{encoder_block.3} parent=19 // pred_check_branch
          %153 = sbr.rel (%p151) target = $region24
        $region23: #{encoder_block.3} parent=19 // pred_region
          %s154 = sand.u32 %s30, 1
          %s155 = scalar_lea.sflag [#allocation3], %s154
          %s156 = sand.u32 %s30, 1
          %s157 = smul.addr %s156, 128
          %s158 = scalar_lea.vmem [#allocation2], %s157
          %s160 = ssub.s32 2048, 2048
          %161 = vsyncadd %s155, %s160
          %s162 = smul.addr %s20, 32
          %s163 = smul.addr %s162, 64
          %s164 = scalar_lea.hbm %s0, %s163
          %s165 = sshll.u32 %s158, 4
          %s166 = int_to_ptr.vmem [resolvable:$true] %s165
          %171 = dma.hbm_to_vmem [thread:$0]  %s164, 2048, %s166, %s155, 64, 64, 4
        $region24: #{encoder_block.3} parent=19 // pred_fallthru
          _
      $region20: #{encoder_block.3} parent=5 // pred_fallthru
        _
      %p172 = scmp.le.s32.totalorder 1, %s20
      %p173 = scmp.lt.s32.totalorder %s20, 3
      %p174 = pnand %p172, %p173
      %p175 = pneg %p174
      // Predicated region
      $region25: #{encoder_block.3} parent=5 // pred_check
        _
      $region26: #{encoder_block.3} parent=5 // pred_check_branch
        %177 = sbr.rel (%p174) target = $region28
      $region27: #{encoder_block.3} parent=5 // pred_region
        %s178 = ssub.s32 %s20, 1
        %s179 = sand.u32 %s33, 1
        %s180 = scalar_lea.sflag [#allocation3], %s179
        %s181 = sand.u32 %s33, 1
        %s182 = smul.addr %s181, 128
        %s183 = scalar_lea.vmem [#allocation2], %s182
        // Predicated region
        $region29: #{encoder_block.3} parent=27 // pred_check
          %p184 = pneg %p46
        $region30: #{encoder_block.3} parent=27 // pred_check_branch
          %186 = sbr.rel (%p184) target = $region32
        $region31: #{encoder_block.3} parent=27 // pred_region
          %187 = dma.done %s180, 2048
        $region32: #{encoder_block.3} parent=27 // pred_fallthru
          _
        // Predicated region
        $region33: #{encoder_block.3} parent=27 // pred_check
          %p188 = pneg %p67
        $region34: #{encoder_block.3} parent=27 // pred_check_branch
          %190 = sbr.rel (%p188) target = $region36
        $region35: #{encoder_block.3} parent=27 // pred_region
          %191 = dma.done [#allocation6], 1024
        $region36: #{encoder_block.3} parent=27 // pred_fallthru
          _
        %s192 = sand.u32 %s33, 1
        %s193 = scalar_lea.sflag [#allocation3], %s192
        %s194 = sand.u32 %s33, 1
        %s195 = smul.addr %s194, 128
        %s196 = scalar_lea.vmem [#allocation2], %s195
        %p197 = pneg %p46
        %p198 = pneg %p43
        %p199 = pneg %p67
        %p200 = pneg %p64
        %p201 = pneg %p93
        %p202 = pneg %p90
        %s203 = sand.u32 %s80, 1
        %s204 = scalar_lea.sflag [#allocation4], %s203
        %s205 = sand.u32 %s80, 1
        %s206 = smul.addr %s205, 128
        %s207 = scalar_lea.vmem [#allocation7], %s206
        %p208 = pneg %p119
        %p209 = pneg %p116
        %s210 = sand.u32 %s106, 1
        %s211 = scalar_lea.sflag [#allocation9], %s210
        %s212 = sand.u32 %s106, 1
        %s213 = smul.addr %s212, 2
        %s214 = scalar_lea.vmem [#allocation8], %s213
        %v216 = vld [vmem:[%s183] sm:$0xf]
        %v217 = vld [vmem:[%s183 + $0x4] sm:$0xf]
        %v218 = vld [vmem:[%s183 + $0x8] sm:$0xf]
        %v219 = vld [vmem:[%s183 + $0xc] sm:$0xf]
        %v220 = vld [vmem:[%s183 + $0x10] sm:$0xf]
        %v221 = vld [vmem:[%s183 + $0x14] sm:$0xf]
        %v222 = vld [vmem:[%s183 + $0x18] sm:$0xf]
        %v223 = vld [vmem:[%s183 + $0x1c] sm:$0xf]
        %v224 = vld [vmem:[%s183 + $0x20] sm:$0xf]
        %v225 = vld [vmem:[%s183 + $0x24] sm:$0xf]
        %v226 = vld [vmem:[%s183 + $0x28] sm:$0xf]
        %v227 = vld [vmem:[%s183 + $0x2c] sm:$0xf]
        %v228 = vld [vmem:[%s183 + $0x30] sm:$0xf]
        %v229 = vld [vmem:[%s183 + $0x34] sm:$0xf]
        %v230 = vld [vmem:[%s183 + $0x38] sm:$0xf]
        %v231 = vld [vmem:[%s183 + $0x3c] sm:$0xf]
        %v232 = vld [vmem:[%s183 + $0x40] sm:$0xf]
        %v233 = vld [vmem:[%s183 + $0x44] sm:$0xf]
        %v234 = vld [vmem:[%s183 + $0x48] sm:$0xf]
        %v235 = vld [vmem:[%s183 + $0x4c] sm:$0xf]
        %v236 = vld [vmem:[%s183 + $0x50] sm:$0xf]
        %v237 = vld [vmem:[%s183 + $0x54] sm:$0xf]
        %v238 = vld [vmem:[%s183 + $0x58] sm:$0xf]
        %v239 = vld [vmem:[%s183 + $0x5c] sm:$0xf]
        %v240 = vld [vmem:[%s183 + $0x60] sm:$0xf]
        %v241 = vld [vmem:[%s183 + $0x64] sm:$0xf]
        %v242 = vld [vmem:[%s183 + $0x68] sm:$0xf]
        %v243 = vld [vmem:[%s183 + $0x6c] sm:$0xf]
        %v244 = vld [vmem:[%s183 + $0x70] sm:$0xf]
        %v245 = vld [vmem:[%s183 + $0x74] sm:$0xf]
        %v246 = vld [vmem:[%s183 + $0x78] sm:$0xf]
        %v247 = vld [vmem:[%s183 + $0x7c] sm:$0xf]
        %v248 = vld [vmem:[#allocation5] sm:$0xf]
        %v249 = vld [vmem:[#allocation5 + $0x4] sm:$0xf]
        %v250 = vld [vmem:[#allocation5 + $0x8] sm:$0xf]
        %v251 = vld [vmem:[#allocation5 + $0xc] sm:$0xf]
        %v252 = vld [vmem:[#allocation5 + $0x10] sm:$0xf]
        %v253 = vld [vmem:[#allocation5 + $0x14] sm:$0xf]
        %v254 = vld [vmem:[#allocation5 + $0x18] sm:$0xf]
        %v255 = vld [vmem:[#allocation5 + $0x1c] sm:$0xf]
        %v256 = vld [vmem:[#allocation5 + $0x20] sm:$0xf]
        %v257 = vld [vmem:[#allocation5 + $0x24] sm:$0xf]
        %v258 = vld [vmem:[#allocation5 + $0x28] sm:$0xf]
        %v259 = vld [vmem:[#allocation5 + $0x2c] sm:$0xf]
        %v260 = vld [vmem:[#allocation5 + $0x30] sm:$0xf]
        %v261 = vld [vmem:[#allocation5 + $0x34] sm:$0xf]
        %v262 = vld [vmem:[#allocation5 + $0x38] sm:$0xf]
        %v263 = vld [vmem:[#allocation5 + $0x3c] sm:$0xf]
        %v296 = vunpack.c.l.b16 %v216
        %v297 = vunpack.c.l.b16 %v217
        %v298 = vunpack.c.l.b16 %v218
        %v299 = vunpack.c.l.b16 %v219
        %v300 = vunpack.c.l.b16 %v220
        %v301 = vunpack.c.l.b16 %v221
        %v302 = vunpack.c.l.b16 %v222
        %v303 = vunpack.c.l.b16 %v223
        %v304 = vunpack.c.l.b16 %v224
        %v305 = vunpack.c.l.b16 %v225
        %v306 = vunpack.c.l.b16 %v226
        %v307 = vunpack.c.l.b16 %v227
        %v308 = vunpack.c.l.b16 %v228
        %v309 = vunpack.c.l.b16 %v229
        %v310 = vunpack.c.l.b16 %v230
        %v311 = vunpack.c.l.b16 %v231
        %v312 = vunpack.c.l.b16 %v232
        %v313 = vunpack.c.l.b16 %v233
        %v314 = vunpack.c.l.b16 %v234
        %v315 = vunpack.c.l.b16 %v235
        %v316 = vunpack.c.l.b16 %v236
        %v317 = vunpack.c.l.b16 %v237
        %v318 = vunpack.c.l.b16 %v238
        %v319 = vunpack.c.l.b16 %v239
        %v320 = vunpack.c.l.b16 %v240
        %v321 = vunpack.c.l.b16 %v241
        %v322 = vunpack.c.l.b16 %v242
        %v323 = vunpack.c.l.b16 %v243
        %v324 = vunpack.c.l.b16 %v244
        %v325 = vunpack.c.l.b16 %v245
        %v326 = vunpack.c.l.b16 %v246
        %v327 = vunpack.c.l.b16 %v247
        %v328 = vpack.c.b16 %v297, %v296
        %v329 = vpack.c.b16 %v299, %v298
        %v330 = vpack.c.b16 %v301, %v300
        %v331 = vpack.c.b16 %v303, %v302
        %v332 = vpack.c.b16 %v305, %v304
        %v333 = vpack.c.b16 %v307, %v306
        %v334 = vpack.c.b16 %v309, %v308
        %v335 = vpack.c.b16 %v311, %v310
        %v336 = vpack.c.b16 %v313, %v312
        %v337 = vpack.c.b16 %v315, %v314
        %v338 = vpack.c.b16 %v317, %v316
        %v339 = vpack.c.b16 %v319, %v318
        %v340 = vpack.c.b16 %v321, %v320
        %v341 = vpack.c.b16 %v323, %v322
        %v342 = vpack.c.b16 %v325, %v324
        %v343 = vpack.c.b16 %v327, %v326
        %v376 = vunpack.c.l.b16 %v248
        %v377 = vunpack.c.l.b16 %v249
        %v378 = vunpack.c.l.b16 %v250
        %v379 = vunpack.c.l.b16 %v251
        %v380 = vunpack.c.l.b16 %v252
        %v381 = vunpack.c.l.b16 %v253
        %v382 = vunpack.c.l.b16 %v254
        %v383 = vunpack.c.l.b16 %v255
        %v384 = vunpack.c.l.b16 %v256
        %v385 = vunpack.c.l.b16 %v257
        %v386 = vunpack.c.l.b16 %v258
        %v387 = vunpack.c.l.b16 %v259
        %v388 = vunpack.c.l.b16 %v260
        %v389 = vunpack.c.l.b16 %v261
        %v390 = vunpack.c.l.b16 %v262
        %v391 = vunpack.c.l.b16 %v263
        %v392 = vpack.c.b16 %v377, %v376
        %v393 = vpack.c.b16 %v379, %v378
        %v394 = vpack.c.b16 %v381, %v380
        %v395 = vpack.c.b16 %v383, %v382
        %v396 = vpack.c.b16 %v385, %v384
        %v397 = vpack.c.b16 %v387, %v386
        %v398 = vpack.c.b16 %v389, %v388
        %v399 = vpack.c.b16 %v391, %v390
        %408 = vmatprep.subr.bf16.mxu0 0
        %409 = vmatpush1.bf16.msra.mxu0 %v392
        %410 = vmatprep.subr.bf16.mxu0 0
        %411 = vmatpush1.bf16.msra.mxu0 %v393
        %412 = vmatprep.subr.bf16.mxu0 0
        %413 = vmatpush1.bf16.msra.mxu0 %v394
        %414 = vmatprep.subr.bf16.mxu0 0
        %415 = vmatpush1.bf16.msra.mxu0 %v395
        %416 = vmatprep.subr.bf16.mxu0 0
        %417 = vmatpush1.bf16.msra.mxu0 %v396
        %418 = vmatprep.subr.bf16.mxu0 0
        %419 = vmatpush1.bf16.msra.mxu0 %v397
        %420 = vmatprep.subr.bf16.mxu0 0
        %421 = vmatpush1.bf16.msra.mxu0 %v398
        %422 = vmatprep.subr.bf16.mxu0 0
        %423 = vmatpush1.bf16.msra.mxu0 %v399
        %424 = vmatprep.subr.bf16.mxu0 0
        %425 = vmatpush1.bf16.msra.mxu0 0
        %426 = vmatprep.subr.bf16.mxu0 0
        %427 = vmatpush1.bf16.msra.mxu0 0
        %428 = vmatprep.subr.bf16.mxu0 0
        %429 = vmatpush1.bf16.msra.mxu0 0
        %430 = vmatprep.subr.bf16.mxu0 0
        %431 = vmatpush1.bf16.msra.mxu0 0
        %432 = vmatprep.subr.bf16.mxu0 0
        %433 = vmatpush1.bf16.msra.mxu0 0
        %434 = vmatprep.subr.bf16.mxu0 0
        %435 = vmatpush1.bf16.msra.mxu0 0
        %436 = vmatprep.subr.bf16.mxu0 0
        %437 = vmatpush1.bf16.msra.mxu0 0
        %438 = vmatprep.subr.bf16.mxu0 0
        %439 = vmatpush1.bf16.msra.mxu0 0
        %440 = vmatprep.mubr.bf16.mxu0 0
        %441 = vmatmul.mubr.bf16.gmra.mrb[0].mxu0 %v328
        %v442 = vpop.f32.mrb[0].mxu0
        %v443 = vadd.f32 0.0, %v442
        %v444 = vpop.f32.mrb[0].mxu0
        %v445 = vpop.f32.mrb[0].mxu0
        %v446 = vadd.f32 0.0, %v445
        %v447 = vpop.f32.mrb[0].mxu0
        %448 = vmatprep.mubr.bf16.mxu0 0
        %449 = vmatmul.mubr.bf16.gmra.mrb[0].mxu0 %v329
        %v450 = vpop.f32.mrb[0].mxu0
        %v451 = vadd.f32 0.0, %v450
        %v452 = vpop.f32.mrb[0].mxu0
        %v453 = vpop.f32.mrb[0].mxu0
        %v454 = vadd.f32 0.0, %v453
        %v455 = vpop.f32.mrb[0].mxu0
        %456 = vmatprep.mubr.bf16.mxu0 0
        %457 = vmatmul.mubr.bf16.gmra.mrb[0].mxu0 %v330
        %v458 = vpop.f32.mrb[0].mxu0
        %v459 = vadd.f32 0.0, %v458
        %v460 = vpop.f32.mrb[0].mxu0
        %v461 = vpop.f32.mrb[0].mxu0
        %v462 = vadd.f32 0.0, %v461
        %v463 = vpop.f32.mrb[0].mxu0
        %464 = vmatprep.mubr.bf16.mxu0 0
        %465 = vmatmul.mubr.bf16.gmra.mrb[0].mxu0 %v331
        %v466 = vpop.f32.mrb[0].mxu0
        %v467 = vadd.f32 0.0, %v466
        %v468 = vpop.f32.mrb[0].mxu0
        %v469 = vpop.f32.mrb[0].mxu0
        %v470 = vadd.f32 0.0, %v469
        %v471 = vpop.f32.mrb[0].mxu0
        %472 = vmatprep.mubr.bf16.mxu0 0
        %473 = vmatmul.mubr.bf16.gmra.mrb[0].mxu0 %v332
        %v474 = vpop.f32.mrb[0].mxu0
        %v475 = vadd.f32 0.0, %v474
        %v476 = vpop.f32.mrb[0].mxu0
        %v477 = vpop.f32.mrb[0].mxu0
        %v478 = vadd.f32 0.0, %v477
        %v479 = vpop.f32.mrb[0].mxu0
        %480 = vmatprep.mubr.bf16.mxu0 0
        %481 = vmatmul.mubr.bf16.gmra.mrb[0].mxu0 %v333
        %v482 = vpop.f32.mrb[0].mxu0
        %v483 = vadd.f32 0.0, %v482
        %v484 = vpop.f32.mrb[0].mxu0
        %v485 = vpop.f32.mrb[0].mxu0
        %v486 = vadd.f32 0.0, %v485
        %v487 = vpop.f32.mrb[0].mxu0
        %488 = vmatprep.mubr.bf16.mxu0 0
        %489 = vmatmul.mubr.bf16.gmra.mrb[0].mxu0 %v334
        %v490 = vpop.f32.mrb[0].mxu0
        %v491 = vadd.f32 0.0, %v490
        %v492 = vpop.f32.mrb[0].mxu0
        %v493 = vpop.f32.mrb[0].mxu0
        %v494 = vadd.f32 0.0, %v493
        %v495 = vpop.f32.mrb[0].mxu0
        %496 = vmatprep.mubr.bf16.mxu0 0
        %497 = vmatmul.mubr.bf16.gmra.mrb[0].mxu0 %v335
        %v498 = vpop.f32.mrb[0].mxu0
        %v499 = vadd.f32 0.0, %v498
        %v500 = vpop.f32.mrb[0].mxu0
        %v501 = vpop.f32.mrb[0].mxu0
        %v502 = vadd.f32 0.0, %v501
        %v503 = vpop.f32.mrb[0].mxu0
        %504 = vmatprep.mubr.bf16.mxu0 0
        %505 = vmatmul.mubr.bf16.gmra.mrb[0].mxu0 %v336
        %v506 = vpop.f32.mrb[0].mxu0
        %v507 = vadd.f32 0.0, %v506
        %v508 = vpop.f32.mrb[0].mxu0
        %v509 = vpop.f32.mrb[0].mxu0
        %v510 = vadd.f32 0.0, %v509
        %v511 = vpop.f32.mrb[0].mxu0
        %512 = vmatprep.mubr.bf16.mxu0 0
        %513 = vmatmul.mubr.bf16.gmra.mrb[0].mxu0 %v337
        %v514 = vpop.f32.mrb[0].mxu0
        %v515 = vadd.f32 0.0, %v514
        %v516 = vpop.f32.mrb[0].mxu0
        %v517 = vpop.f32.mrb[0].mxu0
        %v518 = vadd.f32 0.0, %v517
        %v519 = vpop.f32.mrb[0].mxu0
        %520 = vmatprep.mubr.bf16.mxu0 0
        %521 = vmatmul.mubr.bf16.gmra.mrb[0].mxu0 %v338
        %v522 = vpop.f32.mrb[0].mxu0
        %v523 = vadd.f32 0.0, %v522
        %v524 = vpop.f32.mrb[0].mxu0
        %v525 = vpop.f32.mrb[0].mxu0
        %v526 = vadd.f32 0.0, %v525
        %v527 = vpop.f32.mrb[0].mxu0
        %528 = vmatprep.mubr.bf16.mxu0 0
        %529 = vmatmul.mubr.bf16.gmra.mrb[0].mxu0 %v339
        %v530 = vpop.f32.mrb[0].mxu0
        %v531 = vadd.f32 0.0, %v530
        %v532 = vpop.f32.mrb[0].mxu0
        %v533 = vpop.f32.mrb[0].mxu0
        %v534 = vadd.f32 0.0, %v533
        %v535 = vpop.f32.mrb[0].mxu0
        %536 = vmatprep.mubr.bf16.mxu0 0
        %537 = vmatmul.mubr.bf16.gmra.mrb[0].mxu0 %v340
        %v538 = vpop.f32.mrb[0].mxu0
        %v539 = vadd.f32 0.0, %v538
        %v540 = vpop.f32.mrb[0].mxu0
        %v541 = vpop.f32.mrb[0].mxu0
        %v542 = vadd.f32 0.0, %v541
        %v543 = vpop.f32.mrb[0].mxu0
        %544 = vmatprep.mubr.bf16.mxu0 0
        %545 = vmatmul.mubr.bf16.gmra.mrb[0].mxu0 %v341
        %v546 = vpop.f32.mrb[0].mxu0
        %v547 = vadd.f32 0.0, %v546
        %v548 = vpop.f32.mrb[0].mxu0
        %v549 = vpop.f32.mrb[0].mxu0
        %v550 = vadd.f32 0.0, %v549
        %v551 = vpop.f32.mrb[0].mxu0
        %552 = vmatprep.mubr.bf16.mxu0 0
        %553 = vmatmul.mubr.bf16.gmra.mrb[0].mxu0 %v342
        %v554 = vpop.f32.mrb[0].mxu0
        %v555 = vadd.f32 0.0, %v554
        %v556 = vpop.f32.mrb[0].mxu0
        %v557 = vpop.f32.mrb[0].mxu0
        %v558 = vadd.f32 0.0, %v557
        %v559 = vpop.f32.mrb[0].mxu0
        %560 = vmatprep.mubr.bf16.mxu0 0
        %561 = vmatmul.mubr.bf16.gmra.mrb[0].mxu0 %v343
        %v562 = vpop.f32.mrb[0].mxu0
        %v563 = vadd.f32 0.0, %v562
        %v564 = vpop.f32.mrb[0].mxu0
        %v565 = vpop.f32.mrb[0].mxu0
        %v566 = vadd.f32 0.0, %v565
        %v567 = vpop.f32.mrb[0].mxu0
        %568 = vdwg.mxu0
        %v569 = vadd.f32 %v443, %v446
        %v570 = vadd.f32 %v569, %v451
        %v571 = vadd.f32 %v570, %v454
        %v572 = vadd.f32 %v571, %v459
        %v573 = vadd.f32 %v572, %v462
        %v574 = vadd.f32 %v573, %v467
        %v575 = vadd.f32 %v574, %v470
        %v576 = vadd.f32 %v575, %v475
        %v577 = vadd.f32 %v576, %v478
        %v578 = vadd.f32 %v577, %v483
        %v579 = vadd.f32 %v578, %v486
        %v580 = vadd.f32 %v579, %v491
        %v581 = vadd.f32 %v580, %v494
        %v582 = vadd.f32 %v581, %v499
        %v583 = vadd.f32 %v582, %v502
        %v584 = vadd.f32 %v583, %v507
        %v585 = vadd.f32 %v584, %v510
        %v586 = vadd.f32 %v585, %v515
        %v587 = vadd.f32 %v586, %v518
        %v588 = vadd.f32 %v587, %v523
        %v589 = vadd.f32 %v588, %v526
        %v590 = vadd.f32 %v589, %v531
        %v591 = vadd.f32 %v590, %v534
        %v592 = vadd.f32 %v591, %v539
        %v593 = vadd.f32 %v592, %v542
        %v594 = vadd.f32 %v593, %v547
        %v595 = vadd.f32 %v594, %v550
        %v596 = vadd.f32 %v595, %v555
        %v597 = vadd.f32 %v596, %v558
        %v598 = vadd.f32 %v597, %v563
        %v599 = vadd.f32 %v598, %v566
        %v600 = vrot.slane %v599, 4
        %v601 = vadd.f32 %v599, %v600
        %v602 = vrot.slane %v601, 2
        %v603 = vadd.f32 %v601, %v602
        %v604 = vrot.slane %v603, 1
        %v605 = vadd.f32 %v603, %v604
        %606 = vst [vmem:[%s214] sm:$0x1] %v605
        %v607 = vmul.f32 %v443, %v443
        %v608 = vmul.f32 %v446, %v446
        %v609 = vmul.f32 %v451, %v451
        %v610 = vmul.f32 %v454, %v454
        %v611 = vmul.f32 %v459, %v459
        %v612 = vmul.f32 %v462, %v462
        %v613 = vmul.f32 %v467, %v467
        %v614 = vmul.f32 %v470, %v470
        %v615 = vmul.f32 %v475, %v475
        %v616 = vmul.f32 %v478, %v478
        %v617 = vmul.f32 %v483, %v483
        %v618 = vmul.f32 %v486, %v486
        %v619 = vmul.f32 %v491, %v491
        %v620 = vmul.f32 %v494, %v494
        %v621 = vmul.f32 %v499, %v499
        %v622 = vmul.f32 %v502, %v502
        %v623 = vmul.f32 %v507, %v507
        %v624 = vmul.f32 %v510, %v510
        %v625 = vmul.f32 %v515, %v515
        %v626 = vmul.f32 %v518, %v518
        %v627 = vmul.f32 %v523, %v523
        %v628 = vmul.f32 %v526, %v526
        %v629 = vmul.f32 %v531, %v531
        %v630 = vmul.f32 %v534, %v534
        %v631 = vmul.f32 %v539, %v539
        %v632 = vmul.f32 %v542, %v542
        %v633 = vmul.f32 %v547, %v547
        %v634 = vmul.f32 %v550, %v550
        %v635 = vmul.f32 %v555, %v555
        %v636 = vmul.f32 %v558, %v558
        %v637 = vmul.f32 %v563, %v563
        %v638 = vmul.f32 %v566, %v566
        %v639 = vadd.f32 %v607, %v608
        %v640 = vadd.f32 %v639, %v609
        %v641 = vadd.f32 %v640, %v610
        %v642 = vadd.f32 %v641, %v611
        %v643 = vadd.f32 %v642, %v612
        %v644 = vadd.f32 %v643, %v613
        %v645 = vadd.f32 %v644, %v614
        %v646 = vadd.f32 %v645, %v615
        %v647 = vadd.f32 %v646, %v616
        %v648 = vadd.f32 %v647, %v617
        %v649 = vadd.f32 %v648, %v618
        %v650 = vadd.f32 %v649, %v619
        %v651 = vadd.f32 %v650, %v620
        %v652 = vadd.f32 %v651, %v621
        %v653 = vadd.f32 %v652, %v622
        %v654 = vadd.f32 %v653, %v623
        %v655 = vadd.f32 %v654, %v624
        %v656 = vadd.f32 %v655, %v625
        %v657 = vadd.f32 %v656, %v626
        %v658 = vadd.f32 %v657, %v627
        %v659 = vadd.f32 %v658, %v628
        %v660 = vadd.f32 %v659, %v629
        %v661 = vadd.f32 %v660, %v630
        %v662 = vadd.f32 %v661, %v631
        %v663 = vadd.f32 %v662, %v632
        %v664 = vadd.f32 %v663, %v633
        %v665 = vadd.f32 %v664, %v634
        %v666 = vadd.f32 %v665, %v635
        %v667 = vadd.f32 %v666, %v636
        %v668 = vadd.f32 %v667, %v637
        %v669 = vadd.f32 %v668, %v638
        %v670 = vrot.slane %v669, 4
        %v671 = vadd.f32 %v669, %v670
        %v672 = vrot.slane %v671, 2
        %v673 = vadd.f32 %v671, %v672
        %v674 = vrot.slane %v673, 1
        %v675 = vadd.f32 %v673, %v674
        %676 = vst [vmem:[%s214 + $0x1] sm:$0x1] %v675
        %v677 = vpack.c.bf16 %v446, %v443
        %v678 = vpack.c.bf16 %v454, %v451
        %v679 = vpack.c.bf16 %v462, %v459
        %v680 = vpack.c.bf16 %v470, %v467
        %v681 = vpack.c.bf16 %v478, %v475
        %v682 = vpack.c.bf16 %v486, %v483
        %v683 = vpack.c.bf16 %v494, %v491
        %v684 = vpack.c.bf16 %v502, %v499
        %v685 = vpack.c.bf16 %v510, %v507
        %v686 = vpack.c.bf16 %v518, %v515
        %v687 = vpack.c.bf16 %v526, %v523
        %v688 = vpack.c.bf16 %v534, %v531
        %v689 = vpack.c.bf16 %v542, %v539
        %v690 = vpack.c.bf16 %v550, %v547
        %v691 = vpack.c.bf16 %v558, %v555
        %v692 = vpack.c.bf16 %v566, %v563
        %v709 = vunpack.c.l.b16 %v677
        %v710 = vunpack.c.h.b16 %v677
        %v711 = vunpack.c.l.b16 %v678
        %v712 = vunpack.c.h.b16 %v678
        %v713 = vunpack.c.l.b16 %v679
        %v714 = vunpack.c.h.b16 %v679
        %v715 = vunpack.c.l.b16 %v680
        %v716 = vunpack.c.h.b16 %v680
        %v717 = vunpack.c.l.b16 %v681
        %v718 = vunpack.c.h.b16 %v681
        %v719 = vunpack.c.l.b16 %v682
        %v720 = vunpack.c.h.b16 %v682
        %v721 = vunpack.c.l.b16 %v683
        %v722 = vunpack.c.h.b16 %v683
        %v723 = vunpack.c.l.b16 %v684
        %v724 = vunpack.c.h.b16 %v684
        %v725 = vunpack.c.l.b16 %v685
        %v726 = vunpack.c.h.b16 %v685
        %v727 = vunpack.c.l.b16 %v686
        %v728 = vunpack.c.h.b16 %v686
        %v729 = vunpack.c.l.b16 %v687
        %v730 = vunpack.c.h.b16 %v687
        %v731 = vunpack.c.l.b16 %v688
        %v732 = vunpack.c.h.b16 %v688
        %v733 = vunpack.c.l.b16 %v689
        %v734 = vunpack.c.h.b16 %v689
        %v735 = vunpack.c.l.b16 %v690
        %v736 = vunpack.c.h.b16 %v690
        %v737 = vunpack.c.l.b16 %v691
        %v738 = vunpack.c.h.b16 %v691
        %v739 = vunpack.c.l.b16 %v692
        %v740 = vunpack.c.h.b16 %v692
        %v741 = vpack.c.b16 %v709, %v709
        %v742 = vpack.c.b16 %v710, %v710
        %v743 = vpack.c.b16 %v711, %v711
        %v744 = vpack.c.b16 %v712, %v712
        %v745 = vpack.c.b16 %v713, %v713
        %v746 = vpack.c.b16 %v714, %v714
        %v747 = vpack.c.b16 %v715, %v715
        %v748 = vpack.c.b16 %v716, %v716
        %v749 = vpack.c.b16 %v717, %v717
        %v750 = vpack.c.b16 %v718, %v718
        %v751 = vpack.c.b16 %v719, %v719
        %v752 = vpack.c.b16 %v720, %v720
        %v753 = vpack.c.b16 %v721, %v721
        %v754 = vpack.c.b16 %v722, %v722
        %v755 = vpack.c.b16 %v723, %v723
        %v756 = vpack.c.b16 %v724, %v724
        %v757 = vpack.c.b16 %v725, %v725
        %v758 = vpack.c.b16 %v726, %v726
        %v759 = vpack.c.b16 %v727, %v727
        %v760 = vpack.c.b16 %v728, %v728
        %v761 = vpack.c.b16 %v729, %v729
        %v762 = vpack.c.b16 %v730, %v730
        %v763 = vpack.c.b16 %v731, %v731
        %v764 = vpack.c.b16 %v732, %v732
        %v765 = vpack.c.b16 %v733, %v733
        %v766 = vpack.c.b16 %v734, %v734
        %v767 = vpack.c.b16 %v735, %v735
        %v768 = vpack.c.b16 %v736, %v736
        %v769 = vpack.c.b16 %v737, %v737
        %v770 = vpack.c.b16 %v738, %v738
        %v771 = vpack.c.b16 %v739, %v739
        %v772 = vpack.c.b16 %v740, %v740
        %805 = vst [vmem:[%s207] sm:$0xf] %v741
        %806 = vst [vmem:[%s207 + $0x4] sm:$0xf] %v742
        %807 = vst [vmem:[%s207 + $0x8] sm:$0xf] %v743
        %808 = vst [vmem:[%s207 + $0xc] sm:$0xf] %v744
        %809 = vst [vmem:[%s207 + $0x10] sm:$0xf] %v745
        %810 = vst [vmem:[%s207 + $0x14] sm:$0xf] %v746
        %811 = vst [vmem:[%s207 + $0x18] sm:$0xf] %v747
        %812 = vst [vmem:[%s207 + $0x1c] sm:$0xf] %v748
        %813 = vst [vmem:[%s207 + $0x20] sm:$0xf] %v749
        %814 = vst [vmem:[%s207 + $0x24] sm:$0xf] %v750
        %815 = vst [vmem:[%s207 + $0x28] sm:$0xf] %v751
        %816 = vst [vmem:[%s207 + $0x2c] sm:$0xf] %v752
        %817 = vst [vmem:[%s207 + $0x30] sm:$0xf] %v753
        %818 = vst [vmem:[%s207 + $0x34] sm:$0xf] %v754
        %819 = vst [vmem:[%s207 + $0x38] sm:$0xf] %v755
        %820 = vst [vmem:[%s207 + $0x3c] sm:$0xf] %v756
        %821 = vst [vmem:[%s207 + $0x40] sm:$0xf] %v757
        %822 = vst [vmem:[%s207 + $0x44] sm:$0xf] %v758
        %823 = vst [vmem:[%s207 + $0x48] sm:$0xf] %v759
        %824 = vst [vmem:[%s207 + $0x4c] sm:$0xf] %v760
        %825 = vst [vmem:[%s207 + $0x50] sm:$0xf] %v761
        %826 = vst [vmem:[%s207 + $0x54] sm:$0xf] %v762
        %827 = vst [vmem:[%s207 + $0x58] sm:$0xf] %v763
        %828 = vst [vmem:[%s207 + $0x5c] sm:$0xf] %v764
        %829 = vst [vmem:[%s207 + $0x60] sm:$0xf] %v765
        %830 = vst [vmem:[%s207 + $0x64] sm:$0xf] %v766
        %831 = vst [vmem:[%s207 + $0x68] sm:$0xf] %v767
        %832 = vst [vmem:[%s207 + $0x6c] sm:$0xf] %v768
        %833 = vst [vmem:[%s207 + $0x70] sm:$0xf] %v769
        %834 = vst [vmem:[%s207 + $0x74] sm:$0xf] %v770
        %835 = vst [vmem:[%s207 + $0x78] sm:$0xf] %v771
        %836 = vst [vmem:[%s207 + $0x7c] sm:$0xf] %v772
        %s837 = sand.u32 %s80, 1
        %s838 = scalar_lea.sflag [#allocation4], %s837
        %s839 = sand.u32 %s80, 1
        %s840 = smul.addr %s839, 128
        %s841 = scalar_lea.vmem [#allocation7], %s840
        %s842 = sand.u32 %s106, 1
        %s843 = scalar_lea.sflag [#allocation9], %s842
        %s844 = sand.u32 %s106, 1
        %s845 = smul.addr %s844, 2
        %s846 = scalar_lea.vmem [#allocation8], %s845
        // Predicated region
        $region37: #{encoder_block.3} parent=27 // pred_check
          %p847 = pneg %p90
        $region38: #{encoder_block.3} parent=27 // pred_check_branch
          %849 = sbr.rel (%p847) target = $region40
        $region39: #{encoder_block.3} parent=27 // pred_region
          %s851 = ssub.s32 2048, 2048
          %852 = vsyncadd %s838, %s851
          %s853 = smul.addr %s25, 32
          %s854 = smul.addr %s853, 64
          %s855 = scalar_lea.hbm %s2, %s854
          %s856 = sshll.u32 %s841, 4
          %s857 = int_to_ptr.vmem [resolvable:$true] %s856
          %862 = dma.vmem_to_hbm [thread:$0]  %s857, 2048, %s855, %s838, 64, 64, 4
        $region40: #{encoder_block.3} parent=27 // pred_fallthru
          _
        // Predicated region
        $region41: #{encoder_block.3} parent=27 // pred_check
          %p863 = pneg %p116
        $region42: #{encoder_block.3} parent=27 // pred_check_branch
          %865 = sbr.rel (%p863) target = $region44
        $region43: #{encoder_block.3} parent=27 // pred_region
          %s867 = ssub.s32 32, 32
          %868 = vsyncadd %s843, %s867
          %s869 = smul.addr %s25, 32
          %s870 = scalar_lea.hbm %s3, %s869
          %s872 = sshll.u32 %s846, 4
          %s873 = int_to_ptr.vmem [resolvable:$true] %s872
          %875 = dma.vmem_to_hbm [thread:$0]  %s873, 32, %s870, %s843
        $region44: #{encoder_block.3} parent=27 // pred_fallthru
          _
      $region28: #{encoder_block.3} parent=5 // pred_fallthru
        _
      %p876 = scmp.le.s32.totalorder 2, %s20
      // Predicated region
      $region45: #{encoder_block.3} parent=5 // pred_check
        %p877 = pneg %p876
      $region46: #{encoder_block.3} parent=5 // pred_check_branch
        %879 = sbr.rel (%p877) target = $region48
      $region47: #{encoder_block.3} parent=5 // pred_region
        %s880 = ssub.s32 %s20, 2
        // Predicated region
        $region49: #{encoder_block.3} parent=47 // pred_check
          %p881 = pneg %p96
        $region50: #{encoder_block.3} parent=47 // pred_check_branch
          %883 = sbr.rel (%p881) target = $region52
        $region51: #{encoder_block.3} parent=47 // pred_region
          %s884 = sand.u32 %s81, 1
          %s885 = scalar_lea.sflag [#allocation4], %s884
          %s886 = sand.u32 %s81, 1
          %s887 = smul.addr %s886, 128
          %s888 = scalar_lea.vmem [#allocation7], %s887
          %889 = dma.done %s885, 2048
        $region52: #{encoder_block.3} parent=47 // pred_fallthru
          _
        // Predicated region
        $region53: #{encoder_block.3} parent=47 // pred_check
          %p890 = pneg %p122
        $region54: #{encoder_block.3} parent=47 // pred_check_branch
          %892 = sbr.rel (%p890) target = $region56
        $region55: #{encoder_block.3} parent=47 // pred_region
          %s893 = sand.u32 %s107, 1
          %s894 = scalar_lea.sflag [#allocation9], %s893
          %s895 = sand.u32 %s107, 1
          %s896 = smul.addr %s895, 2
          %s897 = scalar_lea.vmem [#allocation8], %s896
          %898 = dma.done %s894, 32
        $region56: #{encoder_block.3} parent=47 // pred_fallthru
          _
      $region48: #{encoder_block.3} parent=5 // pred_fallthru
        _
    $region6: #{encoder_block.3} parent=1 // loop_footer
      %s24 = sadd.s32 1, %s20
    $region7: #{encoder_block.3} parent=1 // loop_footer_branch
      %19 = sbr.rel target = $region3
    $region8: #{encoder_block.3} parent=1 // loop_exit
      _
    %899 = vsyncpa [#allocation3], 1
    %s900 = scalar_lea.sflag [#allocation3], 1
    %901 = vsyncpa %s900, 1
    %902 = vsyncpa [#allocation6], 1
    %903 = vsyncpa [#allocation4], 1
    %s904 = scalar_lea.sflag [#allocation4], 1
    %905 = vsyncpa %s904, 1
    %906 = vsyncpa [#allocation9], 1
    %s907 = scalar_lea.sflag [#allocation9], 1
    %908 = vsyncpa %s907, 1

// kernel: encoder_block.5
$region0: #{encoder_block.5}
  #allocation0 [shape = 'u32[]', space=smem, size = 0x4, offset = 0x4, fixed_abs, tag = 'smem constant byte address 0x4 - core index']
  #allocation1 [shape = 'u32[144,128]{1,0:T(1,128)}', space=vmem, size = 0x12000, scoped, tag = 'internal scratch']
  %s0 = inlined_call_operand.hbm [shape: bf16[2,16,16,128], index: 0, kind: input, shape index: {}]
  %s1 = inlined_call_operand.hbm [shape: f32[1,128], index: 1, kind: input, shape index: {}]
  %s2 = inlined_call_operand.hbm [shape: f32[1,128], index: 2, kind: input, shape index: {}]
  %s3 = inlined_call_operand.hbm [shape: f32[2,16,16,128], index: 3, kind: output, shape index: {0}]
  %s4 = inlined_call_operand.hbm [shape: f32[2,8,8,128], index: 4, kind: output, shape index: {1}]
  %5 = xla_tuple %s3, %s4
  %s6 = sld [smem:[#allocation0]]
  $region65: #{encoder_block.5} parent=0
    _
  %s8 = ssub.s32 1, %s6
  %s9 = scalar_select 0, %s8, %s6
  $region1: #{encoder_block.5} parent=0
    #allocation2 [shape = 'u8[131072]{0}', space=vmem, size = 0x20000, scoped, tag = 'input window, operand 0']
    #allocation3 [shape = 's32[2]{0}', space=sflag, size = 0x8, scoped, tag = 'scoped memory for encoder_block.5']
    #allocation4 [shape = 's32[2]{0}', space=sflag, size = 0x8, scoped, tag = 'scoped memory for encoder_block.5']
    #allocation5 [shape = 'u8[512]{0}', space=vmem, size = 0x400, scoped, tag = 'input window, operand 1, single buffered']
    #allocation6 [shape = 's32[1]{0}', space=sflag, size = 0x4, scoped, tag = 'scoped memory for encoder_block.5']
    #allocation7 [shape = 'u8[512]{0}', space=vmem, size = 0x400, scoped, tag = 'input window, operand 2, single buffered']
    #allocation8 [shape = 'u8[262144]{0}', space=vmem, size = 0x40000, scoped, tag = 'output window, operand 0']
    #allocation9 [shape = 'u8[65536]{0}', space=vmem, size = 0x10000, scoped, tag = 'output window, operand 1']
    #allocation10 [shape = 's32[2]{0}', space=sflag, size = 0x8, scoped, tag = 'scoped memory for encoder_block.5']
    %10 = vsyncpa [#allocation3], 0
    %s11 = scalar_lea.sflag [#allocation3], 1
    %12 = vsyncpa %s11, 0
    %13 = vsyncpa [#allocation6], 0
    %14 = vsyncpa [#allocation4], 0
    %s15 = scalar_lea.sflag [#allocation4], 1
    %16 = vsyncpa %s15, 0
    %17 = vsyncpa [#allocation10], 0
    %s18 = scalar_lea.sflag [#allocation10], 1
    %19 = vsyncpa %s18, 0
    loop: start=0, step=1, limit=4
    $region2: #{encoder_block.5} parent=1 // loop_pre_header
      _
    $region3: #{encoder_block.5} parent=1 // loop_header
      %s21 = sphi 0, %s25
      %p22 = scmp.ge.s32.totalorder %s21, 4
      %s28 = sphi 0, %s40
      %s29 = sphi 0, %s36
      %s30 = sphi 0, %s28
      %s31 = sphi 0, %s29
      %s32 = sphi 0, %s30
      %s33 = sphi 0, %s31
      %s45 = sphi 0, %s47
      %s48 = sphi 0, %s45
      %s49 = sphi 0, %s48
      %s65 = sphi 0, %s49
      %s69 = sphi 0, %s69
      %s71 = sphi 0, %s69
      %s72 = sphi 0, %s71
      %s86 = sphi 0, %s72
      %s90 = sphi 0, %s90
      %s92 = sphi 0, %s90
      %s93 = sphi 0, %s92
      %s107 = sphi 0, %s93
      %s115 = sphi 0, %s117
      %s118 = sphi 0, %s115
      %s119 = sphi 0, %s118
      %s135 = sphi 0, %s119
      %s143 = sphi 0, %s145
      %s146 = sphi 0, %s143
      %s147 = sphi 0, %s146
      %s163 = sphi 0, %s147
    $region4: #{encoder_block.5} parent=1 // loop_header_branch
      %24 = sbr.rel (%p22) target = $region8
    $region5: #{encoder_block.5} parent=1 // loop_body
      %s26 = ssub.s32 %s21, 1
      %s27 = ssub.s32 %s21, 2
      %s34 = sadd.s32 1, %s29
      %p35 = scmp.ge.s32.totalorder %s34, 1
      %s36 = scalar_select %p35, 0, %s34
      %s37 = sadd.s32 1, %s28
      %s38 = scalar_select %p35, %s37, %s28
      %p39 = scmp.ge.s32.totalorder %s38, 2
      %s40 = scalar_select %p39, 0, %s38
      %s41 = ssub.s32 %s28, %s40
      %s42 = ssub.s32 %s29, %s36
      %s43 = sor.u32 %s41, %s42
      %p44 = scmp.eq.s32.totalorder %s43, 0
      %s46 = sadd.s32 %s45, 1
      %s47 = scalar_select %p44, %s45, %s46
      %p50 = pneg %p44
      %p51 = scmp.eq.s32.totalorder %s21, 1
      %p52 = por %p50, %p51
      %p53 = scmp.ne.s32.totalorder %s45, %s48
      %p54 = scmp.eq.s32.totalorder %s21, 0
      %p55 = por %p53, %p54
      %p56 = scmp.ne.s32.totalorder %s45, %s48
      %p57 = scmp.eq.s32.totalorder %s26, 1
      %p58 = por %p56, %p57
      %p59 = scmp.ne.s32.totalorder %s48, %s49
      %p60 = scmp.eq.s32.totalorder %s26, 0
      %p61 = por %p59, %p60
      %p62 = scmp.ne.s32.totalorder %s48, %s49
      %p63 = scmp.eq.s32.totalorder %s27, 1
      %p64 = por %p62, %p63
      %p66 = scmp.ne.s32.totalorder %s49, %s65
      %p67 = scmp.eq.s32.totalorder %s27, 0
      %p68 = por %p66, %p67
      %s70 = sadd.s32 %s69, 1
      %p73 = scmp.eq.s32.totalorder %s21, 1
      %p74 = scmp.ne.s32.totalorder %s69, %s71
      %p75 = scmp.eq.s32.totalorder %s21, 0
      %p76 = por %p74, %p75
      %p77 = scmp.ne.s32.totalorder %s69, %s71
      %p78 = scmp.eq.s32.totalorder %s26, 1
      %p79 = por %p77, %p78
      %p80 = scmp.ne.s32.totalorder %s71, %s72
      %p81 = scmp.eq.s32.totalorder %s26, 0
      %p82 = por %p80, %p81
      %p83 = scmp.ne.s32.totalorder %s71, %s72
      %p84 = scmp.eq.s32.totalorder %s27, 1
      %p85 = por %p83, %p84
      %p87 = scmp.ne.s32.totalorder %s72, %s86
      %p88 = scmp.eq.s32.totalorder %s27, 0
      %p89 = por %p87, %p88
      %s91 = sadd.s32 %s90, 1
      %p94 = scmp.eq.s32.totalorder %s21, 1
      %p95 = scmp.ne.s32.totalorder %s90, %s92
      %p96 = scmp.eq.s32.totalorder %s21, 0
      %p97 = por %p95, %p96
      %p98 = scmp.ne.s32.totalorder %s90, %s92
      %p99 = scmp.eq.s32.totalorder %s26, 1
      %p100 = por %p98, %p99
      %p101 = scmp.ne.s32.totalorder %s92, %s93
      %p102 = scmp.eq.s32.totalorder %s26, 0
      %p103 = por %p101, %p102
      %p104 = scmp.ne.s32.totalorder %s92, %s93
      %p105 = scmp.eq.s32.totalorder %s27, 1
      %p106 = por %p104, %p105
      %p108 = scmp.ne.s32.totalorder %s93, %s107
      %p109 = scmp.eq.s32.totalorder %s27, 0
      %p110 = por %p108, %p109
      %s111 = ssub.s32 %s28, %s40
      %s112 = ssub.s32 %s29, %s36
      %s113 = sor.u32 %s111, %s112
      %p114 = scmp.eq.s32.totalorder %s113, 0
      %s116 = sadd.s32 %s115, 1
      %s117 = scalar_select %p114, %s115, %s116
      %p120 = pneg %p114
      %p121 = scmp.eq.s32.totalorder %s21, 1
      %p122 = por %p120, %p121
      %p123 = scmp.ne.s32.totalorder %s115, %s118
      %p124 = scmp.eq.s32.totalorder %s21, 0
      %p125 = por %p123, %p124
      %p126 = scmp.ne.s32.totalorder %s115, %s118
      %p127 = scmp.eq.s32.totalorder %s26, 1
      %p128 = por %p126, %p127
      %p129 = scmp.ne.s32.totalorder %s118, %s119
      %p130 = scmp.eq.s32.totalorder %s26, 0
      %p131 = por %p129, %p130
      %p132 = scmp.ne.s32.totalorder %s118, %s119
      %p133 = scmp.eq.s32.totalorder %s27, 1
      %p134 = por %p132, %p133
      %p136 = scmp.ne.s32.totalorder %s119, %s135
      %p137 = scmp.eq.s32.totalorder %s27, 0
      %p138 = por %p136, %p137
      %s139 = ssub.s32 %s28, %s40
      %s140 = ssub.s32 %s29, %s36
      %s141 = sor.u32 %s139, %s140
      %p142 = scmp.eq.s32.totalorder %s141, 0
      %s144 = sadd.s32 %s143, 1
      %s145 = scalar_select %p142, %s143, %s144
      %p148 = pneg %p142
      %p149 = scmp.eq.s32.totalorder %s21, 1
      %p150 = por %p148, %p149
      %p151 = scmp.ne.s32.totalorder %s143, %s146
      %p152 = scmp.eq.s32.totalorder %s21, 0
      %p153 = por %p151, %p152
      %p154 = scmp.ne.s32.totalorder %s143, %s146
      %p155 = scmp.eq.s32.totalorder %s26, 1
      %p156 = por %p154, %p155
      %p157 = scmp.ne.s32.totalorder %s146, %s147
      %p158 = scmp.eq.s32.totalorder %s26, 0
      %p159 = por %p157, %p158
      %p160 = scmp.ne.s32.totalorder %s146, %s147
      %p161 = scmp.eq.s32.totalorder %s27, 1
      %p162 = por %p160, %p161
      %p164 = scmp.ne.s32.totalorder %s147, %s163
      %p165 = scmp.eq.s32.totalorder %s27, 0
      %p166 = por %p164, %p165
      %p167 = scmp.le.s32.totalorder 1, %s21
      %p168 = scmp.lt.s32.totalorder %s21, 3
      %p169 = pnand %p167, %p168
      %p170 = pneg %p169
      // Predicated region
      $region9: #{encoder_block.5} parent=5 // pred_check
        _
      $region10: #{encoder_block.5} parent=5 // pred_check_branch
        %172 = sbr.rel (%p169) target = $region12
      $region11: #{encoder_block.5} parent=5 // pred_region
        %s173 = ssub.s32 %s21, 1
        // Predicated region
        $region13: #{encoder_block.5} parent=11 // pred_check
          %p174 = pneg %p82
        $region14: #{encoder_block.5} parent=11 // pred_check_branch
          %176 = sbr.rel (%p174) target = $region16
        $region15: #{encoder_block.5} parent=11 // pred_region
          %s178 = ssub.s32 16, 16
          %179 = vsyncadd [#allocation6], %s178
          %s181 = sshll.u32 [#allocation5], 4
          %s182 = int_to_ptr.vmem [resolvable:$true] %s181
          %184 = dma.hbm_to_vmem [thread:$0]  %s1, 16, %s182, [#allocation6]
        $region16: #{encoder_block.5} parent=11 // pred_fallthru
          _
        // Predicated region
        $region17: #{encoder_block.5} parent=11 // pred_check
          %p185 = pneg %p103
        $region18: #{encoder_block.5} parent=11 // pred_check_branch
          %187 = sbr.rel (%p185) target = $region20
        $region19: #{encoder_block.5} parent=11 // pred_region
          %s189 = ssub.s32 16, 16
          %190 = vsyncadd [#allocation6], %s189
          %s192 = sshll.u32 [#allocation7], 4
          %s193 = int_to_ptr.vmem [resolvable:$true] %s192
          %195 = dma.hbm_to_vmem [thread:$0]  %s2, 16, %s193, [#allocation6]
        $region20: #{encoder_block.5} parent=11 // pred_fallthru
          _
      $region12: #{encoder_block.5} parent=5 // pred_fallthru
        _
      %p196 = scmp.lt.s32.totalorder %s21, 2
      // Predicated region
      $region21: #{encoder_block.5} parent=5 // pred_check
        %p197 = pneg %p196
      $region22: #{encoder_block.5} parent=5 // pred_check_branch
        %199 = sbr.rel (%p197) target = $region24
      $region23: #{encoder_block.5} parent=5 // pred_region
        // Predicated region
        $region25: #{encoder_block.5} parent=23 // pred_check
          %p200 = pneg %p55
        $region26: #{encoder_block.5} parent=23 // pred_check_branch
          %202 = sbr.rel (%p200) target = $region28
        $region27: #{encoder_block.5} parent=23 // pred_region
          %s203 = sand.u32 %s45, 1
          %s204 = scalar_lea.sflag [#allocation3], %s203
          %s205 = sand.u32 %s45, 1
          %s206 = smul.addr %s205, 128
          %s207 = scalar_lea.vmem [#allocation2], %s206
          %s208 = smul.u32 16, %s29
          %s210 = ssub.s32 2048, 2048
          %211 = vsyncadd %s204, %s210
          %s212 = smul.addr %s208, 2
          %s213 = smul.addr %s28, 32
          %s214 = sadd.s32 %s212, %s213
          %s215 = smul.addr %s214, 64
          %s216 = scalar_lea.hbm %s0, %s215
          %s217 = sshll.u32 %s207, 4
          %s218 = int_to_ptr.vmem [resolvable:$true] %s217
          %223 = dma.hbm_to_vmem [thread:$0]  %s216, 2048, %s218, %s204, 64, 64, 4
        $region28: #{encoder_block.5} parent=23 // pred_fallthru
          _
      $region24: #{encoder_block.5} parent=5 // pred_fallthru
        _
      %p224 = scmp.le.s32.totalorder 1, %s21
      %p225 = scmp.lt.s32.totalorder %s21, 3
      %p226 = pnand %p224, %p225
      %p227 = pneg %p226
      // Predicated region
      $region29: #{encoder_block.5} parent=5 // pred_check
        _
      $region30: #{encoder_block.5} parent=5 // pred_check_branch
        %229 = sbr.rel (%p226) target = $region32
      $region31: #{encoder_block.5} parent=5 // pred_region
        %s230 = ssub.s32 %s21, 1
        %s231 = sand.u32 %s48, 1
        %s232 = scalar_lea.sflag [#allocation3], %s231
        %s233 = sand.u32 %s48, 1
        %s234 = smul.addr %s233, 128
        %s235 = scalar_lea.vmem [#allocation2], %s234
        // Predicated region
        $region33: #{encoder_block.5} parent=31 // pred_check
          %p236 = pneg %p61
        $region34: #{encoder_block.5} parent=31 // pred_check_branch
          %238 = sbr.rel (%p236) target = $region36
        $region35: #{encoder_block.5} parent=31 // pred_region
          %239 = dma.done %s232, 2048
        $region36: #{encoder_block.5} parent=31 // pred_fallthru
          _
        // Predicated region
        $region37: #{encoder_block.5} parent=31 // pred_check
          %p240 = pneg %p82
        $region38: #{encoder_block.5} parent=31 // pred_check_branch
          %242 = sbr.rel (%p240) target = $region40
        $region39: #{encoder_block.5} parent=31 // pred_region
          %243 = dma.done [#allocation6], 16
        $region40: #{encoder_block.5} parent=31 // pred_fallthru
          _
        // Predicated region
        $region41: #{encoder_block.5} parent=31 // pred_check
          %p244 = pneg %p103
        $region42: #{encoder_block.5} parent=31 // pred_check_branch
          %246 = sbr.rel (%p244) target = $region44
        $region43: #{encoder_block.5} parent=31 // pred_region
          %247 = dma.done [#allocation6], 16
        $region44: #{encoder_block.5} parent=31 // pred_fallthru
          _
        %s248 = sand.u32 %s48, 1
        %s249 = scalar_lea.sflag [#allocation3], %s248
        %s250 = sand.u32 %s48, 1
        %s251 = smul.addr %s250, 128
        %s252 = scalar_lea.vmem [#allocation2], %s251
        %p253 = pneg %p61
        %p254 = pneg %p58
        %p255 = pneg %p82
        %p256 = pneg %p79
        %p257 = pneg %p103
        %p258 = pneg %p100
        %p259 = pneg %p131
        %p260 = pneg %p128
        %s261 = sand.u32 %s118, 1
        %s262 = scalar_lea.sflag [#allocation4], %s261
        %s263 = sand.u32 %s118, 1
        %s264 = smul.addr %s263, 256
        %s265 = scalar_lea.vmem [#allocation8], %s264
        %p266 = pneg %p159
        %p267 = pneg %p156
        %s268 = sand.u32 %s146, 1
        %s269 = scalar_lea.sflag [#allocation10], %s268
        %s270 = sand.u32 %s146, 1
        %s271 = smul.addr %s270, 64
        %s272 = scalar_lea.vmem [#allocation9], %s271
        %s273 = smul.u32 16, %s31
        %s274 = smul.u32 16, %s31
        %s275 = smul.u32 8, %s31
        %v276 = vld [vmem:[#allocation5] sm:$0x1]
        %v277 = vld [vmem:[#allocation7] sm:$0x1]
        %v278 = vld [vmem:[%s235] sm:$0xf]
        %v279 = vld [vmem:[%s235 + $0x4] sm:$0xf]
        %v280 = vld [vmem:[%s235 + $0x8] sm:$0xf]
        %v281 = vld [vmem:[%s235 + $0xc] sm:$0xf]
        %v282 = vld [vmem:[%s235 + $0x10] sm:$0xf]
        %v283 = vld [vmem:[%s235 + $0x14] sm:$0xf]
        %v284 = vld [vmem:[%s235 + $0x18] sm:$0xf]
        %v285 = vld [vmem:[%s235 + $0x1c] sm:$0xf]
        %v286 = vld [vmem:[%s235 + $0x20] sm:$0xf]
        %v287 = vld [vmem:[%s235 + $0x24] sm:$0xf]
        %v288 = vld [vmem:[%s235 + $0x28] sm:$0xf]
        %v289 = vld [vmem:[%s235 + $0x2c] sm:$0xf]
        %v290 = vld [vmem:[%s235 + $0x30] sm:$0xf]
        %v291 = vld [vmem:[%s235 + $0x34] sm:$0xf]
        %v292 = vld [vmem:[%s235 + $0x38] sm:$0xf]
        %v293 = vld [vmem:[%s235 + $0x3c] sm:$0xf]
        %v294 = vld [vmem:[%s235 + $0x40] sm:$0xf]
        %v295 = vld [vmem:[%s235 + $0x44] sm:$0xf]
        %v296 = vld [vmem:[%s235 + $0x48] sm:$0xf]
        %v297 = vld [vmem:[%s235 + $0x4c] sm:$0xf]
        %v298 = vld [vmem:[%s235 + $0x50] sm:$0xf]
        %v299 = vld [vmem:[%s235 + $0x54] sm:$0xf]
        %v300 = vld [vmem:[%s235 + $0x58] sm:$0xf]
        %v301 = vld [vmem:[%s235 + $0x5c] sm:$0xf]
        %v302 = vld [vmem:[%s235 + $0x60] sm:$0xf]
        %v303 = vld [vmem:[%s235 + $0x64] sm:$0xf]
        %v304 = vld [vmem:[%s235 + $0x68] sm:$0xf]
        %v305 = vld [vmem:[%s235 + $0x6c] sm:$0xf]
        %v306 = vld [vmem:[%s235 + $0x70] sm:$0xf]
        %v307 = vld [vmem:[%s235 + $0x74] sm:$0xf]
        %v308 = vld [vmem:[%s235 + $0x78] sm:$0xf]
        %v309 = vld [vmem:[%s235 + $0x7c] sm:$0xf]
        %v310 = vunpack.c.l.bf16 %v278
        %v311 = vunpack.c.l.bf16 %v279
        %v312 = vunpack.c.l.bf16 %v280
        %v313 = vunpack.c.l.bf16 %v281
        %v314 = vunpack.c.l.bf16 %v282
        %v315 = vunpack.c.l.bf16 %v283
        %v316 = vunpack.c.l.bf16 %v284
        %v317 = vunpack.c.l.bf16 %v285
        %v318 = vunpack.c.l.bf16 %v286
        %v319 = vunpack.c.l.bf16 %v287
        %v320 = vunpack.c.l.bf16 %v288
        %v321 = vunpack.c.l.bf16 %v289
        %v322 = vunpack.c.l.bf16 %v290
        %v323 = vunpack.c.l.bf16 %v291
        %v324 = vunpack.c.l.bf16 %v292
        %v325 = vunpack.c.l.bf16 %v293
        %v326 = vunpack.c.l.bf16 %v294
        %v327 = vunpack.c.l.bf16 %v295
        %v328 = vunpack.c.l.bf16 %v296
        %v329 = vunpack.c.l.bf16 %v297
        %v330 = vunpack.c.l.bf16 %v298
        %v331 = vunpack.c.l.bf16 %v299
        %v332 = vunpack.c.l.bf16 %v300
        %v333 = vunpack.c.l.bf16 %v301
        %v334 = vunpack.c.l.bf16 %v302
        %v335 = vunpack.c.l.bf16 %v303
        %v336 = vunpack.c.l.bf16 %v304
        %v337 = vunpack.c.l.bf16 %v305
        %v338 = vunpack.c.l.bf16 %v306
        %v339 = vunpack.c.l.bf16 %v307
        %v340 = vunpack.c.l.bf16 %v308
        %v341 = vunpack.c.l.bf16 %v309
        %v343 = vlaneseq
        %v344 = vshrl.u32 %v343, 7
        %v345 = vsub.s32 0, %v344
        %v346 = vrot.slane %v276, %v345
        %v348 = vmul.f32 %v310, %v346
        %v349 = vmul.f32 %v311, %v346
        %v350 = vmul.f32 %v312, %v346
        %v351 = vmul.f32 %v313, %v346
        %v352 = vmul.f32 %v314, %v346
        %v353 = vmul.f32 %v315, %v346
        %v354 = vmul.f32 %v316, %v346
        %v355 = vmul.f32 %v317, %v346
        %v356 = vmul.f32 %v318, %v346
        %v357 = vmul.f32 %v319, %v346
        %v358 = vmul.f32 %v320, %v346
        %v359 = vmul.f32 %v321, %v346
        %v360 = vmul.f32 %v322, %v346
        %v361 = vmul.f32 %v323, %v346
        %v362 = vmul.f32 %v324, %v346
        %v363 = vmul.f32 %v325, %v346
        %v364 = vmul.f32 %v326, %v346
        %v365 = vmul.f32 %v327, %v346
        %v366 = vmul.f32 %v328, %v346
        %v367 = vmul.f32 %v329, %v346
        %v368 = vmul.f32 %v330, %v346
        %v369 = vmul.f32 %v331, %v346
        %v370 = vmul.f32 %v332, %v346
        %v371 = vmul.f32 %v333, %v346
        %v372 = vmul.f32 %v334, %v346
        %v373 = vmul.f32 %v335, %v346
        %v374 = vmul.f32 %v336, %v346
        %v375 = vmul.f32 %v337, %v346
        %v376 = vmul.f32 %v338, %v346
        %v377 = vmul.f32 %v339, %v346
        %v378 = vmul.f32 %v340, %v346
        %v379 = vmul.f32 %v341, %v346
        %v381 = vlaneseq
        %v382 = vshrl.u32 %v381, 7
        %v383 = vsub.s32 0, %v382
        %v384 = vrot.slane %v277, %v383
        %v386 = vadd.f32 %v348, %v384
        %v387 = vadd.f32 %v349, %v384
        %v388 = vadd.f32 %v350, %v384
        %v389 = vadd.f32 %v351, %v384
        %v390 = vadd.f32 %v352, %v384
        %v391 = vadd.f32 %v353, %v384
        %v392 = vadd.f32 %v354, %v384
        %v393 = vadd.f32 %v355, %v384
        %v394 = vadd.f32 %v356, %v384
        %v395 = vadd.f32 %v357, %v384
        %v396 = vadd.f32 %v358, %v384
        %v397 = vadd.f32 %v359, %v384
        %v398 = vadd.f32 %v360, %v384
        %v399 = vadd.f32 %v361, %v384
        %v400 = vadd.f32 %v362, %v384
        %v401 = vadd.f32 %v363, %v384
        %v402 = vadd.f32 %v364, %v384
        %v403 = vadd.f32 %v365, %v384
        %v404 = vadd.f32 %v366, %v384
        %v405 = vadd.f32 %v367, %v384
        %v406 = vadd.f32 %v368, %v384
        %v407 = vadd.f32 %v369, %v384
        %v408 = vadd.f32 %v370, %v384
        %v409 = vadd.f32 %v371, %v384
        %v410 = vadd.f32 %v372, %v384
        %v411 = vadd.f32 %v373, %v384
        %v412 = vadd.f32 %v374, %v384
        %v413 = vadd.f32 %v375, %v384
        %v414 = vadd.f32 %v376, %v384
        %v415 = vadd.f32 %v377, %v384
        %v416 = vadd.f32 %v378, %v384
        %v417 = vadd.f32 %v379, %v384
        %v418 = vmax.f32 %v386, 0.0
        %v419 = vmax.f32 %v387, 0.0
        %v420 = vmax.f32 %v388, 0.0
        %v421 = vmax.f32 %v389, 0.0
        %v422 = vmax.f32 %v390, 0.0
        %v423 = vmax.f32 %v391, 0.0
        %v424 = vmax.f32 %v392, 0.0
        %v425 = vmax.f32 %v393, 0.0
        %v426 = vmax.f32 %v394, 0.0
        %v427 = vmax.f32 %v395, 0.0
        %v428 = vmax.f32 %v396, 0.0
        %v429 = vmax.f32 %v397, 0.0
        %v430 = vmax.f32 %v398, 0.0
        %v431 = vmax.f32 %v399, 0.0
        %v432 = vmax.f32 %v400, 0.0
        %v433 = vmax.f32 %v401, 0.0
        %v434 = vmax.f32 %v402, 0.0
        %v435 = vmax.f32 %v403, 0.0
        %v436 = vmax.f32 %v404, 0.0
        %v437 = vmax.f32 %v405, 0.0
        %v438 = vmax.f32 %v406, 0.0
        %v439 = vmax.f32 %v407, 0.0
        %v440 = vmax.f32 %v408, 0.0
        %v441 = vmax.f32 %v409, 0.0
        %v442 = vmax.f32 %v410, 0.0
        %v443 = vmax.f32 %v411, 0.0
        %v444 = vmax.f32 %v412, 0.0
        %v445 = vmax.f32 %v413, 0.0
        %v446 = vmax.f32 %v414, 0.0
        %v447 = vmax.f32 %v415, 0.0
        %v448 = vmax.f32 %v416, 0.0
        %v449 = vmax.f32 %v417, 0.0
        %450 = vst [vmem:[%s265] sm:$0xff] %v418
        %451 = vst [vmem:[%s265 + $0x8] sm:$0xff] %v419
        %452 = vst [vmem:[%s265 + $0x10] sm:$0xff] %v420
        %453 = vst [vmem:[%s265 + $0x18] sm:$0xff] %v421
        %454 = vst [vmem:[%s265 + $0x20] sm:$0xff] %v422
        %455 = vst [vmem:[%s265 + $0x28] sm:$0xff] %v423
        %456 = vst [vmem:[%s265 + $0x30] sm:$0xff] %v424
        %457 = vst [vmem:[%s265 + $0x38] sm:$0xff] %v425
        %458 = vst [vmem:[%s265 + $0x40] sm:$0xff] %v426
        %459 = vst [vmem:[%s265 + $0x48] sm:$0xff] %v427
        %460 = vst [vmem:[%s265 + $0x50] sm:$0xff] %v428
        %461 = vst [vmem:[%s265 + $0x58] sm:$0xff] %v429
        %462 = vst [vmem:[%s265 + $0x60] sm:$0xff] %v430
        %463 = vst [vmem:[%s265 + $0x68] sm:$0xff] %v431
        %464 = vst [vmem:[%s265 + $0x70] sm:$0xff] %v432
        %465 = vst [vmem:[%s265 + $0x78] sm:$0xff] %v433
        %466 = vst [vmem:[%s265 + $0x80] sm:$0xff] %v434
        %467 = vst [vmem:[%s265 + $0x88] sm:$0xff] %v435
        %468 = vst [vmem:[%s265 + $0x90] sm:$0xff] %v436
        %469 = vst [vmem:[%s265 + $0x98] sm:$0xff] %v437
        %470 = vst [vmem:[%s265 + $0xa0] sm:$0xff] %v438
        %471 = vst [vmem:[%s265 + $0xa8] sm:$0xff] %v439
        %472 = vst [vmem:[%s265 + $0xb0] sm:$0xff] %v440
        %473 = vst [vmem:[%s265 + $0xb8] sm:$0xff] %v441
        %474 = vst [vmem:[%s265 + $0xc0] sm:$0xff] %v442
        %475 = vst [vmem:[%s265 + $0xc8] sm:$0xff] %v443
        %476 = vst [vmem:[%s265 + $0xd0] sm:$0xff] %v444
        %477 = vst [vmem:[%s265 + $0xd8] sm:$0xff] %v445
        %478 = vst [vmem:[%s265 + $0xe0] sm:$0xff] %v446
        %479 = vst [vmem:[%s265 + $0xe8] sm:$0xff] %v447
        %480 = vst [vmem:[%s265 + $0xf0] sm:$0xff] %v448
        %481 = vst [vmem:[%s265 + $0xf8] sm:$0xff] %v449
        %v514 = vcombine.high %v418, %v418
        %v516 = vunpack.c.l.s4 1983009808
        %v517 = vunpack.c.0.s8 %v516
        %v518 = vlaneseq
        %v519 = vshrl.u32 %v518, 7
        %v520 = vsub.s32 %v517, %v519
        %v521 = vrot.slane %v418, %v520
        %v523 = vunpack.c.l.s4 1983009808
        %v524 = vunpack.c.0.s8 %v523
        %v525 = vlaneseq
        %v526 = vshrl.u32 %v525, 7
        %v527 = vsub.s32 %v524, %v526
        %v528 = vrot.slane %v514, %v527
        %v529 = vcombine.high %v521, %v521
        %v530 = vcombine.high %v528, %v528
        %v531 = vcombine.high %v419, %v419
        %v533 = vunpack.c.l.s4 1983009808
        %v534 = vunpack.c.0.s8 %v533
        %v535 = vlaneseq
        %v536 = vshrl.u32 %v535, 7
        %v537 = vsub.s32 %v534, %v536
        %v538 = vrot.slane %v419, %v537
        %v540 = vunpack.c.l.s4 1983009808
        %v541 = vunpack.c.0.s8 %v540
        %v542 = vlaneseq
        %v543 = vshrl.u32 %v542, 7
        %v544 = vsub.s32 %v541, %v543
        %v545 = vrot.slane %v531, %v544
        %v546 = vcombine.high %v538, %v538
        %v547 = vcombine.high %v545, %v545
        %v548 = vcombine.high %v420, %v420
        %v550 = vunpack.c.l.s4 1983009808
        %v551 = vunpack.c.0.s8 %v550
        %v552 = vlaneseq
        %v553 = vshrl.u32 %v552, 7
        %v554 = vsub.s32 %v551, %v553
        %v555 = vrot.slane %v420, %v554
        %v557 = vunpack.c.l.s4 1983009808
        %v558 = vunpack.c.0.s8 %v557
        %v559 = vlaneseq
        %v560 = vshrl.u32 %v559, 7
        %v561 = vsub.s32 %v558, %v560
        %v562 = vrot.slane %v548, %v561
        %v563 = vcombine.high %v555, %v555
        %v564 = vcombine.high %v562, %v562
        %v565 = vcombine.high %v421, %v421
        %v567 = vunpack.c.l.s4 1983009808
        %v568 = vunpack.c.0.s8 %v567
        %v569 = vlaneseq
        %v570 = vshrl.u32 %v569, 7
        %v571 = vsub.s32 %v568, %v570
        %v572 = vrot.slane %v421, %v571
        %v574 = vunpack.c.l.s4 1983009808
        %v575 = vunpack.c.0.s8 %v574
        %v576 = vlaneseq
        %v577 = vshrl.u32 %v576, 7
        %v578 = vsub.s32 %v575, %v577
        %v579 = vrot.slane %v565, %v578
        %v580 = vcombine.high %v572, %v572
        %v581 = vcombine.high %v579, %v579
        %v582 = vcombine.high %v422, %v422
        %v584 = vunpack.c.l.s4 1983009808
        %v585 = vunpack.c.0.s8 %v584
        %v586 = vlaneseq
        %v587 = vshrl.u32 %v586, 7
        %v588 = vsub.s32 %v585, %v587
        %v589 = vrot.slane %v422, %v588
        %v591 = vunpack.c.l.s4 1983009808
        %v592 = vunpack.c.0.s8 %v591
        %v593 = vlaneseq
        %v594 = vshrl.u32 %v593, 7
        %v595 = vsub.s32 %v592, %v594
        %v596 = vrot.slane %v582, %v595
        %v597 = vcombine.high %v589, %v589
        %v598 = vcombine.high %v596, %v596
        %v599 = vcombine.high %v423, %v423
        %v601 = vunpack.c.l.s4 1983009808
        %v602 = vunpack.c.0.s8 %v601
        %v603 = vlaneseq
        %v604 = vshrl.u32 %v603, 7
        %v605 = vsub.s32 %v602, %v604
        %v606 = vrot.slane %v423, %v605
        %v608 = vunpack.c.l.s4 1983009808
        %v609 = vunpack.c.0.s8 %v608
        %v610 = vlaneseq
        %v611 = vshrl.u32 %v610, 7
        %v612 = vsub.s32 %v609, %v611
        %v613 = vrot.slane %v599, %v612
        %v614 = vcombine.high %v606, %v606
        %v615 = vcombine.high %v613, %v613
        %v616 = vcombine.high %v424, %v424
        %v618 = vunpack.c.l.s4 1983009808
        %v619 = vunpack.c.0.s8 %v618
        %v620 = vlaneseq
        %v621 = vshrl.u32 %v620, 7
        %v622 = vsub.s32 %v619, %v621
        %v623 = vrot.slane %v424, %v622
        %v625 = vunpack.c.l.s4 1983009808
        %v626 = vunpack.c.0.s8 %v625
        %v627 = vlaneseq
        %v628 = vshrl.u32 %v627, 7
        %v629 = vsub.s32 %v626, %v628
        %v630 = vrot.slane %v616, %v629
        %v631 = vcombine.high %v623, %v623
        %v632 = vcombine.high %v630, %v630
        %v633 = vcombine.high %v425, %v425
        %v635 = vunpack.c.l.s4 1983009808
        %v636 = vunpack.c.0.s8 %v635
        %v637 = vlaneseq
        %v638 = vshrl.u32 %v637, 7
        %v639 = vsub.s32 %v636, %v638
        %v640 = vrot.slane %v425, %v639
        %v642 = vunpack.c.l.s4 1983009808
        %v643 = vunpack.c.0.s8 %v642
        %v644 = vlaneseq
        %v645 = vshrl.u32 %v644, 7
        %v646 = vsub.s32 %v643, %v645
        %v647 = vrot.slane %v633, %v646
        %v648 = vcombine.high %v640, %v640
        %v649 = vcombine.high %v647, %v647
        %v650 = vcombine.high %v426, %v426
        %v652 = vunpack.c.l.s4 1983009808
        %v653 = vunpack.c.0.s8 %v652
        %v654 = vlaneseq
        %v655 = vshrl.u32 %v654, 7
        %v656 = vsub.s32 %v653, %v655
        %v657 = vrot.slane %v426, %v656
        %v659 = vunpack.c.l.s4 1983009808
        %v660 = vunpack.c.0.s8 %v659
        %v661 = vlaneseq
        %v662 = vshrl.u32 %v661, 7
        %v663 = vsub.s32 %v660, %v662
        %v664 = vrot.slane %v650, %v663
        %v665 = vcombine.high %v657, %v657
        %v666 = vcombine.high %v664, %v664
        %v667 = vcombine.high %v427, %v427
        %v669 = vunpack.c.l.s4 1983009808
        %v670 = vunpack.c.0.s8 %v669
        %v671 = vlaneseq
        %v672 = vshrl.u32 %v671, 7
        %v673 = vsub.s32 %v670, %v672
        %v674 = vrot.slane %v427, %v673
        %v676 = vunpack.c.l.s4 1983009808
        %v677 = vunpack.c.0.s8 %v676
        %v678 = vlaneseq
        %v679 = vshrl.u32 %v678, 7
        %v680 = vsub.s32 %v677, %v679
        %v681 = vrot.slane %v667, %v680
        %v682 = vcombine.high %v674, %v674
        %v683 = vcombine.high %v681, %v681
        %v684 = vcombine.high %v428, %v428
        %v686 = vunpack.c.l.s4 1983009808
        %v687 = vunpack.c.0.s8 %v686
        %v688 = vlaneseq
        %v689 = vshrl.u32 %v688, 7
        %v690 = vsub.s32 %v687, %v689
        %v691 = vrot.slane %v428, %v690
        %v693 = vunpack.c.l.s4 1983009808
        %v694 = vunpack.c.0.s8 %v693
        %v695 = vlaneseq
        %v696 = vshrl.u32 %v695, 7
        %v697 = vsub.s32 %v694, %v696
        %v698 = vrot.slane %v684, %v697
        %v699 = vcombine.high %v691, %v691
        %v700 = vcombine.high %v698, %v698
        %v701 = vcombine.high %v429, %v429
        %v703 = vunpack.c.l.s4 1983009808
        %v704 = vunpack.c.0.s8 %v703
        %v705 = vlaneseq
        %v706 = vshrl.u32 %v705, 7
        %v707 = vsub.s32 %v704, %v706
        %v708 = vrot.slane %v429, %v707
        %v710 = vunpack.c.l.s4 1983009808
        %v711 = vunpack.c.0.s8 %v710
        %v712 = vlaneseq
        %v713 = vshrl.u32 %v712, 7
        %v714 = vsub.s32 %v711, %v713
        %v715 = vrot.slane %v701, %v714
        %v716 = vcombine.high %v708, %v708
        %v717 = vcombine.high %v715, %v715
        %v718 = vcombine.high %v430, %v430
        %v720 = vunpack.c.l.s4 1983009808
        %v721 = vunpack.c.0.s8 %v720
        %v722 = vlaneseq
        %v723 = vshrl.u32 %v722, 7
        %v724 = vsub.s32 %v721, %v723
        %v725 = vrot.slane %v430, %v724
        %v727 = vunpack.c.l.s4 1983009808
        %v728 = vunpack.c.0.s8 %v727
        %v729 = vlaneseq
        %v730 = vshrl.u32 %v729, 7
        %v731 = vsub.s32 %v728, %v730
        %v732 = vrot.slane %v718, %v731
        %v733 = vcombine.high %v725, %v725
        %v734 = vcombine.high %v732, %v732
        %v735 = vcombine.high %v431, %v431
        %v737 = vunpack.c.l.s4 1983009808
        %v738 = vunpack.c.0.s8 %v737
        %v739 = vlaneseq
        %v740 = vshrl.u32 %v739, 7
        %v741 = vsub.s32 %v738, %v740
        %v742 = vrot.slane %v431, %v741
        %v744 = vunpack.c.l.s4 1983009808
        %v745 = vunpack.c.0.s8 %v744
        %v746 = vlaneseq
        %v747 = vshrl.u32 %v746, 7
        %v748 = vsub.s32 %v745, %v747
        %v749 = vrot.slane %v735, %v748
        %v750 = vcombine.high %v742, %v742
        %v751 = vcombine.high %v749, %v749
        %v752 = vcombine.high %v432, %v432
        %v754 = vunpack.c.l.s4 1983009808
        %v755 = vunpack.c.0.s8 %v754
        %v756 = vlaneseq
        %v757 = vshrl.u32 %v756, 7
        %v758 = vsub.s32 %v755, %v757
        %v759 = vrot.slane %v432, %v758
        %v761 = vunpack.c.l.s4 1983009808
        %v762 = vunpack.c.0.s8 %v761
        %v763 = vlaneseq
        %v764 = vshrl.u32 %v763, 7
        %v765 = vsub.s32 %v762, %v764
        %v766 = vrot.slane %v752, %v765
        %v767 = vcombine.high %v759, %v759
        %v768 = vcombine.high %v766, %v766
        %v769 = vcombine.high %v433, %v433
        %v771 = vunpack.c.l.s4 1983009808
        %v772 = vunpack.c.0.s8 %v771
        %v773 = vlaneseq
        %v774 = vshrl.u32 %v773, 7
        %v775 = vsub.s32 %v772, %v774
        %v776 = vrot.slane %v433, %v775
        %v778 = vunpack.c.l.s4 1983009808
        %v779 = vunpack.c.0.s8 %v778
        %v780 = vlaneseq
        %v781 = vshrl.u32 %v780, 7
        %v782 = vsub.s32 %v779, %v781
        %v783 = vrot.slane %v769, %v782
        %v784 = vcombine.high %v776, %v776
        %v785 = vcombine.high %v783, %v783
        %v786 = vcombine.high %v434, %v434
        %v788 = vunpack.c.l.s4 1983009808
        %v789 = vunpack.c.0.s8 %v788
        %v790 = vlaneseq
        %v791 = vshrl.u32 %v790, 7
        %v792 = vsub.s32 %v789, %v791
        %v793 = vrot.slane %v434, %v792
        %v795 = vunpack.c.l.s4 1983009808
        %v796 = vunpack.c.0.s8 %v795
        %v797 = vlaneseq
        %v798 = vshrl.u32 %v797, 7
        %v799 = vsub.s32 %v796, %v798
        %v800 = vrot.slane %v786, %v799
        %v801 = vcombine.high %v793, %v793
        %v802 = vcombine.high %v800, %v800
        %v803 = vcombine.high %v435, %v435
        %v805 = vunpack.c.l.s4 1983009808
        %v806 = vunpack.c.0.s8 %v805
        %v807 = vlaneseq
        %v808 = vshrl.u32 %v807, 7
        %v809 = vsub.s32 %v806, %v808
        %v810 = vrot.slane %v435, %v809
        %v812 = vunpack.c.l.s4 1983009808
        %v813 = vunpack.c.0.s8 %v812
        %v814 = vlaneseq
        %v815 = vshrl.u32 %v814, 7
        %v816 = vsub.s32 %v813, %v815
        %v817 = vrot.slane %v803, %v816
        %v818 = vcombine.high %v810, %v810
        %v819 = vcombine.high %v817, %v817
        %v820 = vcombine.high %v436, %v436
        %v822 = vunpack.c.l.s4 1983009808
        %v823 = vunpack.c.0.s8 %v822
        %v824 = vlaneseq
        %v825 = vshrl.u32 %v824, 7
        %v826 = vsub.s32 %v823, %v825
        %v827 = vrot.slane %v436, %v826
        %v829 = vunpack.c.l.s4 1983009808
        %v830 = vunpack.c.0.s8 %v829
        %v831 = vlaneseq
        %v832 = vshrl.u32 %v831, 7
        %v833 = vsub.s32 %v830, %v832
        %v834 = vrot.slane %v820, %v833
        %v835 = vcombine.high %v827, %v827
        %v836 = vcombine.high %v834, %v834
        %v837 = vcombine.high %v437, %v437
        %v839 = vunpack.c.l.s4 1983009808
        %v840 = vunpack.c.0.s8 %v839
        %v841 = vlaneseq
        %v842 = vshrl.u32 %v841, 7
        %v843 = vsub.s32 %v840, %v842
        %v844 = vrot.slane %v437, %v843
        %v846 = vunpack.c.l.s4 1983009808
        %v847 = vunpack.c.0.s8 %v846
        %v848 = vlaneseq
        %v849 = vshrl.u32 %v848, 7
        %v850 = vsub.s32 %v847, %v849
        %v851 = vrot.slane %v837, %v850
        %v852 = vcombine.high %v844, %v844
        %v853 = vcombine.high %v851, %v851
        %v854 = vcombine.high %v438, %v438
        %v856 = vunpack.c.l.s4 1983009808
        %v857 = vunpack.c.0.s8 %v856
        %v858 = vlaneseq
        %v859 = vshrl.u32 %v858, 7
        %v860 = vsub.s32 %v857, %v859
        %v861 = vrot.slane %v438, %v860
        %v863 = vunpack.c.l.s4 1983009808
        %v864 = vunpack.c.0.s8 %v863
        %v865 = vlaneseq
        %v866 = vshrl.u32 %v865, 7
        %v867 = vsub.s32 %v864, %v866
        %v868 = vrot.slane %v854, %v867
        %v869 = vcombine.high %v861, %v861
        %v870 = vcombine.high %v868, %v868
        %v871 = vcombine.high %v439, %v439
        %v873 = vunpack.c.l.s4 1983009808
        %v874 = vunpack.c.0.s8 %v873
        %v875 = vlaneseq
        %v876 = vshrl.u32 %v875, 7
        %v877 = vsub.s32 %v874, %v876
        %v878 = vrot.slane %v439, %v877
        %v880 = vunpack.c.l.s4 1983009808
        %v881 = vunpack.c.0.s8 %v880
        %v882 = vlaneseq
        %v883 = vshrl.u32 %v882, 7
        %v884 = vsub.s32 %v881, %v883
        %v885 = vrot.slane %v871, %v884
        %v886 = vcombine.high %v878, %v878
        %v887 = vcombine.high %v885, %v885
        %v888 = vcombine.high %v440, %v440
        %v890 = vunpack.c.l.s4 1983009808
        %v891 = vunpack.c.0.s8 %v890
        %v892 = vlaneseq
        %v893 = vshrl.u32 %v892, 7
        %v894 = vsub.s32 %v891, %v893
        %v895 = vrot.slane %v440, %v894
        %v897 = vunpack.c.l.s4 1983009808
        %v898 = vunpack.c.0.s8 %v897
        %v899 = vlaneseq
        %v900 = vshrl.u32 %v899, 7
        %v901 = vsub.s32 %v898, %v900
        %v902 = vrot.slane %v888, %v901
        %v903 = vcombine.high %v895, %v895
        %v904 = vcombine.high %v902, %v902
        %v905 = vcombine.high %v441, %v441
        %v907 = vunpack.c.l.s4 1983009808
        %v908 = vunpack.c.0.s8 %v907
        %v909 = vlaneseq
        %v910 = vshrl.u32 %v909, 7
        %v911 = vsub.s32 %v908, %v910
        %v912 = vrot.slane %v441, %v911
        %v914 = vunpack.c.l.s4 1983009808
        %v915 = vunpack.c.0.s8 %v914
        %v916 = vlaneseq
        %v917 = vshrl.u32 %v916, 7
        %v918 = vsub.s32 %v915, %v917
        %v919 = vrot.slane %v905, %v918
        %v920 = vcombine.high %v912, %v912
        %v921 = vcombine.high %v919, %v919
        %v922 = vcombine.high %v442, %v442
        %v924 = vunpack.c.l.s4 1983009808
        %v925 = vunpack.c.0.s8 %v924
        %v926 = vlaneseq
        %v927 = vshrl.u32 %v926, 7
        %v928 = vsub.s32 %v925, %v927
        %v929 = vrot.slane %v442, %v928
        %v931 = vunpack.c.l.s4 1983009808
        %v932 = vunpack.c.0.s8 %v931
        %v933 = vlaneseq
        %v934 = vshrl.u32 %v933, 7
        %v935 = vsub.s32 %v932, %v934
        %v936 = vrot.slane %v922, %v935
        %v937 = vcombine.high %v929, %v929
        %v938 = vcombine.high %v936, %v936
        %v939 = vcombine.high %v443, %v443
        %v941 = vunpack.c.l.s4 1983009808
        %v942 = vunpack.c.0.s8 %v941
        %v943 = vlaneseq
        %v944 = vshrl.u32 %v943, 7
        %v945 = vsub.s32 %v942, %v944
        %v946 = vrot.slane %v443, %v945
        %v948 = vunpack.c.l.s4 1983009808
        %v949 = vunpack.c.0.s8 %v948
        %v950 = vlaneseq
        %v951 = vshrl.u32 %v950, 7
        %v952 = vsub.s32 %v949, %v951
        %v953 = vrot.slane %v939, %v952
        %v954 = vcombine.high %v946, %v946
        %v955 = vcombine.high %v953, %v953
        %v956 = vcombine.high %v444, %v444
        %v958 = vunpack.c.l.s4 1983009808
        %v959 = vunpack.c.0.s8 %v958
        %v960 = vlaneseq
        %v961 = vshrl.u32 %v960, 7
        %v962 = vsub.s32 %v959, %v961
        %v963 = vrot.slane %v444, %v962
        %v965 = vunpack.c.l.s4 1983009808
        %v966 = vunpack.c.0.s8 %v965
        %v967 = vlaneseq
        %v968 = vshrl.u32 %v967, 7
        %v969 = vsub.s32 %v966, %v968
        %v970 = vrot.slane %v956, %v969
        %v971 = vcombine.high %v963, %v963
        %v972 = vcombine.high %v970, %v970
        %v973 = vcombine.high %v445, %v445
        %v975 = vunpack.c.l.s4 1983009808
        %v976 = vunpack.c.0.s8 %v975
        %v977 = vlaneseq
        %v978 = vshrl.u32 %v977, 7
        %v979 = vsub.s32 %v976, %v978
        %v980 = vrot.slane %v445, %v979
        %v982 = vunpack.c.l.s4 1983009808
        %v983 = vunpack.c.0.s8 %v982
        %v984 = vlaneseq
        %v985 = vshrl.u32 %v984, 7
        %v986 = vsub.s32 %v983, %v985
        %v987 = vrot.slane %v973, %v986
        %v988 = vcombine.high %v980, %v980
        %v989 = vcombine.high %v987, %v987
        %v990 = vcombine.high %v446, %v446
        %v992 = vunpack.c.l.s4 1983009808
        %v993 = vunpack.c.0.s8 %v992
        %v994 = vlaneseq
        %v995 = vshrl.u32 %v994, 7
        %v996 = vsub.s32 %v993, %v995
        %v997 = vrot.slane %v446, %v996
        %v999 = vunpack.c.l.s4 1983009808
        %v1000 = vunpack.c.0.s8 %v999
        %v1001 = vlaneseq
        %v1002 = vshrl.u32 %v1001, 7
        %v1003 = vsub.s32 %v1000, %v1002
        %v1004 = vrot.slane %v990, %v1003
        %v1005 = vcombine.high %v997, %v997
        %v1006 = vcombine.high %v1004, %v1004
        %v1007 = vcombine.high %v447, %v447
        %v1009 = vunpack.c.l.s4 1983009808
        %v1010 = vunpack.c.0.s8 %v1009
        %v1011 = vlaneseq
        %v1012 = vshrl.u32 %v1011, 7
        %v1013 = vsub.s32 %v1010, %v1012
        %v1014 = vrot.slane %v447, %v1013
        %v1016 = vunpack.c.l.s4 1983009808
        %v1017 = vunpack.c.0.s8 %v1016
        %v1018 = vlaneseq
        %v1019 = vshrl.u32 %v1018, 7
        %v1020 = vsub.s32 %v1017, %v1019
        %v1021 = vrot.slane %v1007, %v1020
        %v1022 = vcombine.high %v1014, %v1014
        %v1023 = vcombine.high %v1021, %v1021
        %v1024 = vcombine.high %v448, %v448
        %v1026 = vunpack.c.l.s4 1983009808
        %v1027 = vunpack.c.0.s8 %v1026
        %v1028 = vlaneseq
        %v1029 = vshrl.u32 %v1028, 7
        %v1030 = vsub.s32 %v1027, %v1029
        %v1031 = vrot.slane %v448, %v1030
        %v1033 = vunpack.c.l.s4 1983009808
        %v1034 = vunpack.c.0.s8 %v1033
        %v1035 = vlaneseq
        %v1036 = vshrl.u32 %v1035, 7
        %v1037 = vsub.s32 %v1034, %v1036
        %v1038 = vrot.slane %v1024, %v1037
        %v1039 = vcombine.high %v1031, %v1031
        %v1040 = vcombine.high %v1038, %v1038
        %v1041 = vcombine.high %v449, %v449
        %v1043 = vunpack.c.l.s4 1983009808
        %v1044 = vunpack.c.0.s8 %v1043
        %v1045 = vlaneseq
        %v1046 = vshrl.u32 %v1045, 7
        %v1047 = vsub.s32 %v1044, %v1046
        %v1048 = vrot.slane %v449, %v1047
        %v1050 = vunpack.c.l.s4 1983009808
        %v1051 = vunpack.c.0.s8 %v1050
        %v1052 = vlaneseq
        %v1053 = vshrl.u32 %v1052, 7
        %v1054 = vsub.s32 %v1051, %v1053
        %v1055 = vrot.slane %v1041, %v1054
        %v1056 = vcombine.high %v1048, %v1048
        %v1057 = vcombine.high %v1055, %v1055
        %vm1186 = vcmask 1041408
        %v1187 = vsel %vm1186, %v521, -inf
        %v1188 = vrot.slane %v1187, 4
        %v1189 = vmax.f32 %v1187, %v1188
        %v1190 = vrot.slane %v1189, 2
        %v1191 = vmax.f32 %v1189, %v1190
        %v1192 = vrot.slane %v1191, 1
        %v1193 = vmax.f32 %v1191, %v1192
        %v1194 = vsel %vm1186, %v529, -inf
        %v1195 = vrot.slane %v1194, 4
        %v1196 = vmax.f32 %v1194, %v1195
        %v1197 = vrot.slane %v1196, 2
        %v1198 = vmax.f32 %v1196, %v1197
        %v1199 = vrot.slane %v1198, 1
        %v1200 = vmax.f32 %v1198, %v1199
        %v1201 = vsel %vm1186, %v528, -inf
        %v1202 = vrot.slane %v1201, 4
        %v1203 = vmax.f32 %v1201, %v1202
        %v1204 = vrot.slane %v1203, 2
        %v1205 = vmax.f32 %v1203, %v1204
        %v1206 = vrot.slane %v1205, 1
        %v1207 = vmax.f32 %v1205, %v1206
        %v1208 = vsel %vm1186, %v530, -inf
        %v1209 = vrot.slane %v1208, 4
        %v1210 = vmax.f32 %v1208, %v1209
        %v1211 = vrot.slane %v1210, 2
        %v1212 = vmax.f32 %v1210, %v1211
        %v1213 = vrot.slane %v1212, 1
        %v1214 = vmax.f32 %v1212, %v1213
        %v1215 = vsel %vm1186, %v538, -inf
        %v1216 = vrot.slane %v1215, 4
        %v1217 = vmax.f32 %v1215, %v1216
        %v1218 = vrot.slane %v1217, 2
        %v1219 = vmax.f32 %v1217, %v1218
        %v1220 = vrot.slane %v1219, 1
        %v1221 = vmax.f32 %v1219, %v1220
        %v1222 = vsel %vm1186, %v546, -inf
        %v1223 = vrot.slane %v1222, 4
        %v1224 = vmax.f32 %v1222, %v1223
        %v1225 = vrot.slane %v1224, 2
        %v1226 = vmax.f32 %v1224, %v1225
        %v1227 = vrot.slane %v1226, 1
        %v1228 = vmax.f32 %v1226, %v1227
        %v1229 = vsel %vm1186, %v545, -inf
        %v1230 = vrot.slane %v1229, 4
        %v1231 = vmax.f32 %v1229, %v1230
        %v1232 = vrot.slane %v1231, 2
        %v1233 = vmax.f32 %v1231, %v1232
        %v1234 = vrot.slane %v1233, 1
        %v1235 = vmax.f32 %v1233, %v1234
        %v1236 = vsel %vm1186, %v547, -inf
        %v1237 = vrot.slane %v1236, 4
        %v1238 = vmax.f32 %v1236, %v1237
        %v1239 = vrot.slane %v1238, 2
        %v1240 = vmax.f32 %v1238, %v1239
        %v1241 = vrot.slane %v1240, 1
        %v1242 = vmax.f32 %v1240, %v1241
        %v1243 = vsel %vm1186, %v555, -inf
        %v1244 = vrot.slane %v1243, 4
        %v1245 = vmax.f32 %v1243, %v1244
        %v1246 = vrot.slane %v1245, 2
        %v1247 = vmax.f32 %v1245, %v1246
        %v1248 = vrot.slane %v1247, 1
        %v1249 = vmax.f32 %v1247, %v1248
        %v1250 = vsel %vm1186, %v563, -inf
        %v1251 = vrot.slane %v1250, 4
        %v1252 = vmax.f32 %v1250, %v1251
        %v1253 = vrot.slane %v1252, 2
        %v1254 = vmax.f32 %v1252, %v1253
        %v1255 = vrot.slane %v1254, 1
        %v1256 = vmax.f32 %v1254, %v1255
        %v1257 = vsel %vm1186, %v562, -inf
        %v1258 = vrot.slane %v1257, 4
        %v1259 = vmax.f32 %v1257, %v1258
        %v1260 = vrot.slane %v1259, 2
        %v1261 = vmax.f32 %v1259, %v1260
        %v1262 = vrot.slane %v1261, 1
        %v1263 = vmax.f32 %v1261, %v1262
        %v1264 = vsel %vm1186, %v564, -inf
        %v1265 = vrot.slane %v1264, 4
        %v1266 = vmax.f32 %v1264, %v1265
        %v1267 = vrot.slane %v1266, 2
        %v1268 = vmax.f32 %v1266, %v1267
        %v1269 = vrot.slane %v1268, 1
        %v1270 = vmax.f32 %v1268, %v1269
        %v1271 = vsel %vm1186, %v572, -inf
        %v1272 = vrot.slane %v1271, 4
        %v1273 = vmax.f32 %v1271, %v1272
        %v1274 = vrot.slane %v1273, 2
        %v1275 = vmax.f32 %v1273, %v1274
        %v1276 = vrot.slane %v1275, 1
        %v1277 = vmax.f32 %v1275, %v1276
        %v1278 = vsel %vm1186, %v580, -inf
        %v1279 = vrot.slane %v1278, 4
        %v1280 = vmax.f32 %v1278, %v1279
        %v1281 = vrot.slane %v1280, 2
        %v1282 = vmax.f32 %v1280, %v1281
        %v1283 = vrot.slane %v1282, 1
        %v1284 = vmax.f32 %v1282, %v1283
        %v1285 = vsel %vm1186, %v579, -inf
        %v1286 = vrot.slane %v1285, 4
        %v1287 = vmax.f32 %v1285, %v1286
        %v1288 = vrot.slane %v1287, 2
        %v1289 = vmax.f32 %v1287, %v1288
        %v1290 = vrot.slane %v1289, 1
        %v1291 = vmax.f32 %v1289, %v1290
        %v1292 = vsel %vm1186, %v581, -inf
        %v1293 = vrot.slane %v1292, 4
        %v1294 = vmax.f32 %v1292, %v1293
        %v1295 = vrot.slane %v1294, 2
        %v1296 = vmax.f32 %v1294, %v1295
        %v1297 = vrot.slane %v1296, 1
        %v1298 = vmax.f32 %v1296, %v1297
        %v1299 = vsel %vm1186, %v589, -inf
        %v1300 = vrot.slane %v1299, 4
        %v1301 = vmax.f32 %v1299, %v1300
        %v1302 = vrot.slane %v1301, 2
        %v1303 = vmax.f32 %v1301, %v1302
        %v1304 = vrot.slane %v1303, 1
        %v1305 = vmax.f32 %v1303, %v1304
        %v1306 = vsel %vm1186, %v597, -inf
        %v1307 = vrot.slane %v1306, 4
        %v1308 = vmax.f32 %v1306, %v1307
        %v1309 = vrot.slane %v1308, 2
        %v1310 = vmax.f32 %v1308, %v1309
        %v1311 = vrot.slane %v1310, 1
        %v1312 = vmax.f32 %v1310, %v1311
        %v1313 = vsel %vm1186, %v596, -inf
        %v1314 = vrot.slane %v1313, 4
        %v1315 = vmax.f32 %v1313, %v1314
        %v1316 = vrot.slane %v1315, 2
        %v1317 = vmax.f32 %v1315, %v1316
        %v1318 = vrot.slane %v1317, 1
        %v1319 = vmax.f32 %v1317, %v1318
        %v1320 = vsel %vm1186, %v598, -inf
        %v1321 = vrot.slane %v1320, 4
        %v1322 = vmax.f32 %v1320, %v1321
        %v1323 = vrot.slane %v1322, 2
        %v1324 = vmax.f32 %v1322, %v1323
        %v1325 = vrot.slane %v1324, 1
        %v1326 = vmax.f32 %v1324, %v1325
        %v1327 = vsel %vm1186, %v606, -inf
        %v1328 = vrot.slane %v1327, 4
        %v1329 = vmax.f32 %v1327, %v1328
        %v1330 = vrot.slane %v1329, 2
        %v1331 = vmax.f32 %v1329, %v1330
        %v1332 = vrot.slane %v1331, 1
        %v1333 = vmax.f32 %v1331, %v1332
        %v1334 = vsel %vm1186, %v614, -inf
        %v1335 = vrot.slane %v1334, 4
        %v1336 = vmax.f32 %v1334, %v1335
        %v1337 = vrot.slane %v1336, 2
        %v1338 = vmax.f32 %v1336, %v1337
        %v1339 = vrot.slane %v1338, 1
        %v1340 = vmax.f32 %v1338, %v1339
        %v1341 = vsel %vm1186, %v613, -inf
        %v1342 = vrot.slane %v1341, 4
        %v1343 = vmax.f32 %v1341, %v1342
        %v1344 = vrot.slane %v1343, 2
        %v1345 = vmax.f32 %v1343, %v1344
        %v1346 = vrot.slane %v1345, 1
        %v1347 = vmax.f32 %v1345, %v1346
        %v1348 = vsel %vm1186, %v615, -inf
        %v1349 = vrot.slane %v1348, 4
        %v1350 = vmax.f32 %v1348, %v1349
        %v1351 = vrot.slane %v1350, 2
        %v1352 = vmax.f32 %v1350, %v1351
        %v1353 = vrot.slane %v1352, 1
        %v1354 = vmax.f32 %v1352, %v1353
        %v1355 = vsel %vm1186, %v623, -inf
        %v1356 = vrot.slane %v1355, 4
        %v1357 = vmax.f32 %v1355, %v1356
        %v1358 = vrot.slane %v1357, 2
        %v1359 = vmax.f32 %v1357, %v1358
        %v1360 = vrot.slane %v1359, 1
        %v1361 = vmax.f32 %v1359, %v1360
        %v1362 = vsel %vm1186, %v631, -inf
        %v1363 = vrot.slane %v1362, 4
        %v1364 = vmax.f32 %v1362, %v1363
        %v1365 = vrot.slane %v1364, 2
        %v1366 = vmax.f32 %v1364, %v1365
        %v1367 = vrot.slane %v1366, 1
        %v1368 = vmax.f32 %v1366, %v1367
        %v1369 = vsel %vm1186, %v630, -inf
        %v1370 = vrot.slane %v1369, 4
        %v1371 = vmax.f32 %v1369, %v1370
        %v1372 = vrot.slane %v1371, 2
        %v1373 = vmax.f32 %v1371, %v1372
        %v1374 = vrot.slane %v1373, 1
        %v1375 = vmax.f32 %v1373, %v1374
        %v1376 = vsel %vm1186, %v632, -inf
        %v1377 = vrot.slane %v1376, 4
        %v1378 = vmax.f32 %v1376, %v1377
        %v1379 = vrot.slane %v1378, 2
        %v1380 = vmax.f32 %v1378, %v1379
        %v1381 = vrot.slane %v1380, 1
        %v1382 = vmax.f32 %v1380, %v1381
        %v1383 = vsel %vm1186, %v640, -inf
        %v1384 = vrot.slane %v1383, 4
        %v1385 = vmax.f32 %v1383, %v1384
        %v1386 = vrot.slane %v1385, 2
        %v1387 = vmax.f32 %v1385, %v1386
        %v1388 = vrot.slane %v1387, 1
        %v1389 = vmax.f32 %v1387, %v1388
        %v1390 = vsel %vm1186, %v648, -inf
        %v1391 = vrot.slane %v1390, 4
        %v1392 = vmax.f32 %v1390, %v1391
        %v1393 = vrot.slane %v1392, 2
        %v1394 = vmax.f32 %v1392, %v1393
        %v1395 = vrot.slane %v1394, 1
        %v1396 = vmax.f32 %v1394, %v1395
        %v1397 = vsel %vm1186, %v647, -inf
        %v1398 = vrot.slane %v1397, 4
        %v1399 = vmax.f32 %v1397, %v1398
        %v1400 = vrot.slane %v1399, 2
        %v1401 = vmax.f32 %v1399, %v1400
        %v1402 = vrot.slane %v1401, 1
        %v1403 = vmax.f32 %v1401, %v1402
        %v1404 = vsel %vm1186, %v649, -inf
        %v1405 = vrot.slane %v1404, 4
        %v1406 = vmax.f32 %v1404, %v1405
        %v1407 = vrot.slane %v1406, 2
        %v1408 = vmax.f32 %v1406, %v1407
        %v1409 = vrot.slane %v1408, 1
        %v1410 = vmax.f32 %v1408, %v1409
        %v1411 = vsel %vm1186, %v657, -inf
        %v1412 = vrot.slane %v1411, 4
        %v1413 = vmax.f32 %v1411, %v1412
        %v1414 = vrot.slane %v1413, 2
        %v1415 = vmax.f32 %v1413, %v1414
        %v1416 = vrot.slane %v1415, 1
        %v1417 = vmax.f32 %v1415, %v1416
        %v1418 = vsel %vm1186, %v665, -inf
        %v1419 = vrot.slane %v1418, 4
        %v1420 = vmax.f32 %v1418, %v1419
        %v1421 = vrot.slane %v1420, 2
        %v1422 = vmax.f32 %v1420, %v1421
        %v1423 = vrot.slane %v1422, 1
        %v1424 = vmax.f32 %v1422, %v1423
        %v1425 = vsel %vm1186, %v664, -inf
        %v1426 = vrot.slane %v1425, 4
        %v1427 = vmax.f32 %v1425, %v1426
        %v1428 = vrot.slane %v1427, 2
        %v1429 = vmax.f32 %v1427, %v1428
        %v1430 = vrot.slane %v1429, 1
        %v1431 = vmax.f32 %v1429, %v1430
        %v1432 = vsel %vm1186, %v666, -inf
        %v1433 = vrot.slane %v1432, 4
        %v1434 = vmax.f32 %v1432, %v1433
        %v1435 = vrot.slane %v1434, 2
        %v1436 = vmax.f32 %v1434, %v1435
        %v1437 = vrot.slane %v1436, 1
        %v1438 = vmax.f32 %v1436, %v1437
        %v1439 = vsel %vm1186, %v674, -inf
        %v1440 = vrot.slane %v1439, 4
        %v1441 = vmax.f32 %v1439, %v1440
        %v1442 = vrot.slane %v1441, 2
        %v1443 = vmax.f32 %v1441, %v1442
        %v1444 = vrot.slane %v1443, 1
        %v1445 = vmax.f32 %v1443, %v1444
        %v1446 = vsel %vm1186, %v682, -inf
        %v1447 = vrot.slane %v1446, 4
        %v1448 = vmax.f32 %v1446, %v1447
        %v1449 = vrot.slane %v1448, 2
        %v1450 = vmax.f32 %v1448, %v1449
        %v1451 = vrot.slane %v1450, 1
        %v1452 = vmax.f32 %v1450, %v1451
        %v1453 = vsel %vm1186, %v681, -inf
        %v1454 = vrot.slane %v1453, 4
        %v1455 = vmax.f32 %v1453, %v1454
        %v1456 = vrot.slane %v1455, 2
        %v1457 = vmax.f32 %v1455, %v1456
        %v1458 = vrot.slane %v1457, 1
        %v1459 = vmax.f32 %v1457, %v1458
        %v1460 = vsel %vm1186, %v683, -inf
        %v1461 = vrot.slane %v1460, 4
        %v1462 = vmax.f32 %v1460, %v1461
        %v1463 = vrot.slane %v1462, 2
        %v1464 = vmax.f32 %v1462, %v1463
        %v1465 = vrot.slane %v1464, 1
        %v1466 = vmax.f32 %v1464, %v1465
        %v1467 = vsel %vm1186, %v691, -inf
        %v1468 = vrot.slane %v1467, 4
        %v1469 = vmax.f32 %v1467, %v1468
        %v1470 = vrot.slane %v1469, 2
        %v1471 = vmax.f32 %v1469, %v1470
        %v1472 = vrot.slane %v1471, 1
        %v1473 = vmax.f32 %v1471, %v1472
        %v1474 = vsel %vm1186, %v699, -inf
        %v1475 = vrot.slane %v1474, 4
        %v1476 = vmax.f32 %v1474, %v1475
        %v1477 = vrot.slane %v1476, 2
        %v1478 = vmax.f32 %v1476, %v1477
        %v1479 = vrot.slane %v1478, 1
        %v1480 = vmax.f32 %v1478, %v1479
        %v1481 = vsel %vm1186, %v698, -inf
        %v1482 = vrot.slane %v1481, 4
        %v1483 = vmax.f32 %v1481, %v1482
        %v1484 = vrot.slane %v1483, 2
        %v1485 = vmax.f32 %v1483, %v1484
        %v1486 = vrot.slane %v1485, 1
        %v1487 = vmax.f32 %v1485, %v1486
        %v1488 = vsel %vm1186, %v700, -inf
        %v1489 = vrot.slane %v1488, 4
        %v1490 = vmax.f32 %v1488, %v1489
        %v1491 = vrot.slane %v1490, 2
        %v1492 = vmax.f32 %v1490, %v1491
        %v1493 = vrot.slane %v1492, 1
        %v1494 = vmax.f32 %v1492, %v1493
        %v1495 = vsel %vm1186, %v708, -inf
        %v1496 = vrot.slane %v1495, 4
        %v1497 = vmax.f32 %v1495, %v1496
        %v1498 = vrot.slane %v1497, 2
        %v1499 = vmax.f32 %v1497, %v1498
        %v1500 = vrot.slane %v1499, 1
        %v1501 = vmax.f32 %v1499, %v1500
        %v1502 = vsel %vm1186, %v716, -inf
        %v1503 = vrot.slane %v1502, 4
        %v1504 = vmax.f32 %v1502, %v1503
        %v1505 = vrot.slane %v1504, 2
        %v1506 = vmax.f32 %v1504, %v1505
        %v1507 = vrot.slane %v1506, 1
        %v1508 = vmax.f32 %v1506, %v1507
        %v1509 = vsel %vm1186, %v715, -inf
        %v1510 = vrot.slane %v1509, 4
        %v1511 = vmax.f32 %v1509, %v1510
        %v1512 = vrot.slane %v1511, 2
        %v1513 = vmax.f32 %v1511, %v1512
        %v1514 = vrot.slane %v1513, 1
        %v1515 = vmax.f32 %v1513, %v1514
        %v1516 = vsel %vm1186, %v717, -inf
        %v1517 = vrot.slane %v1516, 4
        %v1518 = vmax.f32 %v1516, %v1517
        %v1519 = vrot.slane %v1518, 2
        %v1520 = vmax.f32 %v1518, %v1519
        %v1521 = vrot.slane %v1520, 1
        %v1522 = vmax.f32 %v1520, %v1521
        %v1523 = vsel %vm1186, %v725, -inf
        %v1524 = vrot.slane %v1523, 4
        %v1525 = vmax.f32 %v1523, %v1524
        %v1526 = vrot.slane %v1525, 2
        %v1527 = vmax.f32 %v1525, %v1526
        %v1528 = vrot.slane %v1527, 1
        %v1529 = vmax.f32 %v1527, %v1528
        %v1530 = vsel %vm1186, %v733, -inf
        %v1531 = vrot.slane %v1530, 4
        %v1532 = vmax.f32 %v1530, %v1531
        %v1533 = vrot.slane %v1532, 2
        %v1534 = vmax.f32 %v1532, %v1533
        %v1535 = vrot.slane %v1534, 1
        %v1536 = vmax.f32 %v1534, %v1535
        %v1537 = vsel %vm1186, %v732, -inf
        %v1538 = vrot.slane %v1537, 4
        %v1539 = vmax.f32 %v1537, %v1538
        %v1540 = vrot.slane %v1539, 2
        %v1541 = vmax.f32 %v1539, %v1540
        %v1542 = vrot.slane %v1541, 1
        %v1543 = vmax.f32 %v1541, %v1542
        %v1544 = vsel %vm1186, %v734, -inf
        %v1545 = vrot.slane %v1544, 4
        %v1546 = vmax.f32 %v1544, %v1545
        %v1547 = vrot.slane %v1546, 2
        %v1548 = vmax.f32 %v1546, %v1547
        %v1549 = vrot.slane %v1548, 1
        %v1550 = vmax.f32 %v1548, %v1549
        %v1551 = vsel %vm1186, %v742, -inf
        %v1552 = vrot.slane %v1551, 4
        %v1553 = vmax.f32 %v1551, %v1552
        %v1554 = vrot.slane %v1553, 2
        %v1555 = vmax.f32 %v1553, %v1554
        %v1556 = vrot.slane %v1555, 1
        %v1557 = vmax.f32 %v1555, %v1556
        %v1558 = vsel %vm1186, %v750, -inf
        %v1559 = vrot.slane %v1558, 4
        %v1560 = vmax.f32 %v1558, %v1559
        %v1561 = vrot.slane %v1560, 2
        %v1562 = vmax.f32 %v1560, %v1561
        %v1563 = vrot.slane %v1562, 1
        %v1564 = vmax.f32 %v1562, %v1563
        %v1565 = vsel %vm1186, %v749, -inf
        %v1566 = vrot.slane %v1565, 4
        %v1567 = vmax.f32 %v1565, %v1566
        %v1568 = vrot.slane %v1567, 2
        %v1569 = vmax.f32 %v1567, %v1568
        %v1570 = vrot.slane %v1569, 1
        %v1571 = vmax.f32 %v1569, %v1570
        %v1572 = vsel %vm1186, %v751, -inf
        %v1573 = vrot.slane %v1572, 4
        %v1574 = vmax.f32 %v1572, %v1573
        %v1575 = vrot.slane %v1574, 2
        %v1576 = vmax.f32 %v1574, %v1575
        %v1577 = vrot.slane %v1576, 1
        %v1578 = vmax.f32 %v1576, %v1577
        %v1579 = vsel %vm1186, %v759, -inf
        %v1580 = vrot.slane %v1579, 4
        %v1581 = vmax.f32 %v1579, %v1580
        %v1582 = vrot.slane %v1581, 2
        %v1583 = vmax.f32 %v1581, %v1582
        %v1584 = vrot.slane %v1583, 1
        %v1585 = vmax.f32 %v1583, %v1584
        %v1586 = vsel %vm1186, %v767, -inf
        %v1587 = vrot.slane %v1586, 4
        %v1588 = vmax.f32 %v1586, %v1587
        %v1589 = vrot.slane %v1588, 2
        %v1590 = vmax.f32 %v1588, %v1589
        %v1591 = vrot.slane %v1590, 1
        %v1592 = vmax.f32 %v1590, %v1591
        %v1593 = vsel %vm1186, %v766, -inf
        %v1594 = vrot.slane %v1593, 4
        %v1595 = vmax.f32 %v1593, %v1594
        %v1596 = vrot.slane %v1595, 2
        %v1597 = vmax.f32 %v1595, %v1596
        %v1598 = vrot.slane %v1597, 1
        %v1599 = vmax.f32 %v1597, %v1598
        %v1600 = vsel %vm1186, %v768, -inf
        %v1601 = vrot.slane %v1600, 4
        %v1602 = vmax.f32 %v1600, %v1601
        %v1603 = vrot.slane %v1602, 2
        %v1604 = vmax.f32 %v1602, %v1603
        %v1605 = vrot.slane %v1604, 1
        %v1606 = vmax.f32 %v1604, %v1605
        %v1607 = vsel %vm1186, %v776, -inf
        %v1608 = vrot.slane %v1607, 4
        %v1609 = vmax.f32 %v1607, %v1608
        %v1610 = vrot.slane %v1609, 2
        %v1611 = vmax.f32 %v1609, %v1610
        %v1612 = vrot.slane %v1611, 1
        %v1613 = vmax.f32 %v1611, %v1612
        %v1614 = vsel %vm1186, %v784, -inf
        %v1615 = vrot.slane %v1614, 4
        %v1616 = vmax.f32 %v1614, %v1615
        %v1617 = vrot.slane %v1616, 2
        %v1618 = vmax.f32 %v1616, %v1617
        %v1619 = vrot.slane %v1618, 1
        %v1620 = vmax.f32 %v1618, %v1619
        %v1621 = vsel %vm1186, %v783, -inf
        %v1622 = vrot.slane %v1621, 4
        %v1623 = vmax.f32 %v1621, %v1622
        %v1624 = vrot.slane %v1623, 2
        %v1625 = vmax.f32 %v1623, %v1624
        %v1626 = vrot.slane %v1625, 1
        %v1627 = vmax.f32 %v1625, %v1626
        %v1628 = vsel %vm1186, %v785, -inf
        %v1629 = vrot.slane %v1628, 4
        %v1630 = vmax.f32 %v1628, %v1629
        %v1631 = vrot.slane %v1630, 2
        %v1632 = vmax.f32 %v1630, %v1631
        %v1633 = vrot.slane %v1632, 1
        %v1634 = vmax.f32 %v1632, %v1633
        %v1635 = vsel %vm1186, %v793, -inf
        %v1636 = vrot.slane %v1635, 4
        %v1637 = vmax.f32 %v1635, %v1636
        %v1638 = vrot.slane %v1637, 2
        %v1639 = vmax.f32 %v1637, %v1638
        %v1640 = vrot.slane %v1639, 1
        %v1641 = vmax.f32 %v1639, %v1640
        %v1642 = vsel %vm1186, %v801, -inf
        %v1643 = vrot.slane %v1642, 4
        %v1644 = vmax.f32 %v1642, %v1643
        %v1645 = vrot.slane %v1644, 2
        %v1646 = vmax.f32 %v1644, %v1645
        %v1647 = vrot.slane %v1646, 1
        %v1648 = vmax.f32 %v1646, %v1647
        %v1649 = vsel %vm1186, %v800, -inf
        %v1650 = vrot.slane %v1649, 4
        %v1651 = vmax.f32 %v1649, %v1650
        %v1652 = vrot.slane %v1651, 2
        %v1653 = vmax.f32 %v1651, %v1652
        %v1654 = vrot.slane %v1653, 1
        %v1655 = vmax.f32 %v1653, %v1654
        %v1656 = vsel %vm1186, %v802, -inf
        %v1657 = vrot.slane %v1656, 4
        %v1658 = vmax.f32 %v1656, %v1657
        %v1659 = vrot.slane %v1658, 2
        %v1660 = vmax.f32 %v1658, %v1659
        %v1661 = vrot.slane %v1660, 1
        %v1662 = vmax.f32 %v1660, %v1661
        %v1663 = vsel %vm1186, %v810, -inf
        %v1664 = vrot.slane %v1663, 4
        %v1665 = vmax.f32 %v1663, %v1664
        %v1666 = vrot.slane %v1665, 2
        %v1667 = vmax.f32 %v1665, %v1666
        %v1668 = vrot.slane %v1667, 1
        %v1669 = vmax.f32 %v1667, %v1668
        %v1670 = vsel %vm1186, %v818, -inf
        %v1671 = vrot.slane %v1670, 4
        %v1672 = vmax.f32 %v1670, %v1671
        %v1673 = vrot.slane %v1672, 2
        %v1674 = vmax.f32 %v1672, %v1673
        %v1675 = vrot.slane %v1674, 1
        %v1676 = vmax.f32 %v1674, %v1675
        %v1677 = vsel %vm1186, %v817, -inf
        %v1678 = vrot.slane %v1677, 4
        %v1679 = vmax.f32 %v1677, %v1678
        %v1680 = vrot.slane %v1679, 2
        %v1681 = vmax.f32 %v1679, %v1680
        %v1682 = vrot.slane %v1681, 1
        %v1683 = vmax.f32 %v1681, %v1682
        %v1684 = vsel %vm1186, %v819, -inf
        %v1685 = vrot.slane %v1684, 4
        %v1686 = vmax.f32 %v1684, %v1685
        %v1687 = vrot.slane %v1686, 2
        %v1688 = vmax.f32 %v1686, %v1687
        %v1689 = vrot.slane %v1688, 1
        %v1690 = vmax.f32 %v1688, %v1689
        %v1691 = vsel %vm1186, %v827, -inf
        %v1692 = vrot.slane %v1691, 4
        %v1693 = vmax.f32 %v1691, %v1692
        %v1694 = vrot.slane %v1693, 2
        %v1695 = vmax.f32 %v1693, %v1694
        %v1696 = vrot.slane %v1695, 1
        %v1697 = vmax.f32 %v1695, %v1696
        %v1698 = vsel %vm1186, %v835, -inf
        %v1699 = vrot.slane %v1698, 4
        %v1700 = vmax.f32 %v1698, %v1699
        %v1701 = vrot.slane %v1700, 2
        %v1702 = vmax.f32 %v1700, %v1701
        %v1703 = vrot.slane %v1702, 1
        %v1704 = vmax.f32 %v1702, %v1703
        %v1705 = vsel %vm1186, %v834, -inf
        %v1706 = vrot.slane %v1705, 4
        %v1707 = vmax.f32 %v1705, %v1706
        %v1708 = vrot.slane %v1707, 2
        %v1709 = vmax.f32 %v1707, %v1708
        %v1710 = vrot.slane %v1709, 1
        %v1711 = vmax.f32 %v1709, %v1710
        %v1712 = vsel %vm1186, %v836, -inf
        %v1713 = vrot.slane %v1712, 4
        %v1714 = vmax.f32 %v1712, %v1713
        %v1715 = vrot.slane %v1714, 2
        %v1716 = vmax.f32 %v1714, %v1715
        %v1717 = vrot.slane %v1716, 1
        %v1718 = vmax.f32 %v1716, %v1717
        %v1719 = vsel %vm1186, %v844, -inf
        %v1720 = vrot.slane %v1719, 4
        %v1721 = vmax.f32 %v1719, %v1720
        %v1722 = vrot.slane %v1721, 2
        %v1723 = vmax.f32 %v1721, %v1722
        %v1724 = vrot.slane %v1723, 1
        %v1725 = vmax.f32 %v1723, %v1724
        %v1726 = vsel %vm1186, %v852, -inf
        %v1727 = vrot.slane %v1726, 4
        %v1728 = vmax.f32 %v1726, %v1727
        %v1729 = vrot.slane %v1728, 2
        %v1730 = vmax.f32 %v1728, %v1729
        %v1731 = vrot.slane %v1730, 1
        %v1732 = vmax.f32 %v1730, %v1731
        %v1733 = vsel %vm1186, %v851, -inf
        %v1734 = vrot.slane %v1733, 4
        %v1735 = vmax.f32 %v1733, %v1734
        %v1736 = vrot.slane %v1735, 2
        %v1737 = vmax.f32 %v1735, %v1736
        %v1738 = vrot.slane %v1737, 1
        %v1739 = vmax.f32 %v1737, %v1738
        %v1740 = vsel %vm1186, %v853, -inf
        %v1741 = vrot.slane %v1740, 4
        %v1742 = vmax.f32 %v1740, %v1741
        %v1743 = vrot.slane %v1742, 2
        %v1744 = vmax.f32 %v1742, %v1743
        %v1745 = vrot.slane %v1744, 1
        %v1746 = vmax.f32 %v1744, %v1745
        %v1747 = vsel %vm1186, %v861, -inf
        %v1748 = vrot.slane %v1747, 4
        %v1749 = vmax.f32 %v1747, %v1748
        %v1750 = vrot.slane %v1749, 2
        %v1751 = vmax.f32 %v1749, %v1750
        %v1752 = vrot.slane %v1751, 1
        %v1753 = vmax.f32 %v1751, %v1752
        %v1754 = vsel %vm1186, %v869, -inf
        %v1755 = vrot.slane %v1754, 4
        %v1756 = vmax.f32 %v1754, %v1755
        %v1757 = vrot.slane %v1756, 2
        %v1758 = vmax.f32 %v1756, %v1757
        %v1759 = vrot.slane %v1758, 1
        %v1760 = vmax.f32 %v1758, %v1759
        %v1761 = vsel %vm1186, %v868, -inf
        %v1762 = vrot.slane %v1761, 4
        %v1763 = vmax.f32 %v1761, %v1762
        %v1764 = vrot.slane %v1763, 2
        %v1765 = vmax.f32 %v1763, %v1764
        %v1766 = vrot.slane %v1765, 1
        %v1767 = vmax.f32 %v1765, %v1766
        %v1768 = vsel %vm1186, %v870, -inf
        %v1769 = vrot.slane %v1768, 4
        %v1770 = vmax.f32 %v1768, %v1769
        %v1771 = vrot.slane %v1770, 2
        %v1772 = vmax.f32 %v1770, %v1771
        %v1773 = vrot.slane %v1772, 1
        %v1774 = vmax.f32 %v1772, %v1773
        %v1775 = vsel %vm1186, %v878, -inf
        %v1776 = vrot.slane %v1775, 4
        %v1777 = vmax.f32 %v1775, %v1776
        %v1778 = vrot.slane %v1777, 2
        %v1779 = vmax.f32 %v1777, %v1778
        %v1780 = vrot.slane %v1779, 1
        %v1781 = vmax.f32 %v1779, %v1780
        %v1782 = vsel %vm1186, %v886, -inf
        %v1783 = vrot.slane %v1782, 4
        %v1784 = vmax.f32 %v1782, %v1783
        %v1785 = vrot.slane %v1784, 2
        %v1786 = vmax.f32 %v1784, %v1785
        %v1787 = vrot.slane %v1786, 1
        %v1788 = vmax.f32 %v1786, %v1787
        %v1789 = vsel %vm1186, %v885, -inf
        %v1790 = vrot.slane %v1789, 4
        %v1791 = vmax.f32 %v1789, %v1790
        %v1792 = vrot.slane %v1791, 2
        %v1793 = vmax.f32 %v1791, %v1792
        %v1794 = vrot.slane %v1793, 1
        %v1795 = vmax.f32 %v1793, %v1794
        %v1796 = vsel %vm1186, %v887, -inf
        %v1797 = vrot.slane %v1796, 4
        %v1798 = vmax.f32 %v1796, %v1797
        %v1799 = vrot.slane %v1798, 2
        %v1800 = vmax.f32 %v1798, %v1799
        %v1801 = vrot.slane %v1800, 1
        %v1802 = vmax.f32 %v1800, %v1801
        %v1803 = vsel %vm1186, %v895, -inf
        %v1804 = vrot.slane %v1803, 4
        %v1805 = vmax.f32 %v1803, %v1804
        %v1806 = vrot.slane %v1805, 2
        %v1807 = vmax.f32 %v1805, %v1806
        %v1808 = vrot.slane %v1807, 1
        %v1809 = vmax.f32 %v1807, %v1808
        %v1810 = vsel %vm1186, %v903, -inf
        %v1811 = vrot.slane %v1810, 4
        %v1812 = vmax.f32 %v1810, %v1811
        %v1813 = vrot.slane %v1812, 2
        %v1814 = vmax.f32 %v1812, %v1813
        %v1815 = vrot.slane %v1814, 1
        %v1816 = vmax.f32 %v1814, %v1815
        %v1817 = vsel %vm1186, %v902, -inf
        %v1818 = vrot.slane %v1817, 4
        %v1819 = vmax.f32 %v1817, %v1818
        %v1820 = vrot.slane %v1819, 2
        %v1821 = vmax.f32 %v1819, %v1820
        %v1822 = vrot.slane %v1821, 1
        %v1823 = vmax.f32 %v1821, %v1822
        %v1824 = vsel %vm1186, %v904, -inf
        %v1825 = vrot.slane %v1824, 4
        %v1826 = vmax.f32 %v1824, %v1825
        %v1827 = vrot.slane %v1826, 2
        %v1828 = vmax.f32 %v1826, %v1827
        %v1829 = vrot.slane %v1828, 1
        %v1830 = vmax.f32 %v1828, %v1829
        %v1831 = vsel %vm1186, %v912, -inf
        %v1832 = vrot.slane %v1831, 4
        %v1833 = vmax.f32 %v1831, %v1832
        %v1834 = vrot.slane %v1833, 2
        %v1835 = vmax.f32 %v1833, %v1834
        %v1836 = vrot.slane %v1835, 1
        %v1837 = vmax.f32 %v1835, %v1836
        %v1838 = vsel %vm1186, %v920, -inf
        %v1839 = vrot.slane %v1838, 4
        %v1840 = vmax.f32 %v1838, %v1839
        %v1841 = vrot.slane %v1840, 2
        %v1842 = vmax.f32 %v1840, %v1841
        %v1843 = vrot.slane %v1842, 1
        %v1844 = vmax.f32 %v1842, %v1843
        %v1845 = vsel %vm1186, %v919, -inf
        %v1846 = vrot.slane %v1845, 4
        %v1847 = vmax.f32 %v1845, %v1846
        %v1848 = vrot.slane %v1847, 2
        %v1849 = vmax.f32 %v1847, %v1848
        %v1850 = vrot.slane %v1849, 1
        %v1851 = vmax.f32 %v1849, %v1850
        %v1852 = vsel %vm1186, %v921, -inf
        %v1853 = vrot.slane %v1852, 4
        %v1854 = vmax.f32 %v1852, %v1853
        %v1855 = vrot.slane %v1854, 2
        %v1856 = vmax.f32 %v1854, %v1855
        %v1857 = vrot.slane %v1856, 1
        %v1858 = vmax.f32 %v1856, %v1857
        %v1859 = vsel %vm1186, %v929, -inf
        %v1860 = vrot.slane %v1859, 4
        %v1861 = vmax.f32 %v1859, %v1860
        %v1862 = vrot.slane %v1861, 2
        %v1863 = vmax.f32 %v1861, %v1862
        %v1864 = vrot.slane %v1863, 1
        %v1865 = vmax.f32 %v1863, %v1864
        %v1866 = vsel %vm1186, %v937, -inf
        %v1867 = vrot.slane %v1866, 4
        %v1868 = vmax.f32 %v1866, %v1867
        %v1869 = vrot.slane %v1868, 2
        %v1870 = vmax.f32 %v1868, %v1869
        %v1871 = vrot.slane %v1870, 1
        %v1872 = vmax.f32 %v1870, %v1871
        %v1873 = vsel %vm1186, %v936, -inf
        %v1874 = vrot.slane %v1873, 4
        %v1875 = vmax.f32 %v1873, %v1874
        %v1876 = vrot.slane %v1875, 2
        %v1877 = vmax.f32 %v1875, %v1876
        %v1878 = vrot.slane %v1877, 1
        %v1879 = vmax.f32 %v1877, %v1878
        %v1880 = vsel %vm1186, %v938, -inf
        %v1881 = vrot.slane %v1880, 4
        %v1882 = vmax.f32 %v1880, %v1881
        %v1883 = vrot.slane %v1882, 2
        %v1884 = vmax.f32 %v1882, %v1883
        %v1885 = vrot.slane %v1884, 1
        %v1886 = vmax.f32 %v1884, %v1885
        %v1887 = vsel %vm1186, %v946, -inf
        %v1888 = vrot.slane %v1887, 4
        %v1889 = vmax.f32 %v1887, %v1888
        %v1890 = vrot.slane %v1889, 2
        %v1891 = vmax.f32 %v1889, %v1890
        %v1892 = vrot.slane %v1891, 1
        %v1893 = vmax.f32 %v1891, %v1892
        %v1894 = vsel %vm1186, %v954, -inf
        %v1895 = vrot.slane %v1894, 4
        %v1896 = vmax.f32 %v1894, %v1895
        %v1897 = vrot.slane %v1896, 2
        %v1898 = vmax.f32 %v1896, %v1897
        %v1899 = vrot.slane %v1898, 1
        %v1900 = vmax.f32 %v1898, %v1899
        %v1901 = vsel %vm1186, %v953, -inf
        %v1902 = vrot.slane %v1901, 4
        %v1903 = vmax.f32 %v1901, %v1902
        %v1904 = vrot.slane %v1903, 2
        %v1905 = vmax.f32 %v1903, %v1904
        %v1906 = vrot.slane %v1905, 1
        %v1907 = vmax.f32 %v1905, %v1906
        %v1908 = vsel %vm1186, %v955, -inf
        %v1909 = vrot.slane %v1908, 4
        %v1910 = vmax.f32 %v1908, %v1909
        %v1911 = vrot.slane %v1910, 2
        %v1912 = vmax.f32 %v1910, %v1911
        %v1913 = vrot.slane %v1912, 1
        %v1914 = vmax.f32 %v1912, %v1913
        %v1915 = vsel %vm1186, %v963, -inf
        %v1916 = vrot.slane %v1915, 4
        %v1917 = vmax.f32 %v1915, %v1916
        %v1918 = vrot.slane %v1917, 2
        %v1919 = vmax.f32 %v1917, %v1918
        %v1920 = vrot.slane %v1919, 1
        %v1921 = vmax.f32 %v1919, %v1920
        %v1922 = vsel %vm1186, %v971, -inf
        %v1923 = vrot.slane %v1922, 4
        %v1924 = vmax.f32 %v1922, %v1923
        %v1925 = vrot.slane %v1924, 2
        %v1926 = vmax.f32 %v1924, %v1925
        %v1927 = vrot.slane %v1926, 1
        %v1928 = vmax.f32 %v1926, %v1927
        %v1929 = vsel %vm1186, %v970, -inf
        %v1930 = vrot.slane %v1929, 4
        %v1931 = vmax.f32 %v1929, %v1930
        %v1932 = vrot.slane %v1931, 2
        %v1933 = vmax.f32 %v1931, %v1932
        %v1934 = vrot.slane %v1933, 1
        %v1935 = vmax.f32 %v1933, %v1934
        %v1936 = vsel %vm1186, %v972, -inf
        %v1937 = vrot.slane %v1936, 4
        %v1938 = vmax.f32 %v1936, %v1937
        %v1939 = vrot.slane %v1938, 2
        %v1940 = vmax.f32 %v1938, %v1939
        %v1941 = vrot.slane %v1940, 1
        %v1942 = vmax.f32 %v1940, %v1941
        %v1943 = vsel %vm1186, %v980, -inf
        %v1944 = vrot.slane %v1943, 4
        %v1945 = vmax.f32 %v1943, %v1944
        %v1946 = vrot.slane %v1945, 2
        %v1947 = vmax.f32 %v1945, %v1946
        %v1948 = vrot.slane %v1947, 1
        %v1949 = vmax.f32 %v1947, %v1948
        %v1950 = vsel %vm1186, %v988, -inf
        %v1951 = vrot.slane %v1950, 4
        %v1952 = vmax.f32 %v1950, %v1951
        %v1953 = vrot.slane %v1952, 2
        %v1954 = vmax.f32 %v1952, %v1953
        %v1955 = vrot.slane %v1954, 1
        %v1956 = vmax.f32 %v1954, %v1955
        %v1957 = vsel %vm1186, %v987, -inf
        %v1958 = vrot.slane %v1957, 4
        %v1959 = vmax.f32 %v1957, %v1958
        %v1960 = vrot.slane %v1959, 2
        %v1961 = vmax.f32 %v1959, %v1960
        %v1962 = vrot.slane %v1961, 1
        %v1963 = vmax.f32 %v1961, %v1962
        %v1964 = vsel %vm1186, %v989, -inf
        %v1965 = vrot.slane %v1964, 4
        %v1966 = vmax.f32 %v1964, %v1965
        %v1967 = vrot.slane %v1966, 2
        %v1968 = vmax.f32 %v1966, %v1967
        %v1969 = vrot.slane %v1968, 1
        %v1970 = vmax.f32 %v1968, %v1969
        %v1971 = vsel %vm1186, %v997, -inf
        %v1972 = vrot.slane %v1971, 4
        %v1973 = vmax.f32 %v1971, %v1972
        %v1974 = vrot.slane %v1973, 2
        %v1975 = vmax.f32 %v1973, %v1974
        %v1976 = vrot.slane %v1975, 1
        %v1977 = vmax.f32 %v1975, %v1976
        %v1978 = vsel %vm1186, %v1005, -inf
        %v1979 = vrot.slane %v1978, 4
        %v1980 = vmax.f32 %v1978, %v1979
        %v1981 = vrot.slane %v1980, 2
        %v1982 = vmax.f32 %v1980, %v1981
        %v1983 = vrot.slane %v1982, 1
        %v1984 = vmax.f32 %v1982, %v1983
        %v1985 = vsel %vm1186, %v1004, -inf
        %v1986 = vrot.slane %v1985, 4
        %v1987 = vmax.f32 %v1985, %v1986
        %v1988 = vrot.slane %v1987, 2
        %v1989 = vmax.f32 %v1987, %v1988
        %v1990 = vrot.slane %v1989, 1
        %v1991 = vmax.f32 %v1989, %v1990
        %v1992 = vsel %vm1186, %v1006, -inf
        %v1993 = vrot.slane %v1992, 4
        %v1994 = vmax.f32 %v1992, %v1993
        %v1995 = vrot.slane %v1994, 2
        %v1996 = vmax.f32 %v1994, %v1995
        %v1997 = vrot.slane %v1996, 1
        %v1998 = vmax.f32 %v1996, %v1997
        %v1999 = vsel %vm1186, %v1014, -inf
        %v2000 = vrot.slane %v1999, 4
        %v2001 = vmax.f32 %v1999, %v2000
        %v2002 = vrot.slane %v2001, 2
        %v2003 = vmax.f32 %v2001, %v2002
        %v2004 = vrot.slane %v2003, 1
        %v2005 = vmax.f32 %v2003, %v2004
        %v2006 = vsel %vm1186, %v1022, -inf
        %v2007 = vrot.slane %v2006, 4
        %v2008 = vmax.f32 %v2006, %v2007
        %v2009 = vrot.slane %v2008, 2
        %v2010 = vmax.f32 %v2008, %v2009
        %v2011 = vrot.slane %v2010, 1
        %v2012 = vmax.f32 %v2010, %v2011
        %v2013 = vsel %vm1186, %v1021, -inf
        %v2014 = vrot.slane %v2013, 4
        %v2015 = vmax.f32 %v2013, %v2014
        %v2016 = vrot.slane %v2015, 2
        %v2017 = vmax.f32 %v2015, %v2016
        %v2018 = vrot.slane %v2017, 1
        %v2019 = vmax.f32 %v2017, %v2018
        %v2020 = vsel %vm1186, %v1023, -inf
        %v2021 = vrot.slane %v2020, 4
        %v2022 = vmax.f32 %v2020, %v2021
        %v2023 = vrot.slane %v2022, 2
        %v2024 = vmax.f32 %v2022, %v2023
        %v2025 = vrot.slane %v2024, 1
        %v2026 = vmax.f32 %v2024, %v2025
        %v2027 = vsel %vm1186, %v1031, -inf
        %v2028 = vrot.slane %v2027, 4
        %v2029 = vmax.f32 %v2027, %v2028
        %v2030 = vrot.slane %v2029, 2
        %v2031 = vmax.f32 %v2029, %v2030
        %v2032 = vrot.slane %v2031, 1
        %v2033 = vmax.f32 %v2031, %v2032
        %v2034 = vsel %vm1186, %v1039, -inf
        %v2035 = vrot.slane %v2034, 4
        %v2036 = vmax.f32 %v2034, %v2035
        %v2037 = vrot.slane %v2036, 2
        %v2038 = vmax.f32 %v2036, %v2037
        %v2039 = vrot.slane %v2038, 1
        %v2040 = vmax.f32 %v2038, %v2039
        %v2041 = vsel %vm1186, %v1038, -inf
        %v2042 = vrot.slane %v2041, 4
        %v2043 = vmax.f32 %v2041, %v2042
        %v2044 = vrot.slane %v2043, 2
        %v2045 = vmax.f32 %v2043, %v2044
        %v2046 = vrot.slane %v2045, 1
        %v2047 = vmax.f32 %v2045, %v2046
        %v2048 = vsel %vm1186, %v1040, -inf
        %v2049 = vrot.slane %v2048, 4
        %v2050 = vmax.f32 %v2048, %v2049
        %v2051 = vrot.slane %v2050, 2
        %v2052 = vmax.f32 %v2050, %v2051
        %v2053 = vrot.slane %v2052, 1
        %v2054 = vmax.f32 %v2052, %v2053
        %v2055 = vsel %vm1186, %v1048, -inf
        %v2056 = vrot.slane %v2055, 4
        %v2057 = vmax.f32 %v2055, %v2056
        %v2058 = vrot.slane %v2057, 2
        %v2059 = vmax.f32 %v2057, %v2058
        %v2060 = vrot.slane %v2059, 1
        %v2061 = vmax.f32 %v2059, %v2060
        %v2062 = vsel %vm1186, %v1056, -inf
        %v2063 = vrot.slane %v2062, 4
        %v2064 = vmax.f32 %v2062, %v2063
        %v2065 = vrot.slane %v2064, 2
        %v2066 = vmax.f32 %v2064, %v2065
        %v2067 = vrot.slane %v2066, 1
        %v2068 = vmax.f32 %v2066, %v2067
        %v2069 = vsel %vm1186, %v1055, -inf
        %v2070 = vrot.slane %v2069, 4
        %v2071 = vmax.f32 %v2069, %v2070
        %v2072 = vrot.slane %v2071, 2
        %v2073 = vmax.f32 %v2071, %v2072
        %v2074 = vrot.slane %v2073, 1
        %v2075 = vmax.f32 %v2073, %v2074
        %v2076 = vsel %vm1186, %v1057, -inf
        %v2077 = vrot.slane %v2076, 4
        %v2078 = vmax.f32 %v2076, %v2077
        %v2079 = vrot.slane %v2078, 2
        %v2080 = vmax.f32 %v2078, %v2079
        %v2081 = vrot.slane %v2080, 1
        %v2082 = vmax.f32 %v2080, %v2081
        %v2083 = vmax.f32 %v1193, %v1249
        %v2084 = vmax.f32 %v1200, %v1256
        %v2085 = vmax.f32 %v1207, %v1263
        %v2086 = vmax.f32 %v1214, %v1270
        %v2087 = vmax.f32 %v1221, %v1277
        %v2088 = vmax.f32 %v1228, %v1284
        %v2089 = vmax.f32 %v1235, %v1291
        %v2090 = vmax.f32 %v1242, %v1298
        %v2091 = vmax.f32 %v1305, %v1361
        %v2092 = vmax.f32 %v1312, %v1368
        %v2093 = vmax.f32 %v1319, %v1375
        %v2094 = vmax.f32 %v1326, %v1382
        %v2095 = vmax.f32 %v1333, %v1389
        %v2096 = vmax.f32 %v1340, %v1396
        %v2097 = vmax.f32 %v1347, %v1403
        %v2098 = vmax.f32 %v1354, %v1410
        %v2099 = vmax.f32 %v1417, %v1473
        %v2100 = vmax.f32 %v1424, %v1480
        %v2101 = vmax.f32 %v1431, %v1487
        %v2102 = vmax.f32 %v1438, %v1494
        %v2103 = vmax.f32 %v1445, %v1501
        %v2104 = vmax.f32 %v1452, %v1508
        %v2105 = vmax.f32 %v1459, %v1515
        %v2106 = vmax.f32 %v1466, %v1522
        %v2107 = vmax.f32 %v1529, %v1585
        %v2108 = vmax.f32 %v1536, %v1592
        %v2109 = vmax.f32 %v1543, %v1599
        %v2110 = vmax.f32 %v1550, %v1606
        %v2111 = vmax.f32 %v1557, %v1613
        %v2112 = vmax.f32 %v1564, %v1620
        %v2113 = vmax.f32 %v1571, %v1627
        %v2114 = vmax.f32 %v1578, %v1634
        %v2115 = vmax.f32 %v1641, %v1697
        %v2116 = vmax.f32 %v1648, %v1704
        %v2117 = vmax.f32 %v1655, %v1711
        %v2118 = vmax.f32 %v1662, %v1718
        %v2119 = vmax.f32 %v1669, %v1725
        %v2120 = vmax.f32 %v1676, %v1732
        %v2121 = vmax.f32 %v1683, %v1739
        %v2122 = vmax.f32 %v1690, %v1746
        %v2123 = vmax.f32 %v1753, %v1809
        %v2124 = vmax.f32 %v1760, %v1816
        %v2125 = vmax.f32 %v1767, %v1823
        %v2126 = vmax.f32 %v1774, %v1830
        %v2127 = vmax.f32 %v1781, %v1837
        %v2128 = vmax.f32 %v1788, %v1844
        %v2129 = vmax.f32 %v1795, %v1851
        %v2130 = vmax.f32 %v1802, %v1858
        %v2131 = vmax.f32 %v1865, %v1921
        %v2132 = vmax.f32 %v1872, %v1928
        %v2133 = vmax.f32 %v1879, %v1935
        %v2134 = vmax.f32 %v1886, %v1942
        %v2135 = vmax.f32 %v1893, %v1949
        %v2136 = vmax.f32 %v1900, %v1956
        %v2137 = vmax.f32 %v1907, %v1963
        %v2138 = vmax.f32 %v1914, %v1970
        %v2139 = vmax.f32 %v1977, %v2033
        %v2140 = vmax.f32 %v1984, %v2040
        %v2141 = vmax.f32 %v1991, %v2047
        %v2142 = vmax.f32 %v1998, %v2054
        %v2143 = vmax.f32 %v2005, %v2061
        %v2144 = vmax.f32 %v2012, %v2068
        %v2145 = vmax.f32 %v2019, %v2075
        %v2146 = vmax.f32 %v2026, %v2082
        %vm2211 = vcmask 1041409
        %v2212 = vsel %vm2211, %v2084, %v2083
        %vm2213 = vcmask 1042434
        %v2214 = vsel %vm2213, %v2085, %v2212
        %vm2215 = vcmask 1043459
        %v2216 = vsel %vm2215, %v2086, %v2214
        %vm2217 = vcmask 1044484
        %v2218 = vsel %vm2217, %v2087, %v2216
        %vm2219 = vcmask 1045509
        %v2220 = vsel %vm2219, %v2088, %v2218
        %vm2221 = vcmask 1046534
        %v2222 = vsel %vm2221, %v2089, %v2220
        %vm2223 = vcmask 1047559
        %v2224 = vsel %vm2223, %v2090, %v2222
        %v2225 = vsel %vm2211, %v2092, %v2091
        %v2226 = vsel %vm2213, %v2093, %v2225
        %v2227 = vsel %vm2215, %v2094, %v2226
        %v2228 = vsel %vm2217, %v2095, %v2227
        %v2229 = vsel %vm2219, %v2096, %v2228
        %v2230 = vsel %vm2221, %v2097, %v2229
        %v2231 = vsel %vm2223, %v2098, %v2230
        %v2232 = vsel %vm2211, %v2100, %v2099
        %v2233 = vsel %vm2213, %v2101, %v2232
        %v2234 = vsel %vm2215, %v2102, %v2233
        %v2235 = vsel %vm2217, %v2103, %v2234
        %v2236 = vsel %vm2219, %v2104, %v2235
        %v2237 = vsel %vm2221, %v2105, %v2236
        %v2238 = vsel %vm2223, %v2106, %v2237
        %v2239 = vsel %vm2211, %v2108, %v2107
        %v2240 = vsel %vm2213, %v2109, %v2239
        %v2241 = vsel %vm2215, %v2110, %v2240
        %v2242 = vsel %vm2217, %v2111, %v2241
        %v2243 = vsel %vm2219, %v2112, %v2242
        %v2244 = vsel %vm2221, %v2113, %v2243
        %v2245 = vsel %vm2223, %v2114, %v2244
        %v2246 = vsel %vm2211, %v2116, %v2115
        %v2247 = vsel %vm2213, %v2117, %v2246
        %v2248 = vsel %vm2215, %v2118, %v2247
        %v2249 = vsel %vm2217, %v2119, %v2248
        %v2250 = vsel %vm2219, %v2120, %v2249
        %v2251 = vsel %vm2221, %v2121, %v2250
        %v2252 = vsel %vm2223, %v2122, %v2251
        %v2253 = vsel %vm2211, %v2124, %v2123
        %v2254 = vsel %vm2213, %v2125, %v2253
        %v2255 = vsel %vm2215, %v2126, %v2254
        %v2256 = vsel %vm2217, %v2127, %v2255
        %v2257 = vsel %vm2219, %v2128, %v2256
        %v2258 = vsel %vm2221, %v2129, %v2257
        %v2259 = vsel %vm2223, %v2130, %v2258
        %v2260 = vsel %vm2211, %v2132, %v2131
        %v2261 = vsel %vm2213, %v2133, %v2260
        %v2262 = vsel %vm2215, %v2134, %v2261
        %v2263 = vsel %vm2217, %v2135, %v2262
        %v2264 = vsel %vm2219, %v2136, %v2263
        %v2265 = vsel %vm2221, %v2137, %v2264
        %v2266 = vsel %vm2223, %v2138, %v2265
        %v2267 = vsel %vm2211, %v2140, %v2139
        %v2268 = vsel %vm2213, %v2141, %v2267
        %v2269 = vsel %vm2215, %v2142, %v2268
        %v2270 = vsel %vm2217, %v2143, %v2269
        %v2271 = vsel %vm2219, %v2144, %v2270
        %v2272 = vsel %vm2221, %v2145, %v2271
        %v2273 = vsel %vm2223, %v2146, %v2272
        %2282 = vst [vmem:[%s272] sm:$0xff] %v2224
        %2283 = vst [vmem:[%s272 + $0x8] sm:$0xff] %v2231
        %2284 = vst [vmem:[%s272 + $0x10] sm:$0xff] %v2238
        %2285 = vst [vmem:[%s272 + $0x18] sm:$0xff] %v2245
        %2286 = vst [vmem:[%s272 + $0x20] sm:$0xff] %v2252
        %2287 = vst [vmem:[%s272 + $0x28] sm:$0xff] %v2259
        %2288 = vst [vmem:[%s272 + $0x30] sm:$0xff] %v2266
        %2289 = vst [vmem:[%s272 + $0x38] sm:$0xff] %v2273
        %s2290 = sand.u32 %s118, 1
        %s2291 = scalar_lea.sflag [#allocation4], %s2290
        %s2292 = sand.u32 %s118, 1
        %s2293 = smul.addr %s2292, 256
        %s2294 = scalar_lea.vmem [#allocation8], %s2293
        %s2295 = sand.u32 %s146, 1
        %s2296 = scalar_lea.sflag [#allocation10], %s2295
        %s2297 = sand.u32 %s146, 1
        %s2298 = smul.addr %s2297, 64
        %s2299 = scalar_lea.vmem [#allocation9], %s2298
        // Predicated region
        $region45: #{encoder_block.5} parent=31 // pred_check
          %p2300 = pneg %p128
        $region46: #{encoder_block.5} parent=31 // pred_check_branch
          %2302 = sbr.rel (%p2300) target = $region48
        $region47: #{encoder_block.5} parent=31 // pred_region
          %s2303 = smul.u32 16, %s31
          %s2305 = ssub.s32 4096, 4096
          %2306 = vsyncadd %s2291, %s2305
          %s2307 = smul.addr %s2303, 2
          %s2308 = smul.addr %s30, 32
          %s2309 = sadd.s32 %s2307, %s2308
          %s2310 = smul.addr %s2309, 128
          %s2311 = scalar_lea.hbm %s3, %s2310
          %s2312 = sshll.u32 %s2294, 4
          %s2313 = int_to_ptr.vmem [resolvable:$true] %s2312
          %2318 = dma.vmem_to_hbm [thread:$0]  %s2313, 4096, %s2311, %s2291, 128, 128, 8
        $region48: #{encoder_block.5} parent=31 // pred_fallthru
          _
        // Predicated region
        $region49: #{encoder_block.5} parent=31 // pred_check
          %p2319 = pneg %p156
        $region50: #{encoder_block.5} parent=31 // pred_check_branch
          %2321 = sbr.rel (%p2319) target = $region52
        $region51: #{encoder_block.5} parent=31 // pred_region
          %s2322 = smul.u32 8, %s31
          %s2324 = ssub.s32 1024, 1024
          %2325 = vsyncadd %s2296, %s2324
          %s2326 = smul.addr %s30, 8
          %s2327 = sadd.s32 %s2322, %s2326
          %s2328 = smul.addr %s2327, 128
          %s2329 = scalar_lea.hbm %s4, %s2328
          %s2330 = sshll.u32 %s2299, 4
          %s2331 = int_to_ptr.vmem [resolvable:$true] %s2330
          %2336 = dma.vmem_to_hbm [thread:$0]  %s2331, 1024, %s2329, %s2296, 128, 128, 8
        $region52: #{encoder_block.5} parent=31 // pred_fallthru
          _
      $region32: #{encoder_block.5} parent=5 // pred_fallthru
        _
      %p2337 = scmp.le.s32.totalorder 2, %s21
      // Predicated region
      $region53: #{encoder_block.5} parent=5 // pred_check
        %p2338 = pneg %p2337
      $region54: #{encoder_block.5} parent=5 // pred_check_branch
        %2340 = sbr.rel (%p2338) target = $region56
      $region55: #{encoder_block.5} parent=5 // pred_region
        %s2341 = ssub.s32 %s21, 2
        // Predicated region
        $region57: #{encoder_block.5} parent=55 // pred_check
          %p2342 = pneg %p134
        $region58: #{encoder_block.5} parent=55 // pred_check_branch
          %2344 = sbr.rel (%p2342) target = $region60
        $region59: #{encoder_block.5} parent=55 // pred_region
          %s2345 = sand.u32 %s119, 1
          %s2346 = scalar_lea.sflag [#allocation4], %s2345
          %s2347 = sand.u32 %s119, 1
          %s2348 = smul.addr %s2347, 256
          %s2349 = scalar_lea.vmem [#allocation8], %s2348
          %2350 = dma.done %s2346, 4096
        $region60: #{encoder_block.5} parent=55 // pred_fallthru
          _
        // Predicated region
        $region61: #{encoder_block.5} parent=55 // pred_check
          %p2351 = pneg %p162
        $region62: #{encoder_block.5} parent=55 // pred_check_branch
          %2353 = sbr.rel (%p2351) target = $region64
        $region63: #{encoder_block.5} parent=55 // pred_region
          %s2354 = sand.u32 %s147, 1
          %s2355 = scalar_lea.sflag [#allocation10], %s2354
          %s2356 = sand.u32 %s147, 1
          %s2357 = smul.addr %s2356, 64
          %s2358 = scalar_lea.vmem [#allocation9], %s2357
          %2359 = dma.done %s2355, 1024
        $region64: #{encoder_block.5} parent=55 // pred_fallthru
          _
      $region56: #{encoder_block.5} parent=5 // pred_fallthru
        _
    $region6: #{encoder_block.5} parent=1 // loop_footer
      %s25 = sadd.s32 1, %s21
    $region7: #{encoder_block.5} parent=1 // loop_footer_branch
      %20 = sbr.rel target = $region3
    $region8: #{encoder_block.5} parent=1 // loop_exit
      _
    %2360 = vsyncpa [#allocation3], 1
    %s2361 = scalar_lea.sflag [#allocation3], 1
    %2362 = vsyncpa %s2361, 1
    %2363 = vsyncpa [#allocation6], 1
    %2364 = vsyncpa [#allocation4], 1
    %s2365 = scalar_lea.sflag [#allocation4], 1
    %2366 = vsyncpa %s2365, 1
    %2367 = vsyncpa [#allocation10], 1
    %s2368 = scalar_lea.sflag [#allocation10], 1
    %2369 = vsyncpa %s2368, 1

// kernel: encoder_block.4
$region0: #{encoder_block.4}
  #allocation0 [shape = 'u32[]', space=smem, size = 0x4, offset = 0x4, fixed_abs, tag = 'smem constant byte address 0x4 - core index']
  #allocation1 [shape = 'u32[144,128]{1,0:T(1,128)}', space=vmem, size = 0x12000, scoped, tag = 'internal scratch']
  #allocation2 [shape = 'bf16[1,18,18,128]{3,2,1,0:T(8,128)(2,1)}', space=vmem, size = 0x1b000, scoped, tag = 'scratch operand']
  %s0 = inlined_call_operand.hbm [shape: bf16[2,16,16,128], index: 0, kind: input, shape index: {}]
  %s1 = inlined_call_operand.hbm [shape: f32[1,128], index: 1, kind: input, shape index: {}]
  %s2 = inlined_call_operand.hbm [shape: f32[1,128], index: 2, kind: input, shape index: {}]
  %s3 = inlined_call_operand.hbm [shape: bf16[9,128,128], index: 3, kind: input, shape index: {}]
  %s4 = inlined_call_operand.hbm [shape: bf16[2,16,16,128], index: 4, kind: output, shape index: {0}]
  %s5 = inlined_call_operand.hbm [shape: f32[2,2,128], index: 5, kind: output, shape index: {1}]
  %6 = xla_tuple %s4, %s5
  %s7 = sld [smem:[#allocation0]]
  $region73: #{encoder_block.4} parent=0
    _
  %s9 = ssub.s32 1, %s7
  %s10 = scalar_select 0, %s9, %s7
  $region1: #{encoder_block.4} parent=0
    #allocation3 [shape = 'u8[131072]{0}', space=vmem, size = 0x20000, scoped, tag = 'input window, operand 0']
    #allocation4 [shape = 's32[2]{0}', space=sflag, size = 0x8, scoped, tag = 'scoped memory for encoder_block.4']
    #allocation5 [shape = 's32[2]{0}', space=sflag, size = 0x8, scoped, tag = 'scoped memory for encoder_block.4']
    #allocation6 [shape = 'u8[512]{0}', space=vmem, size = 0x400, scoped, tag = 'input window, operand 1, single buffered']
    #allocation7 [shape = 's32[1]{0}', space=sflag, size = 0x4, scoped, tag = 'scoped memory for encoder_block.4']
    #allocation8 [shape = 'u8[512]{0}', space=vmem, size = 0x400, scoped, tag = 'input window, operand 2, single buffered']
    #allocation9 [shape = 'u8[294912]{0}', space=vmem, size = 0x48000, scoped, tag = 'input window, operand 3, single buffered']
    #allocation10 [shape = 's32[1]{0}', space=sflag, size = 0x4, scoped, tag = 'scoped memory for encoder_block.4']
    #allocation11 [shape = 'u8[131072]{0}', space=vmem, size = 0x20000, scoped, tag = 'output window, operand 0']
    #allocation12 [shape = 'u8[2048]{0}', space=vmem, size = 0x800, scoped, tag = 'output window, operand 1']
    #allocation13 [shape = 's32[2]{0}', space=sflag, size = 0x8, scoped, tag = 'scoped memory for encoder_block.4']
    %11 = vsyncpa [#allocation4], 0
    %s12 = scalar_lea.sflag [#allocation4], 1
    %13 = vsyncpa %s12, 0
    %14 = vsyncpa [#allocation7], 0
    %15 = vsyncpa [#allocation10], 0
    %16 = vsyncpa [#allocation5], 0
    %s17 = scalar_lea.sflag [#allocation5], 1
    %18 = vsyncpa %s17, 0
    %19 = vsyncpa [#allocation13], 0
    %s20 = scalar_lea.sflag [#allocation13], 1
    %21 = vsyncpa %s20, 0
    loop: start=0, step=1, limit=4
    $region2: #{encoder_block.4} parent=1 // loop_pre_header
      _
    $region3: #{encoder_block.4} parent=1 // loop_header
      %s23 = sphi 0, %s27
      %p24 = scmp.ge.s32.totalorder %s23, 4
      %s33 = sphi 0, %s35
      %s36 = sphi 0, %s33
      %s37 = sphi 0, %s36
      %s53 = sphi 0, %s37
      %s57 = sphi 0, %s57
      %s59 = sphi 0, %s57
      %s60 = sphi 0, %s59
      %s74 = sphi 0, %s60
      %s78 = sphi 0, %s78
      %s80 = sphi 0, %s78
      %s81 = sphi 0, %s80
      %s95 = sphi 0, %s81
      %s99 = sphi 0, %s99
      %s101 = sphi 0, %s99
      %s102 = sphi 0, %s101
      %s116 = sphi 0, %s102
      %s122 = sphi 0, %s124
      %s125 = sphi 0, %s122
      %s126 = sphi 0, %s125
      %s142 = sphi 0, %s126
      %s148 = sphi 0, %s150
      %s151 = sphi 0, %s148
      %s152 = sphi 0, %s151
      %s168 = sphi 0, %s152
    $region4: #{encoder_block.4} parent=1 // loop_header_branch
      %26 = sbr.rel (%p24) target = $region8
    $region5: #{encoder_block.4} parent=1 // loop_body
      %s28 = ssub.s32 %s23, 1
      %s29 = ssub.s32 %s23, 2
      %s30 = sadd.s32 %s23, 1
      %s31 = ssub.s32 %s23, %s30
      %p32 = scmp.eq.s32.totalorder %s31, 0
      %s34 = sadd.s32 %s33, 1
      %s35 = scalar_select %p32, %s33, %s34
      %p38 = pneg %p32
      %p39 = scmp.eq.s32.totalorder %s23, 1
      %p40 = por %p38, %p39
      %p41 = scmp.ne.s32.totalorder %s33, %s36
      %p42 = scmp.eq.s32.totalorder %s23, 0
      %p43 = por %p41, %p42
      %p44 = scmp.ne.s32.totalorder %s33, %s36
      %p45 = scmp.eq.s32.totalorder %s28, 1
      %p46 = por %p44, %p45
      %p47 = scmp.ne.s32.totalorder %s36, %s37
      %p48 = scmp.eq.s32.totalorder %s28, 0
      %p49 = por %p47, %p48
      %p50 = scmp.ne.s32.totalorder %s36, %s37
      %p51 = scmp.eq.s32.totalorder %s29, 1
      %p52 = por %p50, %p51
      %p54 = scmp.ne.s32.totalorder %s37, %s53
      %p55 = scmp.eq.s32.totalorder %s29, 0
      %p56 = por %p54, %p55
      %s58 = sadd.s32 %s57, 1
      %p61 = scmp.eq.s32.totalorder %s23, 1
      %p62 = scmp.ne.s32.totalorder %s57, %s59
      %p63 = scmp.eq.s32.totalorder %s23, 0
      %p64 = por %p62, %p63
      %p65 = scmp.ne.s32.totalorder %s57, %s59
      %p66 = scmp.eq.s32.totalorder %s28, 1
      %p67 = por %p65, %p66
      %p68 = scmp.ne.s32.totalorder %s59, %s60
      %p69 = scmp.eq.s32.totalorder %s28, 0
      %p70 = por %p68, %p69
      %p71 = scmp.ne.s32.totalorder %s59, %s60
      %p72 = scmp.eq.s32.totalorder %s29, 1
      %p73 = por %p71, %p72
      %p75 = scmp.ne.s32.totalorder %s60, %s74
      %p76 = scmp.eq.s32.totalorder %s29, 0
      %p77 = por %p75, %p76
      %s79 = sadd.s32 %s78, 1
      %p82 = scmp.eq.s32.totalorder %s23, 1
      %p83 = scmp.ne.s32.totalorder %s78, %s80
      %p84 = scmp.eq.s32.totalorder %s23, 0
      %p85 = por %p83, %p84
      %p86 = scmp.ne.s32.totalorder %s78, %s80
      %p87 = scmp.eq.s32.totalorder %s28, 1
      %p88 = por %p86, %p87
      %p89 = scmp.ne.s32.totalorder %s80, %s81
      %p90 = scmp.eq.s32.totalorder %s28, 0
      %p91 = por %p89, %p90
      %p92 = scmp.ne.s32.totalorder %s80, %s81
      %p93 = scmp.eq.s32.totalorder %s29, 1
      %p94 = por %p92, %p93
      %p96 = scmp.ne.s32.totalorder %s81, %s95
      %p97 = scmp.eq.s32.totalorder %s29, 0
      %p98 = por %p96, %p97
      %s100 = sadd.s32 %s99, 1
      %p103 = scmp.eq.s32.totalorder %s23, 1
      %p104 = scmp.ne.s32.totalorder %s99, %s101
      %p105 = scmp.eq.s32.totalorder %s23, 0
      %p106 = por %p104, %p105
      %p107 = scmp.ne.s32.totalorder %s99, %s101
      %p108 = scmp.eq.s32.totalorder %s28, 1
      %p109 = por %p107, %p108
      %p110 = scmp.ne.s32.totalorder %s101, %s102
      %p111 = scmp.eq.s32.totalorder %s28, 0
      %p112 = por %p110, %p111
      %p113 = scmp.ne.s32.totalorder %s101, %s102
      %p114 = scmp.eq.s32.totalorder %s29, 1
      %p115 = por %p113, %p114
      %p117 = scmp.ne.s32.totalorder %s102, %s116
      %p118 = scmp.eq.s32.totalorder %s29, 0
      %p119 = por %p117, %p118
      %s120 = ssub.s32 %s23, %s30
      %p121 = scmp.eq.s32.totalorder %s120, 0
      %s123 = sadd.s32 %s122, 1
      %s124 = scalar_select %p121, %s122, %s123
      %p127 = pneg %p121
      %p128 = scmp.eq.s32.totalorder %s23, 1
      %p129 = por %p127, %p128
      %p130 = scmp.ne.s32.totalorder %s122, %s125
      %p131 = scmp.eq.s32.totalorder %s23, 0
      %p132 = por %p130, %p131
      %p133 = scmp.ne.s32.totalorder %s122, %s125
      %p134 = scmp.eq.s32.totalorder %s28, 1
      %p135 = por %p133, %p134
      %p136 = scmp.ne.s32.totalorder %s125, %s126
      %p137 = scmp.eq.s32.totalorder %s28, 0
      %p138 = por %p136, %p137
      %p139 = scmp.ne.s32.totalorder %s125, %s126
      %p140 = scmp.eq.s32.totalorder %s29, 1
      %p141 = por %p139, %p140
      %p143 = scmp.ne.s32.totalorder %s126, %s142
      %p144 = scmp.eq.s32.totalorder %s29, 0
      %p145 = por %p143, %p144
      %s146 = ssub.s32 %s23, %s30
      %p147 = scmp.eq.s32.totalorder %s146, 0
      %s149 = sadd.s32 %s148, 1
      %s150 = scalar_select %p147, %s148, %s149
      %p153 = pneg %p147
      %p154 = scmp.eq.s32.totalorder %s23, 1
      %p155 = por %p153, %p154
      %p156 = scmp.ne.s32.totalorder %s148, %s151
      %p157 = scmp.eq.s32.totalorder %s23, 0
      %p158 = por %p156, %p157
      %p159 = scmp.ne.s32.totalorder %s148, %s151
      %p160 = scmp.eq.s32.totalorder %s28, 1
      %p161 = por %p159, %p160
      %p162 = scmp.ne.s32.totalorder %s151, %s152
      %p163 = scmp.eq.s32.totalorder %s28, 0
      %p164 = por %p162, %p163
      %p165 = scmp.ne.s32.totalorder %s151, %s152
      %p166 = scmp.eq.s32.totalorder %s29, 1
      %p167 = por %p165, %p166
      %p169 = scmp.ne.s32.totalorder %s152, %s168
      %p170 = scmp.eq.s32.totalorder %s29, 0
      %p171 = por %p169, %p170
      %p172 = scmp.le.s32.totalorder 1, %s23
      %p173 = scmp.lt.s32.totalorder %s23, 3
      %p174 = pnand %p172, %p173
      %p175 = pneg %p174
      // Predicated region
      $region9: #{encoder_block.4} parent=5 // pred_check
        _
      $region10: #{encoder_block.4} parent=5 // pred_check_branch
        %177 = sbr.rel (%p174) target = $region12
      $region11: #{encoder_block.4} parent=5 // pred_region
        %s178 = ssub.s32 %s23, 1
        // Predicated region
        $region13: #{encoder_block.4} parent=11 // pred_check
          %p179 = pneg %p70
        $region14: #{encoder_block.4} parent=11 // pred_check_branch
          %181 = sbr.rel (%p179) target = $region16
        $region15: #{encoder_block.4} parent=11 // pred_region
          %s183 = ssub.s32 16, 16
          %184 = vsyncadd [#allocation7], %s183
          %s186 = sshll.u32 [#allocation6], 4
          %s187 = int_to_ptr.vmem [resolvable:$true] %s186
          %189 = dma.hbm_to_vmem [thread:$0]  %s1, 16, %s187, [#allocation7]
        $region16: #{encoder_block.4} parent=11 // pred_fallthru
          _
        // Predicated region
        $region17: #{encoder_block.4} parent=11 // pred_check
          %p190 = pneg %p91
        $region18: #{encoder_block.4} parent=11 // pred_check_branch
          %192 = sbr.rel (%p190) target = $region20
        $region19: #{encoder_block.4} parent=11 // pred_region
          %s194 = ssub.s32 16, 16
          %195 = vsyncadd [#allocation7], %s194
          %s197 = sshll.u32 [#allocation8], 4
          %s198 = int_to_ptr.vmem [resolvable:$true] %s197
          %200 = dma.hbm_to_vmem [thread:$0]  %s2, 16, %s198, [#allocation7]
        $region20: #{encoder_block.4} parent=11 // pred_fallthru
          _
        // Predicated region
        $region21: #{encoder_block.4} parent=11 // pred_check
          %p201 = pneg %p112
        $region22: #{encoder_block.4} parent=11 // pred_check_branch
          %203 = sbr.rel (%p201) target = $region24
        $region23: #{encoder_block.4} parent=11 // pred_region
          %s205 = ssub.s32 9216, 9216
          %206 = vsyncadd [#allocation10], %s205
          %s207 = sshll.u32 [#allocation9], 4
          %s208 = int_to_ptr.vmem [resolvable:$true] %s207
          %213 = dma.hbm_to_vmem [thread:$0]  %s3, 9216, %s208, [#allocation10], 64, 64, 4
        $region24: #{encoder_block.4} parent=11 // pred_fallthru
          _
      $region12: #{encoder_block.4} parent=5 // pred_fallthru
        _
      %p214 = scmp.lt.s32.totalorder %s23, 2
      // Predicated region
      $region25: #{encoder_block.4} parent=5 // pred_check
        %p215 = pneg %p214
      $region26: #{encoder_block.4} parent=5 // pred_check_branch
        %217 = sbr.rel (%p215) target = $region28
      $region27: #{encoder_block.4} parent=5 // pred_region
        // Predicated region
        $region29: #{encoder_block.4} parent=27 // pred_check
          %p218 = pneg %p43
        $region30: #{encoder_block.4} parent=27 // pred_check_branch
          %220 = sbr.rel (%p218) target = $region32
        $region31: #{encoder_block.4} parent=27 // pred_region
          %s221 = sand.u32 %s33, 1
          %s222 = scalar_lea.sflag [#allocation4], %s221
          %s223 = sand.u32 %s33, 1
          %s224 = smul.addr %s223, 128
          %s225 = scalar_lea.vmem [#allocation3], %s224
          %s227 = ssub.s32 2048, 2048
          %228 = vsyncadd %s222, %s227
          %s229 = smul.addr %s23, 32
          %s230 = smul.addr %s229, 64
          %s231 = scalar_lea.hbm %s0, %s230
          %s232 = sshll.u32 %s225, 4
          %s233 = int_to_ptr.vmem [resolvable:$true] %s232
          %238 = dma.hbm_to_vmem [thread:$0]  %s231, 2048, %s233, %s222, 64, 64, 4
        $region32: #{encoder_block.4} parent=27 // pred_fallthru
          _
      $region28: #{encoder_block.4} parent=5 // pred_fallthru
        _
      %p239 = scmp.le.s32.totalorder 1, %s23
      %p240 = scmp.lt.s32.totalorder %s23, 3
      %p241 = pnand %p239, %p240
      %p242 = pneg %p241
      // Predicated region
      $region33: #{encoder_block.4} parent=5 // pred_check
        _
      $region34: #{encoder_block.4} parent=5 // pred_check_branch
        %244 = sbr.rel (%p241) target = $region36
      $region35: #{encoder_block.4} parent=5 // pred_region
        %s245 = ssub.s32 %s23, 1
        %s246 = sand.u32 %s36, 1
        %s247 = scalar_lea.sflag [#allocation4], %s246
        %s248 = sand.u32 %s36, 1
        %s249 = smul.addr %s248, 128
        %s250 = scalar_lea.vmem [#allocation3], %s249
        // Predicated region
        $region37: #{encoder_block.4} parent=35 // pred_check
          %p251 = pneg %p49
        $region38: #{encoder_block.4} parent=35 // pred_check_branch
          %253 = sbr.rel (%p251) target = $region40
        $region39: #{encoder_block.4} parent=35 // pred_region
          %254 = dma.done %s247, 2048
        $region40: #{encoder_block.4} parent=35 // pred_fallthru
          _
        // Predicated region
        $region41: #{encoder_block.4} parent=35 // pred_check
          %p255 = pneg %p70
        $region42: #{encoder_block.4} parent=35 // pred_check_branch
          %257 = sbr.rel (%p255) target = $region44
        $region43: #{encoder_block.4} parent=35 // pred_region
          %258 = dma.done [#allocation7], 16
        $region44: #{encoder_block.4} parent=35 // pred_fallthru
          _
        // Predicated region
        $region45: #{encoder_block.4} parent=35 // pred_check
          %p259 = pneg %p91
        $region46: #{encoder_block.4} parent=35 // pred_check_branch
          %261 = sbr.rel (%p259) target = $region48
        $region47: #{encoder_block.4} parent=35 // pred_region
          %262 = dma.done [#allocation7], 16
        $region48: #{encoder_block.4} parent=35 // pred_fallthru
          _
        // Predicated region
        $region49: #{encoder_block.4} parent=35 // pred_check
          %p263 = pneg %p112
        $region50: #{encoder_block.4} parent=35 // pred_check_branch
          %265 = sbr.rel (%p263) target = $region52
        $region51: #{encoder_block.4} parent=35 // pred_region
          %266 = dma.done [#allocation10], 9216
        $region52: #{encoder_block.4} parent=35 // pred_fallthru
          _
        %s267 = sand.u32 %s36, 1
        %s268 = scalar_lea.sflag [#allocation4], %s267
        %s269 = sand.u32 %s36, 1
        %s270 = smul.addr %s269, 128
        %s271 = scalar_lea.vmem [#allocation3], %s270
        %p272 = pneg %p49
        %p273 = pneg %p46
        %p274 = pneg %p70
        %p275 = pneg %p67
        %p276 = pneg %p91
        %p277 = pneg %p88
        %p278 = pneg %p112
        %p279 = pneg %p109
        %p280 = pneg %p138
        %p281 = pneg %p135
        %s282 = sand.u32 %s125, 1
        %s283 = scalar_lea.sflag [#allocation5], %s282
        %s284 = sand.u32 %s125, 1
        %s285 = smul.addr %s284, 128
        %s286 = scalar_lea.vmem [#allocation11], %s285
        %p287 = pneg %p164
        %p288 = pneg %p161
        %s289 = sand.u32 %s151, 1
        %s290 = scalar_lea.sflag [#allocation13], %s289
        %s291 = sand.u32 %s151, 1
        %s292 = smul.addr %s291, 2
        %s293 = scalar_lea.vmem [#allocation12], %s292
        %v295 = vld [vmem:[#allocation6] sm:$0x1]
        %v296 = vld [vmem:[#allocation8] sm:$0x1]
        %v297 = vld [vmem:[%s250] sm:$0xf]
        %v298 = vld [vmem:[%s250 + $0x4] sm:$0xf]
        %v299 = vld [vmem:[%s250 + $0x8] sm:$0xf]
        %v300 = vld [vmem:[%s250 + $0xc] sm:$0xf]
        %v301 = vld [vmem:[%s250 + $0x10] sm:$0xf]
        %v302 = vld [vmem:[%s250 + $0x14] sm:$0xf]
        %v303 = vld [vmem:[%s250 + $0x18] sm:$0xf]
        %v304 = vld [vmem:[%s250 + $0x1c] sm:$0xf]
        %v305 = vld [vmem:[%s250 + $0x20] sm:$0xf]
        %v306 = vld [vmem:[%s250 + $0x24] sm:$0xf]
        %v307 = vld [vmem:[%s250 + $0x28] sm:$0xf]
        %v308 = vld [vmem:[%s250 + $0x2c] sm:$0xf]
        %v309 = vld [vmem:[%s250 + $0x30] sm:$0xf]
        %v310 = vld [vmem:[%s250 + $0x34] sm:$0xf]
        %v311 = vld [vmem:[%s250 + $0x38] sm:$0xf]
        %v312 = vld [vmem:[%s250 + $0x3c] sm:$0xf]
        %v313 = vld [vmem:[%s250 + $0x40] sm:$0xf]
        %v314 = vld [vmem:[%s250 + $0x44] sm:$0xf]
        %v315 = vld [vmem:[%s250 + $0x48] sm:$0xf]
        %v316 = vld [vmem:[%s250 + $0x4c] sm:$0xf]
        %v317 = vld [vmem:[%s250 + $0x50] sm:$0xf]
        %v318 = vld [vmem:[%s250 + $0x54] sm:$0xf]
        %v319 = vld [vmem:[%s250 + $0x58] sm:$0xf]
        %v320 = vld [vmem:[%s250 + $0x5c] sm:$0xf]
        %v321 = vld [vmem:[%s250 + $0x60] sm:$0xf]
        %v322 = vld [vmem:[%s250 + $0x64] sm:$0xf]
        %v323 = vld [vmem:[%s250 + $0x68] sm:$0xf]
        %v324 = vld [vmem:[%s250 + $0x6c] sm:$0xf]
        %v325 = vld [vmem:[%s250 + $0x70] sm:$0xf]
        %v326 = vld [vmem:[%s250 + $0x74] sm:$0xf]
        %v327 = vld [vmem:[%s250 + $0x78] sm:$0xf]
        %v328 = vld [vmem:[%s250 + $0x7c] sm:$0xf]
        %v329 = vunpack.c.l.bf16 %v297
        %v330 = vunpack.c.l.bf16 %v298
        %v331 = vunpack.c.l.bf16 %v299
        %v332 = vunpack.c.l.bf16 %v300
        %v333 = vunpack.c.l.bf16 %v301
        %v334 = vunpack.c.l.bf16 %v302
        %v335 = vunpack.c.l.bf16 %v303
        %v336 = vunpack.c.l.bf16 %v304
        %v337 = vunpack.c.l.bf16 %v305
        %v338 = vunpack.c.l.bf16 %v306
        %v339 = vunpack.c.l.bf16 %v307
        %v340 = vunpack.c.l.bf16 %v308
        %v341 = vunpack.c.l.bf16 %v309
        %v342 = vunpack.c.l.bf16 %v310
        %v343 = vunpack.c.l.bf16 %v311
        %v344 = vunpack.c.l.bf16 %v312
        %v345 = vunpack.c.l.bf16 %v313
        %v346 = vunpack.c.l.bf16 %v314
        %v347 = vunpack.c.l.bf16 %v315
        %v348 = vunpack.c.l.bf16 %v316
        %v349 = vunpack.c.l.bf16 %v317
        %v350 = vunpack.c.l.bf16 %v318
        %v351 = vunpack.c.l.bf16 %v319
        %v352 = vunpack.c.l.bf16 %v320
        %v353 = vunpack.c.l.bf16 %v321
        %v354 = vunpack.c.l.bf16 %v322
        %v355 = vunpack.c.l.bf16 %v323
        %v356 = vunpack.c.l.bf16 %v324
        %v357 = vunpack.c.l.bf16 %v325
        %v358 = vunpack.c.l.bf16 %v326
        %v359 = vunpack.c.l.bf16 %v327
        %v360 = vunpack.c.l.bf16 %v328
        %v362 = vlaneseq
        %v363 = vshrl.u32 %v362, 7
        %v364 = vsub.s32 0, %v363
        %v365 = vrot.slane %v295, %v364
        %v367 = vmul.f32 %v329, %v365
        %v368 = vmul.f32 %v330, %v365
        %v369 = vmul.f32 %v331, %v365
        %v370 = vmul.f32 %v332, %v365
        %v371 = vmul.f32 %v333, %v365
        %v372 = vmul.f32 %v334, %v365
        %v373 = vmul.f32 %v335, %v365
        %v374 = vmul.f32 %v336, %v365
        %v375 = vmul.f32 %v337, %v365
        %v376 = vmul.f32 %v338, %v365
        %v377 = vmul.f32 %v339, %v365
        %v378 = vmul.f32 %v340, %v365
        %v379 = vmul.f32 %v341, %v365
        %v380 = vmul.f32 %v342, %v365
        %v381 = vmul.f32 %v343, %v365
        %v382 = vmul.f32 %v344, %v365
        %v383 = vmul.f32 %v345, %v365
        %v384 = vmul.f32 %v346, %v365
        %v385 = vmul.f32 %v347, %v365
        %v386 = vmul.f32 %v348, %v365
        %v387 = vmul.f32 %v349, %v365
        %v388 = vmul.f32 %v350, %v365
        %v389 = vmul.f32 %v351, %v365
        %v390 = vmul.f32 %v352, %v365
        %v391 = vmul.f32 %v353, %v365
        %v392 = vmul.f32 %v354, %v365
        %v393 = vmul.f32 %v355, %v365
        %v394 = vmul.f32 %v356, %v365
        %v395 = vmul.f32 %v357, %v365
        %v396 = vmul.f32 %v358, %v365
        %v397 = vmul.f32 %v359, %v365
        %v398 = vmul.f32 %v360, %v365
        %v400 = vlaneseq
        %v401 = vshrl.u32 %v400, 7
        %v402 = vsub.s32 0, %v401
        %v403 = vrot.slane %v296, %v402
        %v405 = vadd.f32 %v367, %v403
        %v406 = vadd.f32 %v368, %v403
        %v407 = vadd.f32 %v369, %v403
        %v408 = vadd.f32 %v370, %v403
        %v409 = vadd.f32 %v371, %v403
        %v410 = vadd.f32 %v372, %v403
        %v411 = vadd.f32 %v373, %v403
        %v412 = vadd.f32 %v374, %v403
        %v413 = vadd.f32 %v375, %v403
        %v414 = vadd.f32 %v376, %v403
        %v415 = vadd.f32 %v377, %v403
        %v416 = vadd.f32 %v378, %v403
        %v417 = vadd.f32 %v379, %v403
        %v418 = vadd.f32 %v380, %v403
        %v419 = vadd.f32 %v381, %v403
        %v420 = vadd.f32 %v382, %v403
        %v421 = vadd.f32 %v383, %v403
        %v422 = vadd.f32 %v384, %v403
        %v423 = vadd.f32 %v385, %v403
        %v424 = vadd.f32 %v386, %v403
        %v425 = vadd.f32 %v387, %v403
        %v426 = vadd.f32 %v388, %v403
        %v427 = vadd.f32 %v389, %v403
        %v428 = vadd.f32 %v390, %v403
        %v429 = vadd.f32 %v391, %v403
        %v430 = vadd.f32 %v392, %v403
        %v431 = vadd.f32 %v393, %v403
        %v432 = vadd.f32 %v394, %v403
        %v433 = vadd.f32 %v395, %v403
        %v434 = vadd.f32 %v396, %v403
        %v435 = vadd.f32 %v397, %v403
        %v436 = vadd.f32 %v398, %v403
        %v437 = vmax.f32 %v405, 0.0
        %v438 = vmax.f32 %v406, 0.0
        %v439 = vmax.f32 %v407, 0.0
        %v440 = vmax.f32 %v408, 0.0
        %v441 = vmax.f32 %v409, 0.0
        %v442 = vmax.f32 %v410, 0.0
        %v443 = vmax.f32 %v411, 0.0
        %v444 = vmax.f32 %v412, 0.0
        %v445 = vmax.f32 %v413, 0.0
        %v446 = vmax.f32 %v414, 0.0
        %v447 = vmax.f32 %v415, 0.0
        %v448 = vmax.f32 %v416, 0.0
        %v449 = vmax.f32 %v417, 0.0
        %v450 = vmax.f32 %v418, 0.0
        %v451 = vmax.f32 %v419, 0.0
        %v452 = vmax.f32 %v420, 0.0
        %v453 = vmax.f32 %v421, 0.0
        %v454 = vmax.f32 %v422, 0.0
        %v455 = vmax.f32 %v423, 0.0
        %v456 = vmax.f32 %v424, 0.0
        %v457 = vmax.f32 %v425, 0.0
        %v458 = vmax.f32 %v426, 0.0
        %v459 = vmax.f32 %v427, 0.0
        %v460 = vmax.f32 %v428, 0.0
        %v461 = vmax.f32 %v429, 0.0
        %v462 = vmax.f32 %v430, 0.0
        %v463 = vmax.f32 %v431, 0.0
        %v464 = vmax.f32 %v432, 0.0
        %v465 = vmax.f32 %v433, 0.0
        %v466 = vmax.f32 %v434, 0.0
        %v467 = vmax.f32 %v435, 0.0
        %v468 = vmax.f32 %v436, 0.0
        %469 = vst [vmem:[#allocation2] sm:$0xf] 0
        %470 = vst [vmem:[#allocation2 + $0x4] sm:$0xf] 0
        %471 = vst [vmem:[#allocation2 + $0x8] sm:$0x1] 0
        %s472 = scalar_lea.vmem [#allocation2], 204
        %473 = vst [vmem:[%s472] sm:$0xf] 0
        %474 = vst [vmem:[%s472 + $0x4] sm:$0xf] 0
        %475 = vst [vmem:[%s472 + $0x8] sm:$0x1] 0
        %vm476 = vcmask 1040384
        %vm477 = vsmask.f32 256
        %vm478 = vmand %vm476, %vm477
        %v479 = vld [vmem:[#allocation2] sm:$0x1]
        %v480 = vsel %vm478, 0, %v479
        %481 = vst [vmem:[#allocation2] sm:$0x1] %v480
        %v482 = vld [vmem:[#allocation2 + $0xc] sm:$0x1]
        %v483 = vsel %vm478, 0, %v482
        %484 = vst [vmem:[#allocation2 + $0xc] sm:$0x1] %v483
        %v485 = vld [vmem:[#allocation2 + $0x18] sm:$0x1]
        %v486 = vsel %vm478, 0, %v485
        %487 = vst [vmem:[#allocation2 + $0x18] sm:$0x1] %v486
        %v488 = vld [vmem:[#allocation2 + $0x24] sm:$0x1]
        %v489 = vsel %vm478, 0, %v488
        %490 = vst [vmem:[#allocation2 + $0x24] sm:$0x1] %v489
        %v491 = vld [vmem:[#allocation2 + $0x30] sm:$0x1]
        %v492 = vsel %vm478, 0, %v491
        %493 = vst [vmem:[#allocation2 + $0x30] sm:$0x1] %v492
        %v494 = vld [vmem:[#allocation2 + $0x3c] sm:$0x1]
        %v495 = vsel %vm478, 0, %v494
        %496 = vst [vmem:[#allocation2 + $0x3c] sm:$0x1] %v495
        %v497 = vld [vmem:[#allocation2 + $0x48] sm:$0x1]
        %v498 = vsel %vm478, 0, %v497
        %499 = vst [vmem:[#allocation2 + $0x48] sm:$0x1] %v498
        %v500 = vld [vmem:[#allocation2 + $0x54] sm:$0x1]
        %v501 = vsel %vm478, 0, %v500
        %502 = vst [vmem:[#allocation2 + $0x54] sm:$0x1] %v501
        %v503 = vld [vmem:[#allocation2 + $0x60] sm:$0x1]
        %v504 = vsel %vm478, 0, %v503
        %505 = vst [vmem:[#allocation2 + $0x60] sm:$0x1] %v504
        %v506 = vld [vmem:[#allocation2 + $0x6c] sm:$0x1]
        %v507 = vsel %vm478, 0, %v506
        %508 = vst [vmem:[#allocation2 + $0x6c] sm:$0x1] %v507
        %v509 = vld [vmem:[#allocation2 + $0x78] sm:$0x1]
        %v510 = vsel %vm478, 0, %v509
        %511 = vst [vmem:[#allocation2 + $0x78] sm:$0x1] %v510
        %v512 = vld [vmem:[#allocation2 + $0x84] sm:$0x1]
        %v513 = vsel %vm478, 0, %v512
        %514 = vst [vmem:[#allocation2 + $0x84] sm:$0x1] %v513
        %v515 = vld [vmem:[#allocation2 + $0x90] sm:$0x1]
        %v516 = vsel %vm478, 0, %v515
        %517 = vst [vmem:[#allocation2 + $0x90] sm:$0x1] %v516
        %v518 = vld [vmem:[#allocation2 + $0x9c] sm:$0x1]
        %v519 = vsel %vm478, 0, %v518
        %520 = vst [vmem:[#allocation2 + $0x9c] sm:$0x1] %v519
        %v521 = vld [vmem:[#allocation2 + $0xa8] sm:$0x1]
        %v522 = vsel %vm478, 0, %v521
        %523 = vst [vmem:[#allocation2 + $0xa8] sm:$0x1] %v522
        %v524 = vld [vmem:[#allocation2 + $0xb4] sm:$0x1]
        %v525 = vsel %vm478, 0, %v524
        %526 = vst [vmem:[#allocation2 + $0xb4] sm:$0x1] %v525
        %v527 = vld [vmem:[#allocation2 + $0xc0] sm:$0x1]
        %v528 = vsel %vm478, 0, %v527
        %529 = vst [vmem:[#allocation2 + $0xc0] sm:$0x1] %v528
        %v530 = vld [vmem:[#allocation2 + $0xcc] sm:$0x1]
        %v531 = vsel %vm478, 0, %v530
        %532 = vst [vmem:[#allocation2 + $0xcc] sm:$0x1] %v531
        %vm533 = vsmask.f32 7938
        %vm534 = vmand %vm476, %vm533
        %v535 = vld [vmem:[#allocation2 + $0x8] sm:$0x1]
        %v536 = vsel %vm534, 0, %v535
        %537 = vst [vmem:[#allocation2 + $0x8] sm:$0x1] %v536
        %v538 = vld [vmem:[#allocation2 + $0x14] sm:$0x1]
        %v539 = vsel %vm534, 0, %v538
        %540 = vst [vmem:[#allocation2 + $0x14] sm:$0x1] %v539
        %v541 = vld [vmem:[#allocation2 + $0x20] sm:$0x1]
        %v542 = vsel %vm534, 0, %v541
        %543 = vst [vmem:[#allocation2 + $0x20] sm:$0x1] %v542
        %v544 = vld [vmem:[#allocation2 + $0x2c] sm:$0x1]
        %v545 = vsel %vm534, 0, %v544
        %546 = vst [vmem:[#allocation2 + $0x2c] sm:$0x1] %v545
        %v547 = vld [vmem:[#allocation2 + $0x38] sm:$0x1]
        %v548 = vsel %vm534, 0, %v547
        %549 = vst [vmem:[#allocation2 + $0x38] sm:$0x1] %v548
        %v550 = vld [vmem:[#allocation2 + $0x44] sm:$0x1]
        %v551 = vsel %vm534, 0, %v550
        %552 = vst [vmem:[#allocation2 + $0x44] sm:$0x1] %v551
        %v553 = vld [vmem:[#allocation2 + $0x50] sm:$0x1]
        %v554 = vsel %vm534, 0, %v553
        %555 = vst [vmem:[#allocation2 + $0x50] sm:$0x1] %v554
        %v556 = vld [vmem:[#allocation2 + $0x5c] sm:$0x1]
        %v557 = vsel %vm534, 0, %v556
        %558 = vst [vmem:[#allocation2 + $0x5c] sm:$0x1] %v557
        %v559 = vld [vmem:[#allocation2 + $0x68] sm:$0x1]
        %v560 = vsel %vm534, 0, %v559
        %561 = vst [vmem:[#allocation2 + $0x68] sm:$0x1] %v560
        %v562 = vld [vmem:[#allocation2 + $0x74] sm:$0x1]
        %v563 = vsel %vm534, 0, %v562
        %564 = vst [vmem:[#allocation2 + $0x74] sm:$0x1] %v563
        %v565 = vld [vmem:[#allocation2 + $0x80] sm:$0x1]
        %v566 = vsel %vm534, 0, %v565
        %567 = vst [vmem:[#allocation2 + $0x80] sm:$0x1] %v566
        %v568 = vld [vmem:[#allocation2 + $0x8c] sm:$0x1]
        %v569 = vsel %vm534, 0, %v568
        %570 = vst [vmem:[#allocation2 + $0x8c] sm:$0x1] %v569
        %v571 = vld [vmem:[#allocation2 + $0x98] sm:$0x1]
        %v572 = vsel %vm534, 0, %v571
        %573 = vst [vmem:[#allocation2 + $0x98] sm:$0x1] %v572
        %v574 = vld [vmem:[#allocation2 + $0xa4] sm:$0x1]
        %v575 = vsel %vm534, 0, %v574
        %576 = vst [vmem:[#allocation2 + $0xa4] sm:$0x1] %v575
        %v577 = vld [vmem:[#allocation2 + $0xb0] sm:$0x1]
        %v578 = vsel %vm534, 0, %v577
        %579 = vst [vmem:[#allocation2 + $0xb0] sm:$0x1] %v578
        %v580 = vld [vmem:[#allocation2 + $0xbc] sm:$0x1]
        %v581 = vsel %vm534, 0, %v580
        %582 = vst [vmem:[#allocation2 + $0xbc] sm:$0x1] %v581
        %v583 = vld [vmem:[#allocation2 + $0xc8] sm:$0x1]
        %v584 = vsel %vm534, 0, %v583
        %585 = vst [vmem:[#allocation2 + $0xc8] sm:$0x1] %v584
        %v586 = vld [vmem:[#allocation2 + $0xd4] sm:$0x1]
        %v587 = vsel %vm534, 0, %v586
        %588 = vst [vmem:[#allocation2 + $0xd4] sm:$0x1] %v587
        %v589 = vpack.c.bf16 %v438, %v437
        %v590 = vpack.c.bf16 %v440, %v439
        %v591 = vpack.c.bf16 %v442, %v441
        %v592 = vpack.c.bf16 %v444, %v443
        %v593 = vpack.c.bf16 %v446, %v445
        %v594 = vpack.c.bf16 %v448, %v447
        %v595 = vpack.c.bf16 %v450, %v449
        %v596 = vpack.c.bf16 %v452, %v451
        %v597 = vpack.c.bf16 %v454, %v453
        %v598 = vpack.c.bf16 %v456, %v455
        %v599 = vpack.c.bf16 %v458, %v457
        %v600 = vpack.c.bf16 %v460, %v459
        %v601 = vpack.c.bf16 %v462, %v461
        %v602 = vpack.c.bf16 %v464, %v463
        %v603 = vpack.c.bf16 %v466, %v465
        %v604 = vpack.c.bf16 %v468, %v467
        %v621 = vunpack.c.l.b16 %v589
        %v622 = vunpack.c.h.b16 %v589
        %v623 = vunpack.c.l.b16 %v590
        %v624 = vunpack.c.h.b16 %v590
        %v625 = vunpack.c.l.b16 %v591
        %v626 = vunpack.c.h.b16 %v591
        %v627 = vunpack.c.l.b16 %v592
        %v628 = vunpack.c.h.b16 %v592
        %v629 = vunpack.c.l.b16 %v593
        %v630 = vunpack.c.h.b16 %v593
        %v631 = vunpack.c.l.b16 %v594
        %v632 = vunpack.c.h.b16 %v594
        %v633 = vunpack.c.l.b16 %v595
        %v634 = vunpack.c.h.b16 %v595
        %v635 = vunpack.c.l.b16 %v596
        %v636 = vunpack.c.h.b16 %v596
        %v637 = vunpack.c.l.b16 %v597
        %v638 = vunpack.c.h.b16 %v597
        %v639 = vunpack.c.l.b16 %v598
        %v640 = vunpack.c.h.b16 %v598
        %v641 = vunpack.c.l.b16 %v599
        %v642 = vunpack.c.h.b16 %v599
        %v643 = vunpack.c.l.b16 %v600
        %v644 = vunpack.c.h.b16 %v600
        %v645 = vunpack.c.l.b16 %v601
        %v646 = vunpack.c.h.b16 %v601
        %v647 = vunpack.c.l.b16 %v602
        %v648 = vunpack.c.h.b16 %v602
        %v649 = vunpack.c.l.b16 %v603
        %v650 = vunpack.c.h.b16 %v603
        %v651 = vunpack.c.l.b16 %v604
        %v652 = vunpack.c.h.b16 %v604
        %v653 = vpack.c.b16 %v621, %v621
        %v654 = vpack.c.b16 %v622, %v622
        %v655 = vpack.c.b16 %v623, %v623
        %v656 = vpack.c.b16 %v624, %v624
        %v657 = vpack.c.b16 %v625, %v625
        %v658 = vpack.c.b16 %v626, %v626
        %v659 = vpack.c.b16 %v627, %v627
        %v660 = vpack.c.b16 %v628, %v628
        %v661 = vpack.c.b16 %v629, %v629
        %v662 = vpack.c.b16 %v630, %v630
        %v663 = vpack.c.b16 %v631, %v631
        %v664 = vpack.c.b16 %v632, %v632
        %v665 = vpack.c.b16 %v633, %v633
        %v666 = vpack.c.b16 %v634, %v634
        %v667 = vpack.c.b16 %v635, %v635
        %v668 = vpack.c.b16 %v636, %v636
        %v669 = vpack.c.b16 %v637, %v637
        %v670 = vpack.c.b16 %v638, %v638
        %v671 = vpack.c.b16 %v639, %v639
        %v672 = vpack.c.b16 %v640, %v640
        %v673 = vpack.c.b16 %v641, %v641
        %v674 = vpack.c.b16 %v642, %v642
        %v675 = vpack.c.b16 %v643, %v643
        %v676 = vpack.c.b16 %v644, %v644
        %v677 = vpack.c.b16 %v645, %v645
        %v678 = vpack.c.b16 %v646, %v646
        %v679 = vpack.c.b16 %v647, %v647
        %v680 = vpack.c.b16 %v648, %v648
        %v681 = vpack.c.b16 %v649, %v649
        %v682 = vpack.c.b16 %v650, %v650
        %v683 = vpack.c.b16 %v651, %v651
        %v684 = vpack.c.b16 %v652, %v652
        %vm685 = vsmask.f32 4368
        %vm686 = vmor %vm477, %vm685
        %v688 = vshrl.u32 %v653, 16
        %v690 = vrot.slane %v688, 7
        %v691 = vshll.u32 %v653, 16
        %v693 = vor.u32 %v690, %v691
        %v694 = vrot.slane %v690, 4
        %v696 = vshrl.u32 %v654, 16
        %v698 = vrot.slane %v696, 7
        %v699 = vshll.u32 %v654, 16
        %v701 = vor.u32 %v698, %v699
        %v702 = vsel %vm686, %v694, %v701
        %v703 = vrot.slane %v698, 4
        %v705 = vshrl.u32 %v655, 16
        %v707 = vrot.slane %v705, 7
        %v708 = vshll.u32 %v655, 16
        %v710 = vor.u32 %v707, %v708
        %v711 = vrot.slane %v707, 4
        %v713 = vshrl.u32 %v656, 16
        %v715 = vrot.slane %v713, 7
        %v716 = vshll.u32 %v656, 16
        %v718 = vor.u32 %v715, %v716
        %v719 = vsel %vm686, %v711, %v718
        %v720 = vrot.slane %v715, 4
        %v722 = vshrl.u32 %v657, 16
        %v724 = vrot.slane %v722, 7
        %v725 = vshll.u32 %v657, 16
        %v727 = vor.u32 %v724, %v725
        %v728 = vrot.slane %v724, 4
        %v730 = vshrl.u32 %v658, 16
        %v732 = vrot.slane %v730, 7
        %v733 = vshll.u32 %v658, 16
        %v735 = vor.u32 %v732, %v733
        %v736 = vsel %vm686, %v728, %v735
        %v737 = vrot.slane %v732, 4
        %v739 = vshrl.u32 %v659, 16
        %v741 = vrot.slane %v739, 7
        %v742 = vshll.u32 %v659, 16
        %v744 = vor.u32 %v741, %v742
        %v745 = vrot.slane %v741, 4
        %v747 = vshrl.u32 %v660, 16
        %v749 = vrot.slane %v747, 7
        %v750 = vshll.u32 %v660, 16
        %v752 = vor.u32 %v749, %v750
        %v753 = vsel %vm686, %v745, %v752
        %v754 = vrot.slane %v749, 4
        %v756 = vshrl.u32 %v661, 16
        %v758 = vrot.slane %v756, 7
        %v759 = vshll.u32 %v661, 16
        %v761 = vor.u32 %v758, %v759
        %v762 = vrot.slane %v758, 4
        %v764 = vshrl.u32 %v662, 16
        %v766 = vrot.slane %v764, 7
        %v767 = vshll.u32 %v662, 16
        %v769 = vor.u32 %v766, %v767
        %v770 = vsel %vm686, %v762, %v769
        %v771 = vrot.slane %v766, 4
        %v773 = vshrl.u32 %v663, 16
        %v775 = vrot.slane %v773, 7
        %v776 = vshll.u32 %v663, 16
        %v778 = vor.u32 %v775, %v776
        %v779 = vrot.slane %v775, 4
        %v781 = vshrl.u32 %v664, 16
        %v783 = vrot.slane %v781, 7
        %v784 = vshll.u32 %v664, 16
        %v786 = vor.u32 %v783, %v784
        %v787 = vsel %vm686, %v779, %v786
        %v788 = vrot.slane %v783, 4
        %v790 = vshrl.u32 %v665, 16
        %v792 = vrot.slane %v790, 7
        %v793 = vshll.u32 %v665, 16
        %v795 = vor.u32 %v792, %v793
        %v796 = vrot.slane %v792, 4
        %v798 = vshrl.u32 %v666, 16
        %v800 = vrot.slane %v798, 7
        %v801 = vshll.u32 %v666, 16
        %v803 = vor.u32 %v800, %v801
        %v804 = vsel %vm686, %v796, %v803
        %v805 = vrot.slane %v800, 4
        %v807 = vshrl.u32 %v667, 16
        %v809 = vrot.slane %v807, 7
        %v810 = vshll.u32 %v667, 16
        %v812 = vor.u32 %v809, %v810
        %v813 = vrot.slane %v809, 4
        %v815 = vshrl.u32 %v668, 16
        %v817 = vrot.slane %v815, 7
        %v818 = vshll.u32 %v668, 16
        %v820 = vor.u32 %v817, %v818
        %v821 = vsel %vm686, %v813, %v820
        %v822 = vrot.slane %v817, 4
        %v824 = vshrl.u32 %v669, 16
        %v826 = vrot.slane %v824, 7
        %v827 = vshll.u32 %v669, 16
        %v829 = vor.u32 %v826, %v827
        %v830 = vrot.slane %v826, 4
        %v832 = vshrl.u32 %v670, 16
        %v834 = vrot.slane %v832, 7
        %v835 = vshll.u32 %v670, 16
        %v837 = vor.u32 %v834, %v835
        %v838 = vsel %vm686, %v830, %v837
        %v839 = vrot.slane %v834, 4
        %v841 = vshrl.u32 %v671, 16
        %v843 = vrot.slane %v841, 7
        %v844 = vshll.u32 %v671, 16
        %v846 = vor.u32 %v843, %v844
        %v847 = vrot.slane %v843, 4
        %v849 = vshrl.u32 %v672, 16
        %v851 = vrot.slane %v849, 7
        %v852 = vshll.u32 %v672, 16
        %v854 = vor.u32 %v851, %v852
        %v855 = vsel %vm686, %v847, %v854
        %v856 = vrot.slane %v851, 4
        %v858 = vshrl.u32 %v673, 16
        %v860 = vrot.slane %v858, 7
        %v861 = vshll.u32 %v673, 16
        %v863 = vor.u32 %v860, %v861
        %v864 = vrot.slane %v860, 4
        %v866 = vshrl.u32 %v674, 16
        %v868 = vrot.slane %v866, 7
        %v869 = vshll.u32 %v674, 16
        %v871 = vor.u32 %v868, %v869
        %v872 = vsel %vm686, %v864, %v871
        %v873 = vrot.slane %v868, 4
        %v875 = vshrl.u32 %v675, 16
        %v877 = vrot.slane %v875, 7
        %v878 = vshll.u32 %v675, 16
        %v880 = vor.u32 %v877, %v878
        %v881 = vrot.slane %v877, 4
        %v883 = vshrl.u32 %v676, 16
        %v885 = vrot.slane %v883, 7
        %v886 = vshll.u32 %v676, 16
        %v888 = vor.u32 %v885, %v886
        %v889 = vsel %vm686, %v881, %v888
        %v890 = vrot.slane %v885, 4
        %v892 = vshrl.u32 %v677, 16
        %v894 = vrot.slane %v892, 7
        %v895 = vshll.u32 %v677, 16
        %v897 = vor.u32 %v894, %v895
        %v898 = vrot.slane %v894, 4
        %v900 = vshrl.u32 %v678, 16
        %v902 = vrot.slane %v900, 7
        %v903 = vshll.u32 %v678, 16
        %v905 = vor.u32 %v902, %v903
        %v906 = vsel %vm686, %v898, %v905
        %v907 = vrot.slane %v902, 4
        %v909 = vshrl.u32 %v679, 16
        %v911 = vrot.slane %v909, 7
        %v912 = vshll.u32 %v679, 16
        %v914 = vor.u32 %v911, %v912
        %v915 = vrot.slane %v911, 4
        %v917 = vshrl.u32 %v680, 16
        %v919 = vrot.slane %v917, 7
        %v920 = vshll.u32 %v680, 16
        %v922 = vor.u32 %v919, %v920
        %v923 = vsel %vm686, %v915, %v922
        %v924 = vrot.slane %v919, 4
        %v926 = vshrl.u32 %v681, 16
        %v928 = vrot.slane %v926, 7
        %v929 = vshll.u32 %v681, 16
        %v931 = vor.u32 %v928, %v929
        %v932 = vrot.slane %v928, 4
        %v934 = vshrl.u32 %v682, 16
        %v936 = vrot.slane %v934, 7
        %v937 = vshll.u32 %v682, 16
        %v939 = vor.u32 %v936, %v937
        %v940 = vsel %vm686, %v932, %v939
        %v941 = vrot.slane %v936, 4
        %v943 = vshrl.u32 %v683, 16
        %v945 = vrot.slane %v943, 7
        %v946 = vshll.u32 %v683, 16
        %v948 = vor.u32 %v945, %v946
        %v949 = vrot.slane %v945, 4
        %v951 = vshrl.u32 %v684, 16
        %v953 = vrot.slane %v951, 7
        %v954 = vshll.u32 %v684, 16
        %v956 = vor.u32 %v953, %v954
        %v957 = vsel %vm686, %v949, %v956
        %v958 = vrot.slane %v953, 4
        %s1007 = scalar_lea.vmem [#allocation2], 12
        %vm1008 = vcmask 1043456
        %vm1009 = vmand %vm1008, %vm533
        %v1010 = vld [vmem:[%s1007] sm:$0xf]
        %v1011 = vsel %vm1009, %v693, %v1010
        %1012 = vst [vmem:[%s1007] sm:$0xf] %v1011
        %1013 = vst [vmem:[%s1007 + $0x4] sm:$0xf] %v702
        %v1014 = vld [vmem:[%s1007 + $0x8] sm:$0x1]
        %v1015 = vsel %vm478, %v703, %v1014
        %1016 = vst [vmem:[%s1007 + $0x8] sm:$0x1] %v1015
        %v1017 = vld [vmem:[%s1007 + $0xc] sm:$0xf]
        %v1018 = vsel %vm1009, %v710, %v1017
        %1019 = vst [vmem:[%s1007 + $0xc] sm:$0xf] %v1018
        %1020 = vst [vmem:[%s1007 + $0x10] sm:$0xf] %v719
        %v1021 = vld [vmem:[%s1007 + $0x14] sm:$0x1]
        %v1022 = vsel %vm478, %v720, %v1021
        %1023 = vst [vmem:[%s1007 + $0x14] sm:$0x1] %v1022
        %v1024 = vld [vmem:[%s1007 + $0x18] sm:$0xf]
        %v1025 = vsel %vm1009, %v727, %v1024
        %1026 = vst [vmem:[%s1007 + $0x18] sm:$0xf] %v1025
        %1027 = vst [vmem:[%s1007 + $0x1c] sm:$0xf] %v736
        %v1028 = vld [vmem:[%s1007 + $0x20] sm:$0x1]
        %v1029 = vsel %vm478, %v737, %v1028
        %1030 = vst [vmem:[%s1007 + $0x20] sm:$0x1] %v1029
        %v1031 = vld [vmem:[%s1007 + $0x24] sm:$0xf]
        %v1032 = vsel %vm1009, %v744, %v1031
        %1033 = vst [vmem:[%s1007 + $0x24] sm:$0xf] %v1032
        %1034 = vst [vmem:[%s1007 + $0x28] sm:$0xf] %v753
        %v1035 = vld [vmem:[%s1007 + $0x2c] sm:$0x1]
        %v1036 = vsel %vm478, %v754, %v1035
        %1037 = vst [vmem:[%s1007 + $0x2c] sm:$0x1] %v1036
        %v1038 = vld [vmem:[%s1007 + $0x30] sm:$0xf]
        %v1039 = vsel %vm1009, %v761, %v1038
        %1040 = vst [vmem:[%s1007 + $0x30] sm:$0xf] %v1039
        %1041 = vst [vmem:[%s1007 + $0x34] sm:$0xf] %v770
        %v1042 = vld [vmem:[%s1007 + $0x38] sm:$0x1]
        %v1043 = vsel %vm478, %v771, %v1042
        %1044 = vst [vmem:[%s1007 + $0x38] sm:$0x1] %v1043
        %v1045 = vld [vmem:[%s1007 + $0x3c] sm:$0xf]
        %v1046 = vsel %vm1009, %v778, %v1045
        %1047 = vst [vmem:[%s1007 + $0x3c] sm:$0xf] %v1046
        %1048 = vst [vmem:[%s1007 + $0x40] sm:$0xf] %v787
        %v1049 = vld [vmem:[%s1007 + $0x44] sm:$0x1]
        %v1050 = vsel %vm478, %v788, %v1049
        %1051 = vst [vmem:[%s1007 + $0x44] sm:$0x1] %v1050
        %v1052 = vld [vmem:[%s1007 + $0x48] sm:$0xf]
        %v1053 = vsel %vm1009, %v795, %v1052
        %1054 = vst [vmem:[%s1007 + $0x48] sm:$0xf] %v1053
        %1055 = vst [vmem:[%s1007 + $0x4c] sm:$0xf] %v804
        %v1056 = vld [vmem:[%s1007 + $0x50] sm:$0x1]
        %v1057 = vsel %vm478, %v805, %v1056
        %1058 = vst [vmem:[%s1007 + $0x50] sm:$0x1] %v1057
        %v1059 = vld [vmem:[%s1007 + $0x54] sm:$0xf]
        %v1060 = vsel %vm1009, %v812, %v1059
        %1061 = vst [vmem:[%s1007 + $0x54] sm:$0xf] %v1060
        %1062 = vst [vmem:[%s1007 + $0x58] sm:$0xf] %v821
        %v1063 = vld [vmem:[%s1007 + $0x5c] sm:$0x1]
        %v1064 = vsel %vm478, %v822, %v1063
        %1065 = vst [vmem:[%s1007 + $0x5c] sm:$0x1] %v1064
        %v1066 = vld [vmem:[%s1007 + $0x60] sm:$0xf]
        %v1067 = vsel %vm1009, %v829, %v1066
        %1068 = vst [vmem:[%s1007 + $0x60] sm:$0xf] %v1067
        %1069 = vst [vmem:[%s1007 + $0x64] sm:$0xf] %v838
        %v1070 = vld [vmem:[%s1007 + $0x68] sm:$0x1]
        %v1071 = vsel %vm478, %v839, %v1070
        %1072 = vst [vmem:[%s1007 + $0x68] sm:$0x1] %v1071
        %v1073 = vld [vmem:[%s1007 + $0x6c] sm:$0xf]
        %v1074 = vsel %vm1009, %v846, %v1073
        %1075 = vst [vmem:[%s1007 + $0x6c] sm:$0xf] %v1074
        %1076 = vst [vmem:[%s1007 + $0x70] sm:$0xf] %v855
        %v1077 = vld [vmem:[%s1007 + $0x74] sm:$0x1]
        %v1078 = vsel %vm478, %v856, %v1077
        %1079 = vst [vmem:[%s1007 + $0x74] sm:$0x1] %v1078
        %v1080 = vld [vmem:[%s1007 + $0x78] sm:$0xf]
        %v1081 = vsel %vm1009, %v863, %v1080
        %1082 = vst [vmem:[%s1007 + $0x78] sm:$0xf] %v1081
        %1083 = vst [vmem:[%s1007 + $0x7c] sm:$0xf] %v872
        %v1084 = vld [vmem:[%s1007 + $0x80] sm:$0x1]
        %v1085 = vsel %vm478, %v873, %v1084
        %1086 = vst [vmem:[%s1007 + $0x80] sm:$0x1] %v1085
        %v1087 = vld [vmem:[%s1007 + $0x84] sm:$0xf]
        %v1088 = vsel %vm1009, %v880, %v1087
        %1089 = vst [vmem:[%s1007 + $0x84] sm:$0xf] %v1088
        %1090 = vst [vmem:[%s1007 + $0x88] sm:$0xf] %v889
        %v1091 = vld [vmem:[%s1007 + $0x8c] sm:$0x1]
        %v1092 = vsel %vm478, %v890, %v1091
        %1093 = vst [vmem:[%s1007 + $0x8c] sm:$0x1] %v1092
        %v1094 = vld [vmem:[%s1007 + $0x90] sm:$0xf]
        %v1095 = vsel %vm1009, %v897, %v1094
        %1096 = vst [vmem:[%s1007 + $0x90] sm:$0xf] %v1095
        %1097 = vst [vmem:[%s1007 + $0x94] sm:$0xf] %v906
        %v1098 = vld [vmem:[%s1007 + $0x98] sm:$0x1]
        %v1099 = vsel %vm478, %v907, %v1098
        %1100 = vst [vmem:[%s1007 + $0x98] sm:$0x1] %v1099
        %v1101 = vld [vmem:[%s1007 + $0x9c] sm:$0xf]
        %v1102 = vsel %vm1009, %v914, %v1101
        %1103 = vst [vmem:[%s1007 + $0x9c] sm:$0xf] %v1102
        %1104 = vst [vmem:[%s1007 + $0xa0] sm:$0xf] %v923
        %v1105 = vld [vmem:[%s1007 + $0xa4] sm:$0x1]
        %v1106 = vsel %vm478, %v924, %v1105
        %1107 = vst [vmem:[%s1007 + $0xa4] sm:$0x1] %v1106
        %v1108 = vld [vmem:[%s1007 + $0xa8] sm:$0xf]
        %v1109 = vsel %vm1009, %v931, %v1108
        %1110 = vst [vmem:[%s1007 + $0xa8] sm:$0xf] %v1109
        %1111 = vst [vmem:[%s1007 + $0xac] sm:$0xf] %v940
        %v1112 = vld [vmem:[%s1007 + $0xb0] sm:$0x1]
        %v1113 = vsel %vm478, %v941, %v1112
        %1114 = vst [vmem:[%s1007 + $0xb0] sm:$0x1] %v1113
        %v1115 = vld [vmem:[%s1007 + $0xb4] sm:$0xf]
        %v1116 = vsel %vm1009, %v948, %v1115
        %1117 = vst [vmem:[%s1007 + $0xb4] sm:$0xf] %v1116
        %1118 = vst [vmem:[%s1007 + $0xb8] sm:$0xf] %v957
        %v1119 = vld [vmem:[%s1007 + $0xbc] sm:$0x1]
        %v1120 = vsel %vm478, %v958, %v1119
        %1121 = vst [vmem:[%s1007 + $0xbc] sm:$0x1] %v1120
        %v1122 = vld [vmem:[#allocation2] sm:$0xf]
        %v1123 = vld [vmem:[#allocation2 + $0x4] sm:$0xf]
        %v1124 = vld [vmem:[#allocation2 + $0xc] sm:$0xf]
        %v1125 = vld [vmem:[#allocation2 + $0x10] sm:$0xf]
        %v1126 = vld [vmem:[#allocation2 + $0x18] sm:$0xf]
        %v1127 = vld [vmem:[#allocation2 + $0x1c] sm:$0xf]
        %v1128 = vld [vmem:[#allocation2 + $0x24] sm:$0xf]
        %v1129 = vld [vmem:[#allocation2 + $0x28] sm:$0xf]
        %v1130 = vld [vmem:[#allocation2 + $0x30] sm:$0xf]
        %v1131 = vld [vmem:[#allocation2 + $0x34] sm:$0xf]
        %v1132 = vld [vmem:[#allocation2 + $0x3c] sm:$0xf]
        %v1133 = vld [vmem:[#allocation2 + $0x40] sm:$0xf]
        %v1134 = vld [vmem:[#allocation2 + $0x48] sm:$0xf]
        %v1135 = vld [vmem:[#allocation2 + $0x4c] sm:$0xf]
        %v1136 = vld [vmem:[#allocation2 + $0x54] sm:$0xf]
        %v1137 = vld [vmem:[#allocation2 + $0x58] sm:$0xf]
        %v1138 = vld [vmem:[#allocation2 + $0x60] sm:$0xf]
        %v1139 = vld [vmem:[#allocation2 + $0x64] sm:$0xf]
        %v1140 = vld [vmem:[#allocation2 + $0x6c] sm:$0xf]
        %v1141 = vld [vmem:[#allocation2 + $0x70] sm:$0xf]
        %v1142 = vld [vmem:[#allocation2 + $0x78] sm:$0xf]
        %v1143 = vld [vmem:[#allocation2 + $0x7c] sm:$0xf]
        %v1144 = vld [vmem:[#allocation2 + $0x84] sm:$0xf]
        %v1145 = vld [vmem:[#allocation2 + $0x88] sm:$0xf]
        %v1146 = vld [vmem:[#allocation2 + $0x90] sm:$0xf]
        %v1147 = vld [vmem:[#allocation2 + $0x94] sm:$0xf]
        %v1148 = vld [vmem:[#allocation2 + $0x9c] sm:$0xf]
        %v1149 = vld [vmem:[#allocation2 + $0xa0] sm:$0xf]
        %v1150 = vld [vmem:[#allocation2 + $0xa8] sm:$0xf]
        %v1151 = vld [vmem:[#allocation2 + $0xac] sm:$0xf]
        %v1152 = vld [vmem:[#allocation2 + $0xb4] sm:$0xf]
        %v1153 = vld [vmem:[#allocation2 + $0xb8] sm:$0xf]
        %v1154 = vld [vmem:[#allocation9] sm:$0xf]
        %v1155 = vld [vmem:[#allocation9 + $0x4] sm:$0xf]
        %v1156 = vld [vmem:[#allocation9 + $0x8] sm:$0xf]
        %v1157 = vld [vmem:[#allocation9 + $0xc] sm:$0xf]
        %v1158 = vld [vmem:[#allocation9 + $0x10] sm:$0xf]
        %v1159 = vld [vmem:[#allocation9 + $0x14] sm:$0xf]
        %v1160 = vld [vmem:[#allocation9 + $0x18] sm:$0xf]
        %v1161 = vld [vmem:[#allocation9 + $0x1c] sm:$0xf]
        %v1162 = vld [vmem:[#allocation9 + $0x20] sm:$0xf]
        %v1163 = vld [vmem:[#allocation9 + $0x24] sm:$0xf]
        %v1164 = vld [vmem:[#allocation9 + $0x28] sm:$0xf]
        %v1165 = vld [vmem:[#allocation9 + $0x2c] sm:$0xf]
        %v1166 = vld [vmem:[#allocation9 + $0x30] sm:$0xf]
        %v1167 = vld [vmem:[#allocation9 + $0x34] sm:$0xf]
        %v1168 = vld [vmem:[#allocation9 + $0x38] sm:$0xf]
        %v1169 = vld [vmem:[#allocation9 + $0x3c] sm:$0xf]
        %v1170 = vld [vmem:[#allocation2 + $0x8] sm:$0x1]
        %v1171 = vld [vmem:[#allocation2 + $0x14] sm:$0x1]
        %v1172 = vld [vmem:[#allocation2 + $0x20] sm:$0x1]
        %v1173 = vld [vmem:[#allocation2 + $0x2c] sm:$0x1]
        %v1174 = vld [vmem:[#allocation2 + $0x38] sm:$0x1]
        %v1175 = vld [vmem:[#allocation2 + $0x44] sm:$0x1]
        %v1176 = vld [vmem:[#allocation2 + $0x50] sm:$0x1]
        %v1177 = vld [vmem:[#allocation2 + $0x5c] sm:$0x1]
        %v1178 = vld [vmem:[#allocation2 + $0x68] sm:$0x1]
        %v1179 = vld [vmem:[#allocation2 + $0x74] sm:$0x1]
        %v1180 = vld [vmem:[#allocation2 + $0x80] sm:$0x1]
        %v1181 = vld [vmem:[#allocation2 + $0x8c] sm:$0x1]
        %v1182 = vld [vmem:[#allocation2 + $0x98] sm:$0x1]
        %v1183 = vld [vmem:[#allocation2 + $0xa4] sm:$0x1]
        %v1184 = vld [vmem:[#allocation2 + $0xb0] sm:$0x1]
        %v1185 = vld [vmem:[#allocation2 + $0xbc] sm:$0x1]
        %vm1186 = vsmask.f32 3328
        %vm1187 = vsmask.f32 7440
        %vm1188 = vmor %vm1186, %vm1187
        %v1190 = vshrl.u32 %v1122, 16
        %v1192 = vrot.slane %v1190, 4
        %v1193 = vshll.u32 %v1122, 16
        %v1195 = vrot.slane %v1193, 5
        %v1196 = vor.u32 %v1192, %v1195
        %v1197 = vrot.slane %v1196, 4
        %v1199 = vshll.u32 %v1123, 16
        %v1201 = vrot.slane %v1199, 5
        %v1202 = vsel %vm1188, %v1197, %v1201
        %v1203 = vshrl.u32 %v1123, 16
        %v1205 = vrot.slane %v1203, 4
        %v1206 = vor.u32 %v1205, %v1201
        %v1207 = vrot.slane %v1206, 4
        %v1209 = vshll.u32 %v1170, 16
        %v1211 = vrot.slane %v1209, 5
        %v1212 = vsel %vm1188, %v1207, %v1211
        %v1214 = vshrl.u32 %v1124, 16
        %v1216 = vrot.slane %v1214, 4
        %v1217 = vshll.u32 %v1124, 16
        %v1219 = vrot.slane %v1217, 5
        %v1220 = vor.u32 %v1216, %v1219
        %v1221 = vrot.slane %v1220, 4
        %v1223 = vshll.u32 %v1125, 16
        %v1225 = vrot.slane %v1223, 5
        %v1226 = vsel %vm1188, %v1221, %v1225
        %v1227 = vshrl.u32 %v1125, 16
        %v1229 = vrot.slane %v1227, 4
        %v1230 = vor.u32 %v1229, %v1225
        %v1231 = vrot.slane %v1230, 4
        %v1233 = vshll.u32 %v1171, 16
        %v1235 = vrot.slane %v1233, 5
        %v1236 = vsel %vm1188, %v1231, %v1235
        %v1238 = vshrl.u32 %v1126, 16
        %v1240 = vrot.slane %v1238, 4
        %v1241 = vshll.u32 %v1126, 16
        %v1243 = vrot.slane %v1241, 5
        %v1244 = vor.u32 %v1240, %v1243
        %v1245 = vrot.slane %v1244, 4
        %v1247 = vshll.u32 %v1127, 16
        %v1249 = vrot.slane %v1247, 5
        %v1250 = vsel %vm1188, %v1245, %v1249
        %v1251 = vshrl.u32 %v1127, 16
        %v1253 = vrot.slane %v1251, 4
        %v1254 = vor.u32 %v1253, %v1249
        %v1255 = vrot.slane %v1254, 4
        %v1257 = vshll.u32 %v1172, 16
        %v1259 = vrot.slane %v1257, 5
        %v1260 = vsel %vm1188, %v1255, %v1259
        %v1262 = vshrl.u32 %v1128, 16
        %v1264 = vrot.slane %v1262, 4
        %v1265 = vshll.u32 %v1128, 16
        %v1267 = vrot.slane %v1265, 5
        %v1268 = vor.u32 %v1264, %v1267
        %v1269 = vrot.slane %v1268, 4
        %v1271 = vshll.u32 %v1129, 16
        %v1273 = vrot.slane %v1271, 5
        %v1274 = vsel %vm1188, %v1269, %v1273
        %v1275 = vshrl.u32 %v1129, 16
        %v1277 = vrot.slane %v1275, 4
        %v1278 = vor.u32 %v1277, %v1273
        %v1279 = vrot.slane %v1278, 4
        %v1281 = vshll.u32 %v1173, 16
        %v1283 = vrot.slane %v1281, 5
        %v1284 = vsel %vm1188, %v1279, %v1283
        %v1286 = vshrl.u32 %v1130, 16
        %v1288 = vrot.slane %v1286, 4
        %v1289 = vshll.u32 %v1130, 16
        %v1291 = vrot.slane %v1289, 5
        %v1292 = vor.u32 %v1288, %v1291
        %v1293 = vrot.slane %v1292, 4
        %v1295 = vshll.u32 %v1131, 16
        %v1297 = vrot.slane %v1295, 5
        %v1298 = vsel %vm1188, %v1293, %v1297
        %v1299 = vshrl.u32 %v1131, 16
        %v1301 = vrot.slane %v1299, 4
        %v1302 = vor.u32 %v1301, %v1297
        %v1303 = vrot.slane %v1302, 4
        %v1305 = vshll.u32 %v1174, 16
        %v1307 = vrot.slane %v1305, 5
        %v1308 = vsel %vm1188, %v1303, %v1307
        %v1310 = vshrl.u32 %v1132, 16
        %v1312 = vrot.slane %v1310, 4
        %v1313 = vshll.u32 %v1132, 16
        %v1315 = vrot.slane %v1313, 5
        %v1316 = vor.u32 %v1312, %v1315
        %v1317 = vrot.slane %v1316, 4
        %v1319 = vshll.u32 %v1133, 16
        %v1321 = vrot.slane %v1319, 5
        %v1322 = vsel %vm1188, %v1317, %v1321
        %v1323 = vshrl.u32 %v1133, 16
        %v1325 = vrot.slane %v1323, 4
        %v1326 = vor.u32 %v1325, %v1321
        %v1327 = vrot.slane %v1326, 4
        %v1329 = vshll.u32 %v1175, 16
        %v1331 = vrot.slane %v1329, 5
        %v1332 = vsel %vm1188, %v1327, %v1331
        %v1334 = vshrl.u32 %v1134, 16
        %v1336 = vrot.slane %v1334, 4
        %v1337 = vshll.u32 %v1134, 16
        %v1339 = vrot.slane %v1337, 5
        %v1340 = vor.u32 %v1336, %v1339
        %v1341 = vrot.slane %v1340, 4
        %v1343 = vshll.u32 %v1135, 16
        %v1345 = vrot.slane %v1343, 5
        %v1346 = vsel %vm1188, %v1341, %v1345
        %v1347 = vshrl.u32 %v1135, 16
        %v1349 = vrot.slane %v1347, 4
        %v1350 = vor.u32 %v1349, %v1345
        %v1351 = vrot.slane %v1350, 4
        %v1353 = vshll.u32 %v1176, 16
        %v1355 = vrot.slane %v1353, 5
        %v1356 = vsel %vm1188, %v1351, %v1355
        %v1358 = vshrl.u32 %v1136, 16
        %v1360 = vrot.slane %v1358, 4
        %v1361 = vshll.u32 %v1136, 16
        %v1363 = vrot.slane %v1361, 5
        %v1364 = vor.u32 %v1360, %v1363
        %v1365 = vrot.slane %v1364, 4
        %v1367 = vshll.u32 %v1137, 16
        %v1369 = vrot.slane %v1367, 5
        %v1370 = vsel %vm1188, %v1365, %v1369
        %v1371 = vshrl.u32 %v1137, 16
        %v1373 = vrot.slane %v1371, 4
        %v1374 = vor.u32 %v1373, %v1369
        %v1375 = vrot.slane %v1374, 4
        %v1377 = vshll.u32 %v1177, 16
        %v1379 = vrot.slane %v1377, 5
        %v1380 = vsel %vm1188, %v1375, %v1379
        %v1382 = vshrl.u32 %v1138, 16
        %v1384 = vrot.slane %v1382, 4
        %v1385 = vshll.u32 %v1138, 16
        %v1387 = vrot.slane %v1385, 5
        %v1388 = vor.u32 %v1384, %v1387
        %v1389 = vrot.slane %v1388, 4
        %v1391 = vshll.u32 %v1139, 16
        %v1393 = vrot.slane %v1391, 5
        %v1394 = vsel %vm1188, %v1389, %v1393
        %v1395 = vshrl.u32 %v1139, 16
        %v1397 = vrot.slane %v1395, 4
        %v1398 = vor.u32 %v1397, %v1393
        %v1399 = vrot.slane %v1398, 4
        %v1401 = vshll.u32 %v1178, 16
        %v1403 = vrot.slane %v1401, 5
        %v1404 = vsel %vm1188, %v1399, %v1403
        %v1406 = vshrl.u32 %v1140, 16
        %v1408 = vrot.slane %v1406, 4
        %v1409 = vshll.u32 %v1140, 16
        %v1411 = vrot.slane %v1409, 5
        %v1412 = vor.u32 %v1408, %v1411
        %v1413 = vrot.slane %v1412, 4
        %v1415 = vshll.u32 %v1141, 16
        %v1417 = vrot.slane %v1415, 5
        %v1418 = vsel %vm1188, %v1413, %v1417
        %v1419 = vshrl.u32 %v1141, 16
        %v1421 = vrot.slane %v1419, 4
        %v1422 = vor.u32 %v1421, %v1417
        %v1423 = vrot.slane %v1422, 4
        %v1425 = vshll.u32 %v1179, 16
        %v1427 = vrot.slane %v1425, 5
        %v1428 = vsel %vm1188, %v1423, %v1427
        %v1430 = vshrl.u32 %v1142, 16
        %v1432 = vrot.slane %v1430, 4
        %v1433 = vshll.u32 %v1142, 16
        %v1435 = vrot.slane %v1433, 5
        %v1436 = vor.u32 %v1432, %v1435
        %v1437 = vrot.slane %v1436, 4
        %v1439 = vshll.u32 %v1143, 16
        %v1441 = vrot.slane %v1439, 5
        %v1442 = vsel %vm1188, %v1437, %v1441
        %v1443 = vshrl.u32 %v1143, 16
        %v1445 = vrot.slane %v1443, 4
        %v1446 = vor.u32 %v1445, %v1441
        %v1447 = vrot.slane %v1446, 4
        %v1449 = vshll.u32 %v1180, 16
        %v1451 = vrot.slane %v1449, 5
        %v1452 = vsel %vm1188, %v1447, %v1451
        %v1454 = vshrl.u32 %v1144, 16
        %v1456 = vrot.slane %v1454, 4
        %v1457 = vshll.u32 %v1144, 16
        %v1459 = vrot.slane %v1457, 5
        %v1460 = vor.u32 %v1456, %v1459
        %v1461 = vrot.slane %v1460, 4
        %v1463 = vshll.u32 %v1145, 16
        %v1465 = vrot.slane %v1463, 5
        %v1466 = vsel %vm1188, %v1461, %v1465
        %v1467 = vshrl.u32 %v1145, 16
        %v1469 = vrot.slane %v1467, 4
        %v1470 = vor.u32 %v1469, %v1465
        %v1471 = vrot.slane %v1470, 4
        %v1473 = vshll.u32 %v1181, 16
        %v1475 = vrot.slane %v1473, 5
        %v1476 = vsel %vm1188, %v1471, %v1475
        %v1478 = vshrl.u32 %v1146, 16
        %v1480 = vrot.slane %v1478, 4
        %v1481 = vshll.u32 %v1146, 16
        %v1483 = vrot.slane %v1481, 5
        %v1484 = vor.u32 %v1480, %v1483
        %v1485 = vrot.slane %v1484, 4
        %v1487 = vshll.u32 %v1147, 16
        %v1489 = vrot.slane %v1487, 5
        %v1490 = vsel %vm1188, %v1485, %v1489
        %v1491 = vshrl.u32 %v1147, 16
        %v1493 = vrot.slane %v1491, 4
        %v1494 = vor.u32 %v1493, %v1489
        %v1495 = vrot.slane %v1494, 4
        %v1497 = vshll.u32 %v1182, 16
        %v1499 = vrot.slane %v1497, 5
        %v1500 = vsel %vm1188, %v1495, %v1499
        %v1502 = vshrl.u32 %v1148, 16
        %v1504 = vrot.slane %v1502, 4
        %v1505 = vshll.u32 %v1148, 16
        %v1507 = vrot.slane %v1505, 5
        %v1508 = vor.u32 %v1504, %v1507
        %v1509 = vrot.slane %v1508, 4
        %v1511 = vshll.u32 %v1149, 16
        %v1513 = vrot.slane %v1511, 5
        %v1514 = vsel %vm1188, %v1509, %v1513
        %v1515 = vshrl.u32 %v1149, 16
        %v1517 = vrot.slane %v1515, 4
        %v1518 = vor.u32 %v1517, %v1513
        %v1519 = vrot.slane %v1518, 4
        %v1521 = vshll.u32 %v1183, 16
        %v1523 = vrot.slane %v1521, 5
        %v1524 = vsel %vm1188, %v1519, %v1523
        %v1526 = vshrl.u32 %v1150, 16
        %v1528 = vrot.slane %v1526, 4
        %v1529 = vshll.u32 %v1150, 16
        %v1531 = vrot.slane %v1529, 5
        %v1532 = vor.u32 %v1528, %v1531
        %v1533 = vrot.slane %v1532, 4
        %v1535 = vshll.u32 %v1151, 16
        %v1537 = vrot.slane %v1535, 5
        %v1538 = vsel %vm1188, %v1533, %v1537
        %v1539 = vshrl.u32 %v1151, 16
        %v1541 = vrot.slane %v1539, 4
        %v1542 = vor.u32 %v1541, %v1537
        %v1543 = vrot.slane %v1542, 4
        %v1545 = vshll.u32 %v1184, 16
        %v1547 = vrot.slane %v1545, 5
        %v1548 = vsel %vm1188, %v1543, %v1547
        %v1550 = vshrl.u32 %v1152, 16
        %v1552 = vrot.slane %v1550, 4
        %v1553 = vshll.u32 %v1152, 16
        %v1555 = vrot.slane %v1553, 5
        %v1556 = vor.u32 %v1552, %v1555
        %v1557 = vrot.slane %v1556, 4
        %v1559 = vshll.u32 %v1153, 16
        %v1561 = vrot.slane %v1559, 5
        %v1562 = vsel %vm1188, %v1557, %v1561
        %v1563 = vshrl.u32 %v1153, 16
        %v1565 = vrot.slane %v1563, 4
        %v1566 = vor.u32 %v1565, %v1561
        %v1567 = vrot.slane %v1566, 4
        %v1569 = vshll.u32 %v1185, 16
        %v1571 = vrot.slane %v1569, 5
        %v1572 = vsel %vm1188, %v1567, %v1571
        %s1573 = scalar_lea.vmem [#allocation9], 64
        %v1574 = vld [vmem:[%s1573] sm:$0xf]
        %v1575 = vld [vmem:[%s1573 + $0x4] sm:$0xf]
        %v1576 = vld [vmem:[%s1573 + $0x8] sm:$0xf]
        %v1577 = vld [vmem:[%s1573 + $0xc] sm:$0xf]
        %v1578 = vld [vmem:[%s1573 + $0x10] sm:$0xf]
        %v1579 = vld [vmem:[%s1573 + $0x14] sm:$0xf]
        %v1580 = vld [vmem:[%s1573 + $0x18] sm:$0xf]
        %v1581 = vld [vmem:[%s1573 + $0x1c] sm:$0xf]
        %v1582 = vld [vmem:[%s1573 + $0x20] sm:$0xf]
        %v1583 = vld [vmem:[%s1573 + $0x24] sm:$0xf]
        %v1584 = vld [vmem:[%s1573 + $0x28] sm:$0xf]
        %v1585 = vld [vmem:[%s1573 + $0x2c] sm:$0xf]
        %v1586 = vld [vmem:[%s1573 + $0x30] sm:$0xf]
        %v1587 = vld [vmem:[%s1573 + $0x34] sm:$0xf]
        %v1588 = vld [vmem:[%s1573 + $0x38] sm:$0xf]
        %v1589 = vld [vmem:[%s1573 + $0x3c] sm:$0xf]
        %v1590 = vunpack.c.l.b16 %v1202
        %v1591 = vunpack.c.l.b16 %v1212
        %v1592 = vunpack.c.l.b16 %v1226
        %v1593 = vunpack.c.l.b16 %v1236
        %v1594 = vunpack.c.l.b16 %v1250
        %v1595 = vunpack.c.l.b16 %v1260
        %v1596 = vunpack.c.l.b16 %v1274
        %v1597 = vunpack.c.l.b16 %v1284
        %v1598 = vunpack.c.l.b16 %v1298
        %v1599 = vunpack.c.l.b16 %v1308
        %v1600 = vunpack.c.l.b16 %v1322
        %v1601 = vunpack.c.l.b16 %v1332
        %v1602 = vunpack.c.l.b16 %v1346
        %v1603 = vunpack.c.l.b16 %v1356
        %v1604 = vunpack.c.l.b16 %v1370
        %v1605 = vunpack.c.l.b16 %v1380
        %v1606 = vunpack.c.l.b16 %v1394
        %v1607 = vunpack.c.l.b16 %v1404
        %v1608 = vunpack.c.l.b16 %v1418
        %v1609 = vunpack.c.l.b16 %v1428
        %v1610 = vunpack.c.l.b16 %v1442
        %v1611 = vunpack.c.l.b16 %v1452
        %v1612 = vunpack.c.l.b16 %v1466
        %v1613 = vunpack.c.l.b16 %v1476
        %v1614 = vunpack.c.l.b16 %v1490
        %v1615 = vunpack.c.l.b16 %v1500
        %v1616 = vunpack.c.l.b16 %v1514
        %v1617 = vunpack.c.l.b16 %v1524
        %v1618 = vunpack.c.l.b16 %v1538
        %v1619 = vunpack.c.l.b16 %v1548
        %v1620 = vunpack.c.l.b16 %v1562
        %v1621 = vunpack.c.l.b16 %v1572
        %v1622 = vpack.c.b16 %v1591, %v1590
        %v1623 = vpack.c.b16 %v1593, %v1592
        %v1624 = vpack.c.b16 %v1595, %v1594
        %v1625 = vpack.c.b16 %v1597, %v1596
        %v1626 = vpack.c.b16 %v1599, %v1598
        %v1627 = vpack.c.b16 %v1601, %v1600
        %v1628 = vpack.c.b16 %v1603, %v1602
        %v1629 = vpack.c.b16 %v1605, %v1604
        %v1630 = vpack.c.b16 %v1607, %v1606
        %v1631 = vpack.c.b16 %v1609, %v1608
        %v1632 = vpack.c.b16 %v1611, %v1610
        %v1633 = vpack.c.b16 %v1613, %v1612
        %v1634 = vpack.c.b16 %v1615, %v1614
        %v1635 = vpack.c.b16 %v1617, %v1616
        %v1636 = vpack.c.b16 %v1619, %v1618
        %v1637 = vpack.c.b16 %v1621, %v1620
        %v1670 = vunpack.c.l.b16 %v1574
        %v1671 = vunpack.c.l.b16 %v1575
        %v1672 = vunpack.c.l.b16 %v1576
        %v1673 = vunpack.c.l.b16 %v1577
        %v1674 = vunpack.c.l.b16 %v1578
        %v1675 = vunpack.c.l.b16 %v1579
        %v1676 = vunpack.c.l.b16 %v1580
        %v1677 = vunpack.c.l.b16 %v1581
        %v1678 = vunpack.c.l.b16 %v1582
        %v1679 = vunpack.c.l.b16 %v1583
        %v1680 = vunpack.c.l.b16 %v1584
        %v1681 = vunpack.c.l.b16 %v1585
        %v1682 = vunpack.c.l.b16 %v1586
        %v1683 = vunpack.c.l.b16 %v1587
        %v1684 = vunpack.c.l.b16 %v1588
        %v1685 = vunpack.c.l.b16 %v1589
        %v1686 = vpack.c.b16 %v1671, %v1670
        %v1687 = vpack.c.b16 %v1673, %v1672
        %v1688 = vpack.c.b16 %v1675, %v1674
        %v1689 = vpack.c.b16 %v1677, %v1676
        %v1690 = vpack.c.b16 %v1679, %v1678
        %v1691 = vpack.c.b16 %v1681, %v1680
        %v1692 = vpack.c.b16 %v1683, %v1682
        %v1693 = vpack.c.b16 %v1685, %v1684
        %1702 = vmatprep.subr.bf16.mxu0 0
        %1703 = vmatpush1.bf16.msra.mxu0 %v1686
        %1704 = vmatprep.subr.bf16.mxu0 0
        %1705 = vmatpush1.bf16.msra.mxu0 %v1687
        %1706 = vmatprep.subr.bf16.mxu0 0
        %1707 = vmatpush1.bf16.msra.mxu0 %v1688
        %1708 = vmatprep.subr.bf16.mxu0 0
        %1709 = vmatpush1.bf16.msra.mxu0 %v1689
        %1710 = vmatprep.subr.bf16.mxu0 0
        %1711 = vmatpush1.bf16.msra.mxu0 %v1690
        %1712 = vmatprep.subr.bf16.mxu0 0
        %1713 = vmatpush1.bf16.msra.mxu0 %v1691
        %1714 = vmatprep.subr.bf16.mxu0 0
        %1715 = vmatpush1.bf16.msra.mxu0 %v1692
        %1716 = vmatprep.subr.bf16.mxu0 0
        %1717 = vmatpush1.bf16.msra.mxu0 %v1693
        %1718 = vmatprep.subr.bf16.mxu0 0
        %1719 = vmatpush1.bf16.msra.mxu0 0
        %1720 = vmatprep.subr.bf16.mxu0 0
        %1721 = vmatpush1.bf16.msra.mxu0 0
        %1722 = vmatprep.subr.bf16.mxu0 0
        %1723 = vmatpush1.bf16.msra.mxu0 0
        %1724 = vmatprep.subr.bf16.mxu0 0
        %1725 = vmatpush1.bf16.msra.mxu0 0
        %1726 = vmatprep.subr.bf16.mxu0 0
        %1727 = vmatpush1.bf16.msra.mxu0 0
        %1728 = vmatprep.subr.bf16.mxu0 0
        %1729 = vmatpush1.bf16.msra.mxu0 0
        %1730 = vmatprep.subr.bf16.mxu0 0
        %1731 = vmatpush1.bf16.msra.mxu0 0
        %1732 = vmatprep.subr.bf16.mxu0 0
        %1733 = vmatpush1.bf16.msra.mxu0 0
        %1734 = vmatprep.mubr.bf16.mxu0 0
        %1735 = vmatmul.mubr.bf16.gmra.mrb[0].mxu0 %v1622
        %v1736 = vpop.f32.mrb[0].mxu0
        %v1737 = vadd.f32 0.0, %v1736
        %v1738 = vpop.f32.mrb[0].mxu0
        %v1739 = vpop.f32.mrb[0].mxu0
        %v1740 = vadd.f32 0.0, %v1739
        %v1741 = vpop.f32.mrb[0].mxu0
        %1742 = vmatprep.mubr.bf16.mxu0 0
        %1743 = vmatmul.mubr.bf16.gmra.mrb[0].mxu0 %v1623
        %v1744 = vpop.f32.mrb[0].mxu0
        %v1745 = vadd.f32 0.0, %v1744
        %v1746 = vpop.f32.mrb[0].mxu0
        %v1747 = vpop.f32.mrb[0].mxu0
        %v1748 = vadd.f32 0.0, %v1747
        %v1749 = vpop.f32.mrb[0].mxu0
        %1750 = vmatprep.mubr.bf16.mxu0 0
        %1751 = vmatmul.mubr.bf16.gmra.mrb[0].mxu0 %v1624
        %v1752 = vpop.f32.mrb[0].mxu0
        %v1753 = vadd.f32 0.0, %v1752
        %v1754 = vpop.f32.mrb[0].mxu0
        %v1755 = vpop.f32.mrb[0].mxu0
        %v1756 = vadd.f32 0.0, %v1755
        %v1757 = vpop.f32.mrb[0].mxu0
        %1758 = vmatprep.mubr.bf16.mxu0 0
        %1759 = vmatmul.mubr.bf16.gmra.mrb[0].mxu0 %v1625
        %v1760 = vpop.f32.mrb[0].mxu0
        %v1761 = vadd.f32 0.0, %v1760
        %v1762 = vpop.f32.mrb[0].mxu0
        %v1763 = vpop.f32.mrb[0].mxu0
        %v1764 = vadd.f32 0.0, %v1763
        %v1765 = vpop.f32.mrb[0].mxu0
        %1766 = vmatprep.mubr.bf16.mxu0 0
        %1767 = vmatmul.mubr.bf16.gmra.mrb[0].mxu0 %v1626
        %v1768 = vpop.f32.mrb[0].mxu0
        %v1769 = vadd.f32 0.0, %v1768
        %v1770 = vpop.f32.mrb[0].mxu0
        %v1771 = vpop.f32.mrb[0].mxu0
        %v1772 = vadd.f32 0.0, %v1771
        %v1773 = vpop.f32.mrb[0].mxu0
        %1774 = vmatprep.mubr.bf16.mxu0 0
        %1775 = vmatmul.mubr.bf16.gmra.mrb[0].mxu0 %v1627
        %v1776 = vpop.f32.mrb[0].mxu0
        %v1777 = vadd.f32 0.0, %v1776
        %v1778 = vpop.f32.mrb[0].mxu0
        %v1779 = vpop.f32.mrb[0].mxu0
        %v1780 = vadd.f32 0.0, %v1779
        %v1781 = vpop.f32.mrb[0].mxu0
        %1782 = vmatprep.mubr.bf16.mxu0 0
        %1783 = vmatmul.mubr.bf16.gmra.mrb[0].mxu0 %v1628
        %v1784 = vpop.f32.mrb[0].mxu0
        %v1785 = vadd.f32 0.0, %v1784
        %v1786 = vpop.f32.mrb[0].mxu0
        %v1787 = vpop.f32.mrb[0].mxu0
        %v1788 = vadd.f32 0.0, %v1787
        %v1789 = vpop.f32.mrb[0].mxu0
        %1790 = vmatprep.mubr.bf16.mxu0 0
        %1791 = vmatmul.mubr.bf16.gmra.mrb[0].mxu0 %v1629
        %v1792 = vpop.f32.mrb[0].mxu0
        %v1793 = vadd.f32 0.0, %v1792
        %v1794 = vpop.f32.mrb[0].mxu0
        %v1795 = vpop.f32.mrb[0].mxu0
        %v1796 = vadd.f32 0.0, %v1795
        %v1797 = vpop.f32.mrb[0].mxu0
        %1798 = vmatprep.mubr.bf16.mxu0 0
        %1799 = vmatmul.mubr.bf16.gmra.mrb[0].mxu0 %v1630
        %v1800 = vpop.f32.mrb[0].mxu0
        %v1801 = vadd.f32 0.0, %v1800
        %v1802 = vpop.f32.mrb[0].mxu0
        %v1803 = vpop.f32.mrb[0].mxu0
        %v1804 = vadd.f32 0.0, %v1803
        %v1805 = vpop.f32.mrb[0].mxu0
        %1806 = vmatprep.mubr.bf16.mxu0 0
        %1807 = vmatmul.mubr.bf16.gmra.mrb[0].mxu0 %v1631
        %v1808 = vpop.f32.mrb[0].mxu0
        %v1809 = vadd.f32 0.0, %v1808
        %v1810 = vpop.f32.mrb[0].mxu0
        %v1811 = vpop.f32.mrb[0].mxu0
        %v1812 = vadd.f32 0.0, %v1811
        %v1813 = vpop.f32.mrb[0].mxu0
        %1814 = vmatprep.mubr.bf16.mxu0 0
        %1815 = vmatmul.mubr.bf16.gmra.mrb[0].mxu0 %v1632
        %v1816 = vpop.f32.mrb[0].mxu0
        %v1817 = vadd.f32 0.0, %v1816
        %v1818 = vpop.f32.mrb[0].mxu0
        %v1819 = vpop.f32.mrb[0].mxu0
        %v1820 = vadd.f32 0.0, %v1819
        %v1821 = vpop.f32.mrb[0].mxu0
        %1822 = vmatprep.mubr.bf16.mxu0 0
        %1823 = vmatmul.mubr.bf16.gmra.mrb[0].mxu0 %v1633
        %v1824 = vpop.f32.mrb[0].mxu0
        %v1825 = vadd.f32 0.0, %v1824
        %v1826 = vpop.f32.mrb[0].mxu0
        %v1827 = vpop.f32.mrb[0].mxu0
        %v1828 = vadd.f32 0.0, %v1827
        %v1829 = vpop.f32.mrb[0].mxu0
        %1830 = vmatprep.mubr.bf16.mxu0 0
        %1831 = vmatmul.mubr.bf16.gmra.mrb[0].mxu0 %v1634
        %v1832 = vpop.f32.mrb[0].mxu0
        %v1833 = vadd.f32 0.0, %v1832
        %v1834 = vpop.f32.mrb[0].mxu0
        %v1835 = vpop.f32.mrb[0].mxu0
        %v1836 = vadd.f32 0.0, %v1835
        %v1837 = vpop.f32.mrb[0].mxu0
        %1838 = vmatprep.mubr.bf16.mxu0 0
        %1839 = vmatmul.mubr.bf16.gmra.mrb[0].mxu0 %v1635
        %v1840 = vpop.f32.mrb[0].mxu0
        %v1841 = vadd.f32 0.0, %v1840
        %v1842 = vpop.f32.mrb[0].mxu0
        %v1843 = vpop.f32.mrb[0].mxu0
        %v1844 = vadd.f32 0.0, %v1843
        %v1845 = vpop.f32.mrb[0].mxu0
        %1846 = vmatprep.mubr.bf16.mxu0 0
        %1847 = vmatmul.mubr.bf16.gmra.mrb[0].mxu0 %v1636
        %v1848 = vpop.f32.mrb[0].mxu0
        %v1849 = vadd.f32 0.0, %v1848
        %v1850 = vpop.f32.mrb[0].mxu0
        %v1851 = vpop.f32.mrb[0].mxu0
        %v1852 = vadd.f32 0.0, %v1851
        %v1853 = vpop.f32.mrb[0].mxu0
        %1854 = vmatprep.mubr.bf16.mxu0 0
        %1855 = vmatmul.mubr.bf16.gmra.mrb[0].mxu0 %v1637
        %v1856 = vpop.f32.mrb[0].mxu0
        %v1857 = vadd.f32 0.0, %v1856
        %v1858 = vpop.f32.mrb[0].mxu0
        %v1859 = vpop.f32.mrb[0].mxu0
        %v1860 = vadd.f32 0.0, %v1859
        %v1861 = vpop.f32.mrb[0].mxu0
        %1862 = vdwg.mxu0
        %v1895 = vunpack.c.l.b16 %v1122
        %v1896 = vunpack.c.l.b16 %v1123
        %v1897 = vunpack.c.l.b16 %v1124
        %v1898 = vunpack.c.l.b16 %v1125
        %v1899 = vunpack.c.l.b16 %v1126
        %v1900 = vunpack.c.l.b16 %v1127
        %v1901 = vunpack.c.l.b16 %v1128
        %v1902 = vunpack.c.l.b16 %v1129
        %v1903 = vunpack.c.l.b16 %v1130
        %v1904 = vunpack.c.l.b16 %v1131
        %v1905 = vunpack.c.l.b16 %v1132
        %v1906 = vunpack.c.l.b16 %v1133
        %v1907 = vunpack.c.l.b16 %v1134
        %v1908 = vunpack.c.l.b16 %v1135
        %v1909 = vunpack.c.l.b16 %v1136
        %v1910 = vunpack.c.l.b16 %v1137
        %v1911 = vunpack.c.l.b16 %v1138
        %v1912 = vunpack.c.l.b16 %v1139
        %v1913 = vunpack.c.l.b16 %v1140
        %v1914 = vunpack.c.l.b16 %v1141
        %v1915 = vunpack.c.l.b16 %v1142
        %v1916 = vunpack.c.l.b16 %v1143
        %v1917 = vunpack.c.l.b16 %v1144
        %v1918 = vunpack.c.l.b16 %v1145
        %v1919 = vunpack.c.l.b16 %v1146
        %v1920 = vunpack.c.l.b16 %v1147
        %v1921 = vunpack.c.l.b16 %v1148
        %v1922 = vunpack.c.l.b16 %v1149
        %v1923 = vunpack.c.l.b16 %v1150
        %v1924 = vunpack.c.l.b16 %v1151
        %v1925 = vunpack.c.l.b16 %v1152
        %v1926 = vunpack.c.l.b16 %v1153
        %v1927 = vpack.c.b16 %v1896, %v1895
        %v1928 = vpack.c.b16 %v1898, %v1897
        %v1929 = vpack.c.b16 %v1900, %v1899
        %v1930 = vpack.c.b16 %v1902, %v1901
        %v1931 = vpack.c.b16 %v1904, %v1903
        %v1932 = vpack.c.b16 %v1906, %v1905
        %v1933 = vpack.c.b16 %v1908, %v1907
        %v1934 = vpack.c.b16 %v1910, %v1909
        %v1935 = vpack.c.b16 %v1912, %v1911
        %v1936 = vpack.c.b16 %v1914, %v1913
        %v1937 = vpack.c.b16 %v1916, %v1915
        %v1938 = vpack.c.b16 %v1918, %v1917
        %v1939 = vpack.c.b16 %v1920, %v1919
        %v1940 = vpack.c.b16 %v1922, %v1921
        %v1941 = vpack.c.b16 %v1924, %v1923
        %v1942 = vpack.c.b16 %v1926, %v1925
        %v1975 = vunpack.c.l.b16 %v1154
        %v1976 = vunpack.c.l.b16 %v1155
        %v1977 = vunpack.c.l.b16 %v1156
        %v1978 = vunpack.c.l.b16 %v1157
        %v1979 = vunpack.c.l.b16 %v1158
        %v1980 = vunpack.c.l.b16 %v1159
        %v1981 = vunpack.c.l.b16 %v1160
        %v1982 = vunpack.c.l.b16 %v1161
        %v1983 = vunpack.c.l.b16 %v1162
        %v1984 = vunpack.c.l.b16 %v1163
        %v1985 = vunpack.c.l.b16 %v1164
        %v1986 = vunpack.c.l.b16 %v1165
        %v1987 = vunpack.c.l.b16 %v1166
        %v1988 = vunpack.c.l.b16 %v1167
        %v1989 = vunpack.c.l.b16 %v1168
        %v1990 = vunpack.c.l.b16 %v1169
        %v1991 = vpack.c.b16 %v1976, %v1975
        %v1992 = vpack.c.b16 %v1978, %v1977
        %v1993 = vpack.c.b16 %v1980, %v1979
        %v1994 = vpack.c.b16 %v1982, %v1981
        %v1995 = vpack.c.b16 %v1984, %v1983
        %v1996 = vpack.c.b16 %v1986, %v1985
        %v1997 = vpack.c.b16 %v1988, %v1987
        %v1998 = vpack.c.b16 %v1990, %v1989
        %2007 = vmatprep.subr.bf16.mxu0 0
        %2008 = vmatpush1.bf16.msra.mxu0 %v1991
        %2009 = vmatprep.subr.bf16.mxu0 0
        %2010 = vmatpush1.bf16.msra.mxu0 %v1992
        %2011 = vmatprep.subr.bf16.mxu0 0
        %2012 = vmatpush1.bf16.msra.mxu0 %v1993
        %2013 = vmatprep.subr.bf16.mxu0 0
        %2014 = vmatpush1.bf16.msra.mxu0 %v1994
        %2015 = vmatprep.subr.bf16.mxu0 0
        %2016 = vmatpush1.bf16.msra.mxu0 %v1995
        %2017 = vmatprep.subr.bf16.mxu0 0
        %2018 = vmatpush1.bf16.msra.mxu0 %v1996
        %2019 = vmatprep.subr.bf16.mxu0 0
        %2020 = vmatpush1.bf16.msra.mxu0 %v1997
        %2021 = vmatprep.subr.bf16.mxu0 0
        %2022 = vmatpush1.bf16.msra.mxu0 %v1998
        %2023 = vmatprep.subr.bf16.mxu0 0
        %2024 = vmatpush1.bf16.msra.mxu0 0
        %2025 = vmatprep.subr.bf16.mxu0 0
        %2026 = vmatpush1.bf16.msra.mxu0 0
        %2027 = vmatprep.subr.bf16.mxu0 0
        %2028 = vmatpush1.bf16.msra.mxu0 0
        %2029 = vmatprep.subr.bf16.mxu0 0
        %2030 = vmatpush1.bf16.msra.mxu0 0
        %2031 = vmatprep.subr.bf16.mxu0 0
        %2032 = vmatpush1.bf16.msra.mxu0 0
        %2033 = vmatprep.subr.bf16.mxu0 0
        %2034 = vmatpush1.bf16.msra.mxu0 0
        %2035 = vmatprep.subr.bf16.mxu0 0
        %2036 = vmatpush1.bf16.msra.mxu0 0
        %2037 = vmatprep.subr.bf16.mxu0 0
        %2038 = vmatpush1.bf16.msra.mxu0 0
        %2039 = vmatprep.mubr.bf16.mxu0 0
        %2040 = vmatmul.mubr.bf16.gmra.mrb[0].mxu0 %v1927
        %v2041 = vpop.f32.mrb[0].mxu0
        %v2042 = vadd.f32 %v1737, %v2041
        %v2043 = vpop.f32.mrb[0].mxu0
        %v2044 = vpop.f32.mrb[0].mxu0
        %v2045 = vadd.f32 %v1740, %v2044
        %v2046 = vpop.f32.mrb[0].mxu0
        %2047 = vmatprep.mubr.bf16.mxu0 0
        %2048 = vmatmul.mubr.bf16.gmra.mrb[0].mxu0 %v1928
        %v2049 = vpop.f32.mrb[0].mxu0
        %v2050 = vadd.f32 %v1745, %v2049
        %v2051 = vpop.f32.mrb[0].mxu0
        %v2052 = vpop.f32.mrb[0].mxu0
        %v2053 = vadd.f32 %v1748, %v2052
        %v2054 = vpop.f32.mrb[0].mxu0
        %2055 = vmatprep.mubr.bf16.mxu0 0
        %2056 = vmatmul.mubr.bf16.gmra.mrb[0].mxu0 %v1929
        %v2057 = vpop.f32.mrb[0].mxu0
        %v2058 = vadd.f32 %v1753, %v2057
        %v2059 = vpop.f32.mrb[0].mxu0
        %v2060 = vpop.f32.mrb[0].mxu0
        %v2061 = vadd.f32 %v1756, %v2060
        %v2062 = vpop.f32.mrb[0].mxu0
        %2063 = vmatprep.mubr.bf16.mxu0 0
        %2064 = vmatmul.mubr.bf16.gmra.mrb[0].mxu0 %v1930
        %v2065 = vpop.f32.mrb[0].mxu0
        %v2066 = vadd.f32 %v1761, %v2065
        %v2067 = vpop.f32.mrb[0].mxu0
        %v2068 = vpop.f32.mrb[0].mxu0
        %v2069 = vadd.f32 %v1764, %v2068
        %v2070 = vpop.f32.mrb[0].mxu0
        %2071 = vmatprep.mubr.bf16.mxu0 0
        %2072 = vmatmul.mubr.bf16.gmra.mrb[0].mxu0 %v1931
        %v2073 = vpop.f32.mrb[0].mxu0
        %v2074 = vadd.f32 %v1769, %v2073
        %v2075 = vpop.f32.mrb[0].mxu0
        %v2076 = vpop.f32.mrb[0].mxu0
        %v2077 = vadd.f32 %v1772, %v2076
        %v2078 = vpop.f32.mrb[0].mxu0
        %2079 = vmatprep.mubr.bf16.mxu0 0
        %2080 = vmatmul.mubr.bf16.gmra.mrb[0].mxu0 %v1932
        %v2081 = vpop.f32.mrb[0].mxu0
        %v2082 = vadd.f32 %v1777, %v2081
        %v2083 = vpop.f32.mrb[0].mxu0
        %v2084 = vpop.f32.mrb[0].mxu0
        %v2085 = vadd.f32 %v1780, %v2084
        %v2086 = vpop.f32.mrb[0].mxu0
        %2087 = vmatprep.mubr.bf16.mxu0 0
        %2088 = vmatmul.mubr.bf16.gmra.mrb[0].mxu0 %v1933
        %v2089 = vpop.f32.mrb[0].mxu0
        %v2090 = vadd.f32 %v1785, %v2089
        %v2091 = vpop.f32.mrb[0].mxu0
        %v2092 = vpop.f32.mrb[0].mxu0
        %v2093 = vadd.f32 %v1788, %v2092
        %v2094 = vpop.f32.mrb[0].mxu0
        %2095 = vmatprep.mubr.bf16.mxu0 0
        %2096 = vmatmul.mubr.bf16.gmra.mrb[0].mxu0 %v1934
        %v2097 = vpop.f32.mrb[0].mxu0
        %v2098 = vadd.f32 %v1793, %v2097
        %v2099 = vpop.f32.mrb[0].mxu0
        %v2100 = vpop.f32.mrb[0].mxu0
        %v2101 = vadd.f32 %v1796, %v2100
        %v2102 = vpop.f32.mrb[0].mxu0
        %2103 = vmatprep.mubr.bf16.mxu0 0
        %2104 = vmatmul.mubr.bf16.gmra.mrb[0].mxu0 %v1935
        %v2105 = vpop.f32.mrb[0].mxu0
        %v2106 = vadd.f32 %v1801, %v2105
        %v2107 = vpop.f32.mrb[0].mxu0
        %v2108 = vpop.f32.mrb[0].mxu0
        %v2109 = vadd.f32 %v1804, %v2108
        %v2110 = vpop.f32.mrb[0].mxu0
        %2111 = vmatprep.mubr.bf16.mxu0 0
        %2112 = vmatmul.mubr.bf16.gmra.mrb[0].mxu0 %v1936
        %v2113 = vpop.f32.mrb[0].mxu0
        %v2114 = vadd.f32 %v1809, %v2113
        %v2115 = vpop.f32.mrb[0].mxu0
        %v2116 = vpop.f32.mrb[0].mxu0
        %v2117 = vadd.f32 %v1812, %v2116
        %v2118 = vpop.f32.mrb[0].mxu0
        %2119 = vmatprep.mubr.bf16.mxu0 0
        %2120 = vmatmul.mubr.bf16.gmra.mrb[0].mxu0 %v1937
        %v2121 = vpop.f32.mrb[0].mxu0
        %v2122 = vadd.f32 %v1817, %v2121
        %v2123 = vpop.f32.mrb[0].mxu0
        %v2124 = vpop.f32.mrb[0].mxu0
        %v2125 = vadd.f32 %v1820, %v2124
        %v2126 = vpop.f32.mrb[0].mxu0
        %2127 = vmatprep.mubr.bf16.mxu0 0
        %2128 = vmatmul.mubr.bf16.gmra.mrb[0].mxu0 %v1938
        %v2129 = vpop.f32.mrb[0].mxu0
        %v2130 = vadd.f32 %v1825, %v2129
        %v2131 = vpop.f32.mrb[0].mxu0
        %v2132 = vpop.f32.mrb[0].mxu0
        %v2133 = vadd.f32 %v1828, %v2132
        %v2134 = vpop.f32.mrb[0].mxu0
        %2135 = vmatprep.mubr.bf16.mxu0 0
        %2136 = vmatmul.mubr.bf16.gmra.mrb[0].mxu0 %v1939
        %v2137 = vpop.f32.mrb[0].mxu0
        %v2138 = vadd.f32 %v1833, %v2137
        %v2139 = vpop.f32.mrb[0].mxu0
        %v2140 = vpop.f32.mrb[0].mxu0
        %v2141 = vadd.f32 %v1836, %v2140
        %v2142 = vpop.f32.mrb[0].mxu0
        %2143 = vmatprep.mubr.bf16.mxu0 0
        %2144 = vmatmul.mubr.bf16.gmra.mrb[0].mxu0 %v1940
        %v2145 = vpop.f32.mrb[0].mxu0
        %v2146 = vadd.f32 %v1841, %v2145
        %v2147 = vpop.f32.mrb[0].mxu0
        %v2148 = vpop.f32.mrb[0].mxu0
        %v2149 = vadd.f32 %v1844, %v2148
        %v2150 = vpop.f32.mrb[0].mxu0
        %2151 = vmatprep.mubr.bf16.mxu0 0
        %2152 = vmatmul.mubr.bf16.gmra.mrb[0].mxu0 %v1941
        %v2153 = vpop.f32.mrb[0].mxu0
        %v2154 = vadd.f32 %v1849, %v2153
        %v2155 = vpop.f32.mrb[0].mxu0
        %v2156 = vpop.f32.mrb[0].mxu0
        %v2157 = vadd.f32 %v1852, %v2156
        %v2158 = vpop.f32.mrb[0].mxu0
        %2159 = vmatprep.mubr.bf16.mxu0 0
        %2160 = vmatmul.mubr.bf16.gmra.mrb[0].mxu0 %v1942
        %v2161 = vpop.f32.mrb[0].mxu0
        %v2162 = vadd.f32 %v1857, %v2161
        %v2163 = vpop.f32.mrb[0].mxu0
        %v2164 = vpop.f32.mrb[0].mxu0
        %v2165 = vadd.f32 %v1860, %v2164
        %v2166 = vpop.f32.mrb[0].mxu0
        %2167 = vdwg.mxu0
        %v2168 = vld [vmem:[#allocation2] sm:$0xe]
        %v2169 = vld [vmem:[#allocation2 + $0xc] sm:$0xe]
        %v2170 = vld [vmem:[#allocation2 + $0x18] sm:$0xe]
        %v2171 = vld [vmem:[#allocation2 + $0x24] sm:$0xe]
        %v2172 = vld [vmem:[#allocation2 + $0x30] sm:$0xe]
        %v2173 = vld [vmem:[#allocation2 + $0x3c] sm:$0xe]
        %v2174 = vld [vmem:[#allocation2 + $0x48] sm:$0xe]
        %v2175 = vld [vmem:[#allocation2 + $0x54] sm:$0xe]
        %v2176 = vld [vmem:[#allocation2 + $0x60] sm:$0xe]
        %v2177 = vld [vmem:[#allocation2 + $0x6c] sm:$0xe]
        %v2178 = vld [vmem:[#allocation2 + $0x78] sm:$0xe]
        %v2179 = vld [vmem:[#allocation2 + $0x84] sm:$0xe]
        %v2180 = vld [vmem:[#allocation2 + $0x90] sm:$0xe]
        %v2181 = vld [vmem:[#allocation2 + $0x9c] sm:$0xe]
        %v2182 = vld [vmem:[#allocation2 + $0xa8] sm:$0xe]
        %v2183 = vld [vmem:[#allocation2 + $0xb4] sm:$0xe]
        %vm2216 = vcmask 1042432
        %vm2217 = vcmask 1046532
        %vm2218 = vmor %vm2216, %vm2217
        %v2219 = vrot.slane %v2168, 5
        %v2220 = vrot.slane %v2219, 4
        %v2221 = vrot.slane %v1123, 5
        %v2222 = vsel %vm2218, %v2220, %v2221
        %v2223 = vrot.slane %v2221, 4
        %v2224 = vrot.slane %v1170, 5
        %v2225 = vsel %vm2218, %v2223, %v2224
        %v2226 = vrot.slane %v2169, 5
        %v2227 = vrot.slane %v2226, 4
        %v2228 = vrot.slane %v1125, 5
        %v2229 = vsel %vm2218, %v2227, %v2228
        %v2230 = vrot.slane %v2228, 4
        %v2231 = vrot.slane %v1171, 5
        %v2232 = vsel %vm2218, %v2230, %v2231
        %v2233 = vrot.slane %v2170, 5
        %v2234 = vrot.slane %v2233, 4
        %v2235 = vrot.slane %v1127, 5
        %v2236 = vsel %vm2218, %v2234, %v2235
        %v2237 = vrot.slane %v2235, 4
        %v2238 = vrot.slane %v1172, 5
        %v2239 = vsel %vm2218, %v2237, %v2238
        %v2240 = vrot.slane %v2171, 5
        %v2241 = vrot.slane %v2240, 4
        %v2242 = vrot.slane %v1129, 5
        %v2243 = vsel %vm2218, %v2241, %v2242
        %v2244 = vrot.slane %v2242, 4
        %v2245 = vrot.slane %v1173, 5
        %v2246 = vsel %vm2218, %v2244, %v2245
        %v2247 = vrot.slane %v2172, 5
        %v2248 = vrot.slane %v2247, 4
        %v2249 = vrot.slane %v1131, 5
        %v2250 = vsel %vm2218, %v2248, %v2249
        %v2251 = vrot.slane %v2249, 4
        %v2252 = vrot.slane %v1174, 5
        %v2253 = vsel %vm2218, %v2251, %v2252
        %v2254 = vrot.slane %v2173, 5
        %v2255 = vrot.slane %v2254, 4
        %v2256 = vrot.slane %v1133, 5
        %v2257 = vsel %vm2218, %v2255, %v2256
        %v2258 = vrot.slane %v2256, 4
        %v2259 = vrot.slane %v1175, 5
        %v2260 = vsel %vm2218, %v2258, %v2259
        %v2261 = vrot.slane %v2174, 5
        %v2262 = vrot.slane %v2261, 4
        %v2263 = vrot.slane %v1135, 5
        %v2264 = vsel %vm2218, %v2262, %v2263
        %v2265 = vrot.slane %v2263, 4
        %v2266 = vrot.slane %v1176, 5
        %v2267 = vsel %vm2218, %v2265, %v2266
        %v2268 = vrot.slane %v2175, 5
        %v2269 = vrot.slane %v2268, 4
        %v2270 = vrot.slane %v1137, 5
        %v2271 = vsel %vm2218, %v2269, %v2270
        %v2272 = vrot.slane %v2270, 4
        %v2273 = vrot.slane %v1177, 5
        %v2274 = vsel %vm2218, %v2272, %v2273
        %v2275 = vrot.slane %v2176, 5
        %v2276 = vrot.slane %v2275, 4
        %v2277 = vrot.slane %v1139, 5
        %v2278 = vsel %vm2218, %v2276, %v2277
        %v2279 = vrot.slane %v2277, 4
        %v2280 = vrot.slane %v1178, 5
        %v2281 = vsel %vm2218, %v2279, %v2280
        %v2282 = vrot.slane %v2177, 5
        %v2283 = vrot.slane %v2282, 4
        %v2284 = vrot.slane %v1141, 5
        %v2285 = vsel %vm2218, %v2283, %v2284
        %v2286 = vrot.slane %v2284, 4
        %v2287 = vrot.slane %v1179, 5
        %v2288 = vsel %vm2218, %v2286, %v2287
        %v2289 = vrot.slane %v2178, 5
        %v2290 = vrot.slane %v2289, 4
        %v2291 = vrot.slane %v1143, 5
        %v2292 = vsel %vm2218, %v2290, %v2291
        %v2293 = vrot.slane %v2291, 4
        %v2294 = vrot.slane %v1180, 5
        %v2295 = vsel %vm2218, %v2293, %v2294
        %v2296 = vrot.slane %v2179, 5
        %v2297 = vrot.slane %v2296, 4
        %v2298 = vrot.slane %v1145, 5
        %v2299 = vsel %vm2218, %v2297, %v2298
        %v2300 = vrot.slane %v2298, 4
        %v2301 = vrot.slane %v1181, 5
        %v2302 = vsel %vm2218, %v2300, %v2301
        %v2303 = vrot.slane %v2180, 5
        %v2304 = vrot.slane %v2303, 4
        %v2305 = vrot.slane %v1147, 5
        %v2306 = vsel %vm2218, %v2304, %v2305
        %v2307 = vrot.slane %v2305, 4
        %v2308 = vrot.slane %v1182, 5
        %v2309 = vsel %vm2218, %v2307, %v2308
        %v2310 = vrot.slane %v2181, 5
        %v2311 = vrot.slane %v2310, 4
        %v2312 = vrot.slane %v1149, 5
        %v2313 = vsel %vm2218, %v2311, %v2312
        %v2314 = vrot.slane %v2312, 4
        %v2315 = vrot.slane %v1183, 5
        %v2316 = vsel %vm2218, %v2314, %v2315
        %v2317 = vrot.slane %v2182, 5
        %v2318 = vrot.slane %v2317, 4
        %v2319 = vrot.slane %v1151, 5
        %v2320 = vsel %vm2218, %v2318, %v2319
        %v2321 = vrot.slane %v2319, 4
        %v2322 = vrot.slane %v1184, 5
        %v2323 = vsel %vm2218, %v2321, %v2322
        %v2324 = vrot.slane %v2183, 5
        %v2325 = vrot.slane %v2324, 4
        %v2326 = vrot.slane %v1153, 5
        %v2327 = vsel %vm2218, %v2325, %v2326
        %v2328 = vrot.slane %v2326, 4
        %v2329 = vrot.slane %v1185, 5
        %v2330 = vsel %vm2218, %v2328, %v2329
        %s2331 = scalar_lea.vmem [#allocation9], 128
        %v2332 = vld [vmem:[%s2331] sm:$0xf]
        %v2333 = vld [vmem:[%s2331 + $0x4] sm:$0xf]
        %v2334 = vld [vmem:[%s2331 + $0x8] sm:$0xf]
        %v2335 = vld [vmem:[%s2331 + $0xc] sm:$0xf]
        %v2336 = vld [vmem:[%s2331 + $0x10] sm:$0xf]
        %v2337 = vld [vmem:[%s2331 + $0x14] sm:$0xf]
        %v2338 = vld [vmem:[%s2331 + $0x18] sm:$0xf]
        %v2339 = vld [vmem:[%s2331 + $0x1c] sm:$0xf]
        %v2340 = vld [vmem:[%s2331 + $0x20] sm:$0xf]
        %v2341 = vld [vmem:[%s2331 + $0x24] sm:$0xf]
        %v2342 = vld [vmem:[%s2331 + $0x28] sm:$0xf]
        %v2343 = vld [vmem:[%s2331 + $0x2c] sm:$0xf]
        %v2344 = vld [vmem:[%s2331 + $0x30] sm:$0xf]
        %v2345 = vld [vmem:[%s2331 + $0x34] sm:$0xf]
        %v2346 = vld [vmem:[%s2331 + $0x38] sm:$0xf]
        %v2347 = vld [vmem:[%s2331 + $0x3c] sm:$0xf]
        %v2348 = vunpack.c.l.b16 %v2222
        %v2349 = vunpack.c.l.b16 %v2225
        %v2350 = vunpack.c.l.b16 %v2229
        %v2351 = vunpack.c.l.b16 %v2232
        %v2352 = vunpack.c.l.b16 %v2236
        %v2353 = vunpack.c.l.b16 %v2239
        %v2354 = vunpack.c.l.b16 %v2243
        %v2355 = vunpack.c.l.b16 %v2246
        %v2356 = vunpack.c.l.b16 %v2250
        %v2357 = vunpack.c.l.b16 %v2253
        %v2358 = vunpack.c.l.b16 %v2257
        %v2359 = vunpack.c.l.b16 %v2260
        %v2360 = vunpack.c.l.b16 %v2264
        %v2361 = vunpack.c.l.b16 %v2267
        %v2362 = vunpack.c.l.b16 %v2271
        %v2363 = vunpack.c.l.b16 %v2274
        %v2364 = vunpack.c.l.b16 %v2278
        %v2365 = vunpack.c.l.b16 %v2281
        %v2366 = vunpack.c.l.b16 %v2285
        %v2367 = vunpack.c.l.b16 %v2288
        %v2368 = vunpack.c.l.b16 %v2292
        %v2369 = vunpack.c.l.b16 %v2295
        %v2370 = vunpack.c.l.b16 %v2299
        %v2371 = vunpack.c.l.b16 %v2302
        %v2372 = vunpack.c.l.b16 %v2306
        %v2373 = vunpack.c.l.b16 %v2309
        %v2374 = vunpack.c.l.b16 %v2313
        %v2375 = vunpack.c.l.b16 %v2316
        %v2376 = vunpack.c.l.b16 %v2320
        %v2377 = vunpack.c.l.b16 %v2323
        %v2378 = vunpack.c.l.b16 %v2327
        %v2379 = vunpack.c.l.b16 %v2330
        %v2380 = vpack.c.b16 %v2349, %v2348
        %v2381 = vpack.c.b16 %v2351, %v2350
        %v2382 = vpack.c.b16 %v2353, %v2352
        %v2383 = vpack.c.b16 %v2355, %v2354
        %v2384 = vpack.c.b16 %v2357, %v2356
        %v2385 = vpack.c.b16 %v2359, %v2358
        %v2386 = vpack.c.b16 %v2361, %v2360
        %v2387 = vpack.c.b16 %v2363, %v2362
        %v2388 = vpack.c.b16 %v2365, %v2364
        %v2389 = vpack.c.b16 %v2367, %v2366
        %v2390 = vpack.c.b16 %v2369, %v2368
        %v2391 = vpack.c.b16 %v2371, %v2370
        %v2392 = vpack.c.b16 %v2373, %v2372
        %v2393 = vpack.c.b16 %v2375, %v2374
        %v2394 = vpack.c.b16 %v2377, %v2376
        %v2395 = vpack.c.b16 %v2379, %v2378
        %v2428 = vunpack.c.l.b16 %v2332
        %v2429 = vunpack.c.l.b16 %v2333
        %v2430 = vunpack.c.l.b16 %v2334
        %v2431 = vunpack.c.l.b16 %v2335
        %v2432 = vunpack.c.l.b16 %v2336
        %v2433 = vunpack.c.l.b16 %v2337
        %v2434 = vunpack.c.l.b16 %v2338
        %v2435 = vunpack.c.l.b16 %v2339
        %v2436 = vunpack.c.l.b16 %v2340
        %v2437 = vunpack.c.l.b16 %v2341
        %v2438 = vunpack.c.l.b16 %v2342
        %v2439 = vunpack.c.l.b16 %v2343
        %v2440 = vunpack.c.l.b16 %v2344
        %v2441 = vunpack.c.l.b16 %v2345
        %v2442 = vunpack.c.l.b16 %v2346
        %v2443 = vunpack.c.l.b16 %v2347
        %v2444 = vpack.c.b16 %v2429, %v2428
        %v2445 = vpack.c.b16 %v2431, %v2430
        %v2446 = vpack.c.b16 %v2433, %v2432
        %v2447 = vpack.c.b16 %v2435, %v2434
        %v2448 = vpack.c.b16 %v2437, %v2436
        %v2449 = vpack.c.b16 %v2439, %v2438
        %v2450 = vpack.c.b16 %v2441, %v2440
        %v2451 = vpack.c.b16 %v2443, %v2442
        %2460 = vmatprep.subr.bf16.mxu0 0
        %2461 = vmatpush1.bf16.msra.mxu0 %v2444
        %2462 = vmatprep.subr.bf16.mxu0 0
        %2463 = vmatpush1.bf16.msra.mxu0 %v2445
        %2464 = vmatprep.subr.bf16.mxu0 0
        %2465 = vmatpush1.bf16.msra.mxu0 %v2446
        %2466 = vmatprep.subr.bf16.mxu0 0
        %2467 = vmatpush1.bf16.msra.mxu0 %v2447
        %2468 = vmatprep.subr.bf16.mxu0 0
        %2469 = vmatpush1.bf16.msra.mxu0 %v2448
        %2470 = vmatprep.subr.bf16.mxu0 0
        %2471 = vmatpush1.bf16.msra.mxu0 %v2449
        %2472 = vmatprep.subr.bf16.mxu0 0
        %2473 = vmatpush1.bf16.msra.mxu0 %v2450
        %2474 = vmatprep.subr.bf16.mxu0 0
        %2475 = vmatpush1.bf16.msra.mxu0 %v2451
        %2476 = vmatprep.subr.bf16.mxu0 0
        %2477 = vmatpush1.bf16.msra.mxu0 0
        %2478 = vmatprep.subr.bf16.mxu0 0
        %2479 = vmatpush1.bf16.msra.mxu0 0
        %2480 = vmatprep.subr.bf16.mxu0 0
        %2481 = vmatpush1.bf16.msra.mxu0 0
        %2482 = vmatprep.subr.bf16.mxu0 0
        %2483 = vmatpush1.bf16.msra.mxu0 0
        %2484 = vmatprep.subr.bf16.mxu0 0
        %2485 = vmatpush1.bf16.msra.mxu0 0
        %2486 = vmatprep.subr.bf16.mxu0 0
        %2487 = vmatpush1.bf16.msra.mxu0 0
        %2488 = vmatprep.subr.bf16.mxu0 0
        %2489 = vmatpush1.bf16.msra.mxu0 0
        %2490 = vmatprep.subr.bf16.mxu0 0
        %2491 = vmatpush1.bf16.msra.mxu0 0
        %2492 = vmatprep.mubr.bf16.mxu0 0
        %2493 = vmatmul.mubr.bf16.gmra.mrb[0].mxu0 %v2380
        %v2494 = vpop.f32.mrb[0].mxu0
        %v2495 = vadd.f32 0.0, %v2494
        %v2496 = vpop.f32.mrb[0].mxu0
        %v2497 = vpop.f32.mrb[0].mxu0
        %v2498 = vadd.f32 0.0, %v2497
        %v2499 = vpop.f32.mrb[0].mxu0
        %2500 = vmatprep.mubr.bf16.mxu0 0
        %2501 = vmatmul.mubr.bf16.gmra.mrb[0].mxu0 %v2381
        %v2502 = vpop.f32.mrb[0].mxu0
        %v2503 = vadd.f32 0.0, %v2502
        %v2504 = vpop.f32.mrb[0].mxu0
        %v2505 = vpop.f32.mrb[0].mxu0
        %v2506 = vadd.f32 0.0, %v2505
        %v2507 = vpop.f32.mrb[0].mxu0
        %2508 = vmatprep.mubr.bf16.mxu0 0
        %2509 = vmatmul.mubr.bf16.gmra.mrb[0].mxu0 %v2382
        %v2510 = vpop.f32.mrb[0].mxu0
        %v2511 = vadd.f32 0.0, %v2510
        %v2512 = vpop.f32.mrb[0].mxu0
        %v2513 = vpop.f32.mrb[0].mxu0
        %v2514 = vadd.f32 0.0, %v2513
        %v2515 = vpop.f32.mrb[0].mxu0
        %2516 = vmatprep.mubr.bf16.mxu0 0
        %2517 = vmatmul.mubr.bf16.gmra.mrb[0].mxu0 %v2383
        %v2518 = vpop.f32.mrb[0].mxu0
        %v2519 = vadd.f32 0.0, %v2518
        %v2520 = vpop.f32.mrb[0].mxu0
        %v2521 = vpop.f32.mrb[0].mxu0
        %v2522 = vadd.f32 0.0, %v2521
        %v2523 = vpop.f32.mrb[0].mxu0
        %2524 = vmatprep.mubr.bf16.mxu0 0
        %2525 = vmatmul.mubr.bf16.gmra.mrb[0].mxu0 %v2384
        %v2526 = vpop.f32.mrb[0].mxu0
        %v2527 = vadd.f32 0.0, %v2526
        %v2528 = vpop.f32.mrb[0].mxu0
        %v2529 = vpop.f32.mrb[0].mxu0
        %v2530 = vadd.f32 0.0, %v2529
        %v2531 = vpop.f32.mrb[0].mxu0
        %2532 = vmatprep.mubr.bf16.mxu0 0
        %2533 = vmatmul.mubr.bf16.gmra.mrb[0].mxu0 %v2385
        %v2534 = vpop.f32.mrb[0].mxu0
        %v2535 = vadd.f32 0.0, %v2534
        %v2536 = vpop.f32.mrb[0].mxu0
        %v2537 = vpop.f32.mrb[0].mxu0
        %v2538 = vadd.f32 0.0, %v2537
        %v2539 = vpop.f32.mrb[0].mxu0
        %2540 = vmatprep.mubr.bf16.mxu0 0
        %2541 = vmatmul.mubr.bf16.gmra.mrb[0].mxu0 %v2386
        %v2542 = vpop.f32.mrb[0].mxu0
        %v2543 = vadd.f32 0.0, %v2542
        %v2544 = vpop.f32.mrb[0].mxu0
        %v2545 = vpop.f32.mrb[0].mxu0
        %v2546 = vadd.f32 0.0, %v2545
        %v2547 = vpop.f32.mrb[0].mxu0
        %2548 = vmatprep.mubr.bf16.mxu0 0
        %2549 = vmatmul.mubr.bf16.gmra.mrb[0].mxu0 %v2387
        %v2550 = vpop.f32.mrb[0].mxu0
        %v2551 = vadd.f32 0.0, %v2550
        %v2552 = vpop.f32.mrb[0].mxu0
        %v2553 = vpop.f32.mrb[0].mxu0
        %v2554 = vadd.f32 0.0, %v2553
        %v2555 = vpop.f32.mrb[0].mxu0
        %2556 = vmatprep.mubr.bf16.mxu0 0
        %2557 = vmatmul.mubr.bf16.gmra.mrb[0].mxu0 %v2388
        %v2558 = vpop.f32.mrb[0].mxu0
        %v2559 = vadd.f32 0.0, %v2558
        %v2560 = vpop.f32.mrb[0].mxu0
        %v2561 = vpop.f32.mrb[0].mxu0
        %v2562 = vadd.f32 0.0, %v2561
        %v2563 = vpop.f32.mrb[0].mxu0
        %2564 = vmatprep.mubr.bf16.mxu0 0
        %2565 = vmatmul.mubr.bf16.gmra.mrb[0].mxu0 %v2389
        %v2566 = vpop.f32.mrb[0].mxu0
        %v2567 = vadd.f32 0.0, %v2566
        %v2568 = vpop.f32.mrb[0].mxu0
        %v2569 = vpop.f32.mrb[0].mxu0
        %v2570 = vadd.f32 0.0, %v2569
        %v2571 = vpop.f32.mrb[0].mxu0
        %2572 = vmatprep.mubr.bf16.mxu0 0
        %2573 = vmatmul.mubr.bf16.gmra.mrb[0].mxu0 %v2390
        %v2574 = vpop.f32.mrb[0].mxu0
        %v2575 = vadd.f32 0.0, %v2574
        %v2576 = vpop.f32.mrb[0].mxu0
        %v2577 = vpop.f32.mrb[0].mxu0
        %v2578 = vadd.f32 0.0, %v2577
        %v2579 = vpop.f32.mrb[0].mxu0
        %2580 = vmatprep.mubr.bf16.mxu0 0
        %2581 = vmatmul.mubr.bf16.gmra.mrb[0].mxu0 %v2391
        %v2582 = vpop.f32.mrb[0].mxu0
        %v2583 = vadd.f32 0.0, %v2582
        %v2584 = vpop.f32.mrb[0].mxu0
        %v2585 = vpop.f32.mrb[0].mxu0
        %v2586 = vadd.f32 0.0, %v2585
        %v2587 = vpop.f32.mrb[0].mxu0
        %2588 = vmatprep.mubr.bf16.mxu0 0
        %2589 = vmatmul.mubr.bf16.gmra.mrb[0].mxu0 %v2392
        %v2590 = vpop.f32.mrb[0].mxu0
        %v2591 = vadd.f32 0.0, %v2590
        %v2592 = vpop.f32.mrb[0].mxu0
        %v2593 = vpop.f32.mrb[0].mxu0
        %v2594 = vadd.f32 0.0, %v2593
        %v2595 = vpop.f32.mrb[0].mxu0
        %2596 = vmatprep.mubr.bf16.mxu0 0
        %2597 = vmatmul.mubr.bf16.gmra.mrb[0].mxu0 %v2393
        %v2598 = vpop.f32.mrb[0].mxu0
        %v2599 = vadd.f32 0.0, %v2598
        %v2600 = vpop.f32.mrb[0].mxu0
        %v2601 = vpop.f32.mrb[0].mxu0
        %v2602 = vadd.f32 0.0, %v2601
        %v2603 = vpop.f32.mrb[0].mxu0
        %2604 = vmatprep.mubr.bf16.mxu0 0
        %2605 = vmatmul.mubr.bf16.gmra.mrb[0].mxu0 %v2394
        %v2606 = vpop.f32.mrb[0].mxu0
        %v2607 = vadd.f32 0.0, %v2606
        %v2608 = vpop.f32.mrb[0].mxu0
        %v2609 = vpop.f32.mrb[0].mxu0
        %v2610 = vadd.f32 0.0, %v2609
        %v2611 = vpop.f32.mrb[0].mxu0
        %2612 = vmatprep.mubr.bf16.mxu0 0
        %2613 = vmatmul.mubr.bf16.gmra.mrb[0].mxu0 %v2395
        %v2614 = vpop.f32.mrb[0].mxu0
        %v2615 = vadd.f32 0.0, %v2614
        %v2616 = vpop.f32.mrb[0].mxu0
        %v2617 = vpop.f32.mrb[0].mxu0
        %v2618 = vadd.f32 0.0, %v2617
        %v2619 = vpop.f32.mrb[0].mxu0
        %2620 = vdwg.mxu0
        %v2621 = vadd.f32 %v2042, %v2495
        %v2622 = vadd.f32 %v2045, %v2498
        %v2623 = vadd.f32 %v2050, %v2503
        %v2624 = vadd.f32 %v2053, %v2506
        %v2625 = vadd.f32 %v2058, %v2511
        %v2626 = vadd.f32 %v2061, %v2514
        %v2627 = vadd.f32 %v2066, %v2519
        %v2628 = vadd.f32 %v2069, %v2522
        %v2629 = vadd.f32 %v2074, %v2527
        %v2630 = vadd.f32 %v2077, %v2530
        %v2631 = vadd.f32 %v2082, %v2535
        %v2632 = vadd.f32 %v2085, %v2538
        %v2633 = vadd.f32 %v2090, %v2543
        %v2634 = vadd.f32 %v2093, %v2546
        %v2635 = vadd.f32 %v2098, %v2551
        %v2636 = vadd.f32 %v2101, %v2554
        %v2637 = vadd.f32 %v2106, %v2559
        %v2638 = vadd.f32 %v2109, %v2562
        %v2639 = vadd.f32 %v2114, %v2567
        %v2640 = vadd.f32 %v2117, %v2570
        %v2641 = vadd.f32 %v2122, %v2575
        %v2642 = vadd.f32 %v2125, %v2578
        %v2643 = vadd.f32 %v2130, %v2583
        %v2644 = vadd.f32 %v2133, %v2586
        %v2645 = vadd.f32 %v2138, %v2591
        %v2646 = vadd.f32 %v2141, %v2594
        %v2647 = vadd.f32 %v2146, %v2599
        %v2648 = vadd.f32 %v2149, %v2602
        %v2649 = vadd.f32 %v2154, %v2607
        %v2650 = vadd.f32 %v2157, %v2610
        %v2651 = vadd.f32 %v2162, %v2615
        %v2652 = vadd.f32 %v2165, %v2618
        %v2653 = vld [vmem:[%s1007] sm:$0xf]
        %v2654 = vld [vmem:[%s1007 + $0x4] sm:$0xf]
        %v2655 = vld [vmem:[%s1007 + $0xc] sm:$0xf]
        %v2656 = vld [vmem:[%s1007 + $0x10] sm:$0xf]
        %v2657 = vld [vmem:[%s1007 + $0x18] sm:$0xf]
        %v2658 = vld [vmem:[%s1007 + $0x1c] sm:$0xf]
        %v2659 = vld [vmem:[%s1007 + $0x24] sm:$0xf]
        %v2660 = vld [vmem:[%s1007 + $0x28] sm:$0xf]
        %v2661 = vld [vmem:[%s1007 + $0x30] sm:$0xf]
        %v2662 = vld [vmem:[%s1007 + $0x34] sm:$0xf]
        %v2663 = vld [vmem:[%s1007 + $0x3c] sm:$0xf]
        %v2664 = vld [vmem:[%s1007 + $0x40] sm:$0xf]
        %v2665 = vld [vmem:[%s1007 + $0x48] sm:$0xf]
        %v2666 = vld [vmem:[%s1007 + $0x4c] sm:$0xf]
        %v2667 = vld [vmem:[%s1007 + $0x54] sm:$0xf]
        %v2668 = vld [vmem:[%s1007 + $0x58] sm:$0xf]
        %v2669 = vld [vmem:[%s1007 + $0x60] sm:$0xf]
        %v2670 = vld [vmem:[%s1007 + $0x64] sm:$0xf]
        %v2671 = vld [vmem:[%s1007 + $0x6c] sm:$0xf]
        %v2672 = vld [vmem:[%s1007 + $0x70] sm:$0xf]
        %v2673 = vld [vmem:[%s1007 + $0x78] sm:$0xf]
        %v2674 = vld [vmem:[%s1007 + $0x7c] sm:$0xf]
        %v2675 = vld [vmem:[%s1007 + $0x84] sm:$0xf]
        %v2676 = vld [vmem:[%s1007 + $0x88] sm:$0xf]
        %v2677 = vld [vmem:[%s1007 + $0x90] sm:$0xf]
        %v2678 = vld [vmem:[%s1007 + $0x94] sm:$0xf]
        %v2679 = vld [vmem:[%s1007 + $0x9c] sm:$0xf]
        %v2680 = vld [vmem:[%s1007 + $0xa0] sm:$0xf]
        %v2681 = vld [vmem:[%s1007 + $0xa8] sm:$0xf]
        %v2682 = vld [vmem:[%s1007 + $0xac] sm:$0xf]
        %v2683 = vld [vmem:[%s1007 + $0xb4] sm:$0xf]
        %v2684 = vld [vmem:[%s1007 + $0xb8] sm:$0xf]
        %s2685 = scalar_lea.vmem [#allocation9], 192
        %v2686 = vld [vmem:[%s2685] sm:$0xf]
        %v2687 = vld [vmem:[%s2685 + $0x4] sm:$0xf]
        %v2688 = vld [vmem:[%s2685 + $0x8] sm:$0xf]
        %v2689 = vld [vmem:[%s2685 + $0xc] sm:$0xf]
        %v2690 = vld [vmem:[%s2685 + $0x10] sm:$0xf]
        %v2691 = vld [vmem:[%s2685 + $0x14] sm:$0xf]
        %v2692 = vld [vmem:[%s2685 + $0x18] sm:$0xf]
        %v2693 = vld [vmem:[%s2685 + $0x1c] sm:$0xf]
        %v2694 = vld [vmem:[%s2685 + $0x20] sm:$0xf]
        %v2695 = vld [vmem:[%s2685 + $0x24] sm:$0xf]
        %v2696 = vld [vmem:[%s2685 + $0x28] sm:$0xf]
        %v2697 = vld [vmem:[%s2685 + $0x2c] sm:$0xf]
        %v2698 = vld [vmem:[%s2685 + $0x30] sm:$0xf]
        %v2699 = vld [vmem:[%s2685 + $0x34] sm:$0xf]
        %v2700 = vld [vmem:[%s2685 + $0x38] sm:$0xf]
        %v2701 = vld [vmem:[%s2685 + $0x3c] sm:$0xf]
        %v2734 = vunpack.c.l.b16 %v2653
        %v2735 = vunpack.c.l.b16 %v2654
        %v2736 = vunpack.c.l.b16 %v2655
        %v2737 = vunpack.c.l.b16 %v2656
        %v2738 = vunpack.c.l.b16 %v2657
        %v2739 = vunpack.c.l.b16 %v2658
        %v2740 = vunpack.c.l.b16 %v2659
        %v2741 = vunpack.c.l.b16 %v2660
        %v2742 = vunpack.c.l.b16 %v2661
        %v2743 = vunpack.c.l.b16 %v2662
        %v2744 = vunpack.c.l.b16 %v2663
        %v2745 = vunpack.c.l.b16 %v2664
        %v2746 = vunpack.c.l.b16 %v2665
        %v2747 = vunpack.c.l.b16 %v2666
        %v2748 = vunpack.c.l.b16 %v2667
        %v2749 = vunpack.c.l.b16 %v2668
        %v2750 = vunpack.c.l.b16 %v2669
        %v2751 = vunpack.c.l.b16 %v2670
        %v2752 = vunpack.c.l.b16 %v2671
        %v2753 = vunpack.c.l.b16 %v2672
        %v2754 = vunpack.c.l.b16 %v2673
        %v2755 = vunpack.c.l.b16 %v2674
        %v2756 = vunpack.c.l.b16 %v2675
        %v2757 = vunpack.c.l.b16 %v2676
        %v2758 = vunpack.c.l.b16 %v2677
        %v2759 = vunpack.c.l.b16 %v2678
        %v2760 = vunpack.c.l.b16 %v2679
        %v2761 = vunpack.c.l.b16 %v2680
        %v2762 = vunpack.c.l.b16 %v2681
        %v2763 = vunpack.c.l.b16 %v2682
        %v2764 = vunpack.c.l.b16 %v2683
        %v2765 = vunpack.c.l.b16 %v2684
        %v2766 = vpack.c.b16 %v2735, %v2734
        %v2767 = vpack.c.b16 %v2737, %v2736
        %v2768 = vpack.c.b16 %v2739, %v2738
        %v2769 = vpack.c.b16 %v2741, %v2740
        %v2770 = vpack.c.b16 %v2743, %v2742
        %v2771 = vpack.c.b16 %v2745, %v2744
        %v2772 = vpack.c.b16 %v2747, %v2746
        %v2773 = vpack.c.b16 %v2749, %v2748
        %v2774 = vpack.c.b16 %v2751, %v2750
        %v2775 = vpack.c.b16 %v2753, %v2752
        %v2776 = vpack.c.b16 %v2755, %v2754
        %v2777 = vpack.c.b16 %v2757, %v2756
        %v2778 = vpack.c.b16 %v2759, %v2758
        %v2779 = vpack.c.b16 %v2761, %v2760
        %v2780 = vpack.c.b16 %v2763, %v2762
        %v2781 = vpack.c.b16 %v2765, %v2764
        %v2814 = vunpack.c.l.b16 %v2686
        %v2815 = vunpack.c.l.b16 %v2687
        %v2816 = vunpack.c.l.b16 %v2688
        %v2817 = vunpack.c.l.b16 %v2689
        %v2818 = vunpack.c.l.b16 %v2690
        %v2819 = vunpack.c.l.b16 %v2691
        %v2820 = vunpack.c.l.b16 %v2692
        %v2821 = vunpack.c.l.b16 %v2693
        %v2822 = vunpack.c.l.b16 %v2694
        %v2823 = vunpack.c.l.b16 %v2695
        %v2824 = vunpack.c.l.b16 %v2696
        %v2825 = vunpack.c.l.b16 %v2697
        %v2826 = vunpack.c.l.b16 %v2698
        %v2827 = vunpack.c.l.b16 %v2699
        %v2828 = vunpack.c.l.b16 %v2700
        %v2829 = vunpack.c.l.b16 %v2701
        %v2830 = vpack.c.b16 %v2815, %v2814
        %v2831 = vpack.c.b16 %v2817, %v2816
        %v2832 = vpack.c.b16 %v2819, %v2818
        %v2833 = vpack.c.b16 %v2821, %v2820
        %v2834 = vpack.c.b16 %v2823, %v2822
        %v2835 = vpack.c.b16 %v2825, %v2824
        %v2836 = vpack.c.b16 %v2827, %v2826
        %v2837 = vpack.c.b16 %v2829, %v2828
        %2846 = vmatprep.subr.bf16.mxu0 0
        %2847 = vmatpush1.bf16.msra.mxu0 %v2830
        %2848 = vmatprep.subr.bf16.mxu0 0
        %2849 = vmatpush1.bf16.msra.mxu0 %v2831
        %2850 = vmatprep.subr.bf16.mxu0 0
        %2851 = vmatpush1.bf16.msra.mxu0 %v2832
        %2852 = vmatprep.subr.bf16.mxu0 0
        %2853 = vmatpush1.bf16.msra.mxu0 %v2833
        %2854 = vmatprep.subr.bf16.mxu0 0
        %2855 = vmatpush1.bf16.msra.mxu0 %v2834
        %2856 = vmatprep.subr.bf16.mxu0 0
        %2857 = vmatpush1.bf16.msra.mxu0 %v2835
        %2858 = vmatprep.subr.bf16.mxu0 0
        %2859 = vmatpush1.bf16.msra.mxu0 %v2836
        %2860 = vmatprep.subr.bf16.mxu0 0
        %2861 = vmatpush1.bf16.msra.mxu0 %v2837
        %2862 = vmatprep.subr.bf16.mxu0 0
        %2863 = vmatpush1.bf16.msra.mxu0 0
        %2864 = vmatprep.subr.bf16.mxu0 0
        %2865 = vmatpush1.bf16.msra.mxu0 0
        %2866 = vmatprep.subr.bf16.mxu0 0
        %2867 = vmatpush1.bf16.msra.mxu0 0
        %2868 = vmatprep.subr.bf16.mxu0 0
        %2869 = vmatpush1.bf16.msra.mxu0 0
        %2870 = vmatprep.subr.bf16.mxu0 0
        %2871 = vmatpush1.bf16.msra.mxu0 0
        %2872 = vmatprep.subr.bf16.mxu0 0
        %2873 = vmatpush1.bf16.msra.mxu0 0
        %2874 = vmatprep.subr.bf16.mxu0 0
        %2875 = vmatpush1.bf16.msra.mxu0 0
        %2876 = vmatprep.subr.bf16.mxu0 0
        %2877 = vmatpush1.bf16.msra.mxu0 0
        %2878 = vmatprep.mubr.bf16.mxu0 0
        %2879 = vmatmul.mubr.bf16.gmra.mrb[0].mxu0 %v2766
        %v2880 = vpop.f32.mrb[0].mxu0
        %v2881 = vadd.f32 0.0, %v2880
        %v2882 = vpop.f32.mrb[0].mxu0
        %v2883 = vpop.f32.mrb[0].mxu0
        %v2884 = vadd.f32 0.0, %v2883
        %v2885 = vpop.f32.mrb[0].mxu0
        %2886 = vmatprep.mubr.bf16.mxu0 0
        %2887 = vmatmul.mubr.bf16.gmra.mrb[0].mxu0 %v2767
        %v2888 = vpop.f32.mrb[0].mxu0
        %v2889 = vadd.f32 0.0, %v2888
        %v2890 = vpop.f32.mrb[0].mxu0
        %v2891 = vpop.f32.mrb[0].mxu0
        %v2892 = vadd.f32 0.0, %v2891
        %v2893 = vpop.f32.mrb[0].mxu0
        %2894 = vmatprep.mubr.bf16.mxu0 0
        %2895 = vmatmul.mubr.bf16.gmra.mrb[0].mxu0 %v2768
        %v2896 = vpop.f32.mrb[0].mxu0
        %v2897 = vadd.f32 0.0, %v2896
        %v2898 = vpop.f32.mrb[0].mxu0
        %v2899 = vpop.f32.mrb[0].mxu0
        %v2900 = vadd.f32 0.0, %v2899
        %v2901 = vpop.f32.mrb[0].mxu0
        %2902 = vmatprep.mubr.bf16.mxu0 0
        %2903 = vmatmul.mubr.bf16.gmra.mrb[0].mxu0 %v2769
        %v2904 = vpop.f32.mrb[0].mxu0
        %v2905 = vadd.f32 0.0, %v2904
        %v2906 = vpop.f32.mrb[0].mxu0
        %v2907 = vpop.f32.mrb[0].mxu0
        %v2908 = vadd.f32 0.0, %v2907
        %v2909 = vpop.f32.mrb[0].mxu0
        %2910 = vmatprep.mubr.bf16.mxu0 0
        %2911 = vmatmul.mubr.bf16.gmra.mrb[0].mxu0 %v2770
        %v2912 = vpop.f32.mrb[0].mxu0
        %v2913 = vadd.f32 0.0, %v2912
        %v2914 = vpop.f32.mrb[0].mxu0
        %v2915 = vpop.f32.mrb[0].mxu0
        %v2916 = vadd.f32 0.0, %v2915
        %v2917 = vpop.f32.mrb[0].mxu0
        %2918 = vmatprep.mubr.bf16.mxu0 0
        %2919 = vmatmul.mubr.bf16.gmra.mrb[0].mxu0 %v2771
        %v2920 = vpop.f32.mrb[0].mxu0
        %v2921 = vadd.f32 0.0, %v2920
        %v2922 = vpop.f32.mrb[0].mxu0
        %v2923 = vpop.f32.mrb[0].mxu0
        %v2924 = vadd.f32 0.0, %v2923
        %v2925 = vpop.f32.mrb[0].mxu0
        %2926 = vmatprep.mubr.bf16.mxu0 0
        %2927 = vmatmul.mubr.bf16.gmra.mrb[0].mxu0 %v2772
        %v2928 = vpop.f32.mrb[0].mxu0
        %v2929 = vadd.f32 0.0, %v2928
        %v2930 = vpop.f32.mrb[0].mxu0
        %v2931 = vpop.f32.mrb[0].mxu0
        %v2932 = vadd.f32 0.0, %v2931
        %v2933 = vpop.f32.mrb[0].mxu0
        %2934 = vmatprep.mubr.bf16.mxu0 0
        %2935 = vmatmul.mubr.bf16.gmra.mrb[0].mxu0 %v2773
        %v2936 = vpop.f32.mrb[0].mxu0
        %v2937 = vadd.f32 0.0, %v2936
        %v2938 = vpop.f32.mrb[0].mxu0
        %v2939 = vpop.f32.mrb[0].mxu0
        %v2940 = vadd.f32 0.0, %v2939
        %v2941 = vpop.f32.mrb[0].mxu0
        %2942 = vmatprep.mubr.bf16.mxu0 0
        %2943 = vmatmul.mubr.bf16.gmra.mrb[0].mxu0 %v2774
        %v2944 = vpop.f32.mrb[0].mxu0
        %v2945 = vadd.f32 0.0, %v2944
        %v2946 = vpop.f32.mrb[0].mxu0
        %v2947 = vpop.f32.mrb[0].mxu0
        %v2948 = vadd.f32 0.0, %v2947
        %v2949 = vpop.f32.mrb[0].mxu0
        %2950 = vmatprep.mubr.bf16.mxu0 0
        %2951 = vmatmul.mubr.bf16.gmra.mrb[0].mxu0 %v2775
        %v2952 = vpop.f32.mrb[0].mxu0
        %v2953 = vadd.f32 0.0, %v2952
        %v2954 = vpop.f32.mrb[0].mxu0
        %v2955 = vpop.f32.mrb[0].mxu0
        %v2956 = vadd.f32 0.0, %v2955
        %v2957 = vpop.f32.mrb[0].mxu0
        %2958 = vmatprep.mubr.bf16.mxu0 0
        %2959 = vmatmul.mubr.bf16.gmra.mrb[0].mxu0 %v2776
        %v2960 = vpop.f32.mrb[0].mxu0
        %v2961 = vadd.f32 0.0, %v2960
        %v2962 = vpop.f32.mrb[0].mxu0
        %v2963 = vpop.f32.mrb[0].mxu0
        %v2964 = vadd.f32 0.0, %v2963
        %v2965 = vpop.f32.mrb[0].mxu0
        %2966 = vmatprep.mubr.bf16.mxu0 0
        %2967 = vmatmul.mubr.bf16.gmra.mrb[0].mxu0 %v2777
        %v2968 = vpop.f32.mrb[0].mxu0
        %v2969 = vadd.f32 0.0, %v2968
        %v2970 = vpop.f32.mrb[0].mxu0
        %v2971 = vpop.f32.mrb[0].mxu0
        %v2972 = vadd.f32 0.0, %v2971
        %v2973 = vpop.f32.mrb[0].mxu0
        %2974 = vmatprep.mubr.bf16.mxu0 0
        %2975 = vmatmul.mubr.bf16.gmra.mrb[0].mxu0 %v2778
        %v2976 = vpop.f32.mrb[0].mxu0
        %v2977 = vadd.f32 0.0, %v2976
        %v2978 = vpop.f32.mrb[0].mxu0
        %v2979 = vpop.f32.mrb[0].mxu0
        %v2980 = vadd.f32 0.0, %v2979
        %v2981 = vpop.f32.mrb[0].mxu0
        %2982 = vmatprep.mubr.bf16.mxu0 0
        %2983 = vmatmul.mubr.bf16.gmra.mrb[0].mxu0 %v2779
        %v2984 = vpop.f32.mrb[0].mxu0
        %v2985 = vadd.f32 0.0, %v2984
        %v2986 = vpop.f32.mrb[0].mxu0
        %v2987 = vpop.f32.mrb[0].mxu0
        %v2988 = vadd.f32 0.0, %v2987
        %v2989 = vpop.f32.mrb[0].mxu0
        %2990 = vmatprep.mubr.bf16.mxu0 0
        %2991 = vmatmul.mubr.bf16.gmra.mrb[0].mxu0 %v2780
        %v2992 = vpop.f32.mrb[0].mxu0
        %v2993 = vadd.f32 0.0, %v2992
        %v2994 = vpop.f32.mrb[0].mxu0
        %v2995 = vpop.f32.mrb[0].mxu0
        %v2996 = vadd.f32 0.0, %v2995
        %v2997 = vpop.f32.mrb[0].mxu0
        %2998 = vmatprep.mubr.bf16.mxu0 0
        %2999 = vmatmul.mubr.bf16.gmra.mrb[0].mxu0 %v2781
        %v3000 = vpop.f32.mrb[0].mxu0
        %v3001 = vadd.f32 0.0, %v3000
        %v3002 = vpop.f32.mrb[0].mxu0
        %v3003 = vpop.f32.mrb[0].mxu0
        %v3004 = vadd.f32 0.0, %v3003
        %v3005 = vpop.f32.mrb[0].mxu0
        %3006 = vdwg.mxu0
        %v3007 = vadd.f32 %v2621, %v2881
        %v3008 = vadd.f32 %v2622, %v2884
        %v3009 = vadd.f32 %v2623, %v2889
        %v3010 = vadd.f32 %v2624, %v2892
        %v3011 = vadd.f32 %v2625, %v2897
        %v3012 = vadd.f32 %v2626, %v2900
        %v3013 = vadd.f32 %v2627, %v2905
        %v3014 = vadd.f32 %v2628, %v2908
        %v3015 = vadd.f32 %v2629, %v2913
        %v3016 = vadd.f32 %v2630, %v2916
        %v3017 = vadd.f32 %v2631, %v2921
        %v3018 = vadd.f32 %v2632, %v2924
        %v3019 = vadd.f32 %v2633, %v2929
        %v3020 = vadd.f32 %v2634, %v2932
        %v3021 = vadd.f32 %v2635, %v2937
        %v3022 = vadd.f32 %v2636, %v2940
        %v3023 = vadd.f32 %v2637, %v2945
        %v3024 = vadd.f32 %v2638, %v2948
        %v3025 = vadd.f32 %v2639, %v2953
        %v3026 = vadd.f32 %v2640, %v2956
        %v3027 = vadd.f32 %v2641, %v2961
        %v3028 = vadd.f32 %v2642, %v2964
        %v3029 = vadd.f32 %v2643, %v2969
        %v3030 = vadd.f32 %v2644, %v2972
        %v3031 = vadd.f32 %v2645, %v2977
        %v3032 = vadd.f32 %v2646, %v2980
        %v3033 = vadd.f32 %v2647, %v2985
        %v3034 = vadd.f32 %v2648, %v2988
        %v3035 = vadd.f32 %v2649, %v2993
        %v3036 = vadd.f32 %v2650, %v2996
        %v3037 = vadd.f32 %v2651, %v3001
        %v3038 = vadd.f32 %v2652, %v3004
        %v3039 = vld [vmem:[%s1007] sm:$0xf]
        %v3040 = vld [vmem:[%s1007 + $0x4] sm:$0xf]
        %v3041 = vld [vmem:[%s1007 + $0x8] sm:$0x1]
        %v3042 = vld [vmem:[%s1007 + $0xc] sm:$0xf]
        %v3043 = vld [vmem:[%s1007 + $0x10] sm:$0xf]
        %v3044 = vld [vmem:[%s1007 + $0x14] sm:$0x1]
        %v3045 = vld [vmem:[%s1007 + $0x18] sm:$0xf]
        %v3046 = vld [vmem:[%s1007 + $0x1c] sm:$0xf]
        %v3047 = vld [vmem:[%s1007 + $0x20] sm:$0x1]
        %v3048 = vld [vmem:[%s1007 + $0x24] sm:$0xf]
        %v3049 = vld [vmem:[%s1007 + $0x28] sm:$0xf]
        %v3050 = vld [vmem:[%s1007 + $0x2c] sm:$0x1]
        %v3051 = vld [vmem:[%s1007 + $0x30] sm:$0xf]
        %v3052 = vld [vmem:[%s1007 + $0x34] sm:$0xf]
        %v3053 = vld [vmem:[%s1007 + $0x38] sm:$0x1]
        %v3054 = vld [vmem:[%s1007 + $0x3c] sm:$0xf]
        %v3055 = vld [vmem:[%s1007 + $0x40] sm:$0xf]
        %v3056 = vld [vmem:[%s1007 + $0x44] sm:$0x1]
        %v3057 = vld [vmem:[%s1007 + $0x48] sm:$0xf]
        %v3058 = vld [vmem:[%s1007 + $0x4c] sm:$0xf]
        %v3059 = vld [vmem:[%s1007 + $0x50] sm:$0x1]
        %v3060 = vld [vmem:[%s1007 + $0x54] sm:$0xf]
        %v3061 = vld [vmem:[%s1007 + $0x58] sm:$0xf]
        %v3062 = vld [vmem:[%s1007 + $0x5c] sm:$0x1]
        %v3063 = vld [vmem:[%s1007 + $0x60] sm:$0xf]
        %v3064 = vld [vmem:[%s1007 + $0x64] sm:$0xf]
        %v3065 = vld [vmem:[%s1007 + $0x68] sm:$0x1]
        %v3066 = vld [vmem:[%s1007 + $0x6c] sm:$0xf]
        %v3067 = vld [vmem:[%s1007 + $0x70] sm:$0xf]
        %v3068 = vld [vmem:[%s1007 + $0x74] sm:$0x1]
        %v3069 = vld [vmem:[%s1007 + $0x78] sm:$0xf]
        %v3070 = vld [vmem:[%s1007 + $0x7c] sm:$0xf]
        %v3071 = vld [vmem:[%s1007 + $0x80] sm:$0x1]
        %v3072 = vld [vmem:[%s1007 + $0x84] sm:$0xf]
        %v3073 = vld [vmem:[%s1007 + $0x88] sm:$0xf]
        %v3074 = vld [vmem:[%s1007 + $0x8c] sm:$0x1]
        %v3075 = vld [vmem:[%s1007 + $0x90] sm:$0xf]
        %v3076 = vld [vmem:[%s1007 + $0x94] sm:$0xf]
        %v3077 = vld [vmem:[%s1007 + $0x98] sm:$0x1]
        %v3078 = vld [vmem:[%s1007 + $0x9c] sm:$0xf]
        %v3079 = vld [vmem:[%s1007 + $0xa0] sm:$0xf]
        %v3080 = vld [vmem:[%s1007 + $0xa4] sm:$0x1]
        %v3081 = vld [vmem:[%s1007 + $0xa8] sm:$0xf]
        %v3082 = vld [vmem:[%s1007 + $0xac] sm:$0xf]
        %v3083 = vld [vmem:[%s1007 + $0xb0] sm:$0x1]
        %v3084 = vld [vmem:[%s1007 + $0xb4] sm:$0xf]
        %v3085 = vld [vmem:[%s1007 + $0xb8] sm:$0xf]
        %v3086 = vld [vmem:[%s1007 + $0xbc] sm:$0x1]
        %v3088 = vshrl.u32 %v3039, 16
        %v3090 = vrot.slane %v3088, 4
        %v3091 = vshll.u32 %v3039, 16
        %v3093 = vrot.slane %v3091, 5
        %v3094 = vor.u32 %v3090, %v3093
        %v3095 = vrot.slane %v3094, 4
        %v3097 = vshll.u32 %v3040, 16
        %v3099 = vrot.slane %v3097, 5
        %v3100 = vsel %vm1188, %v3095, %v3099
        %v3101 = vshrl.u32 %v3040, 16
        %v3103 = vrot.slane %v3101, 4
        %v3104 = vor.u32 %v3103, %v3099
        %v3105 = vrot.slane %v3104, 4
        %v3107 = vshll.u32 %v3041, 16
        %v3109 = vrot.slane %v3107, 5
        %v3110 = vsel %vm1188, %v3105, %v3109
        %v3112 = vshrl.u32 %v3042, 16
        %v3114 = vrot.slane %v3112, 4
        %v3115 = vshll.u32 %v3042, 16
        %v3117 = vrot.slane %v3115, 5
        %v3118 = vor.u32 %v3114, %v3117
        %v3119 = vrot.slane %v3118, 4
        %v3121 = vshll.u32 %v3043, 16
        %v3123 = vrot.slane %v3121, 5
        %v3124 = vsel %vm1188, %v3119, %v3123
        %v3125 = vshrl.u32 %v3043, 16
        %v3127 = vrot.slane %v3125, 4
        %v3128 = vor.u32 %v3127, %v3123
        %v3129 = vrot.slane %v3128, 4
        %v3131 = vshll.u32 %v3044, 16
        %v3133 = vrot.slane %v3131, 5
        %v3134 = vsel %vm1188, %v3129, %v3133
        %v3136 = vshrl.u32 %v3045, 16
        %v3138 = vrot.slane %v3136, 4
        %v3139 = vshll.u32 %v3045, 16
        %v3141 = vrot.slane %v3139, 5
        %v3142 = vor.u32 %v3138, %v3141
        %v3143 = vrot.slane %v3142, 4
        %v3145 = vshll.u32 %v3046, 16
        %v3147 = vrot.slane %v3145, 5
        %v3148 = vsel %vm1188, %v3143, %v3147
        %v3149 = vshrl.u32 %v3046, 16
        %v3151 = vrot.slane %v3149, 4
        %v3152 = vor.u32 %v3151, %v3147
        %v3153 = vrot.slane %v3152, 4
        %v3155 = vshll.u32 %v3047, 16
        %v3157 = vrot.slane %v3155, 5
        %v3158 = vsel %vm1188, %v3153, %v3157
        %v3160 = vshrl.u32 %v3048, 16
        %v3162 = vrot.slane %v3160, 4
        %v3163 = vshll.u32 %v3048, 16
        %v3165 = vrot.slane %v3163, 5
        %v3166 = vor.u32 %v3162, %v3165
        %v3167 = vrot.slane %v3166, 4
        %v3169 = vshll.u32 %v3049, 16
        %v3171 = vrot.slane %v3169, 5
        %v3172 = vsel %vm1188, %v3167, %v3171
        %v3173 = vshrl.u32 %v3049, 16
        %v3175 = vrot.slane %v3173, 4
        %v3176 = vor.u32 %v3175, %v3171
        %v3177 = vrot.slane %v3176, 4
        %v3179 = vshll.u32 %v3050, 16
        %v3181 = vrot.slane %v3179, 5
        %v3182 = vsel %vm1188, %v3177, %v3181
        %v3184 = vshrl.u32 %v3051, 16
        %v3186 = vrot.slane %v3184, 4
        %v3187 = vshll.u32 %v3051, 16
        %v3189 = vrot.slane %v3187, 5
        %v3190 = vor.u32 %v3186, %v3189
        %v3191 = vrot.slane %v3190, 4
        %v3193 = vshll.u32 %v3052, 16
        %v3195 = vrot.slane %v3193, 5
        %v3196 = vsel %vm1188, %v3191, %v3195
        %v3197 = vshrl.u32 %v3052, 16
        %v3199 = vrot.slane %v3197, 4
        %v3200 = vor.u32 %v3199, %v3195
        %v3201 = vrot.slane %v3200, 4
        %v3203 = vshll.u32 %v3053, 16
        %v3205 = vrot.slane %v3203, 5
        %v3206 = vsel %vm1188, %v3201, %v3205
        %v3208 = vshrl.u32 %v3054, 16
        %v3210 = vrot.slane %v3208, 4
        %v3211 = vshll.u32 %v3054, 16
        %v3213 = vrot.slane %v3211, 5
        %v3214 = vor.u32 %v3210, %v3213
        %v3215 = vrot.slane %v3214, 4
        %v3217 = vshll.u32 %v3055, 16
        %v3219 = vrot.slane %v3217, 5
        %v3220 = vsel %vm1188, %v3215, %v3219
        %v3221 = vshrl.u32 %v3055, 16
        %v3223 = vrot.slane %v3221, 4
        %v3224 = vor.u32 %v3223, %v3219
        %v3225 = vrot.slane %v3224, 4
        %v3227 = vshll.u32 %v3056, 16
        %v3229 = vrot.slane %v3227, 5
        %v3230 = vsel %vm1188, %v3225, %v3229
        %v3232 = vshrl.u32 %v3057, 16
        %v3234 = vrot.slane %v3232, 4
        %v3235 = vshll.u32 %v3057, 16
        %v3237 = vrot.slane %v3235, 5
        %v3238 = vor.u32 %v3234, %v3237
        %v3239 = vrot.slane %v3238, 4
        %v3241 = vshll.u32 %v3058, 16
        %v3243 = vrot.slane %v3241, 5
        %v3244 = vsel %vm1188, %v3239, %v3243
        %v3245 = vshrl.u32 %v3058, 16
        %v3247 = vrot.slane %v3245, 4
        %v3248 = vor.u32 %v3247, %v3243
        %v3249 = vrot.slane %v3248, 4
        %v3251 = vshll.u32 %v3059, 16
        %v3253 = vrot.slane %v3251, 5
        %v3254 = vsel %vm1188, %v3249, %v3253
        %v3256 = vshrl.u32 %v3060, 16
        %v3258 = vrot.slane %v3256, 4
        %v3259 = vshll.u32 %v3060, 16
        %v3261 = vrot.slane %v3259, 5
        %v3262 = vor.u32 %v3258, %v3261
        %v3263 = vrot.slane %v3262, 4
        %v3265 = vshll.u32 %v3061, 16
        %v3267 = vrot.slane %v3265, 5
        %v3268 = vsel %vm1188, %v3263, %v3267
        %v3269 = vshrl.u32 %v3061, 16
        %v3271 = vrot.slane %v3269, 4
        %v3272 = vor.u32 %v3271, %v3267
        %v3273 = vrot.slane %v3272, 4
        %v3275 = vshll.u32 %v3062, 16
        %v3277 = vrot.slane %v3275, 5
        %v3278 = vsel %vm1188, %v3273, %v3277
        %v3280 = vshrl.u32 %v3063, 16
        %v3282 = vrot.slane %v3280, 4
        %v3283 = vshll.u32 %v3063, 16
        %v3285 = vrot.slane %v3283, 5
        %v3286 = vor.u32 %v3282, %v3285
        %v3287 = vrot.slane %v3286, 4
        %v3289 = vshll.u32 %v3064, 16
        %v3291 = vrot.slane %v3289, 5
        %v3292 = vsel %vm1188, %v3287, %v3291
        %v3293 = vshrl.u32 %v3064, 16
        %v3295 = vrot.slane %v3293, 4
        %v3296 = vor.u32 %v3295, %v3291
        %v3297 = vrot.slane %v3296, 4
        %v3299 = vshll.u32 %v3065, 16
        %v3301 = vrot.slane %v3299, 5
        %v3302 = vsel %vm1188, %v3297, %v3301
        %v3304 = vshrl.u32 %v3066, 16
        %v3306 = vrot.slane %v3304, 4
        %v3307 = vshll.u32 %v3066, 16
        %v3309 = vrot.slane %v3307, 5
        %v3310 = vor.u32 %v3306, %v3309
        %v3311 = vrot.slane %v3310, 4
        %v3313 = vshll.u32 %v3067, 16
        %v3315 = vrot.slane %v3313, 5
        %v3316 = vsel %vm1188, %v3311, %v3315
        %v3317 = vshrl.u32 %v3067, 16
        %v3319 = vrot.slane %v3317, 4
        %v3320 = vor.u32 %v3319, %v3315
        %v3321 = vrot.slane %v3320, 4
        %v3323 = vshll.u32 %v3068, 16
        %v3325 = vrot.slane %v3323, 5
        %v3326 = vsel %vm1188, %v3321, %v3325
        %v3328 = vshrl.u32 %v3069, 16
        %v3330 = vrot.slane %v3328, 4
        %v3331 = vshll.u32 %v3069, 16
        %v3333 = vrot.slane %v3331, 5
        %v3334 = vor.u32 %v3330, %v3333
        %v3335 = vrot.slane %v3334, 4
        %v3337 = vshll.u32 %v3070, 16
        %v3339 = vrot.slane %v3337, 5
        %v3340 = vsel %vm1188, %v3335, %v3339
        %v3341 = vshrl.u32 %v3070, 16
        %v3343 = vrot.slane %v3341, 4
        %v3344 = vor.u32 %v3343, %v3339
        %v3345 = vrot.slane %v3344, 4
        %v3347 = vshll.u32 %v3071, 16
        %v3349 = vrot.slane %v3347, 5
        %v3350 = vsel %vm1188, %v3345, %v3349
        %v3352 = vshrl.u32 %v3072, 16
        %v3354 = vrot.slane %v3352, 4
        %v3355 = vshll.u32 %v3072, 16
        %v3357 = vrot.slane %v3355, 5
        %v3358 = vor.u32 %v3354, %v3357
        %v3359 = vrot.slane %v3358, 4
        %v3361 = vshll.u32 %v3073, 16
        %v3363 = vrot.slane %v3361, 5
        %v3364 = vsel %vm1188, %v3359, %v3363
        %v3365 = vshrl.u32 %v3073, 16
        %v3367 = vrot.slane %v3365, 4
        %v3368 = vor.u32 %v3367, %v3363
        %v3369 = vrot.slane %v3368, 4
        %v3371 = vshll.u32 %v3074, 16
        %v3373 = vrot.slane %v3371, 5
        %v3374 = vsel %vm1188, %v3369, %v3373
        %v3376 = vshrl.u32 %v3075, 16
        %v3378 = vrot.slane %v3376, 4
        %v3379 = vshll.u32 %v3075, 16
        %v3381 = vrot.slane %v3379, 5
        %v3382 = vor.u32 %v3378, %v3381
        %v3383 = vrot.slane %v3382, 4
        %v3385 = vshll.u32 %v3076, 16
        %v3387 = vrot.slane %v3385, 5
        %v3388 = vsel %vm1188, %v3383, %v3387
        %v3389 = vshrl.u32 %v3076, 16
        %v3391 = vrot.slane %v3389, 4
        %v3392 = vor.u32 %v3391, %v3387
        %v3393 = vrot.slane %v3392, 4
        %v3395 = vshll.u32 %v3077, 16
        %v3397 = vrot.slane %v3395, 5
        %v3398 = vsel %vm1188, %v3393, %v3397
        %v3400 = vshrl.u32 %v3078, 16
        %v3402 = vrot.slane %v3400, 4
        %v3403 = vshll.u32 %v3078, 16
        %v3405 = vrot.slane %v3403, 5
        %v3406 = vor.u32 %v3402, %v3405
        %v3407 = vrot.slane %v3406, 4
        %v3409 = vshll.u32 %v3079, 16
        %v3411 = vrot.slane %v3409, 5
        %v3412 = vsel %vm1188, %v3407, %v3411
        %v3413 = vshrl.u32 %v3079, 16
        %v3415 = vrot.slane %v3413, 4
        %v3416 = vor.u32 %v3415, %v3411
        %v3417 = vrot.slane %v3416, 4
        %v3419 = vshll.u32 %v3080, 16
        %v3421 = vrot.slane %v3419, 5
        %v3422 = vsel %vm1188, %v3417, %v3421
        %v3424 = vshrl.u32 %v3081, 16
        %v3426 = vrot.slane %v3424, 4
        %v3427 = vshll.u32 %v3081, 16
        %v3429 = vrot.slane %v3427, 5
        %v3430 = vor.u32 %v3426, %v3429
        %v3431 = vrot.slane %v3430, 4
        %v3433 = vshll.u32 %v3082, 16
        %v3435 = vrot.slane %v3433, 5
        %v3436 = vsel %vm1188, %v3431, %v3435
        %v3437 = vshrl.u32 %v3082, 16
        %v3439 = vrot.slane %v3437, 4
        %v3440 = vor.u32 %v3439, %v3435
        %v3441 = vrot.slane %v3440, 4
        %v3443 = vshll.u32 %v3083, 16
        %v3445 = vrot.slane %v3443, 5
        %v3446 = vsel %vm1188, %v3441, %v3445
        %v3448 = vshrl.u32 %v3084, 16
        %v3450 = vrot.slane %v3448, 4
        %v3451 = vshll.u32 %v3084, 16
        %v3453 = vrot.slane %v3451, 5
        %v3454 = vor.u32 %v3450, %v3453
        %v3455 = vrot.slane %v3454, 4
        %v3457 = vshll.u32 %v3085, 16
        %v3459 = vrot.slane %v3457, 5
        %v3460 = vsel %vm1188, %v3455, %v3459
        %v3461 = vshrl.u32 %v3085, 16
        %v3463 = vrot.slane %v3461, 4
        %v3464 = vor.u32 %v3463, %v3459
        %v3465 = vrot.slane %v3464, 4
        %v3467 = vshll.u32 %v3086, 16
        %v3469 = vrot.slane %v3467, 5
        %v3470 = vsel %vm1188, %v3465, %v3469
        %s3471 = scalar_lea.vmem [#allocation9], 256
        %v3472 = vld [vmem:[%s3471] sm:$0xf]
        %v3473 = vld [vmem:[%s3471 + $0x4] sm:$0xf]
        %v3474 = vld [vmem:[%s3471 + $0x8] sm:$0xf]
        %v3475 = vld [vmem:[%s3471 + $0xc] sm:$0xf]
        %v3476 = vld [vmem:[%s3471 + $0x10] sm:$0xf]
        %v3477 = vld [vmem:[%s3471 + $0x14] sm:$0xf]
        %v3478 = vld [vmem:[%s3471 + $0x18] sm:$0xf]
        %v3479 = vld [vmem:[%s3471 + $0x1c] sm:$0xf]
        %v3480 = vld [vmem:[%s3471 + $0x20] sm:$0xf]
        %v3481 = vld [vmem:[%s3471 + $0x24] sm:$0xf]
        %v3482 = vld [vmem:[%s3471 + $0x28] sm:$0xf]
        %v3483 = vld [vmem:[%s3471 + $0x2c] sm:$0xf]
        %v3484 = vld [vmem:[%s3471 + $0x30] sm:$0xf]
        %v3485 = vld [vmem:[%s3471 + $0x34] sm:$0xf]
        %v3486 = vld [vmem:[%s3471 + $0x38] sm:$0xf]
        %v3487 = vld [vmem:[%s3471 + $0x3c] sm:$0xf]
        %v3488 = vunpack.c.l.b16 %v3100
        %v3489 = vunpack.c.l.b16 %v3110
        %v3490 = vunpack.c.l.b16 %v3124
        %v3491 = vunpack.c.l.b16 %v3134
        %v3492 = vunpack.c.l.b16 %v3148
        %v3493 = vunpack.c.l.b16 %v3158
        %v3494 = vunpack.c.l.b16 %v3172
        %v3495 = vunpack.c.l.b16 %v3182
        %v3496 = vunpack.c.l.b16 %v3196
        %v3497 = vunpack.c.l.b16 %v3206
        %v3498 = vunpack.c.l.b16 %v3220
        %v3499 = vunpack.c.l.b16 %v3230
        %v3500 = vunpack.c.l.b16 %v3244
        %v3501 = vunpack.c.l.b16 %v3254
        %v3502 = vunpack.c.l.b16 %v3268
        %v3503 = vunpack.c.l.b16 %v3278
        %v3504 = vunpack.c.l.b16 %v3292
        %v3505 = vunpack.c.l.b16 %v3302
        %v3506 = vunpack.c.l.b16 %v3316
        %v3507 = vunpack.c.l.b16 %v3326
        %v3508 = vunpack.c.l.b16 %v3340
        %v3509 = vunpack.c.l.b16 %v3350
        %v3510 = vunpack.c.l.b16 %v3364
        %v3511 = vunpack.c.l.b16 %v3374
        %v3512 = vunpack.c.l.b16 %v3388
        %v3513 = vunpack.c.l.b16 %v3398
        %v3514 = vunpack.c.l.b16 %v3412
        %v3515 = vunpack.c.l.b16 %v3422
        %v3516 = vunpack.c.l.b16 %v3436
        %v3517 = vunpack.c.l.b16 %v3446
        %v3518 = vunpack.c.l.b16 %v3460
        %v3519 = vunpack.c.l.b16 %v3470
        %v3520 = vpack.c.b16 %v3489, %v3488
        %v3521 = vpack.c.b16 %v3491, %v3490
        %v3522 = vpack.c.b16 %v3493, %v3492
        %v3523 = vpack.c.b16 %v3495, %v3494
        %v3524 = vpack.c.b16 %v3497, %v3496
        %v3525 = vpack.c.b16 %v3499, %v3498
        %v3526 = vpack.c.b16 %v3501, %v3500
        %v3527 = vpack.c.b16 %v3503, %v3502
        %v3528 = vpack.c.b16 %v3505, %v3504
        %v3529 = vpack.c.b16 %v3507, %v3506
        %v3530 = vpack.c.b16 %v3509, %v3508
        %v3531 = vpack.c.b16 %v3511, %v3510
        %v3532 = vpack.c.b16 %v3513, %v3512
        %v3533 = vpack.c.b16 %v3515, %v3514
        %v3534 = vpack.c.b16 %v3517, %v3516
        %v3535 = vpack.c.b16 %v3519, %v3518
        %v3568 = vunpack.c.l.b16 %v3472
        %v3569 = vunpack.c.l.b16 %v3473
        %v3570 = vunpack.c.l.b16 %v3474
        %v3571 = vunpack.c.l.b16 %v3475
        %v3572 = vunpack.c.l.b16 %v3476
        %v3573 = vunpack.c.l.b16 %v3477
        %v3574 = vunpack.c.l.b16 %v3478
        %v3575 = vunpack.c.l.b16 %v3479
        %v3576 = vunpack.c.l.b16 %v3480
        %v3577 = vunpack.c.l.b16 %v3481
        %v3578 = vunpack.c.l.b16 %v3482
        %v3579 = vunpack.c.l.b16 %v3483
        %v3580 = vunpack.c.l.b16 %v3484
        %v3581 = vunpack.c.l.b16 %v3485
        %v3582 = vunpack.c.l.b16 %v3486
        %v3583 = vunpack.c.l.b16 %v3487
        %v3584 = vpack.c.b16 %v3569, %v3568
        %v3585 = vpack.c.b16 %v3571, %v3570
        %v3586 = vpack.c.b16 %v3573, %v3572
        %v3587 = vpack.c.b16 %v3575, %v3574
        %v3588 = vpack.c.b16 %v3577, %v3576
        %v3589 = vpack.c.b16 %v3579, %v3578
        %v3590 = vpack.c.b16 %v3581, %v3580
        %v3591 = vpack.c.b16 %v3583, %v3582
        %3600 = vmatprep.subr.bf16.mxu0 0
        %3601 = vmatpush1.bf16.msra.mxu0 %v3584
        %3602 = vmatprep.subr.bf16.mxu0 0
        %3603 = vmatpush1.bf16.msra.mxu0 %v3585
        %3604 = vmatprep.subr.bf16.mxu0 0
        %3605 = vmatpush1.bf16.msra.mxu0 %v3586
        %3606 = vmatprep.subr.bf16.mxu0 0
        %3607 = vmatpush1.bf16.msra.mxu0 %v3587
        %3608 = vmatprep.subr.bf16.mxu0 0
        %3609 = vmatpush1.bf16.msra.mxu0 %v3588
        %3610 = vmatprep.subr.bf16.mxu0 0
        %3611 = vmatpush1.bf16.msra.mxu0 %v3589
        %3612 = vmatprep.subr.bf16.mxu0 0
        %3613 = vmatpush1.bf16.msra.mxu0 %v3590
        %3614 = vmatprep.subr.bf16.mxu0 0
        %3615 = vmatpush1.bf16.msra.mxu0 %v3591
        %3616 = vmatprep.subr.bf16.mxu0 0
        %3617 = vmatpush1.bf16.msra.mxu0 0
        %3618 = vmatprep.subr.bf16.mxu0 0
        %3619 = vmatpush1.bf16.msra.mxu0 0
        %3620 = vmatprep.subr.bf16.mxu0 0
        %3621 = vmatpush1.bf16.msra.mxu0 0
        %3622 = vmatprep.subr.bf16.mxu0 0
        %3623 = vmatpush1.bf16.msra.mxu0 0
        %3624 = vmatprep.subr.bf16.mxu0 0
        %3625 = vmatpush1.bf16.msra.mxu0 0
        %3626 = vmatprep.subr.bf16.mxu0 0
        %3627 = vmatpush1.bf16.msra.mxu0 0
        %3628 = vmatprep.subr.bf16.mxu0 0
        %3629 = vmatpush1.bf16.msra.mxu0 0
        %3630 = vmatprep.subr.bf16.mxu0 0
        %3631 = vmatpush1.bf16.msra.mxu0 0
        %3632 = vmatprep.mubr.bf16.mxu0 0
        %3633 = vmatmul.mubr.bf16.gmra.mrb[0].mxu0 %v3520
        %v3634 = vpop.f32.mrb[0].mxu0
        %v3635 = vadd.f32 0.0, %v3634
        %v3636 = vpop.f32.mrb[0].mxu0
        %v3637 = vpop.f32.mrb[0].mxu0
        %v3638 = vadd.f32 0.0, %v3637
        %v3639 = vpop.f32.mrb[0].mxu0
        %3640 = vmatprep.mubr.bf16.mxu0 0
        %3641 = vmatmul.mubr.bf16.gmra.mrb[0].mxu0 %v3521
        %v3642 = vpop.f32.mrb[0].mxu0
        %v3643 = vadd.f32 0.0, %v3642
        %v3644 = vpop.f32.mrb[0].mxu0
        %v3645 = vpop.f32.mrb[0].mxu0
        %v3646 = vadd.f32 0.0, %v3645
        %v3647 = vpop.f32.mrb[0].mxu0
        %3648 = vmatprep.mubr.bf16.mxu0 0
        %3649 = vmatmul.mubr.bf16.gmra.mrb[0].mxu0 %v3522
        %v3650 = vpop.f32.mrb[0].mxu0
        %v3651 = vadd.f32 0.0, %v3650
        %v3652 = vpop.f32.mrb[0].mxu0
        %v3653 = vpop.f32.mrb[0].mxu0
        %v3654 = vadd.f32 0.0, %v3653
        %v3655 = vpop.f32.mrb[0].mxu0
        %3656 = vmatprep.mubr.bf16.mxu0 0
        %3657 = vmatmul.mubr.bf16.gmra.mrb[0].mxu0 %v3523
        %v3658 = vpop.f32.mrb[0].mxu0
        %v3659 = vadd.f32 0.0, %v3658
        %v3660 = vpop.f32.mrb[0].mxu0
        %v3661 = vpop.f32.mrb[0].mxu0
        %v3662 = vadd.f32 0.0, %v3661
        %v3663 = vpop.f32.mrb[0].mxu0
        %3664 = vmatprep.mubr.bf16.mxu0 0
        %3665 = vmatmul.mubr.bf16.gmra.mrb[0].mxu0 %v3524
        %v3666 = vpop.f32.mrb[0].mxu0
        %v3667 = vadd.f32 0.0, %v3666
        %v3668 = vpop.f32.mrb[0].mxu0
        %v3669 = vpop.f32.mrb[0].mxu0
        %v3670 = vadd.f32 0.0, %v3669
        %v3671 = vpop.f32.mrb[0].mxu0
        %3672 = vmatprep.mubr.bf16.mxu0 0
        %3673 = vmatmul.mubr.bf16.gmra.mrb[0].mxu0 %v3525
        %v3674 = vpop.f32.mrb[0].mxu0
        %v3675 = vadd.f32 0.0, %v3674
        %v3676 = vpop.f32.mrb[0].mxu0
        %v3677 = vpop.f32.mrb[0].mxu0
        %v3678 = vadd.f32 0.0, %v3677
        %v3679 = vpop.f32.mrb[0].mxu0
        %3680 = vmatprep.mubr.bf16.mxu0 0
        %3681 = vmatmul.mubr.bf16.gmra.mrb[0].mxu0 %v3526
        %v3682 = vpop.f32.mrb[0].mxu0
        %v3683 = vadd.f32 0.0, %v3682
        %v3684 = vpop.f32.mrb[0].mxu0
        %v3685 = vpop.f32.mrb[0].mxu0
        %v3686 = vadd.f32 0.0, %v3685
        %v3687 = vpop.f32.mrb[0].mxu0
        %3688 = vmatprep.mubr.bf16.mxu0 0
        %3689 = vmatmul.mubr.bf16.gmra.mrb[0].mxu0 %v3527
        %v3690 = vpop.f32.mrb[0].mxu0
        %v3691 = vadd.f32 0.0, %v3690
        %v3692 = vpop.f32.mrb[0].mxu0
        %v3693 = vpop.f32.mrb[0].mxu0
        %v3694 = vadd.f32 0.0, %v3693
        %v3695 = vpop.f32.mrb[0].mxu0
        %3696 = vmatprep.mubr.bf16.mxu0 0
        %3697 = vmatmul.mubr.bf16.gmra.mrb[0].mxu0 %v3528
        %v3698 = vpop.f32.mrb[0].mxu0
        %v3699 = vadd.f32 0.0, %v3698
        %v3700 = vpop.f32.mrb[0].mxu0
        %v3701 = vpop.f32.mrb[0].mxu0
        %v3702 = vadd.f32 0.0, %v3701
        %v3703 = vpop.f32.mrb[0].mxu0
        %3704 = vmatprep.mubr.bf16.mxu0 0
        %3705 = vmatmul.mubr.bf16.gmra.mrb[0].mxu0 %v3529
        %v3706 = vpop.f32.mrb[0].mxu0
        %v3707 = vadd.f32 0.0, %v3706
        %v3708 = vpop.f32.mrb[0].mxu0
        %v3709 = vpop.f32.mrb[0].mxu0
        %v3710 = vadd.f32 0.0, %v3709
        %v3711 = vpop.f32.mrb[0].mxu0
        %3712 = vmatprep.mubr.bf16.mxu0 0
        %3713 = vmatmul.mubr.bf16.gmra.mrb[0].mxu0 %v3530
        %v3714 = vpop.f32.mrb[0].mxu0
        %v3715 = vadd.f32 0.0, %v3714
        %v3716 = vpop.f32.mrb[0].mxu0
        %v3717 = vpop.f32.mrb[0].mxu0
        %v3718 = vadd.f32 0.0, %v3717
        %v3719 = vpop.f32.mrb[0].mxu0
        %3720 = vmatprep.mubr.bf16.mxu0 0
        %3721 = vmatmul.mubr.bf16.gmra.mrb[0].mxu0 %v3531
        %v3722 = vpop.f32.mrb[0].mxu0
        %v3723 = vadd.f32 0.0, %v3722
        %v3724 = vpop.f32.mrb[0].mxu0
        %v3725 = vpop.f32.mrb[0].mxu0
        %v3726 = vadd.f32 0.0, %v3725
        %v3727 = vpop.f32.mrb[0].mxu0
        %3728 = vmatprep.mubr.bf16.mxu0 0
        %3729 = vmatmul.mubr.bf16.gmra.mrb[0].mxu0 %v3532
        %v3730 = vpop.f32.mrb[0].mxu0
        %v3731 = vadd.f32 0.0, %v3730
        %v3732 = vpop.f32.mrb[0].mxu0
        %v3733 = vpop.f32.mrb[0].mxu0
        %v3734 = vadd.f32 0.0, %v3733
        %v3735 = vpop.f32.mrb[0].mxu0
        %3736 = vmatprep.mubr.bf16.mxu0 0
        %3737 = vmatmul.mubr.bf16.gmra.mrb[0].mxu0 %v3533
        %v3738 = vpop.f32.mrb[0].mxu0
        %v3739 = vadd.f32 0.0, %v3738
        %v3740 = vpop.f32.mrb[0].mxu0
        %v3741 = vpop.f32.mrb[0].mxu0
        %v3742 = vadd.f32 0.0, %v3741
        %v3743 = vpop.f32.mrb[0].mxu0
        %3744 = vmatprep.mubr.bf16.mxu0 0
        %3745 = vmatmul.mubr.bf16.gmra.mrb[0].mxu0 %v3534
        %v3746 = vpop.f32.mrb[0].mxu0
        %v3747 = vadd.f32 0.0, %v3746
        %v3748 = vpop.f32.mrb[0].mxu0
        %v3749 = vpop.f32.mrb[0].mxu0
        %v3750 = vadd.f32 0.0, %v3749
        %v3751 = vpop.f32.mrb[0].mxu0
        %3752 = vmatprep.mubr.bf16.mxu0 0
        %3753 = vmatmul.mubr.bf16.gmra.mrb[0].mxu0 %v3535
        %v3754 = vpop.f32.mrb[0].mxu0
        %v3755 = vadd.f32 0.0, %v3754
        %v3756 = vpop.f32.mrb[0].mxu0
        %v3757 = vpop.f32.mrb[0].mxu0
        %v3758 = vadd.f32 0.0, %v3757
        %v3759 = vpop.f32.mrb[0].mxu0
        %3760 = vdwg.mxu0
        %v3761 = vadd.f32 %v3007, %v3635
        %v3762 = vadd.f32 %v3008, %v3638
        %v3763 = vadd.f32 %v3009, %v3643
        %v3764 = vadd.f32 %v3010, %v3646
        %v3765 = vadd.f32 %v3011, %v3651
        %v3766 = vadd.f32 %v3012, %v3654
        %v3767 = vadd.f32 %v3013, %v3659
        %v3768 = vadd.f32 %v3014, %v3662
        %v3769 = vadd.f32 %v3015, %v3667
        %v3770 = vadd.f32 %v3016, %v3670
        %v3771 = vadd.f32 %v3017, %v3675
        %v3772 = vadd.f32 %v3018, %v3678
        %v3773 = vadd.f32 %v3019, %v3683
        %v3774 = vadd.f32 %v3020, %v3686
        %v3775 = vadd.f32 %v3021, %v3691
        %v3776 = vadd.f32 %v3022, %v3694
        %v3777 = vadd.f32 %v3023, %v3699
        %v3778 = vadd.f32 %v3024, %v3702
        %v3779 = vadd.f32 %v3025, %v3707
        %v3780 = vadd.f32 %v3026, %v3710
        %v3781 = vadd.f32 %v3027, %v3715
        %v3782 = vadd.f32 %v3028, %v3718
        %v3783 = vadd.f32 %v3029, %v3723
        %v3784 = vadd.f32 %v3030, %v3726
        %v3785 = vadd.f32 %v3031, %v3731
        %v3786 = vadd.f32 %v3032, %v3734
        %v3787 = vadd.f32 %v3033, %v3739
        %v3788 = vadd.f32 %v3034, %v3742
        %v3789 = vadd.f32 %v3035, %v3747
        %v3790 = vadd.f32 %v3036, %v3750
        %v3791 = vadd.f32 %v3037, %v3755
        %v3792 = vadd.f32 %v3038, %v3758
        %v3793 = vld [vmem:[%s1007] sm:$0xe]
        %v3794 = vld [vmem:[%s1007 + $0xc] sm:$0xe]
        %v3795 = vld [vmem:[%s1007 + $0x18] sm:$0xe]
        %v3796 = vld [vmem:[%s1007 + $0x24] sm:$0xe]
        %v3797 = vld [vmem:[%s1007 + $0x30] sm:$0xe]
        %v3798 = vld [vmem:[%s1007 + $0x3c] sm:$0xe]
        %v3799 = vld [vmem:[%s1007 + $0x48] sm:$0xe]
        %v3800 = vld [vmem:[%s1007 + $0x54] sm:$0xe]
        %v3801 = vld [vmem:[%s1007 + $0x60] sm:$0xe]
        %v3802 = vld [vmem:[%s1007 + $0x6c] sm:$0xe]
        %v3803 = vld [vmem:[%s1007 + $0x78] sm:$0xe]
        %v3804 = vld [vmem:[%s1007 + $0x84] sm:$0xe]
        %v3805 = vld [vmem:[%s1007 + $0x90] sm:$0xe]
        %v3806 = vld [vmem:[%s1007 + $0x9c] sm:$0xe]
        %v3807 = vld [vmem:[%s1007 + $0xa8] sm:$0xe]
        %v3808 = vld [vmem:[%s1007 + $0xb4] sm:$0xe]
        %v3857 = vrot.slane %v3793, 5
        %v3858 = vrot.slane %v3857, 4
        %v3859 = vrot.slane %v3040, 5
        %v3860 = vsel %vm2218, %v3858, %v3859
        %v3861 = vrot.slane %v3859, 4
        %v3862 = vrot.slane %v3041, 5
        %v3863 = vsel %vm2218, %v3861, %v3862
        %v3864 = vrot.slane %v3794, 5
        %v3865 = vrot.slane %v3864, 4
        %v3866 = vrot.slane %v3043, 5
        %v3867 = vsel %vm2218, %v3865, %v3866
        %v3868 = vrot.slane %v3866, 4
        %v3869 = vrot.slane %v3044, 5
        %v3870 = vsel %vm2218, %v3868, %v3869
        %v3871 = vrot.slane %v3795, 5
        %v3872 = vrot.slane %v3871, 4
        %v3873 = vrot.slane %v3046, 5
        %v3874 = vsel %vm2218, %v3872, %v3873
        %v3875 = vrot.slane %v3873, 4
        %v3876 = vrot.slane %v3047, 5
        %v3877 = vsel %vm2218, %v3875, %v3876
        %v3878 = vrot.slane %v3796, 5
        %v3879 = vrot.slane %v3878, 4
        %v3880 = vrot.slane %v3049, 5
        %v3881 = vsel %vm2218, %v3879, %v3880
        %v3882 = vrot.slane %v3880, 4
        %v3883 = vrot.slane %v3050, 5
        %v3884 = vsel %vm2218, %v3882, %v3883
        %v3885 = vrot.slane %v3797, 5
        %v3886 = vrot.slane %v3885, 4
        %v3887 = vrot.slane %v3052, 5
        %v3888 = vsel %vm2218, %v3886, %v3887
        %v3889 = vrot.slane %v3887, 4
        %v3890 = vrot.slane %v3053, 5
        %v3891 = vsel %vm2218, %v3889, %v3890
        %v3892 = vrot.slane %v3798, 5
        %v3893 = vrot.slane %v3892, 4
        %v3894 = vrot.slane %v3055, 5
        %v3895 = vsel %vm2218, %v3893, %v3894
        %v3896 = vrot.slane %v3894, 4
        %v3897 = vrot.slane %v3056, 5
        %v3898 = vsel %vm2218, %v3896, %v3897
        %v3899 = vrot.slane %v3799, 5
        %v3900 = vrot.slane %v3899, 4
        %v3901 = vrot.slane %v3058, 5
        %v3902 = vsel %vm2218, %v3900, %v3901
        %v3903 = vrot.slane %v3901, 4
        %v3904 = vrot.slane %v3059, 5
        %v3905 = vsel %vm2218, %v3903, %v3904
        %v3906 = vrot.slane %v3800, 5
        %v3907 = vrot.slane %v3906, 4
        %v3908 = vrot.slane %v3061, 5
        %v3909 = vsel %vm2218, %v3907, %v3908
        %v3910 = vrot.slane %v3908, 4
        %v3911 = vrot.slane %v3062, 5
        %v3912 = vsel %vm2218, %v3910, %v3911
        %v3913 = vrot.slane %v3801, 5
        %v3914 = vrot.slane %v3913, 4
        %v3915 = vrot.slane %v3064, 5
        %v3916 = vsel %vm2218, %v3914, %v3915
        %v3917 = vrot.slane %v3915, 4
        %v3918 = vrot.slane %v3065, 5
        %v3919 = vsel %vm2218, %v3917, %v3918
        %v3920 = vrot.slane %v3802, 5
        %v3921 = vrot.slane %v3920, 4
        %v3922 = vrot.slane %v3067, 5
        %v3923 = vsel %vm2218, %v3921, %v3922
        %v3924 = vrot.slane %v3922, 4
        %v3925 = vrot.slane %v3068, 5
        %v3926 = vsel %vm2218, %v3924, %v3925
        %v3927 = vrot.slane %v3803, 5
        %v3928 = vrot.slane %v3927, 4
        %v3929 = vrot.slane %v3070, 5
        %v3930 = vsel %vm2218, %v3928, %v3929
        %v3931 = vrot.slane %v3929, 4
        %v3932 = vrot.slane %v3071, 5
        %v3933 = vsel %vm2218, %v3931, %v3932
        %v3934 = vrot.slane %v3804, 5
        %v3935 = vrot.slane %v3934, 4
        %v3936 = vrot.slane %v3073, 5
        %v3937 = vsel %vm2218, %v3935, %v3936
        %v3938 = vrot.slane %v3936, 4
        %v3939 = vrot.slane %v3074, 5
        %v3940 = vsel %vm2218, %v3938, %v3939
        %v3941 = vrot.slane %v3805, 5
        %v3942 = vrot.slane %v3941, 4
        %v3943 = vrot.slane %v3076, 5
        %v3944 = vsel %vm2218, %v3942, %v3943
        %v3945 = vrot.slane %v3943, 4
        %v3946 = vrot.slane %v3077, 5
        %v3947 = vsel %vm2218, %v3945, %v3946
        %v3948 = vrot.slane %v3806, 5
        %v3949 = vrot.slane %v3948, 4
        %v3950 = vrot.slane %v3079, 5
        %v3951 = vsel %vm2218, %v3949, %v3950
        %v3952 = vrot.slane %v3950, 4
        %v3953 = vrot.slane %v3080, 5
        %v3954 = vsel %vm2218, %v3952, %v3953
        %v3955 = vrot.slane %v3807, 5
        %v3956 = vrot.slane %v3955, 4
        %v3957 = vrot.slane %v3082, 5
        %v3958 = vsel %vm2218, %v3956, %v3957
        %v3959 = vrot.slane %v3957, 4
        %v3960 = vrot.slane %v3083, 5
        %v3961 = vsel %vm2218, %v3959, %v3960
        %v3962 = vrot.slane %v3808, 5
        %v3963 = vrot.slane %v3962, 4
        %v3964 = vrot.slane %v3085, 5
        %v3965 = vsel %vm2218, %v3963, %v3964
        %v3966 = vrot.slane %v3964, 4
        %v3967 = vrot.slane %v3086, 5
        %v3968 = vsel %vm2218, %v3966, %v3967
        %s3969 = scalar_lea.vmem [#allocation9], 320
        %v3970 = vld [vmem:[%s3969] sm:$0xf]
        %v3971 = vld [vmem:[%s3969 + $0x4] sm:$0xf]
        %v3972 = vld [vmem:[%s3969 + $0x8] sm:$0xf]
        %v3973 = vld [vmem:[%s3969 + $0xc] sm:$0xf]
        %v3974 = vld [vmem:[%s3969 + $0x10] sm:$0xf]
        %v3975 = vld [vmem:[%s3969 + $0x14] sm:$0xf]
        %v3976 = vld [vmem:[%s3969 + $0x18] sm:$0xf]
        %v3977 = vld [vmem:[%s3969 + $0x1c] sm:$0xf]
        %v3978 = vld [vmem:[%s3969 + $0x20] sm:$0xf]
        %v3979 = vld [vmem:[%s3969 + $0x24] sm:$0xf]
        %v3980 = vld [vmem:[%s3969 + $0x28] sm:$0xf]
        %v3981 = vld [vmem:[%s3969 + $0x2c] sm:$0xf]
        %v3982 = vld [vmem:[%s3969 + $0x30] sm:$0xf]
        %v3983 = vld [vmem:[%s3969 + $0x34] sm:$0xf]
        %v3984 = vld [vmem:[%s3969 + $0x38] sm:$0xf]
        %v3985 = vld [vmem:[%s3969 + $0x3c] sm:$0xf]
        %v3986 = vunpack.c.l.b16 %v3860
        %v3987 = vunpack.c.l.b16 %v3863
        %v3988 = vunpack.c.l.b16 %v3867
        %v3989 = vunpack.c.l.b16 %v3870
        %v3990 = vunpack.c.l.b16 %v3874
        %v3991 = vunpack.c.l.b16 %v3877
        %v3992 = vunpack.c.l.b16 %v3881
        %v3993 = vunpack.c.l.b16 %v3884
        %v3994 = vunpack.c.l.b16 %v3888
        %v3995 = vunpack.c.l.b16 %v3891
        %v3996 = vunpack.c.l.b16 %v3895
        %v3997 = vunpack.c.l.b16 %v3898
        %v3998 = vunpack.c.l.b16 %v3902
        %v3999 = vunpack.c.l.b16 %v3905
        %v4000 = vunpack.c.l.b16 %v3909
        %v4001 = vunpack.c.l.b16 %v3912
        %v4002 = vunpack.c.l.b16 %v3916
        %v4003 = vunpack.c.l.b16 %v3919
        %v4004 = vunpack.c.l.b16 %v3923
        %v4005 = vunpack.c.l.b16 %v3926
        %v4006 = vunpack.c.l.b16 %v3930
        %v4007 = vunpack.c.l.b16 %v3933
        %v4008 = vunpack.c.l.b16 %v3937
        %v4009 = vunpack.c.l.b16 %v3940
        %v4010 = vunpack.c.l.b16 %v3944
        %v4011 = vunpack.c.l.b16 %v3947
        %v4012 = vunpack.c.l.b16 %v3951
        %v4013 = vunpack.c.l.b16 %v3954
        %v4014 = vunpack.c.l.b16 %v3958
        %v4015 = vunpack.c.l.b16 %v3961
        %v4016 = vunpack.c.l.b16 %v3965
        %v4017 = vunpack.c.l.b16 %v3968
        %v4018 = vpack.c.b16 %v3987, %v3986
        %v4019 = vpack.c.b16 %v3989, %v3988
        %v4020 = vpack.c.b16 %v3991, %v3990
        %v4021 = vpack.c.b16 %v3993, %v3992
        %v4022 = vpack.c.b16 %v3995, %v3994
        %v4023 = vpack.c.b16 %v3997, %v3996
        %v4024 = vpack.c.b16 %v3999, %v3998
        %v4025 = vpack.c.b16 %v4001, %v4000
        %v4026 = vpack.c.b16 %v4003, %v4002
        %v4027 = vpack.c.b16 %v4005, %v4004
        %v4028 = vpack.c.b16 %v4007, %v4006
        %v4029 = vpack.c.b16 %v4009, %v4008
        %v4030 = vpack.c.b16 %v4011, %v4010
        %v4031 = vpack.c.b16 %v4013, %v4012
        %v4032 = vpack.c.b16 %v4015, %v4014
        %v4033 = vpack.c.b16 %v4017, %v4016
        %v4066 = vunpack.c.l.b16 %v3970
        %v4067 = vunpack.c.l.b16 %v3971
        %v4068 = vunpack.c.l.b16 %v3972
        %v4069 = vunpack.c.l.b16 %v3973
        %v4070 = vunpack.c.l.b16 %v3974
        %v4071 = vunpack.c.l.b16 %v3975
        %v4072 = vunpack.c.l.b16 %v3976
        %v4073 = vunpack.c.l.b16 %v3977
        %v4074 = vunpack.c.l.b16 %v3978
        %v4075 = vunpack.c.l.b16 %v3979
        %v4076 = vunpack.c.l.b16 %v3980
        %v4077 = vunpack.c.l.b16 %v3981
        %v4078 = vunpack.c.l.b16 %v3982
        %v4079 = vunpack.c.l.b16 %v3983
        %v4080 = vunpack.c.l.b16 %v3984
        %v4081 = vunpack.c.l.b16 %v3985
        %v4082 = vpack.c.b16 %v4067, %v4066
        %v4083 = vpack.c.b16 %v4069, %v4068
        %v4084 = vpack.c.b16 %v4071, %v4070
        %v4085 = vpack.c.b16 %v4073, %v4072
        %v4086 = vpack.c.b16 %v4075, %v4074
        %v4087 = vpack.c.b16 %v4077, %v4076
        %v4088 = vpack.c.b16 %v4079, %v4078
        %v4089 = vpack.c.b16 %v4081, %v4080
        %4098 = vmatprep.subr.bf16.mxu0 0
        %4099 = vmatpush1.bf16.msra.mxu0 %v4082
        %4100 = vmatprep.subr.bf16.mxu0 0
        %4101 = vmatpush1.bf16.msra.mxu0 %v4083
        %4102 = vmatprep.subr.bf16.mxu0 0
        %4103 = vmatpush1.bf16.msra.mxu0 %v4084
        %4104 = vmatprep.subr.bf16.mxu0 0
        %4105 = vmatpush1.bf16.msra.mxu0 %v4085
        %4106 = vmatprep.subr.bf16.mxu0 0
        %4107 = vmatpush1.bf16.msra.mxu0 %v4086
        %4108 = vmatprep.subr.bf16.mxu0 0
        %4109 = vmatpush1.bf16.msra.mxu0 %v4087
        %4110 = vmatprep.subr.bf16.mxu0 0
        %4111 = vmatpush1.bf16.msra.mxu0 %v4088
        %4112 = vmatprep.subr.bf16.mxu0 0
        %4113 = vmatpush1.bf16.msra.mxu0 %v4089
        %4114 = vmatprep.subr.bf16.mxu0 0
        %4115 = vmatpush1.bf16.msra.mxu0 0
        %4116 = vmatprep.subr.bf16.mxu0 0
        %4117 = vmatpush1.bf16.msra.mxu0 0
        %4118 = vmatprep.subr.bf16.mxu0 0
        %4119 = vmatpush1.bf16.msra.mxu0 0
        %4120 = vmatprep.subr.bf16.mxu0 0
        %4121 = vmatpush1.bf16.msra.mxu0 0
        %4122 = vmatprep.subr.bf16.mxu0 0
        %4123 = vmatpush1.bf16.msra.mxu0 0
        %4124 = vmatprep.subr.bf16.mxu0 0
        %4125 = vmatpush1.bf16.msra.mxu0 0
        %4126 = vmatprep.subr.bf16.mxu0 0
        %4127 = vmatpush1.bf16.msra.mxu0 0
        %4128 = vmatprep.subr.bf16.mxu0 0
        %4129 = vmatpush1.bf16.msra.mxu0 0
        %4130 = vmatprep.mubr.bf16.mxu0 0
        %4131 = vmatmul.mubr.bf16.gmra.mrb[0].mxu0 %v4018
        %v4132 = vpop.f32.mrb[0].mxu0
        %v4133 = vadd.f32 0.0, %v4132
        %v4134 = vpop.f32.mrb[0].mxu0
        %v4135 = vpop.f32.mrb[0].mxu0
        %v4136 = vadd.f32 0.0, %v4135
        %v4137 = vpop.f32.mrb[0].mxu0
        %4138 = vmatprep.mubr.bf16.mxu0 0
        %4139 = vmatmul.mubr.bf16.gmra.mrb[0].mxu0 %v4019
        %v4140 = vpop.f32.mrb[0].mxu0
        %v4141 = vadd.f32 0.0, %v4140
        %v4142 = vpop.f32.mrb[0].mxu0
        %v4143 = vpop.f32.mrb[0].mxu0
        %v4144 = vadd.f32 0.0, %v4143
        %v4145 = vpop.f32.mrb[0].mxu0
        %4146 = vmatprep.mubr.bf16.mxu0 0
        %4147 = vmatmul.mubr.bf16.gmra.mrb[0].mxu0 %v4020
        %v4148 = vpop.f32.mrb[0].mxu0
        %v4149 = vadd.f32 0.0, %v4148
        %v4150 = vpop.f32.mrb[0].mxu0
        %v4151 = vpop.f32.mrb[0].mxu0
        %v4152 = vadd.f32 0.0, %v4151
        %v4153 = vpop.f32.mrb[0].mxu0
        %4154 = vmatprep.mubr.bf16.mxu0 0
        %4155 = vmatmul.mubr.bf16.gmra.mrb[0].mxu0 %v4021
        %v4156 = vpop.f32.mrb[0].mxu0
        %v4157 = vadd.f32 0.0, %v4156
        %v4158 = vpop.f32.mrb[0].mxu0
        %v4159 = vpop.f32.mrb[0].mxu0
        %v4160 = vadd.f32 0.0, %v4159
        %v4161 = vpop.f32.mrb[0].mxu0
        %4162 = vmatprep.mubr.bf16.mxu0 0
        %4163 = vmatmul.mubr.bf16.gmra.mrb[0].mxu0 %v4022
        %v4164 = vpop.f32.mrb[0].mxu0
        %v4165 = vadd.f32 0.0, %v4164
        %v4166 = vpop.f32.mrb[0].mxu0
        %v4167 = vpop.f32.mrb[0].mxu0
        %v4168 = vadd.f32 0.0, %v4167
        %v4169 = vpop.f32.mrb[0].mxu0
        %4170 = vmatprep.mubr.bf16.mxu0 0
        %4171 = vmatmul.mubr.bf16.gmra.mrb[0].mxu0 %v4023
        %v4172 = vpop.f32.mrb[0].mxu0
        %v4173 = vadd.f32 0.0, %v4172
        %v4174 = vpop.f32.mrb[0].mxu0
        %v4175 = vpop.f32.mrb[0].mxu0
        %v4176 = vadd.f32 0.0, %v4175
        %v4177 = vpop.f32.mrb[0].mxu0
        %4178 = vmatprep.mubr.bf16.mxu0 0
        %4179 = vmatmul.mubr.bf16.gmra.mrb[0].mxu0 %v4024
        %v4180 = vpop.f32.mrb[0].mxu0
        %v4181 = vadd.f32 0.0, %v4180
        %v4182 = vpop.f32.mrb[0].mxu0
        %v4183 = vpop.f32.mrb[0].mxu0
        %v4184 = vadd.f32 0.0, %v4183
        %v4185 = vpop.f32.mrb[0].mxu0
        %4186 = vmatprep.mubr.bf16.mxu0 0
        %4187 = vmatmul.mubr.bf16.gmra.mrb[0].mxu0 %v4025
        %v4188 = vpop.f32.mrb[0].mxu0
        %v4189 = vadd.f32 0.0, %v4188
        %v4190 = vpop.f32.mrb[0].mxu0
        %v4191 = vpop.f32.mrb[0].mxu0
        %v4192 = vadd.f32 0.0, %v4191
        %v4193 = vpop.f32.mrb[0].mxu0
        %4194 = vmatprep.mubr.bf16.mxu0 0
        %4195 = vmatmul.mubr.bf16.gmra.mrb[0].mxu0 %v4026
        %v4196 = vpop.f32.mrb[0].mxu0
        %v4197 = vadd.f32 0.0, %v4196
        %v4198 = vpop.f32.mrb[0].mxu0
        %v4199 = vpop.f32.mrb[0].mxu0
        %v4200 = vadd.f32 0.0, %v4199
        %v4201 = vpop.f32.mrb[0].mxu0
        %4202 = vmatprep.mubr.bf16.mxu0 0
        %4203 = vmatmul.mubr.bf16.gmra.mrb[0].mxu0 %v4027
        %v4204 = vpop.f32.mrb[0].mxu0
        %v4205 = vadd.f32 0.0, %v4204
        %v4206 = vpop.f32.mrb[0].mxu0
        %v4207 = vpop.f32.mrb[0].mxu0
        %v4208 = vadd.f32 0.0, %v4207
        %v4209 = vpop.f32.mrb[0].mxu0
        %4210 = vmatprep.mubr.bf16.mxu0 0
        %4211 = vmatmul.mubr.bf16.gmra.mrb[0].mxu0 %v4028
        %v4212 = vpop.f32.mrb[0].mxu0
        %v4213 = vadd.f32 0.0, %v4212
        %v4214 = vpop.f32.mrb[0].mxu0
        %v4215 = vpop.f32.mrb[0].mxu0
        %v4216 = vadd.f32 0.0, %v4215
        %v4217 = vpop.f32.mrb[0].mxu0
        %4218 = vmatprep.mubr.bf16.mxu0 0
        %4219 = vmatmul.mubr.bf16.gmra.mrb[0].mxu0 %v4029
        %v4220 = vpop.f32.mrb[0].mxu0
        %v4221 = vadd.f32 0.0, %v4220
        %v4222 = vpop.f32.mrb[0].mxu0
        %v4223 = vpop.f32.mrb[0].mxu0
        %v4224 = vadd.f32 0.0, %v4223
        %v4225 = vpop.f32.mrb[0].mxu0
        %4226 = vmatprep.mubr.bf16.mxu0 0
        %4227 = vmatmul.mubr.bf16.gmra.mrb[0].mxu0 %v4030
        %v4228 = vpop.f32.mrb[0].mxu0
        %v4229 = vadd.f32 0.0, %v4228
        %v4230 = vpop.f32.mrb[0].mxu0
        %v4231 = vpop.f32.mrb[0].mxu0
        %v4232 = vadd.f32 0.0, %v4231
        %v4233 = vpop.f32.mrb[0].mxu0
        %4234 = vmatprep.mubr.bf16.mxu0 0
        %4235 = vmatmul.mubr.bf16.gmra.mrb[0].mxu0 %v4031
        %v4236 = vpop.f32.mrb[0].mxu0
        %v4237 = vadd.f32 0.0, %v4236
        %v4238 = vpop.f32.mrb[0].mxu0
        %v4239 = vpop.f32.mrb[0].mxu0
        %v4240 = vadd.f32 0.0, %v4239
        %v4241 = vpop.f32.mrb[0].mxu0
        %4242 = vmatprep.mubr.bf16.mxu0 0
        %4243 = vmatmul.mubr.bf16.gmra.mrb[0].mxu0 %v4032
        %v4244 = vpop.f32.mrb[0].mxu0
        %v4245 = vadd.f32 0.0, %v4244
        %v4246 = vpop.f32.mrb[0].mxu0
        %v4247 = vpop.f32.mrb[0].mxu0
        %v4248 = vadd.f32 0.0, %v4247
        %v4249 = vpop.f32.mrb[0].mxu0
        %4250 = vmatprep.mubr.bf16.mxu0 0
        %4251 = vmatmul.mubr.bf16.gmra.mrb[0].mxu0 %v4033
        %v4252 = vpop.f32.mrb[0].mxu0
        %v4253 = vadd.f32 0.0, %v4252
        %v4254 = vpop.f32.mrb[0].mxu0
        %v4255 = vpop.f32.mrb[0].mxu0
        %v4256 = vadd.f32 0.0, %v4255
        %v4257 = vpop.f32.mrb[0].mxu0
        %4258 = vdwg.mxu0
        %v4259 = vadd.f32 %v3761, %v4133
        %v4260 = vadd.f32 %v3762, %v4136
        %v4261 = vadd.f32 %v3763, %v4141
        %v4262 = vadd.f32 %v3764, %v4144
        %v4263 = vadd.f32 %v3765, %v4149
        %v4264 = vadd.f32 %v3766, %v4152
        %v4265 = vadd.f32 %v3767, %v4157
        %v4266 = vadd.f32 %v3768, %v4160
        %v4267 = vadd.f32 %v3769, %v4165
        %v4268 = vadd.f32 %v3770, %v4168
        %v4269 = vadd.f32 %v3771, %v4173
        %v4270 = vadd.f32 %v3772, %v4176
        %v4271 = vadd.f32 %v3773, %v4181
        %v4272 = vadd.f32 %v3774, %v4184
        %v4273 = vadd.f32 %v3775, %v4189
        %v4274 = vadd.f32 %v3776, %v4192
        %v4275 = vadd.f32 %v3777, %v4197
        %v4276 = vadd.f32 %v3778, %v4200
        %v4277 = vadd.f32 %v3779, %v4205
        %v4278 = vadd.f32 %v3780, %v4208
        %v4279 = vadd.f32 %v3781, %v4213
        %v4280 = vadd.f32 %v3782, %v4216
        %v4281 = vadd.f32 %v3783, %v4221
        %v4282 = vadd.f32 %v3784, %v4224
        %v4283 = vadd.f32 %v3785, %v4229
        %v4284 = vadd.f32 %v3786, %v4232
        %v4285 = vadd.f32 %v3787, %v4237
        %v4286 = vadd.f32 %v3788, %v4240
        %v4287 = vadd.f32 %v3789, %v4245
        %v4288 = vadd.f32 %v3790, %v4248
        %v4289 = vadd.f32 %v3791, %v4253
        %v4290 = vadd.f32 %v3792, %v4256
        %s4291 = scalar_lea.vmem [#allocation2], 24
        %v4292 = vld [vmem:[%s4291] sm:$0xf]
        %v4293 = vld [vmem:[%s4291 + $0x4] sm:$0xf]
        %v4294 = vld [vmem:[%s4291 + $0xc] sm:$0xf]
        %v4295 = vld [vmem:[%s4291 + $0x10] sm:$0xf]
        %v4296 = vld [vmem:[%s4291 + $0x18] sm:$0xf]
        %v4297 = vld [vmem:[%s4291 + $0x1c] sm:$0xf]
        %v4298 = vld [vmem:[%s4291 + $0x24] sm:$0xf]
        %v4299 = vld [vmem:[%s4291 + $0x28] sm:$0xf]
        %v4300 = vld [vmem:[%s4291 + $0x30] sm:$0xf]
        %v4301 = vld [vmem:[%s4291 + $0x34] sm:$0xf]
        %v4302 = vld [vmem:[%s4291 + $0x3c] sm:$0xf]
        %v4303 = vld [vmem:[%s4291 + $0x40] sm:$0xf]
        %v4304 = vld [vmem:[%s4291 + $0x48] sm:$0xf]
        %v4305 = vld [vmem:[%s4291 + $0x4c] sm:$0xf]
        %v4306 = vld [vmem:[%s4291 + $0x54] sm:$0xf]
        %v4307 = vld [vmem:[%s4291 + $0x58] sm:$0xf]
        %v4308 = vld [vmem:[%s4291 + $0x60] sm:$0xf]
        %v4309 = vld [vmem:[%s4291 + $0x64] sm:$0xf]
        %v4310 = vld [vmem:[%s4291 + $0x6c] sm:$0xf]
        %v4311 = vld [vmem:[%s4291 + $0x70] sm:$0xf]
        %v4312 = vld [vmem:[%s4291 + $0x78] sm:$0xf]
        %v4313 = vld [vmem:[%s4291 + $0x7c] sm:$0xf]
        %v4314 = vld [vmem:[%s4291 + $0x84] sm:$0xf]
        %v4315 = vld [vmem:[%s4291 + $0x88] sm:$0xf]
        %v4316 = vld [vmem:[%s4291 + $0x90] sm:$0xf]
        %v4317 = vld [vmem:[%s4291 + $0x94] sm:$0xf]
        %v4318 = vld [vmem:[%s4291 + $0x9c] sm:$0xf]
        %v4319 = vld [vmem:[%s4291 + $0xa0] sm:$0xf]
        %v4320 = vld [vmem:[%s4291 + $0xa8] sm:$0xf]
        %v4321 = vld [vmem:[%s4291 + $0xac] sm:$0xf]
        %v4322 = vld [vmem:[%s4291 + $0xb4] sm:$0xf]
        %v4323 = vld [vmem:[%s4291 + $0xb8] sm:$0xf]
        %s4324 = scalar_lea.vmem [#allocation9], 384
        %v4325 = vld [vmem:[%s4324] sm:$0xf]
        %v4326 = vld [vmem:[%s4324 + $0x4] sm:$0xf]
        %v4327 = vld [vmem:[%s4324 + $0x8] sm:$0xf]
        %v4328 = vld [vmem:[%s4324 + $0xc] sm:$0xf]
        %v4329 = vld [vmem:[%s4324 + $0x10] sm:$0xf]
        %v4330 = vld [vmem:[%s4324 + $0x14] sm:$0xf]
        %v4331 = vld [vmem:[%s4324 + $0x18] sm:$0xf]
        %v4332 = vld [vmem:[%s4324 + $0x1c] sm:$0xf]
        %v4333 = vld [vmem:[%s4324 + $0x20] sm:$0xf]
        %v4334 = vld [vmem:[%s4324 + $0x24] sm:$0xf]
        %v4335 = vld [vmem:[%s4324 + $0x28] sm:$0xf]
        %v4336 = vld [vmem:[%s4324 + $0x2c] sm:$0xf]
        %v4337 = vld [vmem:[%s4324 + $0x30] sm:$0xf]
        %v4338 = vld [vmem:[%s4324 + $0x34] sm:$0xf]
        %v4339 = vld [vmem:[%s4324 + $0x38] sm:$0xf]
        %v4340 = vld [vmem:[%s4324 + $0x3c] sm:$0xf]
        %v4373 = vunpack.c.l.b16 %v4292
        %v4374 = vunpack.c.l.b16 %v4293
        %v4375 = vunpack.c.l.b16 %v4294
        %v4376 = vunpack.c.l.b16 %v4295
        %v4377 = vunpack.c.l.b16 %v4296
        %v4378 = vunpack.c.l.b16 %v4297
        %v4379 = vunpack.c.l.b16 %v4298
        %v4380 = vunpack.c.l.b16 %v4299
        %v4381 = vunpack.c.l.b16 %v4300
        %v4382 = vunpack.c.l.b16 %v4301
        %v4383 = vunpack.c.l.b16 %v4302
        %v4384 = vunpack.c.l.b16 %v4303
        %v4385 = vunpack.c.l.b16 %v4304
        %v4386 = vunpack.c.l.b16 %v4305
        %v4387 = vunpack.c.l.b16 %v4306
        %v4388 = vunpack.c.l.b16 %v4307
        %v4389 = vunpack.c.l.b16 %v4308
        %v4390 = vunpack.c.l.b16 %v4309
        %v4391 = vunpack.c.l.b16 %v4310
        %v4392 = vunpack.c.l.b16 %v4311
        %v4393 = vunpack.c.l.b16 %v4312
        %v4394 = vunpack.c.l.b16 %v4313
        %v4395 = vunpack.c.l.b16 %v4314
        %v4396 = vunpack.c.l.b16 %v4315
        %v4397 = vunpack.c.l.b16 %v4316
        %v4398 = vunpack.c.l.b16 %v4317
        %v4399 = vunpack.c.l.b16 %v4318
        %v4400 = vunpack.c.l.b16 %v4319
        %v4401 = vunpack.c.l.b16 %v4320
        %v4402 = vunpack.c.l.b16 %v4321
        %v4403 = vunpack.c.l.b16 %v4322
        %v4404 = vunpack.c.l.b16 %v4323
        %v4405 = vpack.c.b16 %v4374, %v4373
        %v4406 = vpack.c.b16 %v4376, %v4375
        %v4407 = vpack.c.b16 %v4378, %v4377
        %v4408 = vpack.c.b16 %v4380, %v4379
        %v4409 = vpack.c.b16 %v4382, %v4381
        %v4410 = vpack.c.b16 %v4384, %v4383
        %v4411 = vpack.c.b16 %v4386, %v4385
        %v4412 = vpack.c.b16 %v4388, %v4387
        %v4413 = vpack.c.b16 %v4390, %v4389
        %v4414 = vpack.c.b16 %v4392, %v4391
        %v4415 = vpack.c.b16 %v4394, %v4393
        %v4416 = vpack.c.b16 %v4396, %v4395
        %v4417 = vpack.c.b16 %v4398, %v4397
        %v4418 = vpack.c.b16 %v4400, %v4399
        %v4419 = vpack.c.b16 %v4402, %v4401
        %v4420 = vpack.c.b16 %v4404, %v4403
        %v4453 = vunpack.c.l.b16 %v4325
        %v4454 = vunpack.c.l.b16 %v4326
        %v4455 = vunpack.c.l.b16 %v4327
        %v4456 = vunpack.c.l.b16 %v4328
        %v4457 = vunpack.c.l.b16 %v4329
        %v4458 = vunpack.c.l.b16 %v4330
        %v4459 = vunpack.c.l.b16 %v4331
        %v4460 = vunpack.c.l.b16 %v4332
        %v4461 = vunpack.c.l.b16 %v4333
        %v4462 = vunpack.c.l.b16 %v4334
        %v4463 = vunpack.c.l.b16 %v4335
        %v4464 = vunpack.c.l.b16 %v4336
        %v4465 = vunpack.c.l.b16 %v4337
        %v4466 = vunpack.c.l.b16 %v4338
        %v4467 = vunpack.c.l.b16 %v4339
        %v4468 = vunpack.c.l.b16 %v4340
        %v4469 = vpack.c.b16 %v4454, %v4453
        %v4470 = vpack.c.b16 %v4456, %v4455
        %v4471 = vpack.c.b16 %v4458, %v4457
        %v4472 = vpack.c.b16 %v4460, %v4459
        %v4473 = vpack.c.b16 %v4462, %v4461
        %v4474 = vpack.c.b16 %v4464, %v4463
        %v4475 = vpack.c.b16 %v4466, %v4465
        %v4476 = vpack.c.b16 %v4468, %v4467
        %4485 = vmatprep.subr.bf16.mxu0 0
        %4486 = vmatpush1.bf16.msra.mxu0 %v4469
        %4487 = vmatprep.subr.bf16.mxu0 0
        %4488 = vmatpush1.bf16.msra.mxu0 %v4470
        %4489 = vmatprep.subr.bf16.mxu0 0
        %4490 = vmatpush1.bf16.msra.mxu0 %v4471
        %4491 = vmatprep.subr.bf16.mxu0 0
        %4492 = vmatpush1.bf16.msra.mxu0 %v4472
        %4493 = vmatprep.subr.bf16.mxu0 0
        %4494 = vmatpush1.bf16.msra.mxu0 %v4473
        %4495 = vmatprep.subr.bf16.mxu0 0
        %4496 = vmatpush1.bf16.msra.mxu0 %v4474
        %4497 = vmatprep.subr.bf16.mxu0 0
        %4498 = vmatpush1.bf16.msra.mxu0 %v4475
        %4499 = vmatprep.subr.bf16.mxu0 0
        %4500 = vmatpush1.bf16.msra.mxu0 %v4476
        %4501 = vmatprep.subr.bf16.mxu0 0
        %4502 = vmatpush1.bf16.msra.mxu0 0
        %4503 = vmatprep.subr.bf16.mxu0 0
        %4504 = vmatpush1.bf16.msra.mxu0 0
        %4505 = vmatprep.subr.bf16.mxu0 0
        %4506 = vmatpush1.bf16.msra.mxu0 0
        %4507 = vmatprep.subr.bf16.mxu0 0
        %4508 = vmatpush1.bf16.msra.mxu0 0
        %4509 = vmatprep.subr.bf16.mxu0 0
        %4510 = vmatpush1.bf16.msra.mxu0 0
        %4511 = vmatprep.subr.bf16.mxu0 0
        %4512 = vmatpush1.bf16.msra.mxu0 0
        %4513 = vmatprep.subr.bf16.mxu0 0
        %4514 = vmatpush1.bf16.msra.mxu0 0
        %4515 = vmatprep.subr.bf16.mxu0 0
        %4516 = vmatpush1.bf16.msra.mxu0 0
        %4517 = vmatprep.mubr.bf16.mxu0 0
        %4518 = vmatmul.mubr.bf16.gmra.mrb[0].mxu0 %v4405
        %v4519 = vpop.f32.mrb[0].mxu0
        %v4520 = vadd.f32 0.0, %v4519
        %v4521 = vpop.f32.mrb[0].mxu0
        %v4522 = vpop.f32.mrb[0].mxu0
        %v4523 = vadd.f32 0.0, %v4522
        %v4524 = vpop.f32.mrb[0].mxu0
        %4525 = vmatprep.mubr.bf16.mxu0 0
        %4526 = vmatmul.mubr.bf16.gmra.mrb[0].mxu0 %v4406
        %v4527 = vpop.f32.mrb[0].mxu0
        %v4528 = vadd.f32 0.0, %v4527
        %v4529 = vpop.f32.mrb[0].mxu0
        %v4530 = vpop.f32.mrb[0].mxu0
        %v4531 = vadd.f32 0.0, %v4530
        %v4532 = vpop.f32.mrb[0].mxu0
        %4533 = vmatprep.mubr.bf16.mxu0 0
        %4534 = vmatmul.mubr.bf16.gmra.mrb[0].mxu0 %v4407
        %v4535 = vpop.f32.mrb[0].mxu0
        %v4536 = vadd.f32 0.0, %v4535
        %v4537 = vpop.f32.mrb[0].mxu0
        %v4538 = vpop.f32.mrb[0].mxu0
        %v4539 = vadd.f32 0.0, %v4538
        %v4540 = vpop.f32.mrb[0].mxu0
        %4541 = vmatprep.mubr.bf16.mxu0 0
        %4542 = vmatmul.mubr.bf16.gmra.mrb[0].mxu0 %v4408
        %v4543 = vpop.f32.mrb[0].mxu0
        %v4544 = vadd.f32 0.0, %v4543
        %v4545 = vpop.f32.mrb[0].mxu0
        %v4546 = vpop.f32.mrb[0].mxu0
        %v4547 = vadd.f32 0.0, %v4546
        %v4548 = vpop.f32.mrb[0].mxu0
        %4549 = vmatprep.mubr.bf16.mxu0 0
        %4550 = vmatmul.mubr.bf16.gmra.mrb[0].mxu0 %v4409
        %v4551 = vpop.f32.mrb[0].mxu0
        %v4552 = vadd.f32 0.0, %v4551
        %v4553 = vpop.f32.mrb[0].mxu0
        %v4554 = vpop.f32.mrb[0].mxu0
        %v4555 = vadd.f32 0.0, %v4554
        %v4556 = vpop.f32.mrb[0].mxu0
        %4557 = vmatprep.mubr.bf16.mxu0 0
        %4558 = vmatmul.mubr.bf16.gmra.mrb[0].mxu0 %v4410
        %v4559 = vpop.f32.mrb[0].mxu0
        %v4560 = vadd.f32 0.0, %v4559
        %v4561 = vpop.f32.mrb[0].mxu0
        %v4562 = vpop.f32.mrb[0].mxu0
        %v4563 = vadd.f32 0.0, %v4562
        %v4564 = vpop.f32.mrb[0].mxu0
        %4565 = vmatprep.mubr.bf16.mxu0 0
        %4566 = vmatmul.mubr.bf16.gmra.mrb[0].mxu0 %v4411
        %v4567 = vpop.f32.mrb[0].mxu0
        %v4568 = vadd.f32 0.0, %v4567
        %v4569 = vpop.f32.mrb[0].mxu0
        %v4570 = vpop.f32.mrb[0].mxu0
        %v4571 = vadd.f32 0.0, %v4570
        %v4572 = vpop.f32.mrb[0].mxu0
        %4573 = vmatprep.mubr.bf16.mxu0 0
        %4574 = vmatmul.mubr.bf16.gmra.mrb[0].mxu0 %v4412
        %v4575 = vpop.f32.mrb[0].mxu0
        %v4576 = vadd.f32 0.0, %v4575
        %v4577 = vpop.f32.mrb[0].mxu0
        %v4578 = vpop.f32.mrb[0].mxu0
        %v4579 = vadd.f32 0.0, %v4578
        %v4580 = vpop.f32.mrb[0].mxu0
        %4581 = vmatprep.mubr.bf16.mxu0 0
        %4582 = vmatmul.mubr.bf16.gmra.mrb[0].mxu0 %v4413
        %v4583 = vpop.f32.mrb[0].mxu0
        %v4584 = vadd.f32 0.0, %v4583
        %v4585 = vpop.f32.mrb[0].mxu0
        %v4586 = vpop.f32.mrb[0].mxu0
        %v4587 = vadd.f32 0.0, %v4586
        %v4588 = vpop.f32.mrb[0].mxu0
        %4589 = vmatprep.mubr.bf16.mxu0 0
        %4590 = vmatmul.mubr.bf16.gmra.mrb[0].mxu0 %v4414
        %v4591 = vpop.f32.mrb[0].mxu0
        %v4592 = vadd.f32 0.0, %v4591
        %v4593 = vpop.f32.mrb[0].mxu0
        %v4594 = vpop.f32.mrb[0].mxu0
        %v4595 = vadd.f32 0.0, %v4594
        %v4596 = vpop.f32.mrb[0].mxu0
        %4597 = vmatprep.mubr.bf16.mxu0 0
        %4598 = vmatmul.mubr.bf16.gmra.mrb[0].mxu0 %v4415
        %v4599 = vpop.f32.mrb[0].mxu0
        %v4600 = vadd.f32 0.0, %v4599
        %v4601 = vpop.f32.mrb[0].mxu0
        %v4602 = vpop.f32.mrb[0].mxu0
        %v4603 = vadd.f32 0.0, %v4602
        %v4604 = vpop.f32.mrb[0].mxu0
        %4605 = vmatprep.mubr.bf16.mxu0 0
        %4606 = vmatmul.mubr.bf16.gmra.mrb[0].mxu0 %v4416
        %v4607 = vpop.f32.mrb[0].mxu0
        %v4608 = vadd.f32 0.0, %v4607
        %v4609 = vpop.f32.mrb[0].mxu0
        %v4610 = vpop.f32.mrb[0].mxu0
        %v4611 = vadd.f32 0.0, %v4610
        %v4612 = vpop.f32.mrb[0].mxu0
        %4613 = vmatprep.mubr.bf16.mxu0 0
        %4614 = vmatmul.mubr.bf16.gmra.mrb[0].mxu0 %v4417
        %v4615 = vpop.f32.mrb[0].mxu0
        %v4616 = vadd.f32 0.0, %v4615
        %v4617 = vpop.f32.mrb[0].mxu0
        %v4618 = vpop.f32.mrb[0].mxu0
        %v4619 = vadd.f32 0.0, %v4618
        %v4620 = vpop.f32.mrb[0].mxu0
        %4621 = vmatprep.mubr.bf16.mxu0 0
        %4622 = vmatmul.mubr.bf16.gmra.mrb[0].mxu0 %v4418
        %v4623 = vpop.f32.mrb[0].mxu0
        %v4624 = vadd.f32 0.0, %v4623
        %v4625 = vpop.f32.mrb[0].mxu0
        %v4626 = vpop.f32.mrb[0].mxu0
        %v4627 = vadd.f32 0.0, %v4626
        %v4628 = vpop.f32.mrb[0].mxu0
        %4629 = vmatprep.mubr.bf16.mxu0 0
        %4630 = vmatmul.mubr.bf16.gmra.mrb[0].mxu0 %v4419
        %v4631 = vpop.f32.mrb[0].mxu0
        %v4632 = vadd.f32 0.0, %v4631
        %v4633 = vpop.f32.mrb[0].mxu0
        %v4634 = vpop.f32.mrb[0].mxu0
        %v4635 = vadd.f32 0.0, %v4634
        %v4636 = vpop.f32.mrb[0].mxu0
        %4637 = vmatprep.mubr.bf16.mxu0 0
        %4638 = vmatmul.mubr.bf16.gmra.mrb[0].mxu0 %v4420
        %v4639 = vpop.f32.mrb[0].mxu0
        %v4640 = vadd.f32 0.0, %v4639
        %v4641 = vpop.f32.mrb[0].mxu0
        %v4642 = vpop.f32.mrb[0].mxu0
        %v4643 = vadd.f32 0.0, %v4642
        %v4644 = vpop.f32.mrb[0].mxu0
        %4645 = vdwg.mxu0
        %v4646 = vadd.f32 %v4259, %v4520
        %v4647 = vadd.f32 %v4260, %v4523
        %v4648 = vadd.f32 %v4261, %v4528
        %v4649 = vadd.f32 %v4262, %v4531
        %v4650 = vadd.f32 %v4263, %v4536
        %v4651 = vadd.f32 %v4264, %v4539
        %v4652 = vadd.f32 %v4265, %v4544
        %v4653 = vadd.f32 %v4266, %v4547
        %v4654 = vadd.f32 %v4267, %v4552
        %v4655 = vadd.f32 %v4268, %v4555
        %v4656 = vadd.f32 %v4269, %v4560
        %v4657 = vadd.f32 %v4270, %v4563
        %v4658 = vadd.f32 %v4271, %v4568
        %v4659 = vadd.f32 %v4272, %v4571
        %v4660 = vadd.f32 %v4273, %v4576
        %v4661 = vadd.f32 %v4274, %v4579
        %v4662 = vadd.f32 %v4275, %v4584
        %v4663 = vadd.f32 %v4276, %v4587
        %v4664 = vadd.f32 %v4277, %v4592
        %v4665 = vadd.f32 %v4278, %v4595
        %v4666 = vadd.f32 %v4279, %v4600
        %v4667 = vadd.f32 %v4280, %v4603
        %v4668 = vadd.f32 %v4281, %v4608
        %v4669 = vadd.f32 %v4282, %v4611
        %v4670 = vadd.f32 %v4283, %v4616
        %v4671 = vadd.f32 %v4284, %v4619
        %v4672 = vadd.f32 %v4285, %v4624
        %v4673 = vadd.f32 %v4286, %v4627
        %v4674 = vadd.f32 %v4287, %v4632
        %v4675 = vadd.f32 %v4288, %v4635
        %v4676 = vadd.f32 %v4289, %v4640
        %v4677 = vadd.f32 %v4290, %v4643
        %v4678 = vld [vmem:[%s4291] sm:$0xf]
        %v4679 = vld [vmem:[%s4291 + $0x4] sm:$0xf]
        %v4680 = vld [vmem:[%s4291 + $0x8] sm:$0x1]
        %v4681 = vld [vmem:[%s4291 + $0xc] sm:$0xf]
        %v4682 = vld [vmem:[%s4291 + $0x10] sm:$0xf]
        %v4683 = vld [vmem:[%s4291 + $0x14] sm:$0x1]
        %v4684 = vld [vmem:[%s4291 + $0x18] sm:$0xf]
        %v4685 = vld [vmem:[%s4291 + $0x1c] sm:$0xf]
        %v4686 = vld [vmem:[%s4291 + $0x20] sm:$0x1]
        %v4687 = vld [vmem:[%s4291 + $0x24] sm:$0xf]
        %v4688 = vld [vmem:[%s4291 + $0x28] sm:$0xf]
        %v4689 = vld [vmem:[%s4291 + $0x2c] sm:$0x1]
        %v4690 = vld [vmem:[%s4291 + $0x30] sm:$0xf]
        %v4691 = vld [vmem:[%s4291 + $0x34] sm:$0xf]
        %v4692 = vld [vmem:[%s4291 + $0x38] sm:$0x1]
        %v4693 = vld [vmem:[%s4291 + $0x3c] sm:$0xf]
        %v4694 = vld [vmem:[%s4291 + $0x40] sm:$0xf]
        %v4695 = vld [vmem:[%s4291 + $0x44] sm:$0x1]
        %v4696 = vld [vmem:[%s4291 + $0x48] sm:$0xf]
        %v4697 = vld [vmem:[%s4291 + $0x4c] sm:$0xf]
        %v4698 = vld [vmem:[%s4291 + $0x50] sm:$0x1]
        %v4699 = vld [vmem:[%s4291 + $0x54] sm:$0xf]
        %v4700 = vld [vmem:[%s4291 + $0x58] sm:$0xf]
        %v4701 = vld [vmem:[%s4291 + $0x5c] sm:$0x1]
        %v4702 = vld [vmem:[%s4291 + $0x60] sm:$0xf]
        %v4703 = vld [vmem:[%s4291 + $0x64] sm:$0xf]
        %v4704 = vld [vmem:[%s4291 + $0x68] sm:$0x1]
        %v4705 = vld [vmem:[%s4291 + $0x6c] sm:$0xf]
        %v4706 = vld [vmem:[%s4291 + $0x70] sm:$0xf]
        %v4707 = vld [vmem:[%s4291 + $0x74] sm:$0x1]
        %v4708 = vld [vmem:[%s4291 + $0x78] sm:$0xf]
        %v4709 = vld [vmem:[%s4291 + $0x7c] sm:$0xf]
        %v4710 = vld [vmem:[%s4291 + $0x80] sm:$0x1]
        %v4711 = vld [vmem:[%s4291 + $0x84] sm:$0xf]
        %v4712 = vld [vmem:[%s4291 + $0x88] sm:$0xf]
        %v4713 = vld [vmem:[%s4291 + $0x8c] sm:$0x1]
        %v4714 = vld [vmem:[%s4291 + $0x90] sm:$0xf]
        %v4715 = vld [vmem:[%s4291 + $0x94] sm:$0xf]
        %v4716 = vld [vmem:[%s4291 + $0x98] sm:$0x1]
        %v4717 = vld [vmem:[%s4291 + $0x9c] sm:$0xf]
        %v4718 = vld [vmem:[%s4291 + $0xa0] sm:$0xf]
        %v4719 = vld [vmem:[%s4291 + $0xa4] sm:$0x1]
        %v4720 = vld [vmem:[%s4291 + $0xa8] sm:$0xf]
        %v4721 = vld [vmem:[%s4291 + $0xac] sm:$0xf]
        %v4722 = vld [vmem:[%s4291 + $0xb0] sm:$0x1]
        %v4723 = vld [vmem:[%s4291 + $0xb4] sm:$0xf]
        %v4724 = vld [vmem:[%s4291 + $0xb8] sm:$0xf]
        %v4725 = vld [vmem:[%s4291 + $0xbc] sm:$0x1]
        %v4727 = vshrl.u32 %v4678, 16
        %v4729 = vrot.slane %v4727, 4
        %v4730 = vshll.u32 %v4678, 16
        %v4732 = vrot.slane %v4730, 5
        %v4733 = vor.u32 %v4729, %v4732
        %v4734 = vrot.slane %v4733, 4
        %v4736 = vshll.u32 %v4679, 16
        %v4738 = vrot.slane %v4736, 5
        %v4739 = vsel %vm1188, %v4734, %v4738
        %v4740 = vshrl.u32 %v4679, 16
        %v4742 = vrot.slane %v4740, 4
        %v4743 = vor.u32 %v4742, %v4738
        %v4744 = vrot.slane %v4743, 4
        %v4746 = vshll.u32 %v4680, 16
        %v4748 = vrot.slane %v4746, 5
        %v4749 = vsel %vm1188, %v4744, %v4748
        %v4751 = vshrl.u32 %v4681, 16
        %v4753 = vrot.slane %v4751, 4
        %v4754 = vshll.u32 %v4681, 16
        %v4756 = vrot.slane %v4754, 5
        %v4757 = vor.u32 %v4753, %v4756
        %v4758 = vrot.slane %v4757, 4
        %v4760 = vshll.u32 %v4682, 16
        %v4762 = vrot.slane %v4760, 5
        %v4763 = vsel %vm1188, %v4758, %v4762
        %v4764 = vshrl.u32 %v4682, 16
        %v4766 = vrot.slane %v4764, 4
        %v4767 = vor.u32 %v4766, %v4762
        %v4768 = vrot.slane %v4767, 4
        %v4770 = vshll.u32 %v4683, 16
        %v4772 = vrot.slane %v4770, 5
        %v4773 = vsel %vm1188, %v4768, %v4772
        %v4775 = vshrl.u32 %v4684, 16
        %v4777 = vrot.slane %v4775, 4
        %v4778 = vshll.u32 %v4684, 16
        %v4780 = vrot.slane %v4778, 5
        %v4781 = vor.u32 %v4777, %v4780
        %v4782 = vrot.slane %v4781, 4
        %v4784 = vshll.u32 %v4685, 16
        %v4786 = vrot.slane %v4784, 5
        %v4787 = vsel %vm1188, %v4782, %v4786
        %v4788 = vshrl.u32 %v4685, 16
        %v4790 = vrot.slane %v4788, 4
        %v4791 = vor.u32 %v4790, %v4786
        %v4792 = vrot.slane %v4791, 4
        %v4794 = vshll.u32 %v4686, 16
        %v4796 = vrot.slane %v4794, 5
        %v4797 = vsel %vm1188, %v4792, %v4796
        %v4799 = vshrl.u32 %v4687, 16
        %v4801 = vrot.slane %v4799, 4
        %v4802 = vshll.u32 %v4687, 16
        %v4804 = vrot.slane %v4802, 5
        %v4805 = vor.u32 %v4801, %v4804
        %v4806 = vrot.slane %v4805, 4
        %v4808 = vshll.u32 %v4688, 16
        %v4810 = vrot.slane %v4808, 5
        %v4811 = vsel %vm1188, %v4806, %v4810
        %v4812 = vshrl.u32 %v4688, 16
        %v4814 = vrot.slane %v4812, 4
        %v4815 = vor.u32 %v4814, %v4810
        %v4816 = vrot.slane %v4815, 4
        %v4818 = vshll.u32 %v4689, 16
        %v4820 = vrot.slane %v4818, 5
        %v4821 = vsel %vm1188, %v4816, %v4820
        %v4823 = vshrl.u32 %v4690, 16
        %v4825 = vrot.slane %v4823, 4
        %v4826 = vshll.u32 %v4690, 16
        %v4828 = vrot.slane %v4826, 5
        %v4829 = vor.u32 %v4825, %v4828
        %v4830 = vrot.slane %v4829, 4
        %v4832 = vshll.u32 %v4691, 16
        %v4834 = vrot.slane %v4832, 5
        %v4835 = vsel %vm1188, %v4830, %v4834
        %v4836 = vshrl.u32 %v4691, 16
        %v4838 = vrot.slane %v4836, 4
        %v4839 = vor.u32 %v4838, %v4834
        %v4840 = vrot.slane %v4839, 4
        %v4842 = vshll.u32 %v4692, 16
        %v4844 = vrot.slane %v4842, 5
        %v4845 = vsel %vm1188, %v4840, %v4844
        %v4847 = vshrl.u32 %v4693, 16
        %v4849 = vrot.slane %v4847, 4
        %v4850 = vshll.u32 %v4693, 16
        %v4852 = vrot.slane %v4850, 5
        %v4853 = vor.u32 %v4849, %v4852
        %v4854 = vrot.slane %v4853, 4
        %v4856 = vshll.u32 %v4694, 16
        %v4858 = vrot.slane %v4856, 5
        %v4859 = vsel %vm1188, %v4854, %v4858
        %v4860 = vshrl.u32 %v4694, 16
        %v4862 = vrot.slane %v4860, 4
        %v4863 = vor.u32 %v4862, %v4858
        %v4864 = vrot.slane %v4863, 4
        %v4866 = vshll.u32 %v4695, 16
        %v4868 = vrot.slane %v4866, 5
        %v4869 = vsel %vm1188, %v4864, %v4868
        %v4871 = vshrl.u32 %v4696, 16
        %v4873 = vrot.slane %v4871, 4
        %v4874 = vshll.u32 %v4696, 16
        %v4876 = vrot.slane %v4874, 5
        %v4877 = vor.u32 %v4873, %v4876
        %v4878 = vrot.slane %v4877, 4
        %v4880 = vshll.u32 %v4697, 16
        %v4882 = vrot.slane %v4880, 5
        %v4883 = vsel %vm1188, %v4878, %v4882
        %v4884 = vshrl.u32 %v4697, 16
        %v4886 = vrot.slane %v4884, 4
        %v4887 = vor.u32 %v4886, %v4882
        %v4888 = vrot.slane %v4887, 4
        %v4890 = vshll.u32 %v4698, 16
        %v4892 = vrot.slane %v4890, 5
        %v4893 = vsel %vm1188, %v4888, %v4892
        %v4895 = vshrl.u32 %v4699, 16
        %v4897 = vrot.slane %v4895, 4
        %v4898 = vshll.u32 %v4699, 16
        %v4900 = vrot.slane %v4898, 5
        %v4901 = vor.u32 %v4897, %v4900
        %v4902 = vrot.slane %v4901, 4
        %v4904 = vshll.u32 %v4700, 16
        %v4906 = vrot.slane %v4904, 5
        %v4907 = vsel %vm1188, %v4902, %v4906
        %v4908 = vshrl.u32 %v4700, 16
        %v4910 = vrot.slane %v4908, 4
        %v4911 = vor.u32 %v4910, %v4906
        %v4912 = vrot.slane %v4911, 4
        %v4914 = vshll.u32 %v4701, 16
        %v4916 = vrot.slane %v4914, 5
        %v4917 = vsel %vm1188, %v4912, %v4916
        %v4919 = vshrl.u32 %v4702, 16
        %v4921 = vrot.slane %v4919, 4
        %v4922 = vshll.u32 %v4702, 16
        %v4924 = vrot.slane %v4922, 5
        %v4925 = vor.u32 %v4921, %v4924
        %v4926 = vrot.slane %v4925, 4
        %v4928 = vshll.u32 %v4703, 16
        %v4930 = vrot.slane %v4928, 5
        %v4931 = vsel %vm1188, %v4926, %v4930
        %v4932 = vshrl.u32 %v4703, 16
        %v4934 = vrot.slane %v4932, 4
        %v4935 = vor.u32 %v4934, %v4930
        %v4936 = vrot.slane %v4935, 4
        %v4938 = vshll.u32 %v4704, 16
        %v4940 = vrot.slane %v4938, 5
        %v4941 = vsel %vm1188, %v4936, %v4940
        %v4943 = vshrl.u32 %v4705, 16
        %v4945 = vrot.slane %v4943, 4
        %v4946 = vshll.u32 %v4705, 16
        %v4948 = vrot.slane %v4946, 5
        %v4949 = vor.u32 %v4945, %v4948
        %v4950 = vrot.slane %v4949, 4
        %v4952 = vshll.u32 %v4706, 16
        %v4954 = vrot.slane %v4952, 5
        %v4955 = vsel %vm1188, %v4950, %v4954
        %v4956 = vshrl.u32 %v4706, 16
        %v4958 = vrot.slane %v4956, 4
        %v4959 = vor.u32 %v4958, %v4954
        %v4960 = vrot.slane %v4959, 4
        %v4962 = vshll.u32 %v4707, 16
        %v4964 = vrot.slane %v4962, 5
        %v4965 = vsel %vm1188, %v4960, %v4964
        %v4967 = vshrl.u32 %v4708, 16
        %v4969 = vrot.slane %v4967, 4
        %v4970 = vshll.u32 %v4708, 16
        %v4972 = vrot.slane %v4970, 5
        %v4973 = vor.u32 %v4969, %v4972
        %v4974 = vrot.slane %v4973, 4
        %v4976 = vshll.u32 %v4709, 16
        %v4978 = vrot.slane %v4976, 5
        %v4979 = vsel %vm1188, %v4974, %v4978
        %v4980 = vshrl.u32 %v4709, 16
        %v4982 = vrot.slane %v4980, 4
        %v4983 = vor.u32 %v4982, %v4978
        %v4984 = vrot.slane %v4983, 4
        %v4986 = vshll.u32 %v4710, 16
        %v4988 = vrot.slane %v4986, 5
        %v4989 = vsel %vm1188, %v4984, %v4988
        %v4991 = vshrl.u32 %v4711, 16
        %v4993 = vrot.slane %v4991, 4
        %v4994 = vshll.u32 %v4711, 16
        %v4996 = vrot.slane %v4994, 5
        %v4997 = vor.u32 %v4993, %v4996
        %v4998 = vrot.slane %v4997, 4
        %v5000 = vshll.u32 %v4712, 16
        %v5002 = vrot.slane %v5000, 5
        %v5003 = vsel %vm1188, %v4998, %v5002
        %v5004 = vshrl.u32 %v4712, 16
        %v5006 = vrot.slane %v5004, 4
        %v5007 = vor.u32 %v5006, %v5002
        %v5008 = vrot.slane %v5007, 4
        %v5010 = vshll.u32 %v4713, 16
        %v5012 = vrot.slane %v5010, 5
        %v5013 = vsel %vm1188, %v5008, %v5012
        %v5015 = vshrl.u32 %v4714, 16
        %v5017 = vrot.slane %v5015, 4
        %v5018 = vshll.u32 %v4714, 16
        %v5020 = vrot.slane %v5018, 5
        %v5021 = vor.u32 %v5017, %v5020
        %v5022 = vrot.slane %v5021, 4
        %v5024 = vshll.u32 %v4715, 16
        %v5026 = vrot.slane %v5024, 5
        %v5027 = vsel %vm1188, %v5022, %v5026
        %v5028 = vshrl.u32 %v4715, 16
        %v5030 = vrot.slane %v5028, 4
        %v5031 = vor.u32 %v5030, %v5026
        %v5032 = vrot.slane %v5031, 4
        %v5034 = vshll.u32 %v4716, 16
        %v5036 = vrot.slane %v5034, 5
        %v5037 = vsel %vm1188, %v5032, %v5036
        %v5039 = vshrl.u32 %v4717, 16
        %v5041 = vrot.slane %v5039, 4
        %v5042 = vshll.u32 %v4717, 16
        %v5044 = vrot.slane %v5042, 5
        %v5045 = vor.u32 %v5041, %v5044
        %v5046 = vrot.slane %v5045, 4
        %v5048 = vshll.u32 %v4718, 16
        %v5050 = vrot.slane %v5048, 5
        %v5051 = vsel %vm1188, %v5046, %v5050
        %v5052 = vshrl.u32 %v4718, 16
        %v5054 = vrot.slane %v5052, 4
        %v5055 = vor.u32 %v5054, %v5050
        %v5056 = vrot.slane %v5055, 4
        %v5058 = vshll.u32 %v4719, 16
        %v5060 = vrot.slane %v5058, 5
        %v5061 = vsel %vm1188, %v5056, %v5060
        %v5063 = vshrl.u32 %v4720, 16
        %v5065 = vrot.slane %v5063, 4
        %v5066 = vshll.u32 %v4720, 16
        %v5068 = vrot.slane %v5066, 5
        %v5069 = vor.u32 %v5065, %v5068
        %v5070 = vrot.slane %v5069, 4
        %v5072 = vshll.u32 %v4721, 16
        %v5074 = vrot.slane %v5072, 5
        %v5075 = vsel %vm1188, %v5070, %v5074
        %v5076 = vshrl.u32 %v4721, 16
        %v5078 = vrot.slane %v5076, 4
        %v5079 = vor.u32 %v5078, %v5074
        %v5080 = vrot.slane %v5079, 4
        %v5082 = vshll.u32 %v4722, 16
        %v5084 = vrot.slane %v5082, 5
        %v5085 = vsel %vm1188, %v5080, %v5084
        %v5087 = vshrl.u32 %v4723, 16
        %v5089 = vrot.slane %v5087, 4
        %v5090 = vshll.u32 %v4723, 16
        %v5092 = vrot.slane %v5090, 5
        %v5093 = vor.u32 %v5089, %v5092
        %v5094 = vrot.slane %v5093, 4
        %v5096 = vshll.u32 %v4724, 16
        %v5098 = vrot.slane %v5096, 5
        %v5099 = vsel %vm1188, %v5094, %v5098
        %v5100 = vshrl.u32 %v4724, 16
        %v5102 = vrot.slane %v5100, 4
        %v5103 = vor.u32 %v5102, %v5098
        %v5104 = vrot.slane %v5103, 4
        %v5106 = vshll.u32 %v4725, 16
        %v5108 = vrot.slane %v5106, 5
        %v5109 = vsel %vm1188, %v5104, %v5108
        %s5110 = scalar_lea.vmem [#allocation9], 448
        %v5111 = vld [vmem:[%s5110] sm:$0xf]
        %v5112 = vld [vmem:[%s5110 + $0x4] sm:$0xf]
        %v5113 = vld [vmem:[%s5110 + $0x8] sm:$0xf]
        %v5114 = vld [vmem:[%s5110 + $0xc] sm:$0xf]
        %v5115 = vld [vmem:[%s5110 + $0x10] sm:$0xf]
        %v5116 = vld [vmem:[%s5110 + $0x14] sm:$0xf]
        %v5117 = vld [vmem:[%s5110 + $0x18] sm:$0xf]
        %v5118 = vld [vmem:[%s5110 + $0x1c] sm:$0xf]
        %v5119 = vld [vmem:[%s5110 + $0x20] sm:$0xf]
        %v5120 = vld [vmem:[%s5110 + $0x24] sm:$0xf]
        %v5121 = vld [vmem:[%s5110 + $0x28] sm:$0xf]
        %v5122 = vld [vmem:[%s5110 + $0x2c] sm:$0xf]
        %v5123 = vld [vmem:[%s5110 + $0x30] sm:$0xf]
        %v5124 = vld [vmem:[%s5110 + $0x34] sm:$0xf]
        %v5125 = vld [vmem:[%s5110 + $0x38] sm:$0xf]
        %v5126 = vld [vmem:[%s5110 + $0x3c] sm:$0xf]
        %v5127 = vunpack.c.l.b16 %v4739
        %v5128 = vunpack.c.l.b16 %v4749
        %v5129 = vunpack.c.l.b16 %v4763
        %v5130 = vunpack.c.l.b16 %v4773
        %v5131 = vunpack.c.l.b16 %v4787
        %v5132 = vunpack.c.l.b16 %v4797
        %v5133 = vunpack.c.l.b16 %v4811
        %v5134 = vunpack.c.l.b16 %v4821
        %v5135 = vunpack.c.l.b16 %v4835
        %v5136 = vunpack.c.l.b16 %v4845
        %v5137 = vunpack.c.l.b16 %v4859
        %v5138 = vunpack.c.l.b16 %v4869
        %v5139 = vunpack.c.l.b16 %v4883
        %v5140 = vunpack.c.l.b16 %v4893
        %v5141 = vunpack.c.l.b16 %v4907
        %v5142 = vunpack.c.l.b16 %v4917
        %v5143 = vunpack.c.l.b16 %v4931
        %v5144 = vunpack.c.l.b16 %v4941
        %v5145 = vunpack.c.l.b16 %v4955
        %v5146 = vunpack.c.l.b16 %v4965
        %v5147 = vunpack.c.l.b16 %v4979
        %v5148 = vunpack.c.l.b16 %v4989
        %v5149 = vunpack.c.l.b16 %v5003
        %v5150 = vunpack.c.l.b16 %v5013
        %v5151 = vunpack.c.l.b16 %v5027
        %v5152 = vunpack.c.l.b16 %v5037
        %v5153 = vunpack.c.l.b16 %v5051
        %v5154 = vunpack.c.l.b16 %v5061
        %v5155 = vunpack.c.l.b16 %v5075
        %v5156 = vunpack.c.l.b16 %v5085
        %v5157 = vunpack.c.l.b16 %v5099
        %v5158 = vunpack.c.l.b16 %v5109
        %v5159 = vpack.c.b16 %v5128, %v5127
        %v5160 = vpack.c.b16 %v5130, %v5129
        %v5161 = vpack.c.b16 %v5132, %v5131
        %v5162 = vpack.c.b16 %v5134, %v5133
        %v5163 = vpack.c.b16 %v5136, %v5135
        %v5164 = vpack.c.b16 %v5138, %v5137
        %v5165 = vpack.c.b16 %v5140, %v5139
        %v5166 = vpack.c.b16 %v5142, %v5141
        %v5167 = vpack.c.b16 %v5144, %v5143
        %v5168 = vpack.c.b16 %v5146, %v5145
        %v5169 = vpack.c.b16 %v5148, %v5147
        %v5170 = vpack.c.b16 %v5150, %v5149
        %v5171 = vpack.c.b16 %v5152, %v5151
        %v5172 = vpack.c.b16 %v5154, %v5153
        %v5173 = vpack.c.b16 %v5156, %v5155
        %v5174 = vpack.c.b16 %v5158, %v5157
        %v5207 = vunpack.c.l.b16 %v5111
        %v5208 = vunpack.c.l.b16 %v5112
        %v5209 = vunpack.c.l.b16 %v5113
        %v5210 = vunpack.c.l.b16 %v5114
        %v5211 = vunpack.c.l.b16 %v5115
        %v5212 = vunpack.c.l.b16 %v5116
        %v5213 = vunpack.c.l.b16 %v5117
        %v5214 = vunpack.c.l.b16 %v5118
        %v5215 = vunpack.c.l.b16 %v5119
        %v5216 = vunpack.c.l.b16 %v5120
        %v5217 = vunpack.c.l.b16 %v5121
        %v5218 = vunpack.c.l.b16 %v5122
        %v5219 = vunpack.c.l.b16 %v5123
        %v5220 = vunpack.c.l.b16 %v5124
        %v5221 = vunpack.c.l.b16 %v5125
        %v5222 = vunpack.c.l.b16 %v5126
        %v5223 = vpack.c.b16 %v5208, %v5207
        %v5224 = vpack.c.b16 %v5210, %v5209
        %v5225 = vpack.c.b16 %v5212, %v5211
        %v5226 = vpack.c.b16 %v5214, %v5213
        %v5227 = vpack.c.b16 %v5216, %v5215
        %v5228 = vpack.c.b16 %v5218, %v5217
        %v5229 = vpack.c.b16 %v5220, %v5219
        %v5230 = vpack.c.b16 %v5222, %v5221
        %5239 = vmatprep.subr.bf16.mxu0 0
        %5240 = vmatpush1.bf16.msra.mxu0 %v5223
        %5241 = vmatprep.subr.bf16.mxu0 0
        %5242 = vmatpush1.bf16.msra.mxu0 %v5224
        %5243 = vmatprep.subr.bf16.mxu0 0
        %5244 = vmatpush1.bf16.msra.mxu0 %v5225
        %5245 = vmatprep.subr.bf16.mxu0 0
        %5246 = vmatpush1.bf16.msra.mxu0 %v5226
        %5247 = vmatprep.subr.bf16.mxu0 0
        %5248 = vmatpush1.bf16.msra.mxu0 %v5227
        %5249 = vmatprep.subr.bf16.mxu0 0
        %5250 = vmatpush1.bf16.msra.mxu0 %v5228
        %5251 = vmatprep.subr.bf16.mxu0 0
        %5252 = vmatpush1.bf16.msra.mxu0 %v5229
        %5253 = vmatprep.subr.bf16.mxu0 0
        %5254 = vmatpush1.bf16.msra.mxu0 %v5230
        %5255 = vmatprep.subr.bf16.mxu0 0
        %5256 = vmatpush1.bf16.msra.mxu0 0
        %5257 = vmatprep.subr.bf16.mxu0 0
        %5258 = vmatpush1.bf16.msra.mxu0 0
        %5259 = vmatprep.subr.bf16.mxu0 0
        %5260 = vmatpush1.bf16.msra.mxu0 0
        %5261 = vmatprep.subr.bf16.mxu0 0
        %5262 = vmatpush1.bf16.msra.mxu0 0
        %5263 = vmatprep.subr.bf16.mxu0 0
        %5264 = vmatpush1.bf16.msra.mxu0 0
        %5265 = vmatprep.subr.bf16.mxu0 0
        %5266 = vmatpush1.bf16.msra.mxu0 0
        %5267 = vmatprep.subr.bf16.mxu0 0
        %5268 = vmatpush1.bf16.msra.mxu0 0
        %5269 = vmatprep.subr.bf16.mxu0 0
        %5270 = vmatpush1.bf16.msra.mxu0 0
        %5271 = vmatprep.mubr.bf16.mxu0 0
        %5272 = vmatmul.mubr.bf16.gmra.mrb[0].mxu0 %v5159
        %v5273 = vpop.f32.mrb[0].mxu0
        %v5274 = vadd.f32 0.0, %v5273
        %v5275 = vpop.f32.mrb[0].mxu0
        %v5276 = vpop.f32.mrb[0].mxu0
        %v5277 = vadd.f32 0.0, %v5276
        %v5278 = vpop.f32.mrb[0].mxu0
        %5279 = vmatprep.mubr.bf16.mxu0 0
        %5280 = vmatmul.mubr.bf16.gmra.mrb[0].mxu0 %v5160
        %v5281 = vpop.f32.mrb[0].mxu0
        %v5282 = vadd.f32 0.0, %v5281
        %v5283 = vpop.f32.mrb[0].mxu0
        %v5284 = vpop.f32.mrb[0].mxu0
        %v5285 = vadd.f32 0.0, %v5284
        %v5286 = vpop.f32.mrb[0].mxu0
        %5287 = vmatprep.mubr.bf16.mxu0 0
        %5288 = vmatmul.mubr.bf16.gmra.mrb[0].mxu0 %v5161
        %v5289 = vpop.f32.mrb[0].mxu0
        %v5290 = vadd.f32 0.0, %v5289
        %v5291 = vpop.f32.mrb[0].mxu0
        %v5292 = vpop.f32.mrb[0].mxu0
        %v5293 = vadd.f32 0.0, %v5292
        %v5294 = vpop.f32.mrb[0].mxu0
        %5295 = vmatprep.mubr.bf16.mxu0 0
        %5296 = vmatmul.mubr.bf16.gmra.mrb[0].mxu0 %v5162
        %v5297 = vpop.f32.mrb[0].mxu0
        %v5298 = vadd.f32 0.0, %v5297
        %v5299 = vpop.f32.mrb[0].mxu0
        %v5300 = vpop.f32.mrb[0].mxu0
        %v5301 = vadd.f32 0.0, %v5300
        %v5302 = vpop.f32.mrb[0].mxu0
        %5303 = vmatprep.mubr.bf16.mxu0 0
        %5304 = vmatmul.mubr.bf16.gmra.mrb[0].mxu0 %v5163
        %v5305 = vpop.f32.mrb[0].mxu0
        %v5306 = vadd.f32 0.0, %v5305
        %v5307 = vpop.f32.mrb[0].mxu0
        %v5308 = vpop.f32.mrb[0].mxu0
        %v5309 = vadd.f32 0.0, %v5308
        %v5310 = vpop.f32.mrb[0].mxu0
        %5311 = vmatprep.mubr.bf16.mxu0 0
        %5312 = vmatmul.mubr.bf16.gmra.mrb[0].mxu0 %v5164
        %v5313 = vpop.f32.mrb[0].mxu0
        %v5314 = vadd.f32 0.0, %v5313
        %v5315 = vpop.f32.mrb[0].mxu0
        %v5316 = vpop.f32.mrb[0].mxu0
        %v5317 = vadd.f32 0.0, %v5316
        %v5318 = vpop.f32.mrb[0].mxu0
        %5319 = vmatprep.mubr.bf16.mxu0 0
        %5320 = vmatmul.mubr.bf16.gmra.mrb[0].mxu0 %v5165
        %v5321 = vpop.f32.mrb[0].mxu0
        %v5322 = vadd.f32 0.0, %v5321
        %v5323 = vpop.f32.mrb[0].mxu0
        %v5324 = vpop.f32.mrb[0].mxu0
        %v5325 = vadd.f32 0.0, %v5324
        %v5326 = vpop.f32.mrb[0].mxu0
        %5327 = vmatprep.mubr.bf16.mxu0 0
        %5328 = vmatmul.mubr.bf16.gmra.mrb[0].mxu0 %v5166
        %v5329 = vpop.f32.mrb[0].mxu0
        %v5330 = vadd.f32 0.0, %v5329
        %v5331 = vpop.f32.mrb[0].mxu0
        %v5332 = vpop.f32.mrb[0].mxu0
        %v5333 = vadd.f32 0.0, %v5332
        %v5334 = vpop.f32.mrb[0].mxu0
        %5335 = vmatprep.mubr.bf16.mxu0 0
        %5336 = vmatmul.mubr.bf16.gmra.mrb[0].mxu0 %v5167
        %v5337 = vpop.f32.mrb[0].mxu0
        %v5338 = vadd.f32 0.0, %v5337
        %v5339 = vpop.f32.mrb[0].mxu0
        %v5340 = vpop.f32.mrb[0].mxu0
        %v5341 = vadd.f32 0.0, %v5340
        %v5342 = vpop.f32.mrb[0].mxu0
        %5343 = vmatprep.mubr.bf16.mxu0 0
        %5344 = vmatmul.mubr.bf16.gmra.mrb[0].mxu0 %v5168
        %v5345 = vpop.f32.mrb[0].mxu0
        %v5346 = vadd.f32 0.0, %v5345
        %v5347 = vpop.f32.mrb[0].mxu0
        %v5348 = vpop.f32.mrb[0].mxu0
        %v5349 = vadd.f32 0.0, %v5348
        %v5350 = vpop.f32.mrb[0].mxu0
        %5351 = vmatprep.mubr.bf16.mxu0 0
        %5352 = vmatmul.mubr.bf16.gmra.mrb[0].mxu0 %v5169
        %v5353 = vpop.f32.mrb[0].mxu0
        %v5354 = vadd.f32 0.0, %v5353
        %v5355 = vpop.f32.mrb[0].mxu0
        %v5356 = vpop.f32.mrb[0].mxu0
        %v5357 = vadd.f32 0.0, %v5356
        %v5358 = vpop.f32.mrb[0].mxu0
        %5359 = vmatprep.mubr.bf16.mxu0 0
        %5360 = vmatmul.mubr.bf16.gmra.mrb[0].mxu0 %v5170
        %v5361 = vpop.f32.mrb[0].mxu0
        %v5362 = vadd.f32 0.0, %v5361
        %v5363 = vpop.f32.mrb[0].mxu0
        %v5364 = vpop.f32.mrb[0].mxu0
        %v5365 = vadd.f32 0.0, %v5364
        %v5366 = vpop.f32.mrb[0].mxu0
        %5367 = vmatprep.mubr.bf16.mxu0 0
        %5368 = vmatmul.mubr.bf16.gmra.mrb[0].mxu0 %v5171
        %v5369 = vpop.f32.mrb[0].mxu0
        %v5370 = vadd.f32 0.0, %v5369
        %v5371 = vpop.f32.mrb[0].mxu0
        %v5372 = vpop.f32.mrb[0].mxu0
        %v5373 = vadd.f32 0.0, %v5372
        %v5374 = vpop.f32.mrb[0].mxu0
        %5375 = vmatprep.mubr.bf16.mxu0 0
        %5376 = vmatmul.mubr.bf16.gmra.mrb[0].mxu0 %v5172
        %v5377 = vpop.f32.mrb[0].mxu0
        %v5378 = vadd.f32 0.0, %v5377
        %v5379 = vpop.f32.mrb[0].mxu0
        %v5380 = vpop.f32.mrb[0].mxu0
        %v5381 = vadd.f32 0.0, %v5380
        %v5382 = vpop.f32.mrb[0].mxu0
        %5383 = vmatprep.mubr.bf16.mxu0 0
        %5384 = vmatmul.mubr.bf16.gmra.mrb[0].mxu0 %v5173
        %v5385 = vpop.f32.mrb[0].mxu0
        %v5386 = vadd.f32 0.0, %v5385
        %v5387 = vpop.f32.mrb[0].mxu0
        %v5388 = vpop.f32.mrb[0].mxu0
        %v5389 = vadd.f32 0.0, %v5388
        %v5390 = vpop.f32.mrb[0].mxu0
        %5391 = vmatprep.mubr.bf16.mxu0 0
        %5392 = vmatmul.mubr.bf16.gmra.mrb[0].mxu0 %v5174
        %v5393 = vpop.f32.mrb[0].mxu0
        %v5394 = vadd.f32 0.0, %v5393
        %v5395 = vpop.f32.mrb[0].mxu0
        %v5396 = vpop.f32.mrb[0].mxu0
        %v5397 = vadd.f32 0.0, %v5396
        %v5398 = vpop.f32.mrb[0].mxu0
        %5399 = vdwg.mxu0
        %v5400 = vadd.f32 %v4646, %v5274
        %v5401 = vadd.f32 %v4647, %v5277
        %v5402 = vadd.f32 %v4648, %v5282
        %v5403 = vadd.f32 %v4649, %v5285
        %v5404 = vadd.f32 %v4650, %v5290
        %v5405 = vadd.f32 %v4651, %v5293
        %v5406 = vadd.f32 %v4652, %v5298
        %v5407 = vadd.f32 %v4653, %v5301
        %v5408 = vadd.f32 %v4654, %v5306
        %v5409 = vadd.f32 %v4655, %v5309
        %v5410 = vadd.f32 %v4656, %v5314
        %v5411 = vadd.f32 %v4657, %v5317
        %v5412 = vadd.f32 %v4658, %v5322
        %v5413 = vadd.f32 %v4659, %v5325
        %v5414 = vadd.f32 %v4660, %v5330
        %v5415 = vadd.f32 %v4661, %v5333
        %v5416 = vadd.f32 %v4662, %v5338
        %v5417 = vadd.f32 %v4663, %v5341
        %v5418 = vadd.f32 %v4664, %v5346
        %v5419 = vadd.f32 %v4665, %v5349
        %v5420 = vadd.f32 %v4666, %v5354
        %v5421 = vadd.f32 %v4667, %v5357
        %v5422 = vadd.f32 %v4668, %v5362
        %v5423 = vadd.f32 %v4669, %v5365
        %v5424 = vadd.f32 %v4670, %v5370
        %v5425 = vadd.f32 %v4671, %v5373
        %v5426 = vadd.f32 %v4672, %v5378
        %v5427 = vadd.f32 %v4673, %v5381
        %v5428 = vadd.f32 %v4674, %v5386
        %v5429 = vadd.f32 %v4675, %v5389
        %v5430 = vadd.f32 %v4676, %v5394
        %v5431 = vadd.f32 %v4677, %v5397
        %v5432 = vld [vmem:[%s4291] sm:$0xe]
        %v5433 = vld [vmem:[%s4291 + $0xc] sm:$0xe]
        %v5434 = vld [vmem:[%s4291 + $0x18] sm:$0xe]
        %v5435 = vld [vmem:[%s4291 + $0x24] sm:$0xe]
        %v5436 = vld [vmem:[%s4291 + $0x30] sm:$0xe]
        %v5437 = vld [vmem:[%s4291 + $0x3c] sm:$0xe]
        %v5438 = vld [vmem:[%s4291 + $0x48] sm:$0xe]
        %v5439 = vld [vmem:[%s4291 + $0x54] sm:$0xe]
        %v5440 = vld [vmem:[%s4291 + $0x60] sm:$0xe]
        %v5441 = vld [vmem:[%s4291 + $0x6c] sm:$0xe]
        %v5442 = vld [vmem:[%s4291 + $0x78] sm:$0xe]
        %v5443 = vld [vmem:[%s4291 + $0x84] sm:$0xe]
        %v5444 = vld [vmem:[%s4291 + $0x90] sm:$0xe]
        %v5445 = vld [vmem:[%s4291 + $0x9c] sm:$0xe]
        %v5446 = vld [vmem:[%s4291 + $0xa8] sm:$0xe]
        %v5447 = vld [vmem:[%s4291 + $0xb4] sm:$0xe]
        %v5496 = vrot.slane %v5432, 5
        %v5497 = vrot.slane %v5496, 4
        %v5498 = vrot.slane %v4679, 5
        %v5499 = vsel %vm2218, %v5497, %v5498
        %v5500 = vrot.slane %v5498, 4
        %v5501 = vrot.slane %v4680, 5
        %v5502 = vsel %vm2218, %v5500, %v5501
        %v5503 = vrot.slane %v5433, 5
        %v5504 = vrot.slane %v5503, 4
        %v5505 = vrot.slane %v4682, 5
        %v5506 = vsel %vm2218, %v5504, %v5505
        %v5507 = vrot.slane %v5505, 4
        %v5508 = vrot.slane %v4683, 5
        %v5509 = vsel %vm2218, %v5507, %v5508
        %v5510 = vrot.slane %v5434, 5
        %v5511 = vrot.slane %v5510, 4
        %v5512 = vrot.slane %v4685, 5
        %v5513 = vsel %vm2218, %v5511, %v5512
        %v5514 = vrot.slane %v5512, 4
        %v5515 = vrot.slane %v4686, 5
        %v5516 = vsel %vm2218, %v5514, %v5515
        %v5517 = vrot.slane %v5435, 5
        %v5518 = vrot.slane %v5517, 4
        %v5519 = vrot.slane %v4688, 5
        %v5520 = vsel %vm2218, %v5518, %v5519
        %v5521 = vrot.slane %v5519, 4
        %v5522 = vrot.slane %v4689, 5
        %v5523 = vsel %vm2218, %v5521, %v5522
        %v5524 = vrot.slane %v5436, 5
        %v5525 = vrot.slane %v5524, 4
        %v5526 = vrot.slane %v4691, 5
        %v5527 = vsel %vm2218, %v5525, %v5526
        %v5528 = vrot.slane %v5526, 4
        %v5529 = vrot.slane %v4692, 5
        %v5530 = vsel %vm2218, %v5528, %v5529
        %v5531 = vrot.slane %v5437, 5
        %v5532 = vrot.slane %v5531, 4
        %v5533 = vrot.slane %v4694, 5
        %v5534 = vsel %vm2218, %v5532, %v5533
        %v5535 = vrot.slane %v5533, 4
        %v5536 = vrot.slane %v4695, 5
        %v5537 = vsel %vm2218, %v5535, %v5536
        %v5538 = vrot.slane %v5438, 5
        %v5539 = vrot.slane %v5538, 4
        %v5540 = vrot.slane %v4697, 5
        %v5541 = vsel %vm2218, %v5539, %v5540
        %v5542 = vrot.slane %v5540, 4
        %v5543 = vrot.slane %v4698, 5
        %v5544 = vsel %vm2218, %v5542, %v5543
        %v5545 = vrot.slane %v5439, 5
        %v5546 = vrot.slane %v5545, 4
        %v5547 = vrot.slane %v4700, 5
        %v5548 = vsel %vm2218, %v5546, %v5547
        %v5549 = vrot.slane %v5547, 4
        %v5550 = vrot.slane %v4701, 5
        %v5551 = vsel %vm2218, %v5549, %v5550
        %v5552 = vrot.slane %v5440, 5
        %v5553 = vrot.slane %v5552, 4
        %v5554 = vrot.slane %v4703, 5
        %v5555 = vsel %vm2218, %v5553, %v5554
        %v5556 = vrot.slane %v5554, 4
        %v5557 = vrot.slane %v4704, 5
        %v5558 = vsel %vm2218, %v5556, %v5557
        %v5559 = vrot.slane %v5441, 5
        %v5560 = vrot.slane %v5559, 4
        %v5561 = vrot.slane %v4706, 5
        %v5562 = vsel %vm2218, %v5560, %v5561
        %v5563 = vrot.slane %v5561, 4
        %v5564 = vrot.slane %v4707, 5
        %v5565 = vsel %vm2218, %v5563, %v5564
        %v5566 = vrot.slane %v5442, 5
        %v5567 = vrot.slane %v5566, 4
        %v5568 = vrot.slane %v4709, 5
        %v5569 = vsel %vm2218, %v5567, %v5568
        %v5570 = vrot.slane %v5568, 4
        %v5571 = vrot.slane %v4710, 5
        %v5572 = vsel %vm2218, %v5570, %v5571
        %v5573 = vrot.slane %v5443, 5
        %v5574 = vrot.slane %v5573, 4
        %v5575 = vrot.slane %v4712, 5
        %v5576 = vsel %vm2218, %v5574, %v5575
        %v5577 = vrot.slane %v5575, 4
        %v5578 = vrot.slane %v4713, 5
        %v5579 = vsel %vm2218, %v5577, %v5578
        %v5580 = vrot.slane %v5444, 5
        %v5581 = vrot.slane %v5580, 4
        %v5582 = vrot.slane %v4715, 5
        %v5583 = vsel %vm2218, %v5581, %v5582
        %v5584 = vrot.slane %v5582, 4
        %v5585 = vrot.slane %v4716, 5
        %v5586 = vsel %vm2218, %v5584, %v5585
        %v5587 = vrot.slane %v5445, 5
        %v5588 = vrot.slane %v5587, 4
        %v5589 = vrot.slane %v4718, 5
        %v5590 = vsel %vm2218, %v5588, %v5589
        %v5591 = vrot.slane %v5589, 4
        %v5592 = vrot.slane %v4719, 5
        %v5593 = vsel %vm2218, %v5591, %v5592
        %v5594 = vrot.slane %v5446, 5
        %v5595 = vrot.slane %v5594, 4
        %v5596 = vrot.slane %v4721, 5
        %v5597 = vsel %vm2218, %v5595, %v5596
        %v5598 = vrot.slane %v5596, 4
        %v5599 = vrot.slane %v4722, 5
        %v5600 = vsel %vm2218, %v5598, %v5599
        %v5601 = vrot.slane %v5447, 5
        %v5602 = vrot.slane %v5601, 4
        %v5603 = vrot.slane %v4724, 5
        %v5604 = vsel %vm2218, %v5602, %v5603
        %v5605 = vrot.slane %v5603, 4
        %v5606 = vrot.slane %v4725, 5
        %v5607 = vsel %vm2218, %v5605, %v5606
        %s5608 = scalar_lea.vmem [#allocation9], 512
        %v5609 = vld [vmem:[%s5608] sm:$0xf]
        %v5610 = vld [vmem:[%s5608 + $0x4] sm:$0xf]
        %v5611 = vld [vmem:[%s5608 + $0x8] sm:$0xf]
        %v5612 = vld [vmem:[%s5608 + $0xc] sm:$0xf]
        %v5613 = vld [vmem:[%s5608 + $0x10] sm:$0xf]
        %v5614 = vld [vmem:[%s5608 + $0x14] sm:$0xf]
        %v5615 = vld [vmem:[%s5608 + $0x18] sm:$0xf]
        %v5616 = vld [vmem:[%s5608 + $0x1c] sm:$0xf]
        %v5617 = vld [vmem:[%s5608 + $0x20] sm:$0xf]
        %v5618 = vld [vmem:[%s5608 + $0x24] sm:$0xf]
        %v5619 = vld [vmem:[%s5608 + $0x28] sm:$0xf]
        %v5620 = vld [vmem:[%s5608 + $0x2c] sm:$0xf]
        %v5621 = vld [vmem:[%s5608 + $0x30] sm:$0xf]
        %v5622 = vld [vmem:[%s5608 + $0x34] sm:$0xf]
        %v5623 = vld [vmem:[%s5608 + $0x38] sm:$0xf]
        %v5624 = vld [vmem:[%s5608 + $0x3c] sm:$0xf]
        %v5625 = vunpack.c.l.b16 %v5499
        %v5626 = vunpack.c.l.b16 %v5502
        %v5627 = vunpack.c.l.b16 %v5506
        %v5628 = vunpack.c.l.b16 %v5509
        %v5629 = vunpack.c.l.b16 %v5513
        %v5630 = vunpack.c.l.b16 %v5516
        %v5631 = vunpack.c.l.b16 %v5520
        %v5632 = vunpack.c.l.b16 %v5523
        %v5633 = vunpack.c.l.b16 %v5527
        %v5634 = vunpack.c.l.b16 %v5530
        %v5635 = vunpack.c.l.b16 %v5534
        %v5636 = vunpack.c.l.b16 %v5537
        %v5637 = vunpack.c.l.b16 %v5541
        %v5638 = vunpack.c.l.b16 %v5544
        %v5639 = vunpack.c.l.b16 %v5548
        %v5640 = vunpack.c.l.b16 %v5551
        %v5641 = vunpack.c.l.b16 %v5555
        %v5642 = vunpack.c.l.b16 %v5558
        %v5643 = vunpack.c.l.b16 %v5562
        %v5644 = vunpack.c.l.b16 %v5565
        %v5645 = vunpack.c.l.b16 %v5569
        %v5646 = vunpack.c.l.b16 %v5572
        %v5647 = vunpack.c.l.b16 %v5576
        %v5648 = vunpack.c.l.b16 %v5579
        %v5649 = vunpack.c.l.b16 %v5583
        %v5650 = vunpack.c.l.b16 %v5586
        %v5651 = vunpack.c.l.b16 %v5590
        %v5652 = vunpack.c.l.b16 %v5593
        %v5653 = vunpack.c.l.b16 %v5597
        %v5654 = vunpack.c.l.b16 %v5600
        %v5655 = vunpack.c.l.b16 %v5604
        %v5656 = vunpack.c.l.b16 %v5607
        %v5657 = vpack.c.b16 %v5626, %v5625
        %v5658 = vpack.c.b16 %v5628, %v5627
        %v5659 = vpack.c.b16 %v5630, %v5629
        %v5660 = vpack.c.b16 %v5632, %v5631
        %v5661 = vpack.c.b16 %v5634, %v5633
        %v5662 = vpack.c.b16 %v5636, %v5635
        %v5663 = vpack.c.b16 %v5638, %v5637
        %v5664 = vpack.c.b16 %v5640, %v5639
        %v5665 = vpack.c.b16 %v5642, %v5641
        %v5666 = vpack.c.b16 %v5644, %v5643
        %v5667 = vpack.c.b16 %v5646, %v5645
        %v5668 = vpack.c.b16 %v5648, %v5647
        %v5669 = vpack.c.b16 %v5650, %v5649
        %v5670 = vpack.c.b16 %v5652, %v5651
        %v5671 = vpack.c.b16 %v5654, %v5653
        %v5672 = vpack.c.b16 %v5656, %v5655
        %v5705 = vunpack.c.l.b16 %v5609
        %v5706 = vunpack.c.l.b16 %v5610
        %v5707 = vunpack.c.l.b16 %v5611
        %v5708 = vunpack.c.l.b16 %v5612
        %v5709 = vunpack.c.l.b16 %v5613
        %v5710 = vunpack.c.l.b16 %v5614
        %v5711 = vunpack.c.l.b16 %v5615
        %v5712 = vunpack.c.l.b16 %v5616
        %v5713 = vunpack.c.l.b16 %v5617
        %v5714 = vunpack.c.l.b16 %v5618
        %v5715 = vunpack.c.l.b16 %v5619
        %v5716 = vunpack.c.l.b16 %v5620
        %v5717 = vunpack.c.l.b16 %v5621
        %v5718 = vunpack.c.l.b16 %v5622
        %v5719 = vunpack.c.l.b16 %v5623
        %v5720 = vunpack.c.l.b16 %v5624
        %v5721 = vpack.c.b16 %v5706, %v5705
        %v5722 = vpack.c.b16 %v5708, %v5707
        %v5723 = vpack.c.b16 %v5710, %v5709
        %v5724 = vpack.c.b16 %v5712, %v5711
        %v5725 = vpack.c.b16 %v5714, %v5713
        %v5726 = vpack.c.b16 %v5716, %v5715
        %v5727 = vpack.c.b16 %v5718, %v5717
        %v5728 = vpack.c.b16 %v5720, %v5719
        %5737 = vmatprep.subr.bf16.mxu0 0
        %5738 = vmatpush1.bf16.msra.mxu0 %v5721
        %5739 = vmatprep.subr.bf16.mxu0 0
        %5740 = vmatpush1.bf16.msra.mxu0 %v5722
        %5741 = vmatprep.subr.bf16.mxu0 0
        %5742 = vmatpush1.bf16.msra.mxu0 %v5723
        %5743 = vmatprep.subr.bf16.mxu0 0
        %5744 = vmatpush1.bf16.msra.mxu0 %v5724
        %5745 = vmatprep.subr.bf16.mxu0 0
        %5746 = vmatpush1.bf16.msra.mxu0 %v5725
        %5747 = vmatprep.subr.bf16.mxu0 0
        %5748 = vmatpush1.bf16.msra.mxu0 %v5726
        %5749 = vmatprep.subr.bf16.mxu0 0
        %5750 = vmatpush1.bf16.msra.mxu0 %v5727
        %5751 = vmatprep.subr.bf16.mxu0 0
        %5752 = vmatpush1.bf16.msra.mxu0 %v5728
        %5753 = vmatprep.subr.bf16.mxu0 0
        %5754 = vmatpush1.bf16.msra.mxu0 0
        %5755 = vmatprep.subr.bf16.mxu0 0
        %5756 = vmatpush1.bf16.msra.mxu0 0
        %5757 = vmatprep.subr.bf16.mxu0 0
        %5758 = vmatpush1.bf16.msra.mxu0 0
        %5759 = vmatprep.subr.bf16.mxu0 0
        %5760 = vmatpush1.bf16.msra.mxu0 0
        %5761 = vmatprep.subr.bf16.mxu0 0
        %5762 = vmatpush1.bf16.msra.mxu0 0
        %5763 = vmatprep.subr.bf16.mxu0 0
        %5764 = vmatpush1.bf16.msra.mxu0 0
        %5765 = vmatprep.subr.bf16.mxu0 0
        %5766 = vmatpush1.bf16.msra.mxu0 0
        %5767 = vmatprep.subr.bf16.mxu0 0
        %5768 = vmatpush1.bf16.msra.mxu0 0
        %5769 = vmatprep.mubr.bf16.mxu0 0
        %5770 = vmatmul.mubr.bf16.gmra.mrb[0].mxu0 %v5657
        %v5771 = vpop.f32.mrb[0].mxu0
        %v5772 = vadd.f32 0.0, %v5771
        %v5773 = vpop.f32.mrb[0].mxu0
        %v5774 = vpop.f32.mrb[0].mxu0
        %v5775 = vadd.f32 0.0, %v5774
        %v5776 = vpop.f32.mrb[0].mxu0
        %5777 = vmatprep.mubr.bf16.mxu0 0
        %5778 = vmatmul.mubr.bf16.gmra.mrb[0].mxu0 %v5658
        %v5779 = vpop.f32.mrb[0].mxu0
        %v5780 = vadd.f32 0.0, %v5779
        %v5781 = vpop.f32.mrb[0].mxu0
        %v5782 = vpop.f32.mrb[0].mxu0
        %v5783 = vadd.f32 0.0, %v5782
        %v5784 = vpop.f32.mrb[0].mxu0
        %5785 = vmatprep.mubr.bf16.mxu0 0
        %5786 = vmatmul.mubr.bf16.gmra.mrb[0].mxu0 %v5659
        %v5787 = vpop.f32.mrb[0].mxu0
        %v5788 = vadd.f32 0.0, %v5787
        %v5789 = vpop.f32.mrb[0].mxu0
        %v5790 = vpop.f32.mrb[0].mxu0
        %v5791 = vadd.f32 0.0, %v5790
        %v5792 = vpop.f32.mrb[0].mxu0
        %5793 = vmatprep.mubr.bf16.mxu0 0
        %5794 = vmatmul.mubr.bf16.gmra.mrb[0].mxu0 %v5660
        %v5795 = vpop.f32.mrb[0].mxu0
        %v5796 = vadd.f32 0.0, %v5795
        %v5797 = vpop.f32.mrb[0].mxu0
        %v5798 = vpop.f32.mrb[0].mxu0
        %v5799 = vadd.f32 0.0, %v5798
        %v5800 = vpop.f32.mrb[0].mxu0
        %5801 = vmatprep.mubr.bf16.mxu0 0
        %5802 = vmatmul.mubr.bf16.gmra.mrb[0].mxu0 %v5661
        %v5803 = vpop.f32.mrb[0].mxu0
        %v5804 = vadd.f32 0.0, %v5803
        %v5805 = vpop.f32.mrb[0].mxu0
        %v5806 = vpop.f32.mrb[0].mxu0
        %v5807 = vadd.f32 0.0, %v5806
        %v5808 = vpop.f32.mrb[0].mxu0
        %5809 = vmatprep.mubr.bf16.mxu0 0
        %5810 = vmatmul.mubr.bf16.gmra.mrb[0].mxu0 %v5662
        %v5811 = vpop.f32.mrb[0].mxu0
        %v5812 = vadd.f32 0.0, %v5811
        %v5813 = vpop.f32.mrb[0].mxu0
        %v5814 = vpop.f32.mrb[0].mxu0
        %v5815 = vadd.f32 0.0, %v5814
        %v5816 = vpop.f32.mrb[0].mxu0
        %5817 = vmatprep.mubr.bf16.mxu0 0
        %5818 = vmatmul.mubr.bf16.gmra.mrb[0].mxu0 %v5663
        %v5819 = vpop.f32.mrb[0].mxu0
        %v5820 = vadd.f32 0.0, %v5819
        %v5821 = vpop.f32.mrb[0].mxu0
        %v5822 = vpop.f32.mrb[0].mxu0
        %v5823 = vadd.f32 0.0, %v5822
        %v5824 = vpop.f32.mrb[0].mxu0
        %5825 = vmatprep.mubr.bf16.mxu0 0
        %5826 = vmatmul.mubr.bf16.gmra.mrb[0].mxu0 %v5664
        %v5827 = vpop.f32.mrb[0].mxu0
        %v5828 = vadd.f32 0.0, %v5827
        %v5829 = vpop.f32.mrb[0].mxu0
        %v5830 = vpop.f32.mrb[0].mxu0
        %v5831 = vadd.f32 0.0, %v5830
        %v5832 = vpop.f32.mrb[0].mxu0
        %5833 = vmatprep.mubr.bf16.mxu0 0
        %5834 = vmatmul.mubr.bf16.gmra.mrb[0].mxu0 %v5665
        %v5835 = vpop.f32.mrb[0].mxu0
        %v5836 = vadd.f32 0.0, %v5835
        %v5837 = vpop.f32.mrb[0].mxu0
        %v5838 = vpop.f32.mrb[0].mxu0
        %v5839 = vadd.f32 0.0, %v5838
        %v5840 = vpop.f32.mrb[0].mxu0
        %5841 = vmatprep.mubr.bf16.mxu0 0
        %5842 = vmatmul.mubr.bf16.gmra.mrb[0].mxu0 %v5666
        %v5843 = vpop.f32.mrb[0].mxu0
        %v5844 = vadd.f32 0.0, %v5843
        %v5845 = vpop.f32.mrb[0].mxu0
        %v5846 = vpop.f32.mrb[0].mxu0
        %v5847 = vadd.f32 0.0, %v5846
        %v5848 = vpop.f32.mrb[0].mxu0
        %5849 = vmatprep.mubr.bf16.mxu0 0
        %5850 = vmatmul.mubr.bf16.gmra.mrb[0].mxu0 %v5667
        %v5851 = vpop.f32.mrb[0].mxu0
        %v5852 = vadd.f32 0.0, %v5851
        %v5853 = vpop.f32.mrb[0].mxu0
        %v5854 = vpop.f32.mrb[0].mxu0
        %v5855 = vadd.f32 0.0, %v5854
        %v5856 = vpop.f32.mrb[0].mxu0
        %5857 = vmatprep.mubr.bf16.mxu0 0
        %5858 = vmatmul.mubr.bf16.gmra.mrb[0].mxu0 %v5668
        %v5859 = vpop.f32.mrb[0].mxu0
        %v5860 = vadd.f32 0.0, %v5859
        %v5861 = vpop.f32.mrb[0].mxu0
        %v5862 = vpop.f32.mrb[0].mxu0
        %v5863 = vadd.f32 0.0, %v5862
        %v5864 = vpop.f32.mrb[0].mxu0
        %5865 = vmatprep.mubr.bf16.mxu0 0
        %5866 = vmatmul.mubr.bf16.gmra.mrb[0].mxu0 %v5669
        %v5867 = vpop.f32.mrb[0].mxu0
        %v5868 = vadd.f32 0.0, %v5867
        %v5869 = vpop.f32.mrb[0].mxu0
        %v5870 = vpop.f32.mrb[0].mxu0
        %v5871 = vadd.f32 0.0, %v5870
        %v5872 = vpop.f32.mrb[0].mxu0
        %5873 = vmatprep.mubr.bf16.mxu0 0
        %5874 = vmatmul.mubr.bf16.gmra.mrb[0].mxu0 %v5670
        %v5875 = vpop.f32.mrb[0].mxu0
        %v5876 = vadd.f32 0.0, %v5875
        %v5877 = vpop.f32.mrb[0].mxu0
        %v5878 = vpop.f32.mrb[0].mxu0
        %v5879 = vadd.f32 0.0, %v5878
        %v5880 = vpop.f32.mrb[0].mxu0
        %5881 = vmatprep.mubr.bf16.mxu0 0
        %5882 = vmatmul.mubr.bf16.gmra.mrb[0].mxu0 %v5671
        %v5883 = vpop.f32.mrb[0].mxu0
        %v5884 = vadd.f32 0.0, %v5883
        %v5885 = vpop.f32.mrb[0].mxu0
        %v5886 = vpop.f32.mrb[0].mxu0
        %v5887 = vadd.f32 0.0, %v5886
        %v5888 = vpop.f32.mrb[0].mxu0
        %5889 = vmatprep.mubr.bf16.mxu0 0
        %5890 = vmatmul.mubr.bf16.gmra.mrb[0].mxu0 %v5672
        %v5891 = vpop.f32.mrb[0].mxu0
        %v5892 = vadd.f32 0.0, %v5891
        %v5893 = vpop.f32.mrb[0].mxu0
        %v5894 = vpop.f32.mrb[0].mxu0
        %v5895 = vadd.f32 0.0, %v5894
        %v5896 = vpop.f32.mrb[0].mxu0
        %5897 = vdwg.mxu0
        %v5898 = vadd.f32 %v5400, %v5772
        %v5899 = vadd.f32 %v5401, %v5775
        %v5900 = vadd.f32 %v5402, %v5780
        %v5901 = vadd.f32 %v5403, %v5783
        %v5902 = vadd.f32 %v5404, %v5788
        %v5903 = vadd.f32 %v5405, %v5791
        %v5904 = vadd.f32 %v5406, %v5796
        %v5905 = vadd.f32 %v5407, %v5799
        %v5906 = vadd.f32 %v5408, %v5804
        %v5907 = vadd.f32 %v5409, %v5807
        %v5908 = vadd.f32 %v5410, %v5812
        %v5909 = vadd.f32 %v5411, %v5815
        %v5910 = vadd.f32 %v5412, %v5820
        %v5911 = vadd.f32 %v5413, %v5823
        %v5912 = vadd.f32 %v5414, %v5828
        %v5913 = vadd.f32 %v5415, %v5831
        %v5914 = vadd.f32 %v5416, %v5836
        %v5915 = vadd.f32 %v5417, %v5839
        %v5916 = vadd.f32 %v5418, %v5844
        %v5917 = vadd.f32 %v5419, %v5847
        %v5918 = vadd.f32 %v5420, %v5852
        %v5919 = vadd.f32 %v5421, %v5855
        %v5920 = vadd.f32 %v5422, %v5860
        %v5921 = vadd.f32 %v5423, %v5863
        %v5922 = vadd.f32 %v5424, %v5868
        %v5923 = vadd.f32 %v5425, %v5871
        %v5924 = vadd.f32 %v5426, %v5876
        %v5925 = vadd.f32 %v5427, %v5879
        %v5926 = vadd.f32 %v5428, %v5884
        %v5927 = vadd.f32 %v5429, %v5887
        %v5928 = vadd.f32 %v5430, %v5892
        %v5929 = vadd.f32 %v5431, %v5895
        %v5930 = vadd.f32 %v5898, %v5899
        %v5931 = vadd.f32 %v5930, %v5900
        %v5932 = vadd.f32 %v5931, %v5901
        %v5933 = vadd.f32 %v5932, %v5902
        %v5934 = vadd.f32 %v5933, %v5903
        %v5935 = vadd.f32 %v5934, %v5904
        %v5936 = vadd.f32 %v5935, %v5905
        %v5937 = vadd.f32 %v5936, %v5906
        %v5938 = vadd.f32 %v5937, %v5907
        %v5939 = vadd.f32 %v5938, %v5908
        %v5940 = vadd.f32 %v5939, %v5909
        %v5941 = vadd.f32 %v5940, %v5910
        %v5942 = vadd.f32 %v5941, %v5911
        %v5943 = vadd.f32 %v5942, %v5912
        %v5944 = vadd.f32 %v5943, %v5913
        %v5945 = vadd.f32 %v5944, %v5914
        %v5946 = vadd.f32 %v5945, %v5915
        %v5947 = vadd.f32 %v5946, %v5916
        %v5948 = vadd.f32 %v5947, %v5917
        %v5949 = vadd.f32 %v5948, %v5918
        %v5950 = vadd.f32 %v5949, %v5919
        %v5951 = vadd.f32 %v5950, %v5920
        %v5952 = vadd.f32 %v5951, %v5921
        %v5953 = vadd.f32 %v5952, %v5922
        %v5954 = vadd.f32 %v5953, %v5923
        %v5955 = vadd.f32 %v5954, %v5924
        %v5956 = vadd.f32 %v5955, %v5925
        %v5957 = vadd.f32 %v5956, %v5926
        %v5958 = vadd.f32 %v5957, %v5927
        %v5959 = vadd.f32 %v5958, %v5928
        %v5960 = vadd.f32 %v5959, %v5929
        %v5961 = vrot.slane %v5960, 4
        %v5962 = vadd.f32 %v5960, %v5961
        %v5963 = vrot.slane %v5962, 2
        %v5964 = vadd.f32 %v5962, %v5963
        %v5965 = vrot.slane %v5964, 1
        %v5966 = vadd.f32 %v5964, %v5965
        %5967 = vst [vmem:[%s293] sm:$0x1] %v5966
        %v5968 = vmul.f32 %v5898, %v5898
        %v5969 = vmul.f32 %v5899, %v5899
        %v5970 = vmul.f32 %v5900, %v5900
        %v5971 = vmul.f32 %v5901, %v5901
        %v5972 = vmul.f32 %v5902, %v5902
        %v5973 = vmul.f32 %v5903, %v5903
        %v5974 = vmul.f32 %v5904, %v5904
        %v5975 = vmul.f32 %v5905, %v5905
        %v5976 = vmul.f32 %v5906, %v5906
        %v5977 = vmul.f32 %v5907, %v5907
        %v5978 = vmul.f32 %v5908, %v5908
        %v5979 = vmul.f32 %v5909, %v5909
        %v5980 = vmul.f32 %v5910, %v5910
        %v5981 = vmul.f32 %v5911, %v5911
        %v5982 = vmul.f32 %v5912, %v5912
        %v5983 = vmul.f32 %v5913, %v5913
        %v5984 = vmul.f32 %v5914, %v5914
        %v5985 = vmul.f32 %v5915, %v5915
        %v5986 = vmul.f32 %v5916, %v5916
        %v5987 = vmul.f32 %v5917, %v5917
        %v5988 = vmul.f32 %v5918, %v5918
        %v5989 = vmul.f32 %v5919, %v5919
        %v5990 = vmul.f32 %v5920, %v5920
        %v5991 = vmul.f32 %v5921, %v5921
        %v5992 = vmul.f32 %v5922, %v5922
        %v5993 = vmul.f32 %v5923, %v5923
        %v5994 = vmul.f32 %v5924, %v5924
        %v5995 = vmul.f32 %v5925, %v5925
        %v5996 = vmul.f32 %v5926, %v5926
        %v5997 = vmul.f32 %v5927, %v5927
        %v5998 = vmul.f32 %v5928, %v5928
        %v5999 = vmul.f32 %v5929, %v5929
        %v6000 = vadd.f32 %v5968, %v5969
        %v6001 = vadd.f32 %v6000, %v5970
        %v6002 = vadd.f32 %v6001, %v5971
        %v6003 = vadd.f32 %v6002, %v5972
        %v6004 = vadd.f32 %v6003, %v5973
        %v6005 = vadd.f32 %v6004, %v5974
        %v6006 = vadd.f32 %v6005, %v5975
        %v6007 = vadd.f32 %v6006, %v5976
        %v6008 = vadd.f32 %v6007, %v5977
        %v6009 = vadd.f32 %v6008, %v5978
        %v6010 = vadd.f32 %v6009, %v5979
        %v6011 = vadd.f32 %v6010, %v5980
        %v6012 = vadd.f32 %v6011, %v5981
        %v6013 = vadd.f32 %v6012, %v5982
        %v6014 = vadd.f32 %v6013, %v5983
        %v6015 = vadd.f32 %v6014, %v5984
        %v6016 = vadd.f32 %v6015, %v5985
        %v6017 = vadd.f32 %v6016, %v5986
        %v6018 = vadd.f32 %v6017, %v5987
        %v6019 = vadd.f32 %v6018, %v5988
        %v6020 = vadd.f32 %v6019, %v5989
        %v6021 = vadd.f32 %v6020, %v5990
        %v6022 = vadd.f32 %v6021, %v5991
        %v6023 = vadd.f32 %v6022, %v5992
        %v6024 = vadd.f32 %v6023, %v5993
        %v6025 = vadd.f32 %v6024, %v5994
        %v6026 = vadd.f32 %v6025, %v5995
        %v6027 = vadd.f32 %v6026, %v5996
        %v6028 = vadd.f32 %v6027, %v5997
        %v6029 = vadd.f32 %v6028, %v5998
        %v6030 = vadd.f32 %v6029, %v5999
        %v6031 = vrot.slane %v6030, 4
        %v6032 = vadd.f32 %v6030, %v6031
        %v6033 = vrot.slane %v6032, 2
        %v6034 = vadd.f32 %v6032, %v6033
        %v6035 = vrot.slane %v6034, 1
        %v6036 = vadd.f32 %v6034, %v6035
        %6037 = vst [vmem:[%s293 + $0x1] sm:$0x1] %v6036
        %v6038 = vpack.c.bf16 %v5899, %v5898
        %v6039 = vpack.c.bf16 %v5901, %v5900
        %v6040 = vpack.c.bf16 %v5903, %v5902
        %v6041 = vpack.c.bf16 %v5905, %v5904
        %v6042 = vpack.c.bf16 %v5907, %v5906
        %v6043 = vpack.c.bf16 %v5909, %v5908
        %v6044 = vpack.c.bf16 %v5911, %v5910
        %v6045 = vpack.c.bf16 %v5913, %v5912
        %v6046 = vpack.c.bf16 %v5915, %v5914
        %v6047 = vpack.c.bf16 %v5917, %v5916
        %v6048 = vpack.c.bf16 %v5919, %v5918
        %v6049 = vpack.c.bf16 %v5921, %v5920
        %v6050 = vpack.c.bf16 %v5923, %v5922
        %v6051 = vpack.c.bf16 %v5925, %v5924
        %v6052 = vpack.c.bf16 %v5927, %v5926
        %v6053 = vpack.c.bf16 %v5929, %v5928
        %v6070 = vunpack.c.l.b16 %v6038
        %v6071 = vunpack.c.h.b16 %v6038
        %v6072 = vunpack.c.l.b16 %v6039
        %v6073 = vunpack.c.h.b16 %v6039
        %v6074 = vunpack.c.l.b16 %v6040
        %v6075 = vunpack.c.h.b16 %v6040
        %v6076 = vunpack.c.l.b16 %v6041
        %v6077 = vunpack.c.h.b16 %v6041
        %v6078 = vunpack.c.l.b16 %v6042
        %v6079 = vunpack.c.h.b16 %v6042
        %v6080 = vunpack.c.l.b16 %v6043
        %v6081 = vunpack.c.h.b16 %v6043
        %v6082 = vunpack.c.l.b16 %v6044
        %v6083 = vunpack.c.h.b16 %v6044
        %v6084 = vunpack.c.l.b16 %v6045
        %v6085 = vunpack.c.h.b16 %v6045
        %v6086 = vunpack.c.l.b16 %v6046
        %v6087 = vunpack.c.h.b16 %v6046
        %v6088 = vunpack.c.l.b16 %v6047
        %v6089 = vunpack.c.h.b16 %v6047
        %v6090 = vunpack.c.l.b16 %v6048
        %v6091 = vunpack.c.h.b16 %v6048
        %v6092 = vunpack.c.l.b16 %v6049
        %v6093 = vunpack.c.h.b16 %v6049
        %v6094 = vunpack.c.l.b16 %v6050
        %v6095 = vunpack.c.h.b16 %v6050
        %v6096 = vunpack.c.l.b16 %v6051
        %v6097 = vunpack.c.h.b16 %v6051
        %v6098 = vunpack.c.l.b16 %v6052
        %v6099 = vunpack.c.h.b16 %v6052
        %v6100 = vunpack.c.l.b16 %v6053
        %v6101 = vunpack.c.h.b16 %v6053
        %v6102 = vpack.c.b16 %v6070, %v6070
        %v6103 = vpack.c.b16 %v6071, %v6071
        %v6104 = vpack.c.b16 %v6072, %v6072
        %v6105 = vpack.c.b16 %v6073, %v6073
        %v6106 = vpack.c.b16 %v6074, %v6074
        %v6107 = vpack.c.b16 %v6075, %v6075
        %v6108 = vpack.c.b16 %v6076, %v6076
        %v6109 = vpack.c.b16 %v6077, %v6077
        %v6110 = vpack.c.b16 %v6078, %v6078
        %v6111 = vpack.c.b16 %v6079, %v6079
        %v6112 = vpack.c.b16 %v6080, %v6080
        %v6113 = vpack.c.b16 %v6081, %v6081
        %v6114 = vpack.c.b16 %v6082, %v6082
        %v6115 = vpack.c.b16 %v6083, %v6083
        %v6116 = vpack.c.b16 %v6084, %v6084
        %v6117 = vpack.c.b16 %v6085, %v6085
        %v6118 = vpack.c.b16 %v6086, %v6086
        %v6119 = vpack.c.b16 %v6087, %v6087
        %v6120 = vpack.c.b16 %v6088, %v6088
        %v6121 = vpack.c.b16 %v6089, %v6089
        %v6122 = vpack.c.b16 %v6090, %v6090
        %v6123 = vpack.c.b16 %v6091, %v6091
        %v6124 = vpack.c.b16 %v6092, %v6092
        %v6125 = vpack.c.b16 %v6093, %v6093
        %v6126 = vpack.c.b16 %v6094, %v6094
        %v6127 = vpack.c.b16 %v6095, %v6095
        %v6128 = vpack.c.b16 %v6096, %v6096
        %v6129 = vpack.c.b16 %v6097, %v6097
        %v6130 = vpack.c.b16 %v6098, %v6098
        %v6131 = vpack.c.b16 %v6099, %v6099
        %v6132 = vpack.c.b16 %v6100, %v6100
        %v6133 = vpack.c.b16 %v6101, %v6101
        %6166 = vst [vmem:[%s286] sm:$0xf] %v6102
        %6167 = vst [vmem:[%s286 + $0x4] sm:$0xf] %v6103
        %6168 = vst [vmem:[%s286 + $0x8] sm:$0xf] %v6104
        %6169 = vst [vmem:[%s286 + $0xc] sm:$0xf] %v6105
        %6170 = vst [vmem:[%s286 + $0x10] sm:$0xf] %v6106
        %6171 = vst [vmem:[%s286 + $0x14] sm:$0xf] %v6107
        %6172 = vst [vmem:[%s286 + $0x18] sm:$0xf] %v6108
        %6173 = vst [vmem:[%s286 + $0x1c] sm:$0xf] %v6109
        %6174 = vst [vmem:[%s286 + $0x20] sm:$0xf] %v6110
        %6175 = vst [vmem:[%s286 + $0x24] sm:$0xf] %v6111
        %6176 = vst [vmem:[%s286 + $0x28] sm:$0xf] %v6112
        %6177 = vst [vmem:[%s286 + $0x2c] sm:$0xf] %v6113
        %6178 = vst [vmem:[%s286 + $0x30] sm:$0xf] %v6114
        %6179 = vst [vmem:[%s286 + $0x34] sm:$0xf] %v6115
        %6180 = vst [vmem:[%s286 + $0x38] sm:$0xf] %v6116
        %6181 = vst [vmem:[%s286 + $0x3c] sm:$0xf] %v6117
        %6182 = vst [vmem:[%s286 + $0x40] sm:$0xf] %v6118
        %6183 = vst [vmem:[%s286 + $0x44] sm:$0xf] %v6119
        %6184 = vst [vmem:[%s286 + $0x48] sm:$0xf] %v6120
        %6185 = vst [vmem:[%s286 + $0x4c] sm:$0xf] %v6121
        %6186 = vst [vmem:[%s286 + $0x50] sm:$0xf] %v6122
        %6187 = vst [vmem:[%s286 + $0x54] sm:$0xf] %v6123
        %6188 = vst [vmem:[%s286 + $0x58] sm:$0xf] %v6124
        %6189 = vst [vmem:[%s286 + $0x5c] sm:$0xf] %v6125
        %6190 = vst [vmem:[%s286 + $0x60] sm:$0xf] %v6126
        %6191 = vst [vmem:[%s286 + $0x64] sm:$0xf] %v6127
        %6192 = vst [vmem:[%s286 + $0x68] sm:$0xf] %v6128
        %6193 = vst [vmem:[%s286 + $0x6c] sm:$0xf] %v6129
        %6194 = vst [vmem:[%s286 + $0x70] sm:$0xf] %v6130
        %6195 = vst [vmem:[%s286 + $0x74] sm:$0xf] %v6131
        %6196 = vst [vmem:[%s286 + $0x78] sm:$0xf] %v6132
        %6197 = vst [vmem:[%s286 + $0x7c] sm:$0xf] %v6133
        %s6198 = sand.u32 %s125, 1
        %s6199 = scalar_lea.sflag [#allocation5], %s6198
        %s6200 = sand.u32 %s125, 1
        %s6201 = smul.addr %s6200, 128
        %s6202 = scalar_lea.vmem [#allocation11], %s6201
        %s6203 = sand.u32 %s151, 1
        %s6204 = scalar_lea.sflag [#allocation13], %s6203
        %s6205 = sand.u32 %s151, 1
        %s6206 = smul.addr %s6205, 2
        %s6207 = scalar_lea.vmem [#allocation12], %s6206
        // Predicated region
        $region53: #{encoder_block.4} parent=35 // pred_check
          %p6208 = pneg %p135
        $region54: #{encoder_block.4} parent=35 // pred_check_branch
          %6210 = sbr.rel (%p6208) target = $region56
        $region55: #{encoder_block.4} parent=35 // pred_region
          %s6212 = ssub.s32 2048, 2048
          %6213 = vsyncadd %s6199, %s6212
          %s6214 = smul.addr %s28, 32
          %s6215 = smul.addr %s6214, 64
          %s6216 = scalar_lea.hbm %s4, %s6215
          %s6217 = sshll.u32 %s6202, 4
          %s6218 = int_to_ptr.vmem [resolvable:$true] %s6217
          %6223 = dma.vmem_to_hbm [thread:$0]  %s6218, 2048, %s6216, %s6199, 64, 64, 4
        $region56: #{encoder_block.4} parent=35 // pred_fallthru
          _
        // Predicated region
        $region57: #{encoder_block.4} parent=35 // pred_check
          %p6224 = pneg %p161
        $region58: #{encoder_block.4} parent=35 // pred_check_branch
          %6226 = sbr.rel (%p6224) target = $region60
        $region59: #{encoder_block.4} parent=35 // pred_region
          %s6228 = ssub.s32 32, 32
          %6229 = vsyncadd %s6204, %s6228
          %s6230 = smul.addr %s28, 32
          %s6231 = scalar_lea.hbm %s5, %s6230
          %s6233 = sshll.u32 %s6207, 4
          %s6234 = int_to_ptr.vmem [resolvable:$true] %s6233
          %6236 = dma.vmem_to_hbm [thread:$0]  %s6234, 32, %s6231, %s6204
        $region60: #{encoder_block.4} parent=35 // pred_fallthru
          _
      $region36: #{encoder_block.4} parent=5 // pred_fallthru
        _
      %p6237 = scmp.le.s32.totalorder 2, %s23
      // Predicated region
      $region61: #{encoder_block.4} parent=5 // pred_check
        %p6238 = pneg %p6237
      $region62: #{encoder_block.4} parent=5 // pred_check_branch
        %6240 = sbr.rel (%p6238) target = $region64
      $region63: #{encoder_block.4} parent=5 // pred_region
        %s6241 = ssub.s32 %s23, 2
        // Predicated region
        $region65: #{encoder_block.4} parent=63 // pred_check
          %p6242 = pneg %p141
        $region66: #{encoder_block.4} parent=63 // pred_check_branch
          %6244 = sbr.rel (%p6242) target = $region68
        $region67: #{encoder_block.4} parent=63 // pred_region
          %s6245 = sand.u32 %s126, 1
          %s6246 = scalar_lea.sflag [#allocation5], %s6245
          %s6247 = sand.u32 %s126, 1
          %s6248 = smul.addr %s6247, 128
          %s6249 = scalar_lea.vmem [#allocation11], %s6248
          %6250 = dma.done %s6246, 2048
        $region68: #{encoder_block.4} parent=63 // pred_fallthru
          _
        // Predicated region
        $region69: #{encoder_block.4} parent=63 // pred_check
          %p6251 = pneg %p167
        $region70: #{encoder_block.4} parent=63 // pred_check_branch
          %6253 = sbr.rel (%p6251) target = $region72
        $region71: #{encoder_block.4} parent=63 // pred_region
          %s6254 = sand.u32 %s152, 1
          %s6255 = scalar_lea.sflag [#allocation13], %s6254
          %s6256 = sand.u32 %s152, 1
          %s6257 = smul.addr %s6256, 2
          %s6258 = scalar_lea.vmem [#allocation12], %s6257
          %6259 = dma.done %s6255, 32
        $region72: #{encoder_block.4} parent=63 // pred_fallthru
          _
      $region64: #{encoder_block.4} parent=5 // pred_fallthru
        _
    $region6: #{encoder_block.4} parent=1 // loop_footer
      %s27 = sadd.s32 1, %s23
    $region7: #{encoder_block.4} parent=1 // loop_footer_branch
      %22 = sbr.rel target = $region3
    $region8: #{encoder_block.4} parent=1 // loop_exit
      _
    %6260 = vsyncpa [#allocation4], 1
    %s6261 = scalar_lea.sflag [#allocation4], 1
    %6262 = vsyncpa %s6261, 1
    %6263 = vsyncpa [#allocation7], 1
    %6264 = vsyncpa [#allocation10], 1
    %6265 = vsyncpa [#allocation5], 1
    %s6266 = scalar_lea.sflag [#allocation5], 1
    %6267 = vsyncpa %s6266, 1
    %6268 = vsyncpa [#allocation13], 1
    %s6269 = scalar_lea.sflag [#allocation13], 1
    %6270 = vsyncpa %s6269, 1

</llo_original>
